<compile_context>
chip_gen: v7x
topology: tpu7x:2x2x1
jax: 0.10.0
libtpu: 0.0.40
codegen_flags: <defaults>
</compile_context>

<pallas_src>
import functools

import jax
import jax.numpy as jnp
from jax import lax
from jax.experimental import pallas as pl
from jax.experimental.pallas import tpu as pltpu

# Keep f32 matmuls (kernel and reference) at full precision so the correctness
# check is independent of the backend's default bf16-pass matmul policy.
jax.config.update("jax_default_matmul_precision", "highest")


def _deconv2x2_fused_kernel(x_ref, l_ref, s_ref, b_ref, o_ref, *, nb,
                            negative_slope):
    """Processes `nb` samples per grid step.

    x_ref: (nb, C*H, W)    input, rows ordered (c, h), lanes = w
    l_ref: (4, O*2H, C*H)  per-tap channel mix + output-row (kh) placement
    s_ref: (4, W, 2W)      per-tap output-lane (kw) placement
    b_ref: (O*2H, 1)       bias, replicated over output rows
    o_ref: (nb, O*2H, 2W)  output, rows ordered (o, 2h+kh), lanes = 2w+kw
    """
    b = b_ref[...]                                         # (O*2H, 1)

    def one_sample(i, carry):
        x = x_ref[i]                                       # (C*H, W)
        y = b                                              # broadcasts over lanes
        for k in range(4):                                 # static unroll, 4 taps
            t = jnp.dot(l_ref[k], x,
                        preferred_element_type=jnp.float32,
                        precision=lax.Precision.HIGHEST)   # (O*2H, W)
            y = y + jnp.dot(t, s_ref[k],
                            preferred_element_type=jnp.float32,
                            precision=lax.Precision.HIGHEST)  # (O*2H, 2W)
        # LeakyReLU (negative_slope=0.0 gives plain ReLU).
        o_ref[i] = jnp.where(y >= 0.0, y, negative_slope * y)
        return carry

    lax.fori_loop(0, nb, one_sample, 0, unroll=nb <= 8)


def conv_transpose_2d(x, weight, bias, *, activation="lrelu"):
    """Forward of nn.ConvTranspose2d(Cin, Cout, kernel_size=2, stride=2, padding=0)
    followed by LeakyReLU (default) or ReLU.

    x:      (N, Cin, H, W)     f32
    weight: (Cin, Cout, 2, 2)  f32  (PyTorch ConvTranspose2d layout)
    bias:   (Cout,)            f32
    returns (N, Cout, 2H, 2W)  f32
    """
    negative_slope = 0.0 if activation == "relu" else 0.01

    N, C, H, W = x.shape
    Cw, O, KH, KW = weight.shape
    assert Cw == C, "weight in_channels must match x channels"
    assert (KH, KW) == (2, 2), "kernel specialized to kernel_size=2, stride=2"

    CH, O2H, W2 = C * H, O * 2 * H, 2 * W

    # ---- constant operands (built once in plain XLA; DMA'd once by the kernel) ----
    eye_h = jnp.eye(H, dtype=jnp.float32)
    eye_w = jnp.eye(W, dtype=jnp.float32)
    l_taps, s_taps = [], []
    for kh in range(2):
        e_kh = jnp.zeros((2, 1), jnp.float32).at[kh, 0].set(1.0)
        E = jnp.kron(eye_h, e_kh)                   # (2H, H): E[2h+kh, h] = 1
        for kw in range(2):
            wk = weight[:, :, kh, kw].T.astype(jnp.float32)     # (O, C)
            l_taps.append(jnp.kron(wk, E))          # (O*2H, C*H)
            e_kw = jnp.zeros((1, 2), jnp.float32).at[0, kw].set(1.0)
            s_taps.append(jnp.kron(eye_w, e_kw))    # (W, 2W): S[w, 2w+kw] = 1
    L = jnp.stack(l_taps)                           # (4, O*2H, C*H)
    S = jnp.stack(s_taps)                           # (4, W, 2W)
    b_rows = jnp.repeat(bias.astype(jnp.float32), 2 * H).reshape(O2H, 1)

    # Input: metadata-only reshape; rows = (c, h), lanes = w.
    x2 = x.reshape(N, CH, W).astype(jnp.float32)

    # ---- samples per grid step: ~1 MiB per step, but keep several grid steps
    # so both v7x TensorCores get work and the pipeline can overlap DMAs. ----
    bytes_per_sample = 4 * (CH * W + O2H * W2)
    target_step_bytes = 1 << 20
    nb = max(1, min(N, target_step_bytes // bytes_per_sample))
    min_steps = 4 if N >= 4 else (2 if N >= 2 else 1)
    nb = max(1, min(nb, N // min_steps))
    while N % nb:                                   # keep blocks evenly sized
        nb -= 1
    grid = (N // nb,)

    step_bytes = nb * bytes_per_sample
    const_bytes = 4 * (L.size + S.size + b_rows.size)
    vmem_limit = int(min(28 << 20,
                         max(16 << 20, 4 * step_bytes + const_bytes + (2 << 20))))

    kernel = functools.partial(_deconv2x2_fused_kernel, nb=nb,
                               negative_slope=negative_slope)

    out = pl.pallas_call(
        kernel,
        out_shape=jax.ShapeDtypeStruct((N, O2H, W2), jnp.float32),
        grid_spec=pltpu.PrefetchScalarGridSpec(
            num_scalar_prefetch=0,
            grid=grid,
            in_specs=[
                pl.BlockSpec((nb, CH, W), lambda i: (i, 0, 0)),
                pl.BlockSpec((4, O2H, CH), lambda i: (0, 0, 0)),
                pl.BlockSpec((4, W, W2), lambda i: (0, 0, 0)),
                pl.BlockSpec((O2H, 1), lambda i: (0, 0)),
            ],
            out_specs=pl.BlockSpec((nb, O2H, W2), lambda i: (i, 0, 0)),
        ),
        compiler_params=pltpu.CompilerParams(
            dimension_semantics=("parallel",),
            vmem_limit_bytes=vmem_limit),
        cost_estimate=pl.CostEstimate(
            flops=2 * N * 4 * (O2H * CH * W + O2H * W * W2),
            transcendentals=0,
            bytes_accessed=4 * (N * CH * W + N * O2H * W2
                                + 4 * O2H * CH + 4 * W * W2 + O2H)),
    )(x2, L, S, b_rows)

    # The 2x2 interleave already happened inside the kernel: this reshape is
    # metadata-only (no extra HBM pass).
    return out.reshape(N, O, 2 * H, 2 * W)


def conv_transpose_2d_reference(x, weight, bias, negative_slope=0.01):
    """Pure-JAX reference mirroring the PyTorch forward (k=2, s=2, p=0 + LeakyReLU)."""
    N, C, H, W = x.shape
    _, O, KH, KW = weight.shape
    y = jnp.einsum("nchw,cokl->nohkwl", x, weight,
                   precision=lax.Precision.HIGHEST)        # (N, O, H, kh, W, kw)
    y = y + bias[None, :, None, None, None, None]
    y = y.reshape(N, O, KH * H, KW * W)
    return jnp.where(y >= 0.0, y, negative_slope * y)


if __name__ == "__main__":
    # Module config: ConvTranspose2D(in_channels=4, out_channels=4, activation='lrelu')
    N, Cin, Cout, H, W = 2, 4, 4, 16, 16

    key = jax.random.PRNGKey(0)
    kx, kw, kb = jax.random.split(key, 3)

    x = jax.random.normal(kx, (N, Cin, H, W), dtype=jnp.float32)
    weight = 0.3 * jax.random.normal(kw, (Cin, Cout, 2, 2), dtype=jnp.float32)
    bias = 0.1 * jax.random.normal(kb, (Cout,), dtype=jnp.float32)

    out = conv_transpose_2d(x, weight, bias, activation="lrelu")
    out = jax.block_until_ready(out)

    ref = conv_transpose_2d_reference(x, weight, bias, negative_slope=0.01)
    assert out.shape == (N, Cout, 2 * H, 2 * W)
    assert jnp.allclose(out, ref, atol=1e-3, rtol=1e-3), "mismatch vs reference"

    print("KERNEL_OK")
</pallas_src>

<mosaic_0001>
module attributes {stable_mosaic.version = 11 : i64} {
  func.func @_deconv2x2_fused_kernel(%arg0: i32, %arg1: memref<1x64x16xf32, #tpu.memory_space<vmem>>, %arg2: memref<4x128x64xf32, #tpu.memory_space<vmem>>, %arg3: memref<4x16x32xf32, #tpu.memory_space<vmem>>, %arg4: memref<128x1xf32, #tpu.memory_space<vmem>>, %arg5: memref<1x128x32xf32, #tpu.memory_space<vmem>>) attributes {dimension_semantics = [#tpu.dimension_semantics<parallel>], iteration_bounds = array<i64: 2>, scalar_prefetch = 0 : i64, scratch_operands = 0 : i64, tpu.core_type = #tpu.core_type<tc>, window_params = [{transform_indices = @transform_0, window_bounds = array<i64: 1, 64, 16>}, {pipeline_mode = #tpu.pipeline_mode<synchronous>, transform_indices = @transform_1, window_bounds = array<i64: 4, 128, 64>}, {pipeline_mode = #tpu.pipeline_mode<synchronous>, transform_indices = @transform_2, window_bounds = array<i64: 4, 16, 32>}, {pipeline_mode = #tpu.pipeline_mode<synchronous>, transform_indices = @transform_3, window_bounds = array<i64: 128, 1>}, {transform_indices = @transform_4, window_bounds = array<i64: 1, 128, 32>}]} {
    %c0 = arith.constant 0 : index
    %c0_0 = arith.constant 0 : index
    %0 = vector.load %arg4[%c0, %c0_0] : memref<128x1xf32, #tpu.memory_space<vmem>>, vector<128x1xf32>
    %c0_i32 = arith.constant 0 : i32
    %1 = arith.index_cast %c0_i32 : i32 to index
    %c0_1 = arith.constant 0 : index
    %c0_2 = arith.constant 0 : index
    %2 = vector.load %arg1[%1, %c0_1, %c0_2] : memref<1x64x16xf32, #tpu.memory_space<vmem>>, vector<1x64x16xf32>
    %3 = vector.shape_cast %2 : vector<1x64x16xf32> to vector<64x16xf32>
    %c0_3 = arith.constant 0 : index
    %c0_4 = arith.constant 0 : index
    %c0_5 = arith.constant 0 : index
    %4 = vector.load %arg2[%c0_3, %c0_4, %c0_5] : memref<4x128x64xf32, #tpu.memory_space<vmem>>, vector<1x128x64xf32>
    %5 = vector.shape_cast %4 : vector<1x128x64xf32> to vector<128x64xf32>
    %cst = arith.constant dense<0.000000e+00> : vector<128x16xf32>
    %6 = tpu.matmul %5, %3, %cst {dimension_numbers = #tpu.dot_dimension_numbers<[1], [0], [0], [1], [0, 0, 1, 1], [], []>, precision = #tpu.contract_precision<fp32>} : vector<128x64xf32>, vector<64x16xf32>, vector<128x16xf32> -> vector<128x16xf32>
    %c0_6 = arith.constant 0 : index
    %c0_7 = arith.constant 0 : index
    %c0_8 = arith.constant 0 : index
    %7 = vector.load %arg3[%c0_6, %c0_7, %c0_8] : memref<4x16x32xf32, #tpu.memory_space<vmem>>, vector<1x16x32xf32>
    %8 = vector.shape_cast %7 : vector<1x16x32xf32> to vector<16x32xf32>
    %cst_9 = arith.constant dense<0.000000e+00> : vector<128x32xf32>
    %9 = tpu.matmul %6, %8, %cst_9 {dimension_numbers = #tpu.dot_dimension_numbers<[1], [0], [0], [1], [0, 0, 1, 1], [], []>, precision = #tpu.contract_precision<fp32>} : vector<128x16xf32>, vector<16x32xf32>, vector<128x32xf32> -> vector<128x32xf32>
    %10 = vector.broadcast %0 : vector<128x1xf32> to vector<128x32xf32>
    %11 = arith.addf %10, %9 : vector<128x32xf32>
    %c1 = arith.constant 1 : index
    %c0_10 = arith.constant 0 : index
    %c0_11 = arith.constant 0 : index
    %12 = vector.load %arg2[%c1, %c0_10, %c0_11] : memref<4x128x64xf32, #tpu.memory_space<vmem>>, vector<1x128x64xf32>
    %13 = vector.shape_cast %12 : vector<1x128x64xf32> to vector<128x64xf32>
    %cst_12 = arith.constant dense<0.000000e+00> : vector<128x16xf32>
    %14 = tpu.matmul %13, %3, %cst_12 {dimension_numbers = #tpu.dot_dimension_numbers<[1], [0], [0], [1], [0, 0, 1, 1], [], []>, precision = #tpu.contract_precision<fp32>} : vector<128x64xf32>, vector<64x16xf32>, vector<128x16xf32> -> vector<128x16xf32>
    %c1_13 = arith.constant 1 : index
    %c0_14 = arith.constant 0 : index
    %c0_15 = arith.constant 0 : index
    %15 = vector.load %arg3[%c1_13, %c0_14, %c0_15] : memref<4x16x32xf32, #tpu.memory_space<vmem>>, vector<1x16x32xf32>
    %16 = vector.shape_cast %15 : vector<1x16x32xf32> to vector<16x32xf32>
    %cst_16 = arith.constant dense<0.000000e+00> : vector<128x32xf32>
    %17 = tpu.matmul %14, %16, %cst_16 {dimension_numbers = #tpu.dot_dimension_numbers<[1], [0], [0], [1], [0, 0, 1, 1], [], []>, precision = #tpu.contract_precision<fp32>} : vector<128x16xf32>, vector<16x32xf32>, vector<128x32xf32> -> vector<128x32xf32>
    %18 = arith.addf %11, %17 : vector<128x32xf32>
    %c2 = arith.constant 2 : index
    %c0_17 = arith.constant 0 : index
    %c0_18 = arith.constant 0 : index
    %19 = vector.load %arg2[%c2, %c0_17, %c0_18] : memref<4x128x64xf32, #tpu.memory_space<vmem>>, vector<1x128x64xf32>
    %20 = vector.shape_cast %19 : vector<1x128x64xf32> to vector<128x64xf32>
    %cst_19 = arith.constant dense<0.000000e+00> : vector<128x16xf32>
    %21 = tpu.matmul %20, %3, %cst_19 {dimension_numbers = #tpu.dot_dimension_numbers<[1], [0], [0], [1], [0, 0, 1, 1], [], []>, precision = #tpu.contract_precision<fp32>} : vector<128x64xf32>, vector<64x16xf32>, vector<128x16xf32> -> vector<128x16xf32>
    %c2_20 = arith.constant 2 : index
    %c0_21 = arith.constant 0 : index
    %c0_22 = arith.constant 0 : index
    %22 = vector.load %arg3[%c2_20, %c0_21, %c0_22] : memref<4x16x32xf32, #tpu.memory_space<vmem>>, vector<1x16x32xf32>
    %23 = vector.shape_cast %22 : vector<1x16x32xf32> to vector<16x32xf32>
    %cst_23 = arith.constant dense<0.000000e+00> : vector<128x32xf32>
    %24 = tpu.matmul %21, %23, %cst_23 {dimension_numbers = #tpu.dot_dimension_numbers<[1], [0], [0], [1], [0, 0, 1, 1], [], []>, precision = #tpu.contract_precision<fp32>} : vector<128x16xf32>, vector<16x32xf32>, vector<128x32xf32> -> vector<128x32xf32>
    %25 = arith.addf %18, %24 : vector<128x32xf32>
    %c3 = arith.constant 3 : index
    %c0_24 = arith.constant 0 : index
    %c0_25 = arith.constant 0 : index
    %26 = vector.load %arg2[%c3, %c0_24, %c0_25] : memref<4x128x64xf32, #tpu.memory_space<vmem>>, vector<1x128x64xf32>
    %27 = vector.shape_cast %26 : vector<1x128x64xf32> to vector<128x64xf32>
    %cst_26 = arith.constant dense<0.000000e+00> : vector<128x16xf32>
    %28 = tpu.matmul %27, %3, %cst_26 {dimension_numbers = #tpu.dot_dimension_numbers<[1], [0], [0], [1], [0, 0, 1, 1], [], []>, precision = #tpu.contract_precision<fp32>} : vector<128x64xf32>, vector<64x16xf32>, vector<128x16xf32> -> vector<128x16xf32>
    %c3_27 = arith.constant 3 : index
    %c0_28 = arith.constant 0 : index
    %c0_29 = arith.constant 0 : index
    %29 = vector.load %arg3[%c3_27, %c0_28, %c0_29] : memref<4x16x32xf32, #tpu.memory_space<vmem>>, vector<1x16x32xf32>
    %30 = vector.shape_cast %29 : vector<1x16x32xf32> to vector<16x32xf32>
    %cst_30 = arith.constant dense<0.000000e+00> : vector<128x32xf32>
    %31 = tpu.matmul %28, %30, %cst_30 {dimension_numbers = #tpu.dot_dimension_numbers<[1], [0], [0], [1], [0, 0, 1, 1], [], []>, precision = #tpu.contract_precision<fp32>} : vector<128x16xf32>, vector<16x32xf32>, vector<128x32xf32> -> vector<128x32xf32>
    %32 = arith.addf %25, %31 : vector<128x32xf32>
    %cst_31 = arith.constant 0.000000e+00 : f32
    %33 = vector.broadcast %cst_31 : f32 to vector<128x32xf32>
    %34 = arith.cmpf oge, %32, %33 : vector<128x32xf32>
    %cst_32 = arith.constant 0.00999999977 : f32
    %35 = vector.broadcast %cst_32 : f32 to vector<128x32xf32>
    %36 = arith.mulf %35, %32 : vector<128x32xf32>
    %37 = arith.select %34, %32, %36 : vector<128x32xi1>, vector<128x32xf32>
    %38 = arith.index_cast %c0_i32 : i32 to index
    %c0_33 = arith.constant 0 : index
    %c0_34 = arith.constant 0 : index
    %39 = vector.load %arg5[%38, %c0_33, %c0_34] : memref<1x128x32xf32, #tpu.memory_space<vmem>>, vector<1x128x32xf32>
    %40 = vector.shape_cast %39 : vector<1x128x32xf32> to vector<128x32xf32>
    %41 = vector.shape_cast %37 : vector<128x32xf32> to vector<1x128x32xf32>
    tpu.vector_store %arg5[%38, %c0_33, %c0_34], %41 {strides = array<i32>} : memref<1x128x32xf32, #tpu.memory_space<vmem>>, vector<1x128x32xf32>,
    %c1_i32 = arith.constant 1 : i32
    return
  }
  func.func @transform_0(%arg0: i32) -> (i32, i32, i32) {
    %c0_i32 = arith.constant 0 : i32
    %c0_i32_0 = arith.constant 0 : i32
    %c0_i32_1 = arith.constant 0 : i32
    return %arg0, %c0_i32, %c0_i32_0 : i32, i32, i32
  }
  func.func @transform_1(%arg0: i32) -> (i32, i32, i32) {
    %c0_i32 = arith.constant 0 : i32
    %c0_i32_0 = arith.constant 0 : i32
    %c0_i32_1 = arith.constant 0 : i32
    %c0_i32_2 = arith.constant 0 : i32
    return %c0_i32, %c0_i32_0, %c0_i32_1 : i32, i32, i32
  }
  func.func @transform_2(%arg0: i32) -> (i32, i32, i32) {
    %c0_i32 = arith.constant 0 : i32
    %c0_i32_0 = arith.constant 0 : i32
    %c0_i32_1 = arith.constant 0 : i32
    %c0_i32_2 = arith.constant 0 : i32
    return %c0_i32, %c0_i32_0, %c0_i32_1 : i32, i32, i32
  }
  func.func @transform_3(%arg0: i32) -> (i32, i32) {
    %c0_i32 = arith.constant 0 : i32
    %c0_i32_0 = arith.constant 0 : i32
    %c0_i32_1 = arith.constant 0 : i32
    return %c0_i32, %c0_i32_0 : i32, i32
  }
  func.func @transform_4(%arg0: i32) -> (i32, i32, i32) {
    %c0_i32 = arith.constant 0 : i32
    %c0_i32_0 = arith.constant 0 : i32
    %c0_i32_1 = arith.constant 0 : i32
    return %arg0, %c0_i32, %c0_i32_0 : i32, i32, i32
  }
}

</mosaic_0001>

<llo_original>
// kernel: tpu_custom_call.1
$region0: #{tpu_custom_call.1}
  #allocation0 [shape = 'u32[]', space=smem, size = 0x4, offset = 0x4, fixed_abs, tag = 'smem constant byte address 0x4 - core index']
  #allocation1 [shape = 'u32[144,128]{1,0:T(1,128)}', space=vmem, size = 0x12000, scoped, tag = 'internal scratch']
  %s0 = inlined_call_operand.vmem [shape: f32[2,64,16], index: 0, kind: input, shape index: {}]
  %s1 = inlined_call_operand.vmem [shape: f32[4,128,64], index: 1, kind: input, shape index: {}]
  %s2 = inlined_call_operand.vmem [shape: f32[4,16,32], index: 2, kind: input, shape index: {}]
  %s3 = inlined_call_operand.vmem [shape: f32[128,1], index: 3, kind: input, shape index: {}]
  %s4 = inlined_call_operand.vmem [shape: f32[2,128,32], index: 4, kind: output, shape index: {}]
  %s5 = sld [smem:[#allocation0]]
  $region49: #{tpu_custom_call.1} parent=0
    _
  %s7 = ssub.s32 1, %s5
  %s8 = scalar_select 0, %s7, %s5
  loop: start=0, step=1, limit=4
  $region2: #{tpu_custom_call.1} parent=0 // loop_pre_header
    _
  $region3: #{tpu_custom_call.1} parent=0 // loop_header
    %s10 = sphi 0, %s14
    %p11 = scmp.ge.s32.totalorder %s10, 4
    %s20 = sphi 0, %s22
    %s23 = sphi 0, %s20
    %s24 = sphi 0, %s23
    %s40 = sphi 0, %s24
    %s44 = sphi 0, %s44
    %s46 = sphi 0, %s44
    %s47 = sphi 0, %s46
    %s61 = sphi 0, %s47
    %s65 = sphi 0, %s65
    %s67 = sphi 0, %s65
    %s68 = sphi 0, %s67
    %s82 = sphi 0, %s68
    %s86 = sphi 0, %s86
    %s88 = sphi 0, %s86
    %s89 = sphi 0, %s88
    %s103 = sphi 0, %s89
    %s109 = sphi 0, %s111
    %s112 = sphi 0, %s109
    %s113 = sphi 0, %s112
    %s129 = sphi 0, %s113
  $region4: #{tpu_custom_call.1} parent=0 // loop_header_branch
    %13 = sbr.rel (%p11) target = $region8
  $region5: #{tpu_custom_call.1} parent=0 // loop_body
    %s15 = ssub.s32 %s10, 1
    %s16 = ssub.s32 %s10, 2
    %s17 = sadd.s32 %s10, 1
    %s18 = ssub.s32 %s10, %s17
    %p19 = scmp.eq.s32.totalorder %s18, 0
    %s21 = sadd.s32 %s20, 1
    %s22 = scalar_select %p19, %s20, %s21
    %p25 = pneg %p19
    %p26 = scmp.eq.s32.totalorder %s10, 1
    %p27 = por %p25, %p26
    %p28 = scmp.ne.s32.totalorder %s20, %s23
    %p29 = scmp.eq.s32.totalorder %s10, 0
    %p30 = por %p28, %p29
    %p31 = scmp.ne.s32.totalorder %s20, %s23
    %p32 = scmp.eq.s32.totalorder %s15, 1
    %p33 = por %p31, %p32
    %p34 = scmp.ne.s32.totalorder %s23, %s24
    %p35 = scmp.eq.s32.totalorder %s15, 0
    %p36 = por %p34, %p35
    %p37 = scmp.ne.s32.totalorder %s23, %s24
    %p38 = scmp.eq.s32.totalorder %s16, 1
    %p39 = por %p37, %p38
    %p41 = scmp.ne.s32.totalorder %s24, %s40
    %p42 = scmp.eq.s32.totalorder %s16, 0
    %p43 = por %p41, %p42
    %s45 = sadd.s32 %s44, 1
    %p48 = scmp.eq.s32.totalorder %s10, 1
    %p49 = scmp.ne.s32.totalorder %s44, %s46
    %p50 = scmp.eq.s32.totalorder %s10, 0
    %p51 = por %p49, %p50
    %p52 = scmp.ne.s32.totalorder %s44, %s46
    %p53 = scmp.eq.s32.totalorder %s15, 1
    %p54 = por %p52, %p53
    %p55 = scmp.ne.s32.totalorder %s46, %s47
    %p56 = scmp.eq.s32.totalorder %s15, 0
    %p57 = por %p55, %p56
    %p58 = scmp.ne.s32.totalorder %s46, %s47
    %p59 = scmp.eq.s32.totalorder %s16, 1
    %p60 = por %p58, %p59
    %p62 = scmp.ne.s32.totalorder %s47, %s61
    %p63 = scmp.eq.s32.totalorder %s16, 0
    %p64 = por %p62, %p63
    %s66 = sadd.s32 %s65, 1
    %p69 = scmp.eq.s32.totalorder %s10, 1
    %p70 = scmp.ne.s32.totalorder %s65, %s67
    %p71 = scmp.eq.s32.totalorder %s10, 0
    %p72 = por %p70, %p71
    %p73 = scmp.ne.s32.totalorder %s65, %s67
    %p74 = scmp.eq.s32.totalorder %s15, 1
    %p75 = por %p73, %p74
    %p76 = scmp.ne.s32.totalorder %s67, %s68
    %p77 = scmp.eq.s32.totalorder %s15, 0
    %p78 = por %p76, %p77
    %p79 = scmp.ne.s32.totalorder %s67, %s68
    %p80 = scmp.eq.s32.totalorder %s16, 1
    %p81 = por %p79, %p80
    %p83 = scmp.ne.s32.totalorder %s68, %s82
    %p84 = scmp.eq.s32.totalorder %s16, 0
    %p85 = por %p83, %p84
    %s87 = sadd.s32 %s86, 1
    %p90 = scmp.eq.s32.totalorder %s10, 1
    %p91 = scmp.ne.s32.totalorder %s86, %s88
    %p92 = scmp.eq.s32.totalorder %s10, 0
    %p93 = por %p91, %p92
    %p94 = scmp.ne.s32.totalorder %s86, %s88
    %p95 = scmp.eq.s32.totalorder %s15, 1
    %p96 = por %p94, %p95
    %p97 = scmp.ne.s32.totalorder %s88, %s89
    %p98 = scmp.eq.s32.totalorder %s15, 0
    %p99 = por %p97, %p98
    %p100 = scmp.ne.s32.totalorder %s88, %s89
    %p101 = scmp.eq.s32.totalorder %s16, 1
    %p102 = por %p100, %p101
    %p104 = scmp.ne.s32.totalorder %s89, %s103
    %p105 = scmp.eq.s32.totalorder %s16, 0
    %p106 = por %p104, %p105
    %s107 = ssub.s32 %s10, %s17
    %p108 = scmp.eq.s32.totalorder %s107, 0
    %s110 = sadd.s32 %s109, 1
    %s111 = scalar_select %p108, %s109, %s110
    %p114 = pneg %p108
    %p115 = scmp.eq.s32.totalorder %s10, 1
    %p116 = por %p114, %p115
    %p117 = scmp.ne.s32.totalorder %s109, %s112
    %p118 = scmp.eq.s32.totalorder %s10, 0
    %p119 = por %p117, %p118
    %p120 = scmp.ne.s32.totalorder %s109, %s112
    %p121 = scmp.eq.s32.totalorder %s15, 1
    %p122 = por %p120, %p121
    %p123 = scmp.ne.s32.totalorder %s112, %s113
    %p124 = scmp.eq.s32.totalorder %s15, 0
    %p125 = por %p123, %p124
    %p126 = scmp.ne.s32.totalorder %s112, %s113
    %p127 = scmp.eq.s32.totalorder %s16, 1
    %p128 = por %p126, %p127
    %p130 = scmp.ne.s32.totalorder %s113, %s129
    %p131 = scmp.eq.s32.totalorder %s16, 0
    %p132 = por %p130, %p131
    %p133 = scmp.le.s32.totalorder 1, %s10
    %p134 = scmp.lt.s32.totalorder %s10, 3
    %p135 = pnand %p133, %p134
    %p136 = pneg %p135
    // Predicated region
    $region9: #{tpu_custom_call.1} parent=5 // pred_check
      _
    $region10: #{tpu_custom_call.1} parent=5 // pred_check_branch
      %138 = sbr.rel (%p135) target = $region12
    $region11: #{tpu_custom_call.1} parent=5 // pred_region
      %s139 = ssub.s32 %s10, 1
      // Predicated region
      $region13: #{tpu_custom_call.1} parent=11 // pred_check
        %p140 = pneg %p57
      $region14: #{tpu_custom_call.1} parent=11 // pred_check_branch
        %142 = sbr.rel (%p140) target = $region16
      $region15: #{tpu_custom_call.1} parent=11 // pred_region
        _
      $region16: #{tpu_custom_call.1} parent=11 // pred_fallthru
        _
      // Predicated region
      $region17: #{tpu_custom_call.1} parent=11 // pred_check
        %p143 = pneg %p78
      $region18: #{tpu_custom_call.1} parent=11 // pred_check_branch
        %145 = sbr.rel (%p143) target = $region20
      $region19: #{tpu_custom_call.1} parent=11 // pred_region
        _
      $region20: #{tpu_custom_call.1} parent=11 // pred_fallthru
        _
      // Predicated region
      $region21: #{tpu_custom_call.1} parent=11 // pred_check
        %p146 = pneg %p99
      $region22: #{tpu_custom_call.1} parent=11 // pred_check_branch
        %148 = sbr.rel (%p146) target = $region24
      $region23: #{tpu_custom_call.1} parent=11 // pred_region
        _
      $region24: #{tpu_custom_call.1} parent=11 // pred_fallthru
        _
    $region12: #{tpu_custom_call.1} parent=5 // pred_fallthru
      _
    %p149 = scmp.lt.s32.totalorder %s10, 2
    // Predicated region
    $region25: #{tpu_custom_call.1} parent=5 // pred_check
      %p150 = pneg %p149
    $region26: #{tpu_custom_call.1} parent=5 // pred_check_branch
      %152 = sbr.rel (%p150) target = $region28
    $region27: #{tpu_custom_call.1} parent=5 // pred_region
      // Predicated region
      $region29: #{tpu_custom_call.1} parent=27 // pred_check
        %p153 = pneg %p30
      $region30: #{tpu_custom_call.1} parent=27 // pred_check_branch
        %155 = sbr.rel (%p153) target = $region32
      $region31: #{tpu_custom_call.1} parent=27 // pred_region
        %p156 = scmp.lt.s32.totalorder %s10, 1
        %s157 = scalar_select %p156, %s10, 1
        %s158 = smul.addr %s157, 8
        %s159 = smul.addr %s158, 8
        %s160 = scalar_lea.vmem %s0, %s159
      $region32: #{tpu_custom_call.1} parent=27 // pred_fallthru
        _
    $region28: #{tpu_custom_call.1} parent=5 // pred_fallthru
      _
    %p161 = scmp.le.s32.totalorder 1, %s10
    %p162 = scmp.lt.s32.totalorder %s10, 3
    %p163 = pnand %p161, %p162
    %p164 = pneg %p163
    // Predicated region
    $region33: #{tpu_custom_call.1} parent=5 // pred_check
      _
    $region34: #{tpu_custom_call.1} parent=5 // pred_check_branch
      %166 = sbr.rel (%p163) target = $region36
    $region35: #{tpu_custom_call.1} parent=5 // pred_region
      %s167 = ssub.s32 %s10, 1
      %p168 = scmp.lt.s32.totalorder %s15, 1
      %s169 = scalar_select %p168, %s15, 1
      %s170 = smul.addr %s169, 8
      %s171 = smul.addr %s170, 8
      %s172 = scalar_lea.vmem %s0, %s171
      %p173 = pneg %p36
      %p174 = pneg %p33
      %p175 = pneg %p57
      %p176 = pneg %p54
      %p177 = pneg %p78
      %p178 = pneg %p75
      %p179 = pneg %p99
      %p180 = pneg %p96
      %p181 = pneg %p125
      %p182 = pneg %p122
      %p183 = scmp.lt.s32.totalorder %s15, 1
      %s184 = scalar_select %p183, %s15, 1
      %s185 = smul.addr %s184, 16
      %s186 = smul.addr %s185, 8
      %s187 = scalar_lea.vmem %s4, %s186
      %p188 = scmp.lt.s32.totalorder %s15, 1
      %s189 = scalar_select %p188, %s15, 1
      %s190 = smul.addr %s189, 8
      %s191 = smul.addr %s190, 8
      %s192 = scalar_lea.vmem %s0, %s191
      %p193 = scmp.lt.s32.totalorder %s15, 1
      %s194 = scalar_select %p193, %s15, 1
      %s195 = smul.addr %s194, 16
      %s196 = smul.addr %s195, 8
      %s197 = scalar_lea.vmem %s4, %s196
      %v198 = vld [vmem:[%s3] sm:$0xff]
      %v199 = vld [vmem:[%s3 + $0x8] sm:$0xff]
      %v200 = vld [vmem:[%s3 + $0x10] sm:$0xff]
      %v201 = vld [vmem:[%s3 + $0x18] sm:$0xff]
      %v202 = vld [vmem:[%s3 + $0x20] sm:$0xff]
      %v203 = vld [vmem:[%s3 + $0x28] sm:$0xff]
      %v204 = vld [vmem:[%s3 + $0x30] sm:$0xff]
      %v205 = vld [vmem:[%s3 + $0x38] sm:$0xff]
      %v206 = vld [vmem:[%s3 + $0x40] sm:$0xff]
      %v207 = vld [vmem:[%s3 + $0x48] sm:$0xff]
      %v208 = vld [vmem:[%s3 + $0x50] sm:$0xff]
      %v209 = vld [vmem:[%s3 + $0x58] sm:$0xff]
      %v210 = vld [vmem:[%s3 + $0x60] sm:$0xff]
      %v211 = vld [vmem:[%s3 + $0x68] sm:$0xff]
      %v212 = vld [vmem:[%s3 + $0x70] sm:$0xff]
      %v213 = vld [vmem:[%s3 + $0x78] sm:$0xff]
      %v214 = vld [vmem:[%s192] sm:$0xff]
      %v215 = vld [vmem:[%s192 + $0x8] sm:$0xff]
      %v216 = vld [vmem:[%s192 + $0x10] sm:$0xff]
      %v217 = vld [vmem:[%s192 + $0x18] sm:$0xff]
      %v218 = vld [vmem:[%s192 + $0x20] sm:$0xff]
      %v219 = vld [vmem:[%s192 + $0x28] sm:$0xff]
      %v220 = vld [vmem:[%s192 + $0x30] sm:$0xff]
      %v221 = vld [vmem:[%s192 + $0x38] sm:$0xff]
      %v222 = vld [vmem:[%s1] sm:$0xff]
      %v223 = vld [vmem:[%s1 + $0x8] sm:$0xff]
      %v224 = vld [vmem:[%s1 + $0x10] sm:$0xff]
      %v225 = vld [vmem:[%s1 + $0x18] sm:$0xff]
      %v226 = vld [vmem:[%s1 + $0x20] sm:$0xff]
      %v227 = vld [vmem:[%s1 + $0x28] sm:$0xff]
      %v228 = vld [vmem:[%s1 + $0x30] sm:$0xff]
      %v229 = vld [vmem:[%s1 + $0x38] sm:$0xff]
      %v230 = vld [vmem:[%s1 + $0x40] sm:$0xff]
      %v231 = vld [vmem:[%s1 + $0x48] sm:$0xff]
      %v232 = vld [vmem:[%s1 + $0x50] sm:$0xff]
      %v233 = vld [vmem:[%s1 + $0x58] sm:$0xff]
      %v234 = vld [vmem:[%s1 + $0x60] sm:$0xff]
      %v235 = vld [vmem:[%s1 + $0x68] sm:$0xff]
      %v236 = vld [vmem:[%s1 + $0x70] sm:$0xff]
      %v237 = vld [vmem:[%s1 + $0x78] sm:$0xff]
      %vm238 = vcmask 523264
      %v240 = vsel %vm238, %v222, 0
      %v243 = vsel %vm238, %v223, 0
      %v246 = vsel %vm238, %v224, 0
      %v249 = vsel %vm238, %v225, 0
      %v252 = vsel %vm238, %v226, 0
      %v255 = vsel %vm238, %v227, 0
      %v258 = vsel %vm238, %v228, 0
      %v261 = vsel %vm238, %v229, 0
      %v264 = vsel %vm238, %v230, 0
      %v267 = vsel %vm238, %v231, 0
      %v270 = vsel %vm238, %v232, 0
      %v273 = vsel %vm238, %v233, 0
      %v276 = vsel %vm238, %v234, 0
      %v279 = vsel %vm238, %v235, 0
      %v282 = vsel %vm238, %v236, 0
      %v285 = vsel %vm238, %v237, 0
      %287 = vmatprep.subr.mxu0 0.0
      %v288 = vand.u32 %v214, 4294901760
      %289 = vmatpush1.msra.mxu0 %v288
      %290 = vmatprep.subr.mxu0 0.0
      %v291 = vand.u32 %v215, 4294901760
      %292 = vmatpush1.msra.mxu0 %v291
      %293 = vmatprep.subr.mxu0 0.0
      %v294 = vand.u32 %v216, 4294901760
      %295 = vmatpush1.msra.mxu0 %v294
      %296 = vmatprep.subr.mxu0 0.0
      %v297 = vand.u32 %v217, 4294901760
      %298 = vmatpush1.msra.mxu0 %v297
      %299 = vmatprep.subr.mxu0 0.0
      %v300 = vand.u32 %v218, 4294901760
      %301 = vmatpush1.msra.mxu0 %v300
      %302 = vmatprep.subr.mxu0 0.0
      %v303 = vand.u32 %v219, 4294901760
      %304 = vmatpush1.msra.mxu0 %v303
      %305 = vmatprep.subr.mxu0 0.0
      %v306 = vand.u32 %v220, 4294901760
      %307 = vmatpush1.msra.mxu0 %v306
      %308 = vmatprep.subr.mxu0 0.0
      %v309 = vand.u32 %v221, 4294901760
      %310 = vmatpush1.msra.mxu0 %v309
      %311 = vmatprep.subr.mxu0 0.0
      %312 = vmatpush1.msra.mxu0 0.0
      %313 = vmatprep.subr.mxu0 0.0
      %314 = vmatpush1.msra.mxu0 0.0
      %315 = vmatprep.subr.mxu0 0.0
      %316 = vmatpush1.msra.mxu0 0.0
      %317 = vmatprep.subr.mxu0 0.0
      %318 = vmatpush1.msra.mxu0 0.0
      %319 = vmatprep.subr.mxu0 0.0
      %320 = vmatpush1.msra.mxu0 0.0
      %321 = vmatprep.subr.mxu0 0.0
      %322 = vmatpush1.msra.mxu0 0.0
      %323 = vmatprep.subr.mxu0 0.0
      %324 = vmatpush1.msra.mxu0 0.0
      %325 = vmatprep.subr.mxu0 0.0
      %326 = vmatpush1.msra.mxu0 0.0
      %327 = vmatprep.subr.mxu0 0.0
      %328 = vmatpush1.msra.mxu0 0.0
      %329 = vmatprep.subr.mxu0 0.0
      %330 = vmatpush1.msra.mxu0 0.0
      %331 = vmatprep.subr.mxu0 0.0
      %332 = vmatpush1.msra.mxu0 0.0
      %333 = vmatprep.subr.mxu0 0.0
      %334 = vmatpush1.msra.mxu0 0.0
      %335 = vmatprep.subr.mxu0 0.0
      %336 = vmatpush1.msra.mxu0 0.0
      %337 = vmatprep.subr.mxu0 0.0
      %338 = vmatpush1.msra.mxu0 0.0
      %339 = vmatprep.subr.mxu0 0.0
      %340 = vmatpush1.msra.mxu0 0.0
      %341 = vmatprep.subr.mxu0 0.0
      %342 = vmatpush1.msra.mxu0 0.0
      %343 = vmatprep.subr.mxu0 0.0
      %344 = vmatpush1.msra.mxu0 0.0
      %345 = vmatprep.subr.mxu0 0.0
      %346 = vmatpush1.msra.mxu0 0.0
      %347 = vmatprep.subr.mxu0 0.0
      %348 = vmatpush1.msra.mxu0 0.0
      %349 = vmatprep.subr.mxu0 0.0
      %350 = vmatpush1.msra.mxu0 0.0
      %351 = vmatprep.subr.mxu0 0.0
      %352 = vmatpush1.msra.mxu0 0.0
      %353 = vmatprep.subr.mxu0 0.0
      %354 = vmatpush1.msra.mxu0 0.0
      %355 = vmatprep.subr.mxu0 0.0
      %356 = vmatpush1.msra.mxu0 0.0
      %357 = vmatprep.subr.mxu0 0.0
      %358 = vmatpush1.msra.mxu0 0.0
      %359 = vmatprep.mubr.f32.mxu0 0.0
      %v360 = vand.u32 %v240, 4294901760
      %v361 = vsub.f32 %v240, %v360
      %v362 = vand.u32 %v361, 4294901760
      %v363 = vsub.f32 %v361, %v362
      %v364 = vand.u32 %v363, 4294901760
      %365 = vmatmul.mubr.f32.gmra.mrb[0].mxu0 %v364
      %v366 = vpop.f32.mrb[0].mxu0
      %v367 = vadd.f32 0.0, %v366
      %v368 = vpop.f32.mrb[0].mxu0
      %369 = vmatprep.mubr.f32.mxu0 0.0
      %v370 = vand.u32 %v243, 4294901760
      %v371 = vsub.f32 %v243, %v370
      %v372 = vand.u32 %v371, 4294901760
      %v373 = vsub.f32 %v371, %v372
      %v374 = vand.u32 %v373, 4294901760
      %375 = vmatmul.mubr.f32.gmra.mrb[0].mxu0 %v374
      %v376 = vpop.f32.mrb[0].mxu0
      %v377 = vadd.f32 0.0, %v376
      %v378 = vpop.f32.mrb[0].mxu0
      %379 = vmatprep.mubr.f32.mxu0 0.0
      %v380 = vand.u32 %v246, 4294901760
      %v381 = vsub.f32 %v246, %v380
      %v382 = vand.u32 %v381, 4294901760
      %v383 = vsub.f32 %v381, %v382
      %v384 = vand.u32 %v383, 4294901760
      %385 = vmatmul.mubr.f32.gmra.mrb[0].mxu0 %v384
      %v386 = vpop.f32.mrb[0].mxu0
      %v387 = vadd.f32 0.0, %v386
      %v388 = vpop.f32.mrb[0].mxu0
      %389 = vmatprep.mubr.f32.mxu0 0.0
      %v390 = vand.u32 %v249, 4294901760
      %v391 = vsub.f32 %v249, %v390
      %v392 = vand.u32 %v391, 4294901760
      %v393 = vsub.f32 %v391, %v392
      %v394 = vand.u32 %v393, 4294901760
      %395 = vmatmul.mubr.f32.gmra.mrb[0].mxu0 %v394
      %v396 = vpop.f32.mrb[0].mxu0
      %v397 = vadd.f32 0.0, %v396
      %v398 = vpop.f32.mrb[0].mxu0
      %399 = vmatprep.mubr.f32.mxu0 0.0
      %v400 = vand.u32 %v252, 4294901760
      %v401 = vsub.f32 %v252, %v400
      %v402 = vand.u32 %v401, 4294901760
      %v403 = vsub.f32 %v401, %v402
      %v404 = vand.u32 %v403, 4294901760
      %405 = vmatmul.mubr.f32.gmra.mrb[0].mxu0 %v404
      %v406 = vpop.f32.mrb[0].mxu0
      %v407 = vadd.f32 0.0, %v406
      %v408 = vpop.f32.mrb[0].mxu0
      %409 = vmatprep.mubr.f32.mxu0 0.0
      %v410 = vand.u32 %v255, 4294901760
      %v411 = vsub.f32 %v255, %v410
      %v412 = vand.u32 %v411, 4294901760
      %v413 = vsub.f32 %v411, %v412
      %v414 = vand.u32 %v413, 4294901760
      %415 = vmatmul.mubr.f32.gmra.mrb[0].mxu0 %v414
      %v416 = vpop.f32.mrb[0].mxu0
      %v417 = vadd.f32 0.0, %v416
      %v418 = vpop.f32.mrb[0].mxu0
      %419 = vmatprep.mubr.f32.mxu0 0.0
      %v420 = vand.u32 %v258, 4294901760
      %v421 = vsub.f32 %v258, %v420
      %v422 = vand.u32 %v421, 4294901760
      %v423 = vsub.f32 %v421, %v422
      %v424 = vand.u32 %v423, 4294901760
      %425 = vmatmul.mubr.f32.gmra.mrb[0].mxu0 %v424
      %v426 = vpop.f32.mrb[0].mxu0
      %v427 = vadd.f32 0.0, %v426
      %v428 = vpop.f32.mrb[0].mxu0
      %429 = vmatprep.mubr.f32.mxu0 0.0
      %v430 = vand.u32 %v261, 4294901760
      %v431 = vsub.f32 %v261, %v430
      %v432 = vand.u32 %v431, 4294901760
      %v433 = vsub.f32 %v431, %v432
      %v434 = vand.u32 %v433, 4294901760
      %435 = vmatmul.mubr.f32.gmra.mrb[0].mxu0 %v434
      %v436 = vpop.f32.mrb[0].mxu0
      %v437 = vadd.f32 0.0, %v436
      %v438 = vpop.f32.mrb[0].mxu0
      %439 = vmatprep.mubr.f32.mxu0 0.0
      %v440 = vand.u32 %v264, 4294901760
      %v441 = vsub.f32 %v264, %v440
      %v442 = vand.u32 %v441, 4294901760
      %v443 = vsub.f32 %v441, %v442
      %v444 = vand.u32 %v443, 4294901760
      %445 = vmatmul.mubr.f32.gmra.mrb[0].mxu0 %v444
      %v446 = vpop.f32.mrb[0].mxu0
      %v447 = vadd.f32 0.0, %v446
      %v448 = vpop.f32.mrb[0].mxu0
      %449 = vmatprep.mubr.f32.mxu0 0.0
      %v450 = vand.u32 %v267, 4294901760
      %v451 = vsub.f32 %v267, %v450
      %v452 = vand.u32 %v451, 4294901760
      %v453 = vsub.f32 %v451, %v452
      %v454 = vand.u32 %v453, 4294901760
      %455 = vmatmul.mubr.f32.gmra.mrb[0].mxu0 %v454
      %v456 = vpop.f32.mrb[0].mxu0
      %v457 = vadd.f32 0.0, %v456
      %v458 = vpop.f32.mrb[0].mxu0
      %459 = vmatprep.mubr.f32.mxu0 0.0
      %v460 = vand.u32 %v270, 4294901760
      %v461 = vsub.f32 %v270, %v460
      %v462 = vand.u32 %v461, 4294901760
      %v463 = vsub.f32 %v461, %v462
      %v464 = vand.u32 %v463, 4294901760
      %465 = vmatmul.mubr.f32.gmra.mrb[0].mxu0 %v464
      %v466 = vpop.f32.mrb[0].mxu0
      %v467 = vadd.f32 0.0, %v466
      %v468 = vpop.f32.mrb[0].mxu0
      %469 = vmatprep.mubr.f32.mxu0 0.0
      %v470 = vand.u32 %v273, 4294901760
      %v471 = vsub.f32 %v273, %v470
      %v472 = vand.u32 %v471, 4294901760
      %v473 = vsub.f32 %v471, %v472
      %v474 = vand.u32 %v473, 4294901760
      %475 = vmatmul.mubr.f32.gmra.mrb[0].mxu0 %v474
      %v476 = vpop.f32.mrb[0].mxu0
      %v477 = vadd.f32 0.0, %v476
      %v478 = vpop.f32.mrb[0].mxu0
      %479 = vmatprep.mubr.f32.mxu0 0.0
      %v480 = vand.u32 %v276, 4294901760
      %v481 = vsub.f32 %v276, %v480
      %v482 = vand.u32 %v481, 4294901760
      %v483 = vsub.f32 %v481, %v482
      %v484 = vand.u32 %v483, 4294901760
      %485 = vmatmul.mubr.f32.gmra.mrb[0].mxu0 %v484
      %v486 = vpop.f32.mrb[0].mxu0
      %v487 = vadd.f32 0.0, %v486
      %v488 = vpop.f32.mrb[0].mxu0
      %489 = vmatprep.mubr.f32.mxu0 0.0
      %v490 = vand.u32 %v279, 4294901760
      %v491 = vsub.f32 %v279, %v490
      %v492 = vand.u32 %v491, 4294901760
      %v493 = vsub.f32 %v491, %v492
      %v494 = vand.u32 %v493, 4294901760
      %495 = vmatmul.mubr.f32.gmra.mrb[0].mxu0 %v494
      %v496 = vpop.f32.mrb[0].mxu0
      %v497 = vadd.f32 0.0, %v496
      %v498 = vpop.f32.mrb[0].mxu0
      %499 = vmatprep.mubr.f32.mxu0 0.0
      %v500 = vand.u32 %v282, 4294901760
      %v501 = vsub.f32 %v282, %v500
      %v502 = vand.u32 %v501, 4294901760
      %v503 = vsub.f32 %v501, %v502
      %v504 = vand.u32 %v503, 4294901760
      %505 = vmatmul.mubr.f32.gmra.mrb[0].mxu0 %v504
      %v506 = vpop.f32.mrb[0].mxu0
      %v507 = vadd.f32 0.0, %v506
      %v508 = vpop.f32.mrb[0].mxu0
      %509 = vmatprep.mubr.f32.mxu0 0.0
      %v510 = vand.u32 %v285, 4294901760
      %v511 = vsub.f32 %v285, %v510
      %v512 = vand.u32 %v511, 4294901760
      %v513 = vsub.f32 %v511, %v512
      %v514 = vand.u32 %v513, 4294901760
      %515 = vmatmul.mubr.f32.gmra.mrb[0].mxu0 %v514
      %v516 = vpop.f32.mrb[0].mxu0
      %v517 = vadd.f32 0.0, %v516
      %v518 = vpop.f32.mrb[0].mxu0
      %519 = vdwg.mxu0
      %520 = vmatprep.subr.mxu0 0.0
      %v521 = vand.u32 %v214, 4294901760
      %v522 = vsub.f32 %v214, %v521
      %v523 = vand.u32 %v522, 4294901760
      %v524 = vsub.f32 %v522, %v523
      %v525 = vand.u32 %v524, 4294901760
      %526 = vmatpush1.msra.mxu0 %v525
      %527 = vmatprep.subr.mxu0 0.0
      %v528 = vand.u32 %v215, 4294901760
      %v529 = vsub.f32 %v215, %v528
      %v530 = vand.u32 %v529, 4294901760
      %v531 = vsub.f32 %v529, %v530
      %v532 = vand.u32 %v531, 4294901760
      %533 = vmatpush1.msra.mxu0 %v532
      %534 = vmatprep.subr.mxu0 0.0
      %v535 = vand.u32 %v216, 4294901760
      %v536 = vsub.f32 %v216, %v535
      %v537 = vand.u32 %v536, 4294901760
      %v538 = vsub.f32 %v536, %v537
      %v539 = vand.u32 %v538, 4294901760
      %540 = vmatpush1.msra.mxu0 %v539
      %541 = vmatprep.subr.mxu0 0.0
      %v542 = vand.u32 %v217, 4294901760
      %v543 = vsub.f32 %v217, %v542
      %v544 = vand.u32 %v543, 4294901760
      %v545 = vsub.f32 %v543, %v544
      %v546 = vand.u32 %v545, 4294901760
      %547 = vmatpush1.msra.mxu0 %v546
      %548 = vmatprep.subr.mxu0 0.0
      %v549 = vand.u32 %v218, 4294901760
      %v550 = vsub.f32 %v218, %v549
      %v551 = vand.u32 %v550, 4294901760
      %v552 = vsub.f32 %v550, %v551
      %v553 = vand.u32 %v552, 4294901760
      %554 = vmatpush1.msra.mxu0 %v553
      %555 = vmatprep.subr.mxu0 0.0
      %v556 = vand.u32 %v219, 4294901760
      %v557 = vsub.f32 %v219, %v556
      %v558 = vand.u32 %v557, 4294901760
      %v559 = vsub.f32 %v557, %v558
      %v560 = vand.u32 %v559, 4294901760
      %561 = vmatpush1.msra.mxu0 %v560
      %562 = vmatprep.subr.mxu0 0.0
      %v563 = vand.u32 %v220, 4294901760
      %v564 = vsub.f32 %v220, %v563
      %v565 = vand.u32 %v564, 4294901760
      %v566 = vsub.f32 %v564, %v565
      %v567 = vand.u32 %v566, 4294901760
      %568 = vmatpush1.msra.mxu0 %v567
      %569 = vmatprep.subr.mxu0 0.0
      %v570 = vand.u32 %v221, 4294901760
      %v571 = vsub.f32 %v221, %v570
      %v572 = vand.u32 %v571, 4294901760
      %v573 = vsub.f32 %v571, %v572
      %v574 = vand.u32 %v573, 4294901760
      %575 = vmatpush1.msra.mxu0 %v574
      %576 = vmatprep.subr.mxu0 0.0
      %577 = vmatpush1.msra.mxu0 0.0
      %578 = vmatprep.subr.mxu0 0.0
      %579 = vmatpush1.msra.mxu0 0.0
      %580 = vmatprep.subr.mxu0 0.0
      %581 = vmatpush1.msra.mxu0 0.0
      %582 = vmatprep.subr.mxu0 0.0
      %583 = vmatpush1.msra.mxu0 0.0
      %584 = vmatprep.subr.mxu0 0.0
      %585 = vmatpush1.msra.mxu0 0.0
      %586 = vmatprep.subr.mxu0 0.0
      %587 = vmatpush1.msra.mxu0 0.0
      %588 = vmatprep.subr.mxu0 0.0
      %589 = vmatpush1.msra.mxu0 0.0
      %590 = vmatprep.subr.mxu0 0.0
      %591 = vmatpush1.msra.mxu0 0.0
      %592 = vmatprep.subr.mxu0 0.0
      %593 = vmatpush1.msra.mxu0 0.0
      %594 = vmatprep.subr.mxu0 0.0
      %595 = vmatpush1.msra.mxu0 0.0
      %596 = vmatprep.subr.mxu0 0.0
      %597 = vmatpush1.msra.mxu0 0.0
      %598 = vmatprep.subr.mxu0 0.0
      %599 = vmatpush1.msra.mxu0 0.0
      %600 = vmatprep.subr.mxu0 0.0
      %601 = vmatpush1.msra.mxu0 0.0
      %602 = vmatprep.subr.mxu0 0.0
      %603 = vmatpush1.msra.mxu0 0.0
      %604 = vmatprep.subr.mxu0 0.0
      %605 = vmatpush1.msra.mxu0 0.0
      %606 = vmatprep.subr.mxu0 0.0
      %607 = vmatpush1.msra.mxu0 0.0
      %608 = vmatprep.subr.mxu0 0.0
      %609 = vmatpush1.msra.mxu0 0.0
      %610 = vmatprep.subr.mxu0 0.0
      %611 = vmatpush1.msra.mxu0 0.0
      %612 = vmatprep.subr.mxu0 0.0
      %613 = vmatpush1.msra.mxu0 0.0
      %614 = vmatprep.subr.mxu0 0.0
      %615 = vmatpush1.msra.mxu0 0.0
      %616 = vmatprep.subr.mxu0 0.0
      %617 = vmatpush1.msra.mxu0 0.0
      %618 = vmatprep.subr.mxu0 0.0
      %619 = vmatpush1.msra.mxu0 0.0
      %620 = vmatprep.subr.mxu0 0.0
      %621 = vmatpush1.msra.mxu0 0.0
      %622 = vmatprep.subr.mxu0 0.0
      %623 = vmatpush1.msra.mxu0 0.0
      %624 = vmatprep.mubr.f32.mxu0 0.0
      %v625 = vand.u32 %v240, 4294901760
      %626 = vmatmul.mubr.f32.gmra.mrb[0].mxu0 %v625
      %v627 = vpop.f32.mrb[0].mxu0
      %v628 = vadd.f32 %v367, %v627
      %v629 = vpop.f32.mrb[0].mxu0
      %630 = vmatprep.mubr.f32.mxu0 0.0
      %v631 = vand.u32 %v243, 4294901760
      %632 = vmatmul.mubr.f32.gmra.mrb[0].mxu0 %v631
      %v633 = vpop.f32.mrb[0].mxu0
      %v634 = vadd.f32 %v377, %v633
      %v635 = vpop.f32.mrb[0].mxu0
      %636 = vmatprep.mubr.f32.mxu0 0.0
      %v637 = vand.u32 %v246, 4294901760
      %638 = vmatmul.mubr.f32.gmra.mrb[0].mxu0 %v637
      %v639 = vpop.f32.mrb[0].mxu0
      %v640 = vadd.f32 %v387, %v639
      %v641 = vpop.f32.mrb[0].mxu0
      %642 = vmatprep.mubr.f32.mxu0 0.0
      %v643 = vand.u32 %v249, 4294901760
      %644 = vmatmul.mubr.f32.gmra.mrb[0].mxu0 %v643
      %v645 = vpop.f32.mrb[0].mxu0
      %v646 = vadd.f32 %v397, %v645
      %v647 = vpop.f32.mrb[0].mxu0
      %648 = vmatprep.mubr.f32.mxu0 0.0
      %v649 = vand.u32 %v252, 4294901760
      %650 = vmatmul.mubr.f32.gmra.mrb[0].mxu0 %v649
      %v651 = vpop.f32.mrb[0].mxu0
      %v652 = vadd.f32 %v407, %v651
      %v653 = vpop.f32.mrb[0].mxu0
      %654 = vmatprep.mubr.f32.mxu0 0.0
      %v655 = vand.u32 %v255, 4294901760
      %656 = vmatmul.mubr.f32.gmra.mrb[0].mxu0 %v655
      %v657 = vpop.f32.mrb[0].mxu0
      %v658 = vadd.f32 %v417, %v657
      %v659 = vpop.f32.mrb[0].mxu0
      %660 = vmatprep.mubr.f32.mxu0 0.0
      %v661 = vand.u32 %v258, 4294901760
      %662 = vmatmul.mubr.f32.gmra.mrb[0].mxu0 %v661
      %v663 = vpop.f32.mrb[0].mxu0
      %v664 = vadd.f32 %v427, %v663
      %v665 = vpop.f32.mrb[0].mxu0
      %666 = vmatprep.mubr.f32.mxu0 0.0
      %v667 = vand.u32 %v261, 4294901760
      %668 = vmatmul.mubr.f32.gmra.mrb[0].mxu0 %v667
      %v669 = vpop.f32.mrb[0].mxu0
      %v670 = vadd.f32 %v437, %v669
      %v671 = vpop.f32.mrb[0].mxu0
      %672 = vmatprep.mubr.f32.mxu0 0.0
      %v673 = vand.u32 %v264, 4294901760
      %674 = vmatmul.mubr.f32.gmra.mrb[0].mxu0 %v673
      %v675 = vpop.f32.mrb[0].mxu0
      %v676 = vadd.f32 %v447, %v675
      %v677 = vpop.f32.mrb[0].mxu0
      %678 = vmatprep.mubr.f32.mxu0 0.0
      %v679 = vand.u32 %v267, 4294901760
      %680 = vmatmul.mubr.f32.gmra.mrb[0].mxu0 %v679
      %v681 = vpop.f32.mrb[0].mxu0
      %v682 = vadd.f32 %v457, %v681
      %v683 = vpop.f32.mrb[0].mxu0
      %684 = vmatprep.mubr.f32.mxu0 0.0
      %v685 = vand.u32 %v270, 4294901760
      %686 = vmatmul.mubr.f32.gmra.mrb[0].mxu0 %v685
      %v687 = vpop.f32.mrb[0].mxu0
      %v688 = vadd.f32 %v467, %v687
      %v689 = vpop.f32.mrb[0].mxu0
      %690 = vmatprep.mubr.f32.mxu0 0.0
      %v691 = vand.u32 %v273, 4294901760
      %692 = vmatmul.mubr.f32.gmra.mrb[0].mxu0 %v691
      %v693 = vpop.f32.mrb[0].mxu0
      %v694 = vadd.f32 %v477, %v693
      %v695 = vpop.f32.mrb[0].mxu0
      %696 = vmatprep.mubr.f32.mxu0 0.0
      %v697 = vand.u32 %v276, 4294901760
      %698 = vmatmul.mubr.f32.gmra.mrb[0].mxu0 %v697
      %v699 = vpop.f32.mrb[0].mxu0
      %v700 = vadd.f32 %v487, %v699
      %v701 = vpop.f32.mrb[0].mxu0
      %702 = vmatprep.mubr.f32.mxu0 0.0
      %v703 = vand.u32 %v279, 4294901760
      %704 = vmatmul.mubr.f32.gmra.mrb[0].mxu0 %v703
      %v705 = vpop.f32.mrb[0].mxu0
      %v706 = vadd.f32 %v497, %v705
      %v707 = vpop.f32.mrb[0].mxu0
      %708 = vmatprep.mubr.f32.mxu0 0.0
      %v709 = vand.u32 %v282, 4294901760
      %710 = vmatmul.mubr.f32.gmra.mrb[0].mxu0 %v709
      %v711 = vpop.f32.mrb[0].mxu0
      %v712 = vadd.f32 %v507, %v711
      %v713 = vpop.f32.mrb[0].mxu0
      %714 = vmatprep.mubr.f32.mxu0 0.0
      %v715 = vand.u32 %v285, 4294901760
      %716 = vmatmul.mubr.f32.gmra.mrb[0].mxu0 %v715
      %v717 = vpop.f32.mrb[0].mxu0
      %v718 = vadd.f32 %v517, %v717
      %v719 = vpop.f32.mrb[0].mxu0
      %720 = vdwg.mxu0
      %721 = vmatprep.subr.mxu0 0.0
      %v722 = vand.u32 %v214, 4294901760
      %v723 = vsub.f32 %v214, %v722
      %724 = vmatpush1.msra.mxu0 %v723
      %725 = vmatprep.subr.mxu0 0.0
      %v726 = vand.u32 %v215, 4294901760
      %v727 = vsub.f32 %v215, %v726
      %728 = vmatpush1.msra.mxu0 %v727
      %729 = vmatprep.subr.mxu0 0.0
      %v730 = vand.u32 %v216, 4294901760
      %v731 = vsub.f32 %v216, %v730
      %732 = vmatpush1.msra.mxu0 %v731
      %733 = vmatprep.subr.mxu0 0.0
      %v734 = vand.u32 %v217, 4294901760
      %v735 = vsub.f32 %v217, %v734
      %736 = vmatpush1.msra.mxu0 %v735
      %737 = vmatprep.subr.mxu0 0.0
      %v738 = vand.u32 %v218, 4294901760
      %v739 = vsub.f32 %v218, %v738
      %740 = vmatpush1.msra.mxu0 %v739
      %741 = vmatprep.subr.mxu0 0.0
      %v742 = vand.u32 %v219, 4294901760
      %v743 = vsub.f32 %v219, %v742
      %744 = vmatpush1.msra.mxu0 %v743
      %745 = vmatprep.subr.mxu0 0.0
      %v746 = vand.u32 %v220, 4294901760
      %v747 = vsub.f32 %v220, %v746
      %748 = vmatpush1.msra.mxu0 %v747
      %749 = vmatprep.subr.mxu0 0.0
      %v750 = vand.u32 %v221, 4294901760
      %v751 = vsub.f32 %v221, %v750
      %752 = vmatpush1.msra.mxu0 %v751
      %753 = vmatprep.subr.mxu0 0.0
      %754 = vmatpush1.msra.mxu0 0.0
      %755 = vmatprep.subr.mxu0 0.0
      %756 = vmatpush1.msra.mxu0 0.0
      %757 = vmatprep.subr.mxu0 0.0
      %758 = vmatpush1.msra.mxu0 0.0
      %759 = vmatprep.subr.mxu0 0.0
      %760 = vmatpush1.msra.mxu0 0.0
      %761 = vmatprep.subr.mxu0 0.0
      %762 = vmatpush1.msra.mxu0 0.0
      %763 = vmatprep.subr.mxu0 0.0
      %764 = vmatpush1.msra.mxu0 0.0
      %765 = vmatprep.subr.mxu0 0.0
      %766 = vmatpush1.msra.mxu0 0.0
      %767 = vmatprep.subr.mxu0 0.0
      %768 = vmatpush1.msra.mxu0 0.0
      %769 = vmatprep.subr.mxu0 0.0
      %770 = vmatpush1.msra.mxu0 0.0
      %771 = vmatprep.subr.mxu0 0.0
      %772 = vmatpush1.msra.mxu0 0.0
      %773 = vmatprep.subr.mxu0 0.0
      %774 = vmatpush1.msra.mxu0 0.0
      %775 = vmatprep.subr.mxu0 0.0
      %776 = vmatpush1.msra.mxu0 0.0
      %777 = vmatprep.subr.mxu0 0.0
      %778 = vmatpush1.msra.mxu0 0.0
      %779 = vmatprep.subr.mxu0 0.0
      %780 = vmatpush1.msra.mxu0 0.0
      %781 = vmatprep.subr.mxu0 0.0
      %782 = vmatpush1.msra.mxu0 0.0
      %783 = vmatprep.subr.mxu0 0.0
      %784 = vmatpush1.msra.mxu0 0.0
      %785 = vmatprep.subr.mxu0 0.0
      %786 = vmatpush1.msra.mxu0 0.0
      %787 = vmatprep.subr.mxu0 0.0
      %788 = vmatpush1.msra.mxu0 0.0
      %789 = vmatprep.subr.mxu0 0.0
      %790 = vmatpush1.msra.mxu0 0.0
      %791 = vmatprep.subr.mxu0 0.0
      %792 = vmatpush1.msra.mxu0 0.0
      %793 = vmatprep.subr.mxu0 0.0
      %794 = vmatpush1.msra.mxu0 0.0
      %795 = vmatprep.subr.mxu0 0.0
      %796 = vmatpush1.msra.mxu0 0.0
      %797 = vmatprep.subr.mxu0 0.0
      %798 = vmatpush1.msra.mxu0 0.0
      %799 = vmatprep.subr.mxu0 0.0
      %800 = vmatpush1.msra.mxu0 0.0
      %801 = vmatprep.mubr.f32.mxu0 0.0
      %v802 = vand.u32 %v240, 4294901760
      %v803 = vsub.f32 %v240, %v802
      %804 = vmatmul.mubr.f32.gmra.mrb[0].mxu0 %v803
      %v805 = vpop.f32.mrb[0].mxu0
      %v806 = vadd.f32 %v628, %v805
      %v807 = vpop.f32.mrb[0].mxu0
      %808 = vmatprep.mubr.f32.mxu0 0.0
      %v809 = vand.u32 %v243, 4294901760
      %v810 = vsub.f32 %v243, %v809
      %811 = vmatmul.mubr.f32.gmra.mrb[0].mxu0 %v810
      %v812 = vpop.f32.mrb[0].mxu0
      %v813 = vadd.f32 %v634, %v812
      %v814 = vpop.f32.mrb[0].mxu0
      %815 = vmatprep.mubr.f32.mxu0 0.0
      %v816 = vand.u32 %v246, 4294901760
      %v817 = vsub.f32 %v246, %v816
      %818 = vmatmul.mubr.f32.gmra.mrb[0].mxu0 %v817
      %v819 = vpop.f32.mrb[0].mxu0
      %v820 = vadd.f32 %v640, %v819
      %v821 = vpop.f32.mrb[0].mxu0
      %822 = vmatprep.mubr.f32.mxu0 0.0
      %v823 = vand.u32 %v249, 4294901760
      %v824 = vsub.f32 %v249, %v823
      %825 = vmatmul.mubr.f32.gmra.mrb[0].mxu0 %v824
      %v826 = vpop.f32.mrb[0].mxu0
      %v827 = vadd.f32 %v646, %v826
      %v828 = vpop.f32.mrb[0].mxu0
      %829 = vmatprep.mubr.f32.mxu0 0.0
      %v830 = vand.u32 %v252, 4294901760
      %v831 = vsub.f32 %v252, %v830
      %832 = vmatmul.mubr.f32.gmra.mrb[0].mxu0 %v831
      %v833 = vpop.f32.mrb[0].mxu0
      %v834 = vadd.f32 %v652, %v833
      %v835 = vpop.f32.mrb[0].mxu0
      %836 = vmatprep.mubr.f32.mxu0 0.0
      %v837 = vand.u32 %v255, 4294901760
      %v838 = vsub.f32 %v255, %v837
      %839 = vmatmul.mubr.f32.gmra.mrb[0].mxu0 %v838
      %v840 = vpop.f32.mrb[0].mxu0
      %v841 = vadd.f32 %v658, %v840
      %v842 = vpop.f32.mrb[0].mxu0
      %843 = vmatprep.mubr.f32.mxu0 0.0
      %v844 = vand.u32 %v258, 4294901760
      %v845 = vsub.f32 %v258, %v844
      %846 = vmatmul.mubr.f32.gmra.mrb[0].mxu0 %v845
      %v847 = vpop.f32.mrb[0].mxu0
      %v848 = vadd.f32 %v664, %v847
      %v849 = vpop.f32.mrb[0].mxu0
      %850 = vmatprep.mubr.f32.mxu0 0.0
      %v851 = vand.u32 %v261, 4294901760
      %v852 = vsub.f32 %v261, %v851
      %853 = vmatmul.mubr.f32.gmra.mrb[0].mxu0 %v852
      %v854 = vpop.f32.mrb[0].mxu0
      %v855 = vadd.f32 %v670, %v854
      %v856 = vpop.f32.mrb[0].mxu0
      %857 = vmatprep.mubr.f32.mxu0 0.0
      %v858 = vand.u32 %v264, 4294901760
      %v859 = vsub.f32 %v264, %v858
      %860 = vmatmul.mubr.f32.gmra.mrb[0].mxu0 %v859
      %v861 = vpop.f32.mrb[0].mxu0
      %v862 = vadd.f32 %v676, %v861
      %v863 = vpop.f32.mrb[0].mxu0
      %864 = vmatprep.mubr.f32.mxu0 0.0
      %v865 = vand.u32 %v267, 4294901760
      %v866 = vsub.f32 %v267, %v865
      %867 = vmatmul.mubr.f32.gmra.mrb[0].mxu0 %v866
      %v868 = vpop.f32.mrb[0].mxu0
      %v869 = vadd.f32 %v682, %v868
      %v870 = vpop.f32.mrb[0].mxu0
      %871 = vmatprep.mubr.f32.mxu0 0.0
      %v872 = vand.u32 %v270, 4294901760
      %v873 = vsub.f32 %v270, %v872
      %874 = vmatmul.mubr.f32.gmra.mrb[0].mxu0 %v873
      %v875 = vpop.f32.mrb[0].mxu0
      %v876 = vadd.f32 %v688, %v875
      %v877 = vpop.f32.mrb[0].mxu0
      %878 = vmatprep.mubr.f32.mxu0 0.0
      %v879 = vand.u32 %v273, 4294901760
      %v880 = vsub.f32 %v273, %v879
      %881 = vmatmul.mubr.f32.gmra.mrb[0].mxu0 %v880
      %v882 = vpop.f32.mrb[0].mxu0
      %v883 = vadd.f32 %v694, %v882
      %v884 = vpop.f32.mrb[0].mxu0
      %885 = vmatprep.mubr.f32.mxu0 0.0
      %v886 = vand.u32 %v276, 4294901760
      %v887 = vsub.f32 %v276, %v886
      %888 = vmatmul.mubr.f32.gmra.mrb[0].mxu0 %v887
      %v889 = vpop.f32.mrb[0].mxu0
      %v890 = vadd.f32 %v700, %v889
      %v891 = vpop.f32.mrb[0].mxu0
      %892 = vmatprep.mubr.f32.mxu0 0.0
      %v893 = vand.u32 %v279, 4294901760
      %v894 = vsub.f32 %v279, %v893
      %895 = vmatmul.mubr.f32.gmra.mrb[0].mxu0 %v894
      %v896 = vpop.f32.mrb[0].mxu0
      %v897 = vadd.f32 %v706, %v896
      %v898 = vpop.f32.mrb[0].mxu0
      %899 = vmatprep.mubr.f32.mxu0 0.0
      %v900 = vand.u32 %v282, 4294901760
      %v901 = vsub.f32 %v282, %v900
      %902 = vmatmul.mubr.f32.gmra.mrb[0].mxu0 %v901
      %v903 = vpop.f32.mrb[0].mxu0
      %v904 = vadd.f32 %v712, %v903
      %v905 = vpop.f32.mrb[0].mxu0
      %906 = vmatprep.mubr.f32.mxu0 0.0
      %v907 = vand.u32 %v285, 4294901760
      %v908 = vsub.f32 %v285, %v907
      %909 = vmatmul.mubr.f32.gmra.mrb[0].mxu0 %v908
      %v910 = vpop.f32.mrb[0].mxu0
      %v911 = vadd.f32 %v718, %v910
      %v912 = vpop.f32.mrb[0].mxu0
      %913 = vdwg.mxu0
      %914 = vmatprep.subr.mxu0 0.0
      %v915 = vand.u32 %v214, 4294901760
      %916 = vmatpush1.msra.mxu0 %v915
      %917 = vmatprep.subr.mxu0 0.0
      %v918 = vand.u32 %v215, 4294901760
      %919 = vmatpush1.msra.mxu0 %v918
      %920 = vmatprep.subr.mxu0 0.0
      %v921 = vand.u32 %v216, 4294901760
      %922 = vmatpush1.msra.mxu0 %v921
      %923 = vmatprep.subr.mxu0 0.0
      %v924 = vand.u32 %v217, 4294901760
      %925 = vmatpush1.msra.mxu0 %v924
      %926 = vmatprep.subr.mxu0 0.0
      %v927 = vand.u32 %v218, 4294901760
      %928 = vmatpush1.msra.mxu0 %v927
      %929 = vmatprep.subr.mxu0 0.0
      %v930 = vand.u32 %v219, 4294901760
      %931 = vmatpush1.msra.mxu0 %v930
      %932 = vmatprep.subr.mxu0 0.0
      %v933 = vand.u32 %v220, 4294901760
      %934 = vmatpush1.msra.mxu0 %v933
      %935 = vmatprep.subr.mxu0 0.0
      %v936 = vand.u32 %v221, 4294901760
      %937 = vmatpush1.msra.mxu0 %v936
      %938 = vmatprep.subr.mxu0 0.0
      %939 = vmatpush1.msra.mxu0 0.0
      %940 = vmatprep.subr.mxu0 0.0
      %941 = vmatpush1.msra.mxu0 0.0
      %942 = vmatprep.subr.mxu0 0.0
      %943 = vmatpush1.msra.mxu0 0.0
      %944 = vmatprep.subr.mxu0 0.0
      %945 = vmatpush1.msra.mxu0 0.0
      %946 = vmatprep.subr.mxu0 0.0
      %947 = vmatpush1.msra.mxu0 0.0
      %948 = vmatprep.subr.mxu0 0.0
      %949 = vmatpush1.msra.mxu0 0.0
      %950 = vmatprep.subr.mxu0 0.0
      %951 = vmatpush1.msra.mxu0 0.0
      %952 = vmatprep.subr.mxu0 0.0
      %953 = vmatpush1.msra.mxu0 0.0
      %954 = vmatprep.subr.mxu0 0.0
      %955 = vmatpush1.msra.mxu0 0.0
      %956 = vmatprep.subr.mxu0 0.0
      %957 = vmatpush1.msra.mxu0 0.0
      %958 = vmatprep.subr.mxu0 0.0
      %959 = vmatpush1.msra.mxu0 0.0
      %960 = vmatprep.subr.mxu0 0.0
      %961 = vmatpush1.msra.mxu0 0.0
      %962 = vmatprep.subr.mxu0 0.0
      %963 = vmatpush1.msra.mxu0 0.0
      %964 = vmatprep.subr.mxu0 0.0
      %965 = vmatpush1.msra.mxu0 0.0
      %966 = vmatprep.subr.mxu0 0.0
      %967 = vmatpush1.msra.mxu0 0.0
      %968 = vmatprep.subr.mxu0 0.0
      %969 = vmatpush1.msra.mxu0 0.0
      %970 = vmatprep.subr.mxu0 0.0
      %971 = vmatpush1.msra.mxu0 0.0
      %972 = vmatprep.subr.mxu0 0.0
      %973 = vmatpush1.msra.mxu0 0.0
      %974 = vmatprep.subr.mxu0 0.0
      %975 = vmatpush1.msra.mxu0 0.0
      %976 = vmatprep.subr.mxu0 0.0
      %977 = vmatpush1.msra.mxu0 0.0
      %978 = vmatprep.subr.mxu0 0.0
      %979 = vmatpush1.msra.mxu0 0.0
      %980 = vmatprep.subr.mxu0 0.0
      %981 = vmatpush1.msra.mxu0 0.0
      %982 = vmatprep.subr.mxu0 0.0
      %983 = vmatpush1.msra.mxu0 0.0
      %984 = vmatprep.subr.mxu0 0.0
      %985 = vmatpush1.msra.mxu0 0.0
      %986 = vmatprep.mubr.f32.mxu0 0.0
      %v987 = vand.u32 %v240, 4294901760
      %v988 = vsub.f32 %v240, %v987
      %v989 = vand.u32 %v988, 4294901760
      %990 = vmatmul.mubr.f32.gmra.mrb[0].mxu0 %v989
      %v991 = vpop.f32.mrb[0].mxu0
      %v992 = vadd.f32 %v806, %v991
      %v993 = vpop.f32.mrb[0].mxu0
      %994 = vmatprep.mubr.f32.mxu0 0.0
      %v995 = vand.u32 %v243, 4294901760
      %v996 = vsub.f32 %v243, %v995
      %v997 = vand.u32 %v996, 4294901760
      %998 = vmatmul.mubr.f32.gmra.mrb[0].mxu0 %v997
      %v999 = vpop.f32.mrb[0].mxu0
      %v1000 = vadd.f32 %v813, %v999
      %v1001 = vpop.f32.mrb[0].mxu0
      %1002 = vmatprep.mubr.f32.mxu0 0.0
      %v1003 = vand.u32 %v246, 4294901760
      %v1004 = vsub.f32 %v246, %v1003
      %v1005 = vand.u32 %v1004, 4294901760
      %1006 = vmatmul.mubr.f32.gmra.mrb[0].mxu0 %v1005
      %v1007 = vpop.f32.mrb[0].mxu0
      %v1008 = vadd.f32 %v820, %v1007
      %v1009 = vpop.f32.mrb[0].mxu0
      %1010 = vmatprep.mubr.f32.mxu0 0.0
      %v1011 = vand.u32 %v249, 4294901760
      %v1012 = vsub.f32 %v249, %v1011
      %v1013 = vand.u32 %v1012, 4294901760
      %1014 = vmatmul.mubr.f32.gmra.mrb[0].mxu0 %v1013
      %v1015 = vpop.f32.mrb[0].mxu0
      %v1016 = vadd.f32 %v827, %v1015
      %v1017 = vpop.f32.mrb[0].mxu0
      %1018 = vmatprep.mubr.f32.mxu0 0.0
      %v1019 = vand.u32 %v252, 4294901760
      %v1020 = vsub.f32 %v252, %v1019
      %v1021 = vand.u32 %v1020, 4294901760
      %1022 = vmatmul.mubr.f32.gmra.mrb[0].mxu0 %v1021
      %v1023 = vpop.f32.mrb[0].mxu0
      %v1024 = vadd.f32 %v834, %v1023
      %v1025 = vpop.f32.mrb[0].mxu0
      %1026 = vmatprep.mubr.f32.mxu0 0.0
      %v1027 = vand.u32 %v255, 4294901760
      %v1028 = vsub.f32 %v255, %v1027
      %v1029 = vand.u32 %v1028, 4294901760
      %1030 = vmatmul.mubr.f32.gmra.mrb[0].mxu0 %v1029
      %v1031 = vpop.f32.mrb[0].mxu0
      %v1032 = vadd.f32 %v841, %v1031
      %v1033 = vpop.f32.mrb[0].mxu0
      %1034 = vmatprep.mubr.f32.mxu0 0.0
      %v1035 = vand.u32 %v258, 4294901760
      %v1036 = vsub.f32 %v258, %v1035
      %v1037 = vand.u32 %v1036, 4294901760
      %1038 = vmatmul.mubr.f32.gmra.mrb[0].mxu0 %v1037
      %v1039 = vpop.f32.mrb[0].mxu0
      %v1040 = vadd.f32 %v848, %v1039
      %v1041 = vpop.f32.mrb[0].mxu0
      %1042 = vmatprep.mubr.f32.mxu0 0.0
      %v1043 = vand.u32 %v261, 4294901760
      %v1044 = vsub.f32 %v261, %v1043
      %v1045 = vand.u32 %v1044, 4294901760
      %1046 = vmatmul.mubr.f32.gmra.mrb[0].mxu0 %v1045
      %v1047 = vpop.f32.mrb[0].mxu0
      %v1048 = vadd.f32 %v855, %v1047
      %v1049 = vpop.f32.mrb[0].mxu0
      %1050 = vmatprep.mubr.f32.mxu0 0.0
      %v1051 = vand.u32 %v264, 4294901760
      %v1052 = vsub.f32 %v264, %v1051
      %v1053 = vand.u32 %v1052, 4294901760
      %1054 = vmatmul.mubr.f32.gmra.mrb[0].mxu0 %v1053
      %v1055 = vpop.f32.mrb[0].mxu0
      %v1056 = vadd.f32 %v862, %v1055
      %v1057 = vpop.f32.mrb[0].mxu0
      %1058 = vmatprep.mubr.f32.mxu0 0.0
      %v1059 = vand.u32 %v267, 4294901760
      %v1060 = vsub.f32 %v267, %v1059
      %v1061 = vand.u32 %v1060, 4294901760
      %1062 = vmatmul.mubr.f32.gmra.mrb[0].mxu0 %v1061
      %v1063 = vpop.f32.mrb[0].mxu0
      %v1064 = vadd.f32 %v869, %v1063
      %v1065 = vpop.f32.mrb[0].mxu0
      %1066 = vmatprep.mubr.f32.mxu0 0.0
      %v1067 = vand.u32 %v270, 4294901760
      %v1068 = vsub.f32 %v270, %v1067
      %v1069 = vand.u32 %v1068, 4294901760
      %1070 = vmatmul.mubr.f32.gmra.mrb[0].mxu0 %v1069
      %v1071 = vpop.f32.mrb[0].mxu0
      %v1072 = vadd.f32 %v876, %v1071
      %v1073 = vpop.f32.mrb[0].mxu0
      %1074 = vmatprep.mubr.f32.mxu0 0.0
      %v1075 = vand.u32 %v273, 4294901760
      %v1076 = vsub.f32 %v273, %v1075
      %v1077 = vand.u32 %v1076, 4294901760
      %1078 = vmatmul.mubr.f32.gmra.mrb[0].mxu0 %v1077
      %v1079 = vpop.f32.mrb[0].mxu0
      %v1080 = vadd.f32 %v883, %v1079
      %v1081 = vpop.f32.mrb[0].mxu0
      %1082 = vmatprep.mubr.f32.mxu0 0.0
      %v1083 = vand.u32 %v276, 4294901760
      %v1084 = vsub.f32 %v276, %v1083
      %v1085 = vand.u32 %v1084, 4294901760
      %1086 = vmatmul.mubr.f32.gmra.mrb[0].mxu0 %v1085
      %v1087 = vpop.f32.mrb[0].mxu0
      %v1088 = vadd.f32 %v890, %v1087
      %v1089 = vpop.f32.mrb[0].mxu0
      %1090 = vmatprep.mubr.f32.mxu0 0.0
      %v1091 = vand.u32 %v279, 4294901760
      %v1092 = vsub.f32 %v279, %v1091
      %v1093 = vand.u32 %v1092, 4294901760
      %1094 = vmatmul.mubr.f32.gmra.mrb[0].mxu0 %v1093
      %v1095 = vpop.f32.mrb[0].mxu0
      %v1096 = vadd.f32 %v897, %v1095
      %v1097 = vpop.f32.mrb[0].mxu0
      %1098 = vmatprep.mubr.f32.mxu0 0.0
      %v1099 = vand.u32 %v282, 4294901760
      %v1100 = vsub.f32 %v282, %v1099
      %v1101 = vand.u32 %v1100, 4294901760
      %1102 = vmatmul.mubr.f32.gmra.mrb[0].mxu0 %v1101
      %v1103 = vpop.f32.mrb[0].mxu0
      %v1104 = vadd.f32 %v904, %v1103
      %v1105 = vpop.f32.mrb[0].mxu0
      %1106 = vmatprep.mubr.f32.mxu0 0.0
      %v1107 = vand.u32 %v285, 4294901760
      %v1108 = vsub.f32 %v285, %v1107
      %v1109 = vand.u32 %v1108, 4294901760
      %1110 = vmatmul.mubr.f32.gmra.mrb[0].mxu0 %v1109
      %v1111 = vpop.f32.mrb[0].mxu0
      %v1112 = vadd.f32 %v911, %v1111
      %v1113 = vpop.f32.mrb[0].mxu0
      %1114 = vdwg.mxu0
      %1115 = vmatprep.subr.mxu0 0.0
      %v1116 = vand.u32 %v214, 4294901760
      %v1117 = vsub.f32 %v214, %v1116
      %v1118 = vand.u32 %v1117, 4294901760
      %1119 = vmatpush1.msra.mxu0 %v1118
      %1120 = vmatprep.subr.mxu0 0.0
      %v1121 = vand.u32 %v215, 4294901760
      %v1122 = vsub.f32 %v215, %v1121
      %v1123 = vand.u32 %v1122, 4294901760
      %1124 = vmatpush1.msra.mxu0 %v1123
      %1125 = vmatprep.subr.mxu0 0.0
      %v1126 = vand.u32 %v216, 4294901760
      %v1127 = vsub.f32 %v216, %v1126
      %v1128 = vand.u32 %v1127, 4294901760
      %1129 = vmatpush1.msra.mxu0 %v1128
      %1130 = vmatprep.subr.mxu0 0.0
      %v1131 = vand.u32 %v217, 4294901760
      %v1132 = vsub.f32 %v217, %v1131
      %v1133 = vand.u32 %v1132, 4294901760
      %1134 = vmatpush1.msra.mxu0 %v1133
      %1135 = vmatprep.subr.mxu0 0.0
      %v1136 = vand.u32 %v218, 4294901760
      %v1137 = vsub.f32 %v218, %v1136
      %v1138 = vand.u32 %v1137, 4294901760
      %1139 = vmatpush1.msra.mxu0 %v1138
      %1140 = vmatprep.subr.mxu0 0.0
      %v1141 = vand.u32 %v219, 4294901760
      %v1142 = vsub.f32 %v219, %v1141
      %v1143 = vand.u32 %v1142, 4294901760
      %1144 = vmatpush1.msra.mxu0 %v1143
      %1145 = vmatprep.subr.mxu0 0.0
      %v1146 = vand.u32 %v220, 4294901760
      %v1147 = vsub.f32 %v220, %v1146
      %v1148 = vand.u32 %v1147, 4294901760
      %1149 = vmatpush1.msra.mxu0 %v1148
      %1150 = vmatprep.subr.mxu0 0.0
      %v1151 = vand.u32 %v221, 4294901760
      %v1152 = vsub.f32 %v221, %v1151
      %v1153 = vand.u32 %v1152, 4294901760
      %1154 = vmatpush1.msra.mxu0 %v1153
      %1155 = vmatprep.subr.mxu0 0.0
      %1156 = vmatpush1.msra.mxu0 0.0
      %1157 = vmatprep.subr.mxu0 0.0
      %1158 = vmatpush1.msra.mxu0 0.0
      %1159 = vmatprep.subr.mxu0 0.0
      %1160 = vmatpush1.msra.mxu0 0.0
      %1161 = vmatprep.subr.mxu0 0.0
      %1162 = vmatpush1.msra.mxu0 0.0
      %1163 = vmatprep.subr.mxu0 0.0
      %1164 = vmatpush1.msra.mxu0 0.0
      %1165 = vmatprep.subr.mxu0 0.0
      %1166 = vmatpush1.msra.mxu0 0.0
      %1167 = vmatprep.subr.mxu0 0.0
      %1168 = vmatpush1.msra.mxu0 0.0
      %1169 = vmatprep.subr.mxu0 0.0
      %1170 = vmatpush1.msra.mxu0 0.0
      %1171 = vmatprep.subr.mxu0 0.0
      %1172 = vmatpush1.msra.mxu0 0.0
      %1173 = vmatprep.subr.mxu0 0.0
      %1174 = vmatpush1.msra.mxu0 0.0
      %1175 = vmatprep.subr.mxu0 0.0
      %1176 = vmatpush1.msra.mxu0 0.0
      %1177 = vmatprep.subr.mxu0 0.0
      %1178 = vmatpush1.msra.mxu0 0.0
      %1179 = vmatprep.subr.mxu0 0.0
      %1180 = vmatpush1.msra.mxu0 0.0
      %1181 = vmatprep.subr.mxu0 0.0
      %1182 = vmatpush1.msra.mxu0 0.0
      %1183 = vmatprep.subr.mxu0 0.0
      %1184 = vmatpush1.msra.mxu0 0.0
      %1185 = vmatprep.subr.mxu0 0.0
      %1186 = vmatpush1.msra.mxu0 0.0
      %1187 = vmatprep.subr.mxu0 0.0
      %1188 = vmatpush1.msra.mxu0 0.0
      %1189 = vmatprep.subr.mxu0 0.0
      %1190 = vmatpush1.msra.mxu0 0.0
      %1191 = vmatprep.subr.mxu0 0.0
      %1192 = vmatpush1.msra.mxu0 0.0
      %1193 = vmatprep.subr.mxu0 0.0
      %1194 = vmatpush1.msra.mxu0 0.0
      %1195 = vmatprep.subr.mxu0 0.0
      %1196 = vmatpush1.msra.mxu0 0.0
      %1197 = vmatprep.subr.mxu0 0.0
      %1198 = vmatpush1.msra.mxu0 0.0
      %1199 = vmatprep.subr.mxu0 0.0
      %1200 = vmatpush1.msra.mxu0 0.0
      %1201 = vmatprep.subr.mxu0 0.0
      %1202 = vmatpush1.msra.mxu0 0.0
      %1203 = vmatprep.mubr.f32.mxu0 0.0
      %v1204 = vand.u32 %v240, 4294901760
      %1205 = vmatmul.mubr.f32.gmra.mrb[0].mxu0 %v1204
      %v1206 = vpop.f32.mrb[0].mxu0
      %v1207 = vadd.f32 %v992, %v1206
      %v1208 = vpop.f32.mrb[0].mxu0
      %1209 = vmatprep.mubr.f32.mxu0 0.0
      %v1210 = vand.u32 %v243, 4294901760
      %1211 = vmatmul.mubr.f32.gmra.mrb[0].mxu0 %v1210
      %v1212 = vpop.f32.mrb[0].mxu0
      %v1213 = vadd.f32 %v1000, %v1212
      %v1214 = vpop.f32.mrb[0].mxu0
      %1215 = vmatprep.mubr.f32.mxu0 0.0
      %v1216 = vand.u32 %v246, 4294901760
      %1217 = vmatmul.mubr.f32.gmra.mrb[0].mxu0 %v1216
      %v1218 = vpop.f32.mrb[0].mxu0
      %v1219 = vadd.f32 %v1008, %v1218
      %v1220 = vpop.f32.mrb[0].mxu0
      %1221 = vmatprep.mubr.f32.mxu0 0.0
      %v1222 = vand.u32 %v249, 4294901760
      %1223 = vmatmul.mubr.f32.gmra.mrb[0].mxu0 %v1222
      %v1224 = vpop.f32.mrb[0].mxu0
      %v1225 = vadd.f32 %v1016, %v1224
      %v1226 = vpop.f32.mrb[0].mxu0
      %1227 = vmatprep.mubr.f32.mxu0 0.0
      %v1228 = vand.u32 %v252, 4294901760
      %1229 = vmatmul.mubr.f32.gmra.mrb[0].mxu0 %v1228
      %v1230 = vpop.f32.mrb[0].mxu0
      %v1231 = vadd.f32 %v1024, %v1230
      %v1232 = vpop.f32.mrb[0].mxu0
      %1233 = vmatprep.mubr.f32.mxu0 0.0
      %v1234 = vand.u32 %v255, 4294901760
      %1235 = vmatmul.mubr.f32.gmra.mrb[0].mxu0 %v1234
      %v1236 = vpop.f32.mrb[0].mxu0
      %v1237 = vadd.f32 %v1032, %v1236
      %v1238 = vpop.f32.mrb[0].mxu0
      %1239 = vmatprep.mubr.f32.mxu0 0.0
      %v1240 = vand.u32 %v258, 4294901760
      %1241 = vmatmul.mubr.f32.gmra.mrb[0].mxu0 %v1240
      %v1242 = vpop.f32.mrb[0].mxu0
      %v1243 = vadd.f32 %v1040, %v1242
      %v1244 = vpop.f32.mrb[0].mxu0
      %1245 = vmatprep.mubr.f32.mxu0 0.0
      %v1246 = vand.u32 %v261, 4294901760
      %1247 = vmatmul.mubr.f32.gmra.mrb[0].mxu0 %v1246
      %v1248 = vpop.f32.mrb[0].mxu0
      %v1249 = vadd.f32 %v1048, %v1248
      %v1250 = vpop.f32.mrb[0].mxu0
      %1251 = vmatprep.mubr.f32.mxu0 0.0
      %v1252 = vand.u32 %v264, 4294901760
      %1253 = vmatmul.mubr.f32.gmra.mrb[0].mxu0 %v1252
      %v1254 = vpop.f32.mrb[0].mxu0
      %v1255 = vadd.f32 %v1056, %v1254
      %v1256 = vpop.f32.mrb[0].mxu0
      %1257 = vmatprep.mubr.f32.mxu0 0.0
      %v1258 = vand.u32 %v267, 4294901760
      %1259 = vmatmul.mubr.f32.gmra.mrb[0].mxu0 %v1258
      %v1260 = vpop.f32.mrb[0].mxu0
      %v1261 = vadd.f32 %v1064, %v1260
      %v1262 = vpop.f32.mrb[0].mxu0
      %1263 = vmatprep.mubr.f32.mxu0 0.0
      %v1264 = vand.u32 %v270, 4294901760
      %1265 = vmatmul.mubr.f32.gmra.mrb[0].mxu0 %v1264
      %v1266 = vpop.f32.mrb[0].mxu0
      %v1267 = vadd.f32 %v1072, %v1266
      %v1268 = vpop.f32.mrb[0].mxu0
      %1269 = vmatprep.mubr.f32.mxu0 0.0
      %v1270 = vand.u32 %v273, 4294901760
      %1271 = vmatmul.mubr.f32.gmra.mrb[0].mxu0 %v1270
      %v1272 = vpop.f32.mrb[0].mxu0
      %v1273 = vadd.f32 %v1080, %v1272
      %v1274 = vpop.f32.mrb[0].mxu0
      %1275 = vmatprep.mubr.f32.mxu0 0.0
      %v1276 = vand.u32 %v276, 4294901760
      %1277 = vmatmul.mubr.f32.gmra.mrb[0].mxu0 %v1276
      %v1278 = vpop.f32.mrb[0].mxu0
      %v1279 = vadd.f32 %v1088, %v1278
      %v1280 = vpop.f32.mrb[0].mxu0
      %1281 = vmatprep.mubr.f32.mxu0 0.0
      %v1282 = vand.u32 %v279, 4294901760
      %1283 = vmatmul.mubr.f32.gmra.mrb[0].mxu0 %v1282
      %v1284 = vpop.f32.mrb[0].mxu0
      %v1285 = vadd.f32 %v1096, %v1284
      %v1286 = vpop.f32.mrb[0].mxu0
      %1287 = vmatprep.mubr.f32.mxu0 0.0
      %v1288 = vand.u32 %v282, 4294901760
      %1289 = vmatmul.mubr.f32.gmra.mrb[0].mxu0 %v1288
      %v1290 = vpop.f32.mrb[0].mxu0
      %v1291 = vadd.f32 %v1104, %v1290
      %v1292 = vpop.f32.mrb[0].mxu0
      %1293 = vmatprep.mubr.f32.mxu0 0.0
      %v1294 = vand.u32 %v285, 4294901760
      %1295 = vmatmul.mubr.f32.gmra.mrb[0].mxu0 %v1294
      %v1296 = vpop.f32.mrb[0].mxu0
      %v1297 = vadd.f32 %v1112, %v1296
      %v1298 = vpop.f32.mrb[0].mxu0
      %1299 = vdwg.mxu0
      %1300 = vmatprep.subr.mxu0 0.0
      %v1301 = vand.u32 %v214, 4294901760
      %1302 = vmatpush1.msra.mxu0 %v1301
      %1303 = vmatprep.subr.mxu0 0.0
      %v1304 = vand.u32 %v215, 4294901760
      %1305 = vmatpush1.msra.mxu0 %v1304
      %1306 = vmatprep.subr.mxu0 0.0
      %v1307 = vand.u32 %v216, 4294901760
      %1308 = vmatpush1.msra.mxu0 %v1307
      %1309 = vmatprep.subr.mxu0 0.0
      %v1310 = vand.u32 %v217, 4294901760
      %1311 = vmatpush1.msra.mxu0 %v1310
      %1312 = vmatprep.subr.mxu0 0.0
      %v1313 = vand.u32 %v218, 4294901760
      %1314 = vmatpush1.msra.mxu0 %v1313
      %1315 = vmatprep.subr.mxu0 0.0
      %v1316 = vand.u32 %v219, 4294901760
      %1317 = vmatpush1.msra.mxu0 %v1316
      %1318 = vmatprep.subr.mxu0 0.0
      %v1319 = vand.u32 %v220, 4294901760
      %1320 = vmatpush1.msra.mxu0 %v1319
      %1321 = vmatprep.subr.mxu0 0.0
      %v1322 = vand.u32 %v221, 4294901760
      %1323 = vmatpush1.msra.mxu0 %v1322
      %1324 = vmatprep.subr.mxu0 0.0
      %1325 = vmatpush1.msra.mxu0 0.0
      %1326 = vmatprep.subr.mxu0 0.0
      %1327 = vmatpush1.msra.mxu0 0.0
      %1328 = vmatprep.subr.mxu0 0.0
      %1329 = vmatpush1.msra.mxu0 0.0
      %1330 = vmatprep.subr.mxu0 0.0
      %1331 = vmatpush1.msra.mxu0 0.0
      %1332 = vmatprep.subr.mxu0 0.0
      %1333 = vmatpush1.msra.mxu0 0.0
      %1334 = vmatprep.subr.mxu0 0.0
      %1335 = vmatpush1.msra.mxu0 0.0
      %1336 = vmatprep.subr.mxu0 0.0
      %1337 = vmatpush1.msra.mxu0 0.0
      %1338 = vmatprep.subr.mxu0 0.0
      %1339 = vmatpush1.msra.mxu0 0.0
      %1340 = vmatprep.subr.mxu0 0.0
      %1341 = vmatpush1.msra.mxu0 0.0
      %1342 = vmatprep.subr.mxu0 0.0
      %1343 = vmatpush1.msra.mxu0 0.0
      %1344 = vmatprep.subr.mxu0 0.0
      %1345 = vmatpush1.msra.mxu0 0.0
      %1346 = vmatprep.subr.mxu0 0.0
      %1347 = vmatpush1.msra.mxu0 0.0
      %1348 = vmatprep.subr.mxu0 0.0
      %1349 = vmatpush1.msra.mxu0 0.0
      %1350 = vmatprep.subr.mxu0 0.0
      %1351 = vmatpush1.msra.mxu0 0.0
      %1352 = vmatprep.subr.mxu0 0.0
      %1353 = vmatpush1.msra.mxu0 0.0
      %1354 = vmatprep.subr.mxu0 0.0
      %1355 = vmatpush1.msra.mxu0 0.0
      %1356 = vmatprep.subr.mxu0 0.0
      %1357 = vmatpush1.msra.mxu0 0.0
      %1358 = vmatprep.subr.mxu0 0.0
      %1359 = vmatpush1.msra.mxu0 0.0
      %1360 = vmatprep.subr.mxu0 0.0
      %1361 = vmatpush1.msra.mxu0 0.0
      %1362 = vmatprep.subr.mxu0 0.0
      %1363 = vmatpush1.msra.mxu0 0.0
      %1364 = vmatprep.subr.mxu0 0.0
      %1365 = vmatpush1.msra.mxu0 0.0
      %1366 = vmatprep.subr.mxu0 0.0
      %1367 = vmatpush1.msra.mxu0 0.0
      %1368 = vmatprep.subr.mxu0 0.0
      %1369 = vmatpush1.msra.mxu0 0.0
      %1370 = vmatprep.subr.mxu0 0.0
      %1371 = vmatpush1.msra.mxu0 0.0
      %1372 = vmatprep.mubr.f32.mxu0 0.0
      %v1373 = vand.u32 %v240, 4294901760
      %1374 = vmatmul.mubr.f32.gmra.mrb[0].mxu0 %v1373
      %v1375 = vpop.f32.mrb[0].mxu0
      %v1376 = vadd.f32 %v1207, %v1375
      %v1377 = vpop.f32.mrb[0].mxu0
      %1378 = vmatprep.mubr.f32.mxu0 0.0
      %v1379 = vand.u32 %v243, 4294901760
      %1380 = vmatmul.mubr.f32.gmra.mrb[0].mxu0 %v1379
      %v1381 = vpop.f32.mrb[0].mxu0
      %v1382 = vadd.f32 %v1213, %v1381
      %v1383 = vpop.f32.mrb[0].mxu0
      %1384 = vmatprep.mubr.f32.mxu0 0.0
      %v1385 = vand.u32 %v246, 4294901760
      %1386 = vmatmul.mubr.f32.gmra.mrb[0].mxu0 %v1385
      %v1387 = vpop.f32.mrb[0].mxu0
      %v1388 = vadd.f32 %v1219, %v1387
      %v1389 = vpop.f32.mrb[0].mxu0
      %1390 = vmatprep.mubr.f32.mxu0 0.0
      %v1391 = vand.u32 %v249, 4294901760
      %1392 = vmatmul.mubr.f32.gmra.mrb[0].mxu0 %v1391
      %v1393 = vpop.f32.mrb[0].mxu0
      %v1394 = vadd.f32 %v1225, %v1393
      %v1395 = vpop.f32.mrb[0].mxu0
      %1396 = vmatprep.mubr.f32.mxu0 0.0
      %v1397 = vand.u32 %v252, 4294901760
      %1398 = vmatmul.mubr.f32.gmra.mrb[0].mxu0 %v1397
      %v1399 = vpop.f32.mrb[0].mxu0
      %v1400 = vadd.f32 %v1231, %v1399
      %v1401 = vpop.f32.mrb[0].mxu0
      %1402 = vmatprep.mubr.f32.mxu0 0.0
      %v1403 = vand.u32 %v255, 4294901760
      %1404 = vmatmul.mubr.f32.gmra.mrb[0].mxu0 %v1403
      %v1405 = vpop.f32.mrb[0].mxu0
      %v1406 = vadd.f32 %v1237, %v1405
      %v1407 = vpop.f32.mrb[0].mxu0
      %1408 = vmatprep.mubr.f32.mxu0 0.0
      %v1409 = vand.u32 %v258, 4294901760
      %1410 = vmatmul.mubr.f32.gmra.mrb[0].mxu0 %v1409
      %v1411 = vpop.f32.mrb[0].mxu0
      %v1412 = vadd.f32 %v1243, %v1411
      %v1413 = vpop.f32.mrb[0].mxu0
      %1414 = vmatprep.mubr.f32.mxu0 0.0
      %v1415 = vand.u32 %v261, 4294901760
      %1416 = vmatmul.mubr.f32.gmra.mrb[0].mxu0 %v1415
      %v1417 = vpop.f32.mrb[0].mxu0
      %v1418 = vadd.f32 %v1249, %v1417
      %v1419 = vpop.f32.mrb[0].mxu0
      %1420 = vmatprep.mubr.f32.mxu0 0.0
      %v1421 = vand.u32 %v264, 4294901760
      %1422 = vmatmul.mubr.f32.gmra.mrb[0].mxu0 %v1421
      %v1423 = vpop.f32.mrb[0].mxu0
      %v1424 = vadd.f32 %v1255, %v1423
      %v1425 = vpop.f32.mrb[0].mxu0
      %1426 = vmatprep.mubr.f32.mxu0 0.0
      %v1427 = vand.u32 %v267, 4294901760
      %1428 = vmatmul.mubr.f32.gmra.mrb[0].mxu0 %v1427
      %v1429 = vpop.f32.mrb[0].mxu0
      %v1430 = vadd.f32 %v1261, %v1429
      %v1431 = vpop.f32.mrb[0].mxu0
      %1432 = vmatprep.mubr.f32.mxu0 0.0
      %v1433 = vand.u32 %v270, 4294901760
      %1434 = vmatmul.mubr.f32.gmra.mrb[0].mxu0 %v1433
      %v1435 = vpop.f32.mrb[0].mxu0
      %v1436 = vadd.f32 %v1267, %v1435
      %v1437 = vpop.f32.mrb[0].mxu0
      %1438 = vmatprep.mubr.f32.mxu0 0.0
      %v1439 = vand.u32 %v273, 4294901760
      %1440 = vmatmul.mubr.f32.gmra.mrb[0].mxu0 %v1439
      %v1441 = vpop.f32.mrb[0].mxu0
      %v1442 = vadd.f32 %v1273, %v1441
      %v1443 = vpop.f32.mrb[0].mxu0
      %1444 = vmatprep.mubr.f32.mxu0 0.0
      %v1445 = vand.u32 %v276, 4294901760
      %1446 = vmatmul.mubr.f32.gmra.mrb[0].mxu0 %v1445
      %v1447 = vpop.f32.mrb[0].mxu0
      %v1448 = vadd.f32 %v1279, %v1447
      %v1449 = vpop.f32.mrb[0].mxu0
      %1450 = vmatprep.mubr.f32.mxu0 0.0
      %v1451 = vand.u32 %v279, 4294901760
      %1452 = vmatmul.mubr.f32.gmra.mrb[0].mxu0 %v1451
      %v1453 = vpop.f32.mrb[0].mxu0
      %v1454 = vadd.f32 %v1285, %v1453
      %v1455 = vpop.f32.mrb[0].mxu0
      %1456 = vmatprep.mubr.f32.mxu0 0.0
      %v1457 = vand.u32 %v282, 4294901760
      %1458 = vmatmul.mubr.f32.gmra.mrb[0].mxu0 %v1457
      %v1459 = vpop.f32.mrb[0].mxu0
      %v1460 = vadd.f32 %v1291, %v1459
      %v1461 = vpop.f32.mrb[0].mxu0
      %1462 = vmatprep.mubr.f32.mxu0 0.0
      %v1463 = vand.u32 %v285, 4294901760
      %1464 = vmatmul.mubr.f32.gmra.mrb[0].mxu0 %v1463
      %v1465 = vpop.f32.mrb[0].mxu0
      %v1466 = vadd.f32 %v1297, %v1465
      %v1467 = vpop.f32.mrb[0].mxu0
      %1468 = vdwg.mxu0
      %v1469 = vld [vmem:[%s2] sm:$0xff]
      %v1470 = vld [vmem:[%s2 + $0x8] sm:$0xff]
      %vm1471 = vcmask 130048
      %v1473 = vsel %vm1471, %v1376, 0
      %v1476 = vsel %vm1471, %v1382, 0
      %v1479 = vsel %vm1471, %v1388, 0
      %v1482 = vsel %vm1471, %v1394, 0
      %v1485 = vsel %vm1471, %v1400, 0
      %v1488 = vsel %vm1471, %v1406, 0
      %v1491 = vsel %vm1471, %v1412, 0
      %v1494 = vsel %vm1471, %v1418, 0
      %v1497 = vsel %vm1471, %v1424, 0
      %v1500 = vsel %vm1471, %v1430, 0
      %v1503 = vsel %vm1471, %v1436, 0
      %v1506 = vsel %vm1471, %v1442, 0
      %v1509 = vsel %vm1471, %v1448, 0
      %v1512 = vsel %vm1471, %v1454, 0
      %v1515 = vsel %vm1471, %v1460, 0
      %v1518 = vsel %vm1471, %v1466, 0
      %1520 = vmatprep.subr.mxu0 0.0
      %v1521 = vand.u32 %v1469, 4294901760
      %1522 = vmatpush1.msra.mxu0 %v1521
      %1523 = vmatprep.subr.mxu0 0.0
      %v1524 = vand.u32 %v1470, 4294901760
      %1525 = vmatpush1.msra.mxu0 %v1524
      %1526 = vmatprep.subr.mxu0 0.0
      %1527 = vmatpush1.msra.mxu0 0.0
      %1528 = vmatprep.subr.mxu0 0.0
      %1529 = vmatpush1.msra.mxu0 0.0
      %1530 = vmatprep.subr.mxu0 0.0
      %1531 = vmatpush1.msra.mxu0 0.0
      %1532 = vmatprep.subr.mxu0 0.0
      %1533 = vmatpush1.msra.mxu0 0.0
      %1534 = vmatprep.subr.mxu0 0.0
      %1535 = vmatpush1.msra.mxu0 0.0
      %1536 = vmatprep.subr.mxu0 0.0
      %1537 = vmatpush1.msra.mxu0 0.0
      %1538 = vmatprep.subr.mxu0 0.0
      %1539 = vmatpush1.msra.mxu0 0.0
      %1540 = vmatprep.subr.mxu0 0.0
      %1541 = vmatpush1.msra.mxu0 0.0
      %1542 = vmatprep.subr.mxu0 0.0
      %1543 = vmatpush1.msra.mxu0 0.0
      %1544 = vmatprep.subr.mxu0 0.0
      %1545 = vmatpush1.msra.mxu0 0.0
      %1546 = vmatprep.subr.mxu0 0.0
      %1547 = vmatpush1.msra.mxu0 0.0
      %1548 = vmatprep.subr.mxu0 0.0
      %1549 = vmatpush1.msra.mxu0 0.0
      %1550 = vmatprep.subr.mxu0 0.0
      %1551 = vmatpush1.msra.mxu0 0.0
      %1552 = vmatprep.subr.mxu0 0.0
      %1553 = vmatpush1.msra.mxu0 0.0
      %1554 = vmatprep.subr.mxu0 0.0
      %1555 = vmatpush1.msra.mxu0 0.0
      %1556 = vmatprep.subr.mxu0 0.0
      %1557 = vmatpush1.msra.mxu0 0.0
      %1558 = vmatprep.subr.mxu0 0.0
      %1559 = vmatpush1.msra.mxu0 0.0
      %1560 = vmatprep.subr.mxu0 0.0
      %1561 = vmatpush1.msra.mxu0 0.0
      %1562 = vmatprep.subr.mxu0 0.0
      %1563 = vmatpush1.msra.mxu0 0.0
      %1564 = vmatprep.subr.mxu0 0.0
      %1565 = vmatpush1.msra.mxu0 0.0
      %1566 = vmatprep.subr.mxu0 0.0
      %1567 = vmatpush1.msra.mxu0 0.0
      %1568 = vmatprep.subr.mxu0 0.0
      %1569 = vmatpush1.msra.mxu0 0.0
      %1570 = vmatprep.subr.mxu0 0.0
      %1571 = vmatpush1.msra.mxu0 0.0
      %1572 = vmatprep.subr.mxu0 0.0
      %1573 = vmatpush1.msra.mxu0 0.0
      %1574 = vmatprep.subr.mxu0 0.0
      %1575 = vmatpush1.msra.mxu0 0.0
      %1576 = vmatprep.subr.mxu0 0.0
      %1577 = vmatpush1.msra.mxu0 0.0
      %1578 = vmatprep.subr.mxu0 0.0
      %1579 = vmatpush1.msra.mxu0 0.0
      %1580 = vmatprep.subr.mxu0 0.0
      %1581 = vmatpush1.msra.mxu0 0.0
      %1582 = vmatprep.subr.mxu0 0.0
      %1583 = vmatpush1.msra.mxu0 0.0
      %1584 = vmatprep.subr.mxu0 0.0
      %1585 = vmatpush1.msra.mxu0 0.0
      %1586 = vmatprep.mubr.f32.mxu0 0.0
      %v1587 = vand.u32 %v1473, 4294901760
      %v1588 = vsub.f32 %v1473, %v1587
      %v1589 = vand.u32 %v1588, 4294901760
      %v1590 = vsub.f32 %v1588, %v1589
      %v1591 = vand.u32 %v1590, 4294901760
      %1592 = vmatmul.mubr.f32.gmra.mrb[0].mxu0 %v1591
      %v1593 = vpop.f32.mrb[0].mxu0
      %v1594 = vadd.f32 0.0, %v1593
      %v1595 = vpop.f32.mrb[0].mxu0
      %1596 = vmatprep.mubr.f32.mxu0 0.0
      %v1597 = vand.u32 %v1476, 4294901760
      %v1598 = vsub.f32 %v1476, %v1597
      %v1599 = vand.u32 %v1598, 4294901760
      %v1600 = vsub.f32 %v1598, %v1599
      %v1601 = vand.u32 %v1600, 4294901760
      %1602 = vmatmul.mubr.f32.gmra.mrb[0].mxu0 %v1601
      %v1603 = vpop.f32.mrb[0].mxu0
      %v1604 = vadd.f32 0.0, %v1603
      %v1605 = vpop.f32.mrb[0].mxu0
      %1606 = vmatprep.mubr.f32.mxu0 0.0
      %v1607 = vand.u32 %v1479, 4294901760
      %v1608 = vsub.f32 %v1479, %v1607
      %v1609 = vand.u32 %v1608, 4294901760
      %v1610 = vsub.f32 %v1608, %v1609
      %v1611 = vand.u32 %v1610, 4294901760
      %1612 = vmatmul.mubr.f32.gmra.mrb[0].mxu0 %v1611
      %v1613 = vpop.f32.mrb[0].mxu0
      %v1614 = vadd.f32 0.0, %v1613
      %v1615 = vpop.f32.mrb[0].mxu0
      %1616 = vmatprep.mubr.f32.mxu0 0.0
      %v1617 = vand.u32 %v1482, 4294901760
      %v1618 = vsub.f32 %v1482, %v1617
      %v1619 = vand.u32 %v1618, 4294901760
      %v1620 = vsub.f32 %v1618, %v1619
      %v1621 = vand.u32 %v1620, 4294901760
      %1622 = vmatmul.mubr.f32.gmra.mrb[0].mxu0 %v1621
      %v1623 = vpop.f32.mrb[0].mxu0
      %v1624 = vadd.f32 0.0, %v1623
      %v1625 = vpop.f32.mrb[0].mxu0
      %1626 = vmatprep.mubr.f32.mxu0 0.0
      %v1627 = vand.u32 %v1485, 4294901760
      %v1628 = vsub.f32 %v1485, %v1627
      %v1629 = vand.u32 %v1628, 4294901760
      %v1630 = vsub.f32 %v1628, %v1629
      %v1631 = vand.u32 %v1630, 4294901760
      %1632 = vmatmul.mubr.f32.gmra.mrb[0].mxu0 %v1631
      %v1633 = vpop.f32.mrb[0].mxu0
      %v1634 = vadd.f32 0.0, %v1633
      %v1635 = vpop.f32.mrb[0].mxu0
      %1636 = vmatprep.mubr.f32.mxu0 0.0
      %v1637 = vand.u32 %v1488, 4294901760
      %v1638 = vsub.f32 %v1488, %v1637
      %v1639 = vand.u32 %v1638, 4294901760
      %v1640 = vsub.f32 %v1638, %v1639
      %v1641 = vand.u32 %v1640, 4294901760
      %1642 = vmatmul.mubr.f32.gmra.mrb[0].mxu0 %v1641
      %v1643 = vpop.f32.mrb[0].mxu0
      %v1644 = vadd.f32 0.0, %v1643
      %v1645 = vpop.f32.mrb[0].mxu0
      %1646 = vmatprep.mubr.f32.mxu0 0.0
      %v1647 = vand.u32 %v1491, 4294901760
      %v1648 = vsub.f32 %v1491, %v1647
      %v1649 = vand.u32 %v1648, 4294901760
      %v1650 = vsub.f32 %v1648, %v1649
      %v1651 = vand.u32 %v1650, 4294901760
      %1652 = vmatmul.mubr.f32.gmra.mrb[0].mxu0 %v1651
      %v1653 = vpop.f32.mrb[0].mxu0
      %v1654 = vadd.f32 0.0, %v1653
      %v1655 = vpop.f32.mrb[0].mxu0
      %1656 = vmatprep.mubr.f32.mxu0 0.0
      %v1657 = vand.u32 %v1494, 4294901760
      %v1658 = vsub.f32 %v1494, %v1657
      %v1659 = vand.u32 %v1658, 4294901760
      %v1660 = vsub.f32 %v1658, %v1659
      %v1661 = vand.u32 %v1660, 4294901760
      %1662 = vmatmul.mubr.f32.gmra.mrb[0].mxu0 %v1661
      %v1663 = vpop.f32.mrb[0].mxu0
      %v1664 = vadd.f32 0.0, %v1663
      %v1665 = vpop.f32.mrb[0].mxu0
      %1666 = vmatprep.mubr.f32.mxu0 0.0
      %v1667 = vand.u32 %v1497, 4294901760
      %v1668 = vsub.f32 %v1497, %v1667
      %v1669 = vand.u32 %v1668, 4294901760
      %v1670 = vsub.f32 %v1668, %v1669
      %v1671 = vand.u32 %v1670, 4294901760
      %1672 = vmatmul.mubr.f32.gmra.mrb[0].mxu0 %v1671
      %v1673 = vpop.f32.mrb[0].mxu0
      %v1674 = vadd.f32 0.0, %v1673
      %v1675 = vpop.f32.mrb[0].mxu0
      %1676 = vmatprep.mubr.f32.mxu0 0.0
      %v1677 = vand.u32 %v1500, 4294901760
      %v1678 = vsub.f32 %v1500, %v1677
      %v1679 = vand.u32 %v1678, 4294901760
      %v1680 = vsub.f32 %v1678, %v1679
      %v1681 = vand.u32 %v1680, 4294901760
      %1682 = vmatmul.mubr.f32.gmra.mrb[0].mxu0 %v1681
      %v1683 = vpop.f32.mrb[0].mxu0
      %v1684 = vadd.f32 0.0, %v1683
      %v1685 = vpop.f32.mrb[0].mxu0
      %1686 = vmatprep.mubr.f32.mxu0 0.0
      %v1687 = vand.u32 %v1503, 4294901760
      %v1688 = vsub.f32 %v1503, %v1687
      %v1689 = vand.u32 %v1688, 4294901760
      %v1690 = vsub.f32 %v1688, %v1689
      %v1691 = vand.u32 %v1690, 4294901760
      %1692 = vmatmul.mubr.f32.gmra.mrb[0].mxu0 %v1691
      %v1693 = vpop.f32.mrb[0].mxu0
      %v1694 = vadd.f32 0.0, %v1693
      %v1695 = vpop.f32.mrb[0].mxu0
      %1696 = vmatprep.mubr.f32.mxu0 0.0
      %v1697 = vand.u32 %v1506, 4294901760
      %v1698 = vsub.f32 %v1506, %v1697
      %v1699 = vand.u32 %v1698, 4294901760
      %v1700 = vsub.f32 %v1698, %v1699
      %v1701 = vand.u32 %v1700, 4294901760
      %1702 = vmatmul.mubr.f32.gmra.mrb[0].mxu0 %v1701
      %v1703 = vpop.f32.mrb[0].mxu0
      %v1704 = vadd.f32 0.0, %v1703
      %v1705 = vpop.f32.mrb[0].mxu0
      %1706 = vmatprep.mubr.f32.mxu0 0.0
      %v1707 = vand.u32 %v1509, 4294901760
      %v1708 = vsub.f32 %v1509, %v1707
      %v1709 = vand.u32 %v1708, 4294901760
      %v1710 = vsub.f32 %v1708, %v1709
      %v1711 = vand.u32 %v1710, 4294901760
      %1712 = vmatmul.mubr.f32.gmra.mrb[0].mxu0 %v1711
      %v1713 = vpop.f32.mrb[0].mxu0
      %v1714 = vadd.f32 0.0, %v1713
      %v1715 = vpop.f32.mrb[0].mxu0
      %1716 = vmatprep.mubr.f32.mxu0 0.0
      %v1717 = vand.u32 %v1512, 4294901760
      %v1718 = vsub.f32 %v1512, %v1717
      %v1719 = vand.u32 %v1718, 4294901760
      %v1720 = vsub.f32 %v1718, %v1719
      %v1721 = vand.u32 %v1720, 4294901760
      %1722 = vmatmul.mubr.f32.gmra.mrb[0].mxu0 %v1721
      %v1723 = vpop.f32.mrb[0].mxu0
      %v1724 = vadd.f32 0.0, %v1723
      %v1725 = vpop.f32.mrb[0].mxu0
      %1726 = vmatprep.mubr.f32.mxu0 0.0
      %v1727 = vand.u32 %v1515, 4294901760
      %v1728 = vsub.f32 %v1515, %v1727
      %v1729 = vand.u32 %v1728, 4294901760
      %v1730 = vsub.f32 %v1728, %v1729
      %v1731 = vand.u32 %v1730, 4294901760
      %1732 = vmatmul.mubr.f32.gmra.mrb[0].mxu0 %v1731
      %v1733 = vpop.f32.mrb[0].mxu0
      %v1734 = vadd.f32 0.0, %v1733
      %v1735 = vpop.f32.mrb[0].mxu0
      %1736 = vmatprep.mubr.f32.mxu0 0.0
      %v1737 = vand.u32 %v1518, 4294901760
      %v1738 = vsub.f32 %v1518, %v1737
      %v1739 = vand.u32 %v1738, 4294901760
      %v1740 = vsub.f32 %v1738, %v1739
      %v1741 = vand.u32 %v1740, 4294901760
      %1742 = vmatmul.mubr.f32.gmra.mrb[0].mxu0 %v1741
      %v1743 = vpop.f32.mrb[0].mxu0
      %v1744 = vadd.f32 0.0, %v1743
      %v1745 = vpop.f32.mrb[0].mxu0
      %1746 = vdwg.mxu0
      %1747 = vmatprep.subr.mxu0 0.0
      %v1748 = vand.u32 %v1469, 4294901760
      %v1749 = vsub.f32 %v1469, %v1748
      %v1750 = vand.u32 %v1749, 4294901760
      %v1751 = vsub.f32 %v1749, %v1750
      %v1752 = vand.u32 %v1751, 4294901760
      %1753 = vmatpush1.msra.mxu0 %v1752
      %1754 = vmatprep.subr.mxu0 0.0
      %v1755 = vand.u32 %v1470, 4294901760
      %v1756 = vsub.f32 %v1470, %v1755
      %v1757 = vand.u32 %v1756, 4294901760
      %v1758 = vsub.f32 %v1756, %v1757
      %v1759 = vand.u32 %v1758, 4294901760
      %1760 = vmatpush1.msra.mxu0 %v1759
      %1761 = vmatprep.subr.mxu0 0.0
      %1762 = vmatpush1.msra.mxu0 0.0
      %1763 = vmatprep.subr.mxu0 0.0
      %1764 = vmatpush1.msra.mxu0 0.0
      %1765 = vmatprep.subr.mxu0 0.0
      %1766 = vmatpush1.msra.mxu0 0.0
      %1767 = vmatprep.subr.mxu0 0.0
      %1768 = vmatpush1.msra.mxu0 0.0
      %1769 = vmatprep.subr.mxu0 0.0
      %1770 = vmatpush1.msra.mxu0 0.0
      %1771 = vmatprep.subr.mxu0 0.0
      %1772 = vmatpush1.msra.mxu0 0.0
      %1773 = vmatprep.subr.mxu0 0.0
      %1774 = vmatpush1.msra.mxu0 0.0
      %1775 = vmatprep.subr.mxu0 0.0
      %1776 = vmatpush1.msra.mxu0 0.0
      %1777 = vmatprep.subr.mxu0 0.0
      %1778 = vmatpush1.msra.mxu0 0.0
      %1779 = vmatprep.subr.mxu0 0.0
      %1780 = vmatpush1.msra.mxu0 0.0
      %1781 = vmatprep.subr.mxu0 0.0
      %1782 = vmatpush1.msra.mxu0 0.0
      %1783 = vmatprep.subr.mxu0 0.0
      %1784 = vmatpush1.msra.mxu0 0.0
      %1785 = vmatprep.subr.mxu0 0.0
      %1786 = vmatpush1.msra.mxu0 0.0
      %1787 = vmatprep.subr.mxu0 0.0
      %1788 = vmatpush1.msra.mxu0 0.0
      %1789 = vmatprep.subr.mxu0 0.0
      %1790 = vmatpush1.msra.mxu0 0.0
      %1791 = vmatprep.subr.mxu0 0.0
      %1792 = vmatpush1.msra.mxu0 0.0
      %1793 = vmatprep.subr.mxu0 0.0
      %1794 = vmatpush1.msra.mxu0 0.0
      %1795 = vmatprep.subr.mxu0 0.0
      %1796 = vmatpush1.msra.mxu0 0.0
      %1797 = vmatprep.subr.mxu0 0.0
      %1798 = vmatpush1.msra.mxu0 0.0
      %1799 = vmatprep.subr.mxu0 0.0
      %1800 = vmatpush1.msra.mxu0 0.0
      %1801 = vmatprep.subr.mxu0 0.0
      %1802 = vmatpush1.msra.mxu0 0.0
      %1803 = vmatprep.subr.mxu0 0.0
      %1804 = vmatpush1.msra.mxu0 0.0
      %1805 = vmatprep.subr.mxu0 0.0
      %1806 = vmatpush1.msra.mxu0 0.0
      %1807 = vmatprep.subr.mxu0 0.0
      %1808 = vmatpush1.msra.mxu0 0.0
      %1809 = vmatprep.subr.mxu0 0.0
      %1810 = vmatpush1.msra.mxu0 0.0
      %1811 = vmatprep.subr.mxu0 0.0
      %1812 = vmatpush1.msra.mxu0 0.0
      %1813 = vmatprep.subr.mxu0 0.0
      %1814 = vmatpush1.msra.mxu0 0.0
      %1815 = vmatprep.subr.mxu0 0.0
      %1816 = vmatpush1.msra.mxu0 0.0
      %1817 = vmatprep.subr.mxu0 0.0
      %1818 = vmatpush1.msra.mxu0 0.0
      %1819 = vmatprep.subr.mxu0 0.0
      %1820 = vmatpush1.msra.mxu0 0.0
      %1821 = vmatprep.mubr.f32.mxu0 0.0
      %v1822 = vand.u32 %v1473, 4294901760
      %1823 = vmatmul.mubr.f32.gmra.mrb[0].mxu0 %v1822
      %v1824 = vpop.f32.mrb[0].mxu0
      %v1825 = vadd.f32 %v1594, %v1824
      %v1826 = vpop.f32.mrb[0].mxu0
      %1827 = vmatprep.mubr.f32.mxu0 0.0
      %v1828 = vand.u32 %v1476, 4294901760
      %1829 = vmatmul.mubr.f32.gmra.mrb[0].mxu0 %v1828
      %v1830 = vpop.f32.mrb[0].mxu0
      %v1831 = vadd.f32 %v1604, %v1830
      %v1832 = vpop.f32.mrb[0].mxu0
      %1833 = vmatprep.mubr.f32.mxu0 0.0
      %v1834 = vand.u32 %v1479, 4294901760
      %1835 = vmatmul.mubr.f32.gmra.mrb[0].mxu0 %v1834
      %v1836 = vpop.f32.mrb[0].mxu0
      %v1837 = vadd.f32 %v1614, %v1836
      %v1838 = vpop.f32.mrb[0].mxu0
      %1839 = vmatprep.mubr.f32.mxu0 0.0
      %v1840 = vand.u32 %v1482, 4294901760
      %1841 = vmatmul.mubr.f32.gmra.mrb[0].mxu0 %v1840
      %v1842 = vpop.f32.mrb[0].mxu0
      %v1843 = vadd.f32 %v1624, %v1842
      %v1844 = vpop.f32.mrb[0].mxu0
      %1845 = vmatprep.mubr.f32.mxu0 0.0
      %v1846 = vand.u32 %v1485, 4294901760
      %1847 = vmatmul.mubr.f32.gmra.mrb[0].mxu0 %v1846
      %v1848 = vpop.f32.mrb[0].mxu0
      %v1849 = vadd.f32 %v1634, %v1848
      %v1850 = vpop.f32.mrb[0].mxu0
      %1851 = vmatprep.mubr.f32.mxu0 0.0
      %v1852 = vand.u32 %v1488, 4294901760
      %1853 = vmatmul.mubr.f32.gmra.mrb[0].mxu0 %v1852
      %v1854 = vpop.f32.mrb[0].mxu0
      %v1855 = vadd.f32 %v1644, %v1854
      %v1856 = vpop.f32.mrb[0].mxu0
      %1857 = vmatprep.mubr.f32.mxu0 0.0
      %v1858 = vand.u32 %v1491, 4294901760
      %1859 = vmatmul.mubr.f32.gmra.mrb[0].mxu0 %v1858
      %v1860 = vpop.f32.mrb[0].mxu0
      %v1861 = vadd.f32 %v1654, %v1860
      %v1862 = vpop.f32.mrb[0].mxu0
      %1863 = vmatprep.mubr.f32.mxu0 0.0
      %v1864 = vand.u32 %v1494, 4294901760
      %1865 = vmatmul.mubr.f32.gmra.mrb[0].mxu0 %v1864
      %v1866 = vpop.f32.mrb[0].mxu0
      %v1867 = vadd.f32 %v1664, %v1866
      %v1868 = vpop.f32.mrb[0].mxu0
      %1869 = vmatprep.mubr.f32.mxu0 0.0
      %v1870 = vand.u32 %v1497, 4294901760
      %1871 = vmatmul.mubr.f32.gmra.mrb[0].mxu0 %v1870
      %v1872 = vpop.f32.mrb[0].mxu0
      %v1873 = vadd.f32 %v1674, %v1872
      %v1874 = vpop.f32.mrb[0].mxu0
      %1875 = vmatprep.mubr.f32.mxu0 0.0
      %v1876 = vand.u32 %v1500, 4294901760
      %1877 = vmatmul.mubr.f32.gmra.mrb[0].mxu0 %v1876
      %v1878 = vpop.f32.mrb[0].mxu0
      %v1879 = vadd.f32 %v1684, %v1878
      %v1880 = vpop.f32.mrb[0].mxu0
      %1881 = vmatprep.mubr.f32.mxu0 0.0
      %v1882 = vand.u32 %v1503, 4294901760
      %1883 = vmatmul.mubr.f32.gmra.mrb[0].mxu0 %v1882
      %v1884 = vpop.f32.mrb[0].mxu0
      %v1885 = vadd.f32 %v1694, %v1884
      %v1886 = vpop.f32.mrb[0].mxu0
      %1887 = vmatprep.mubr.f32.mxu0 0.0
      %v1888 = vand.u32 %v1506, 4294901760
      %1889 = vmatmul.mubr.f32.gmra.mrb[0].mxu0 %v1888
      %v1890 = vpop.f32.mrb[0].mxu0
      %v1891 = vadd.f32 %v1704, %v1890
      %v1892 = vpop.f32.mrb[0].mxu0
      %1893 = vmatprep.mubr.f32.mxu0 0.0
      %v1894 = vand.u32 %v1509, 4294901760
      %1895 = vmatmul.mubr.f32.gmra.mrb[0].mxu0 %v1894
      %v1896 = vpop.f32.mrb[0].mxu0
      %v1897 = vadd.f32 %v1714, %v1896
      %v1898 = vpop.f32.mrb[0].mxu0
      %1899 = vmatprep.mubr.f32.mxu0 0.0
      %v1900 = vand.u32 %v1512, 4294901760
      %1901 = vmatmul.mubr.f32.gmra.mrb[0].mxu0 %v1900
      %v1902 = vpop.f32.mrb[0].mxu0
      %v1903 = vadd.f32 %v1724, %v1902
      %v1904 = vpop.f32.mrb[0].mxu0
      %1905 = vmatprep.mubr.f32.mxu0 0.0
      %v1906 = vand.u32 %v1515, 4294901760
      %1907 = vmatmul.mubr.f32.gmra.mrb[0].mxu0 %v1906
      %v1908 = vpop.f32.mrb[0].mxu0
      %v1909 = vadd.f32 %v1734, %v1908
      %v1910 = vpop.f32.mrb[0].mxu0
      %1911 = vmatprep.mubr.f32.mxu0 0.0
      %v1912 = vand.u32 %v1518, 4294901760
      %1913 = vmatmul.mubr.f32.gmra.mrb[0].mxu0 %v1912
      %v1914 = vpop.f32.mrb[0].mxu0
      %v1915 = vadd.f32 %v1744, %v1914
      %v1916 = vpop.f32.mrb[0].mxu0
      %1917 = vdwg.mxu0
      %1918 = vmatprep.subr.mxu0 0.0
      %v1919 = vand.u32 %v1469, 4294901760
      %v1920 = vsub.f32 %v1469, %v1919
      %1921 = vmatpush1.msra.mxu0 %v1920
      %1922 = vmatprep.subr.mxu0 0.0
      %v1923 = vand.u32 %v1470, 4294901760
      %v1924 = vsub.f32 %v1470, %v1923
      %1925 = vmatpush1.msra.mxu0 %v1924
      %1926 = vmatprep.subr.mxu0 0.0
      %1927 = vmatpush1.msra.mxu0 0.0
      %1928 = vmatprep.subr.mxu0 0.0
      %1929 = vmatpush1.msra.mxu0 0.0
      %1930 = vmatprep.subr.mxu0 0.0
      %1931 = vmatpush1.msra.mxu0 0.0
      %1932 = vmatprep.subr.mxu0 0.0
      %1933 = vmatpush1.msra.mxu0 0.0
      %1934 = vmatprep.subr.mxu0 0.0
      %1935 = vmatpush1.msra.mxu0 0.0
      %1936 = vmatprep.subr.mxu0 0.0
      %1937 = vmatpush1.msra.mxu0 0.0
      %1938 = vmatprep.subr.mxu0 0.0
      %1939 = vmatpush1.msra.mxu0 0.0
      %1940 = vmatprep.subr.mxu0 0.0
      %1941 = vmatpush1.msra.mxu0 0.0
      %1942 = vmatprep.subr.mxu0 0.0
      %1943 = vmatpush1.msra.mxu0 0.0
      %1944 = vmatprep.subr.mxu0 0.0
      %1945 = vmatpush1.msra.mxu0 0.0
      %1946 = vmatprep.subr.mxu0 0.0
      %1947 = vmatpush1.msra.mxu0 0.0
      %1948 = vmatprep.subr.mxu0 0.0
      %1949 = vmatpush1.msra.mxu0 0.0
      %1950 = vmatprep.subr.mxu0 0.0
      %1951 = vmatpush1.msra.mxu0 0.0
      %1952 = vmatprep.subr.mxu0 0.0
      %1953 = vmatpush1.msra.mxu0 0.0
      %1954 = vmatprep.subr.mxu0 0.0
      %1955 = vmatpush1.msra.mxu0 0.0
      %1956 = vmatprep.subr.mxu0 0.0
      %1957 = vmatpush1.msra.mxu0 0.0
      %1958 = vmatprep.subr.mxu0 0.0
      %1959 = vmatpush1.msra.mxu0 0.0
      %1960 = vmatprep.subr.mxu0 0.0
      %1961 = vmatpush1.msra.mxu0 0.0
      %1962 = vmatprep.subr.mxu0 0.0
      %1963 = vmatpush1.msra.mxu0 0.0
      %1964 = vmatprep.subr.mxu0 0.0
      %1965 = vmatpush1.msra.mxu0 0.0
      %1966 = vmatprep.subr.mxu0 0.0
      %1967 = vmatpush1.msra.mxu0 0.0
      %1968 = vmatprep.subr.mxu0 0.0
      %1969 = vmatpush1.msra.mxu0 0.0
      %1970 = vmatprep.subr.mxu0 0.0
      %1971 = vmatpush1.msra.mxu0 0.0
      %1972 = vmatprep.subr.mxu0 0.0
      %1973 = vmatpush1.msra.mxu0 0.0
      %1974 = vmatprep.subr.mxu0 0.0
      %1975 = vmatpush1.msra.mxu0 0.0
      %1976 = vmatprep.subr.mxu0 0.0
      %1977 = vmatpush1.msra.mxu0 0.0
      %1978 = vmatprep.subr.mxu0 0.0
      %1979 = vmatpush1.msra.mxu0 0.0
      %1980 = vmatprep.subr.mxu0 0.0
      %1981 = vmatpush1.msra.mxu0 0.0
      %1982 = vmatprep.subr.mxu0 0.0
      %1983 = vmatpush1.msra.mxu0 0.0
      %1984 = vmatprep.subr.mxu0 0.0
      %1985 = vmatpush1.msra.mxu0 0.0
      %1986 = vmatprep.mubr.f32.mxu0 0.0
      %v1987 = vand.u32 %v1473, 4294901760
      %v1988 = vsub.f32 %v1473, %v1987
      %1989 = vmatmul.mubr.f32.gmra.mrb[0].mxu0 %v1988
      %v1990 = vpop.f32.mrb[0].mxu0
      %v1991 = vadd.f32 %v1825, %v1990
      %v1992 = vpop.f32.mrb[0].mxu0
      %1993 = vmatprep.mubr.f32.mxu0 0.0
      %v1994 = vand.u32 %v1476, 4294901760
      %v1995 = vsub.f32 %v1476, %v1994
      %1996 = vmatmul.mubr.f32.gmra.mrb[0].mxu0 %v1995
      %v1997 = vpop.f32.mrb[0].mxu0
      %v1998 = vadd.f32 %v1831, %v1997
      %v1999 = vpop.f32.mrb[0].mxu0
      %2000 = vmatprep.mubr.f32.mxu0 0.0
      %v2001 = vand.u32 %v1479, 4294901760
      %v2002 = vsub.f32 %v1479, %v2001
      %2003 = vmatmul.mubr.f32.gmra.mrb[0].mxu0 %v2002
      %v2004 = vpop.f32.mrb[0].mxu0
      %v2005 = vadd.f32 %v1837, %v2004
      %v2006 = vpop.f32.mrb[0].mxu0
      %2007 = vmatprep.mubr.f32.mxu0 0.0
      %v2008 = vand.u32 %v1482, 4294901760
      %v2009 = vsub.f32 %v1482, %v2008
      %2010 = vmatmul.mubr.f32.gmra.mrb[0].mxu0 %v2009
      %v2011 = vpop.f32.mrb[0].mxu0
      %v2012 = vadd.f32 %v1843, %v2011
      %v2013 = vpop.f32.mrb[0].mxu0
      %2014 = vmatprep.mubr.f32.mxu0 0.0
      %v2015 = vand.u32 %v1485, 4294901760
      %v2016 = vsub.f32 %v1485, %v2015
      %2017 = vmatmul.mubr.f32.gmra.mrb[0].mxu0 %v2016
      %v2018 = vpop.f32.mrb[0].mxu0
      %v2019 = vadd.f32 %v1849, %v2018
      %v2020 = vpop.f32.mrb[0].mxu0
      %2021 = vmatprep.mubr.f32.mxu0 0.0
      %v2022 = vand.u32 %v1488, 4294901760
      %v2023 = vsub.f32 %v1488, %v2022
      %2024 = vmatmul.mubr.f32.gmra.mrb[0].mxu0 %v2023
      %v2025 = vpop.f32.mrb[0].mxu0
      %v2026 = vadd.f32 %v1855, %v2025
      %v2027 = vpop.f32.mrb[0].mxu0
      %2028 = vmatprep.mubr.f32.mxu0 0.0
      %v2029 = vand.u32 %v1491, 4294901760
      %v2030 = vsub.f32 %v1491, %v2029
      %2031 = vmatmul.mubr.f32.gmra.mrb[0].mxu0 %v2030
      %v2032 = vpop.f32.mrb[0].mxu0
      %v2033 = vadd.f32 %v1861, %v2032
      %v2034 = vpop.f32.mrb[0].mxu0
      %2035 = vmatprep.mubr.f32.mxu0 0.0
      %v2036 = vand.u32 %v1494, 4294901760
      %v2037 = vsub.f32 %v1494, %v2036
      %2038 = vmatmul.mubr.f32.gmra.mrb[0].mxu0 %v2037
      %v2039 = vpop.f32.mrb[0].mxu0
      %v2040 = vadd.f32 %v1867, %v2039
      %v2041 = vpop.f32.mrb[0].mxu0
      %2042 = vmatprep.mubr.f32.mxu0 0.0
      %v2043 = vand.u32 %v1497, 4294901760
      %v2044 = vsub.f32 %v1497, %v2043
      %2045 = vmatmul.mubr.f32.gmra.mrb[0].mxu0 %v2044
      %v2046 = vpop.f32.mrb[0].mxu0
      %v2047 = vadd.f32 %v1873, %v2046
      %v2048 = vpop.f32.mrb[0].mxu0
      %2049 = vmatprep.mubr.f32.mxu0 0.0
      %v2050 = vand.u32 %v1500, 4294901760
      %v2051 = vsub.f32 %v1500, %v2050
      %2052 = vmatmul.mubr.f32.gmra.mrb[0].mxu0 %v2051
      %v2053 = vpop.f32.mrb[0].mxu0
      %v2054 = vadd.f32 %v1879, %v2053
      %v2055 = vpop.f32.mrb[0].mxu0
      %2056 = vmatprep.mubr.f32.mxu0 0.0
      %v2057 = vand.u32 %v1503, 4294901760
      %v2058 = vsub.f32 %v1503, %v2057
      %2059 = vmatmul.mubr.f32.gmra.mrb[0].mxu0 %v2058
      %v2060 = vpop.f32.mrb[0].mxu0
      %v2061 = vadd.f32 %v1885, %v2060
      %v2062 = vpop.f32.mrb[0].mxu0
      %2063 = vmatprep.mubr.f32.mxu0 0.0
      %v2064 = vand.u32 %v1506, 4294901760
      %v2065 = vsub.f32 %v1506, %v2064
      %2066 = vmatmul.mubr.f32.gmra.mrb[0].mxu0 %v2065
      %v2067 = vpop.f32.mrb[0].mxu0
      %v2068 = vadd.f32 %v1891, %v2067
      %v2069 = vpop.f32.mrb[0].mxu0
      %2070 = vmatprep.mubr.f32.mxu0 0.0
      %v2071 = vand.u32 %v1509, 4294901760
      %v2072 = vsub.f32 %v1509, %v2071
      %2073 = vmatmul.mubr.f32.gmra.mrb[0].mxu0 %v2072
      %v2074 = vpop.f32.mrb[0].mxu0
      %v2075 = vadd.f32 %v1897, %v2074
      %v2076 = vpop.f32.mrb[0].mxu0
      %2077 = vmatprep.mubr.f32.mxu0 0.0
      %v2078 = vand.u32 %v1512, 4294901760
      %v2079 = vsub.f32 %v1512, %v2078
      %2080 = vmatmul.mubr.f32.gmra.mrb[0].mxu0 %v2079
      %v2081 = vpop.f32.mrb[0].mxu0
      %v2082 = vadd.f32 %v1903, %v2081
      %v2083 = vpop.f32.mrb[0].mxu0
      %2084 = vmatprep.mubr.f32.mxu0 0.0
      %v2085 = vand.u32 %v1515, 4294901760
      %v2086 = vsub.f32 %v1515, %v2085
      %2087 = vmatmul.mubr.f32.gmra.mrb[0].mxu0 %v2086
      %v2088 = vpop.f32.mrb[0].mxu0
      %v2089 = vadd.f32 %v1909, %v2088
      %v2090 = vpop.f32.mrb[0].mxu0
      %2091 = vmatprep.mubr.f32.mxu0 0.0
      %v2092 = vand.u32 %v1518, 4294901760
      %v2093 = vsub.f32 %v1518, %v2092
      %2094 = vmatmul.mubr.f32.gmra.mrb[0].mxu0 %v2093
      %v2095 = vpop.f32.mrb[0].mxu0
      %v2096 = vadd.f32 %v1915, %v2095
      %v2097 = vpop.f32.mrb[0].mxu0
      %2098 = vdwg.mxu0
      %2099 = vmatprep.subr.mxu0 0.0
      %v2100 = vand.u32 %v1469, 4294901760
      %2101 = vmatpush1.msra.mxu0 %v2100
      %2102 = vmatprep.subr.mxu0 0.0
      %v2103 = vand.u32 %v1470, 4294901760
      %2104 = vmatpush1.msra.mxu0 %v2103
      %2105 = vmatprep.subr.mxu0 0.0
      %2106 = vmatpush1.msra.mxu0 0.0
      %2107 = vmatprep.subr.mxu0 0.0
      %2108 = vmatpush1.msra.mxu0 0.0
      %2109 = vmatprep.subr.mxu0 0.0
      %2110 = vmatpush1.msra.mxu0 0.0
      %2111 = vmatprep.subr.mxu0 0.0
      %2112 = vmatpush1.msra.mxu0 0.0
      %2113 = vmatprep.subr.mxu0 0.0
      %2114 = vmatpush1.msra.mxu0 0.0
      %2115 = vmatprep.subr.mxu0 0.0
      %2116 = vmatpush1.msra.mxu0 0.0
      %2117 = vmatprep.subr.mxu0 0.0
      %2118 = vmatpush1.msra.mxu0 0.0
      %2119 = vmatprep.subr.mxu0 0.0
      %2120 = vmatpush1.msra.mxu0 0.0
      %2121 = vmatprep.subr.mxu0 0.0
      %2122 = vmatpush1.msra.mxu0 0.0
      %2123 = vmatprep.subr.mxu0 0.0
      %2124 = vmatpush1.msra.mxu0 0.0
      %2125 = vmatprep.subr.mxu0 0.0
      %2126 = vmatpush1.msra.mxu0 0.0
      %2127 = vmatprep.subr.mxu0 0.0
      %2128 = vmatpush1.msra.mxu0 0.0
      %2129 = vmatprep.subr.mxu0 0.0
      %2130 = vmatpush1.msra.mxu0 0.0
      %2131 = vmatprep.subr.mxu0 0.0
      %2132 = vmatpush1.msra.mxu0 0.0
      %2133 = vmatprep.subr.mxu0 0.0
      %2134 = vmatpush1.msra.mxu0 0.0
      %2135 = vmatprep.subr.mxu0 0.0
      %2136 = vmatpush1.msra.mxu0 0.0
      %2137 = vmatprep.subr.mxu0 0.0
      %2138 = vmatpush1.msra.mxu0 0.0
      %2139 = vmatprep.subr.mxu0 0.0
      %2140 = vmatpush1.msra.mxu0 0.0
      %2141 = vmatprep.subr.mxu0 0.0
      %2142 = vmatpush1.msra.mxu0 0.0
      %2143 = vmatprep.subr.mxu0 0.0
      %2144 = vmatpush1.msra.mxu0 0.0
      %2145 = vmatprep.subr.mxu0 0.0
      %2146 = vmatpush1.msra.mxu0 0.0
      %2147 = vmatprep.subr.mxu0 0.0
      %2148 = vmatpush1.msra.mxu0 0.0
      %2149 = vmatprep.subr.mxu0 0.0
      %2150 = vmatpush1.msra.mxu0 0.0
      %2151 = vmatprep.subr.mxu0 0.0
      %2152 = vmatpush1.msra.mxu0 0.0
      %2153 = vmatprep.subr.mxu0 0.0
      %2154 = vmatpush1.msra.mxu0 0.0
      %2155 = vmatprep.subr.mxu0 0.0
      %2156 = vmatpush1.msra.mxu0 0.0
      %2157 = vmatprep.subr.mxu0 0.0
      %2158 = vmatpush1.msra.mxu0 0.0
      %2159 = vmatprep.subr.mxu0 0.0
      %2160 = vmatpush1.msra.mxu0 0.0
      %2161 = vmatprep.subr.mxu0 0.0
      %2162 = vmatpush1.msra.mxu0 0.0
      %2163 = vmatprep.subr.mxu0 0.0
      %2164 = vmatpush1.msra.mxu0 0.0
      %2165 = vmatprep.mubr.f32.mxu0 0.0
      %v2166 = vand.u32 %v1473, 4294901760
      %v2167 = vsub.f32 %v1473, %v2166
      %v2168 = vand.u32 %v2167, 4294901760
      %2169 = vmatmul.mubr.f32.gmra.mrb[0].mxu0 %v2168
      %v2170 = vpop.f32.mrb[0].mxu0
      %v2171 = vadd.f32 %v1991, %v2170
      %v2172 = vpop.f32.mrb[0].mxu0
      %2173 = vmatprep.mubr.f32.mxu0 0.0
      %v2174 = vand.u32 %v1476, 4294901760
      %v2175 = vsub.f32 %v1476, %v2174
      %v2176 = vand.u32 %v2175, 4294901760
      %2177 = vmatmul.mubr.f32.gmra.mrb[0].mxu0 %v2176
      %v2178 = vpop.f32.mrb[0].mxu0
      %v2179 = vadd.f32 %v1998, %v2178
      %v2180 = vpop.f32.mrb[0].mxu0
      %2181 = vmatprep.mubr.f32.mxu0 0.0
      %v2182 = vand.u32 %v1479, 4294901760
      %v2183 = vsub.f32 %v1479, %v2182
      %v2184 = vand.u32 %v2183, 4294901760
      %2185 = vmatmul.mubr.f32.gmra.mrb[0].mxu0 %v2184
      %v2186 = vpop.f32.mrb[0].mxu0
      %v2187 = vadd.f32 %v2005, %v2186
      %v2188 = vpop.f32.mrb[0].mxu0
      %2189 = vmatprep.mubr.f32.mxu0 0.0
      %v2190 = vand.u32 %v1482, 4294901760
      %v2191 = vsub.f32 %v1482, %v2190
      %v2192 = vand.u32 %v2191, 4294901760
      %2193 = vmatmul.mubr.f32.gmra.mrb[0].mxu0 %v2192
      %v2194 = vpop.f32.mrb[0].mxu0
      %v2195 = vadd.f32 %v2012, %v2194
      %v2196 = vpop.f32.mrb[0].mxu0
      %2197 = vmatprep.mubr.f32.mxu0 0.0
      %v2198 = vand.u32 %v1485, 4294901760
      %v2199 = vsub.f32 %v1485, %v2198
      %v2200 = vand.u32 %v2199, 4294901760
      %2201 = vmatmul.mubr.f32.gmra.mrb[0].mxu0 %v2200
      %v2202 = vpop.f32.mrb[0].mxu0
      %v2203 = vadd.f32 %v2019, %v2202
      %v2204 = vpop.f32.mrb[0].mxu0
      %2205 = vmatprep.mubr.f32.mxu0 0.0
      %v2206 = vand.u32 %v1488, 4294901760
      %v2207 = vsub.f32 %v1488, %v2206
      %v2208 = vand.u32 %v2207, 4294901760
      %2209 = vmatmul.mubr.f32.gmra.mrb[0].mxu0 %v2208
      %v2210 = vpop.f32.mrb[0].mxu0
      %v2211 = vadd.f32 %v2026, %v2210
      %v2212 = vpop.f32.mrb[0].mxu0
      %2213 = vmatprep.mubr.f32.mxu0 0.0
      %v2214 = vand.u32 %v1491, 4294901760
      %v2215 = vsub.f32 %v1491, %v2214
      %v2216 = vand.u32 %v2215, 4294901760
      %2217 = vmatmul.mubr.f32.gmra.mrb[0].mxu0 %v2216
      %v2218 = vpop.f32.mrb[0].mxu0
      %v2219 = vadd.f32 %v2033, %v2218
      %v2220 = vpop.f32.mrb[0].mxu0
      %2221 = vmatprep.mubr.f32.mxu0 0.0
      %v2222 = vand.u32 %v1494, 4294901760
      %v2223 = vsub.f32 %v1494, %v2222
      %v2224 = vand.u32 %v2223, 4294901760
      %2225 = vmatmul.mubr.f32.gmra.mrb[0].mxu0 %v2224
      %v2226 = vpop.f32.mrb[0].mxu0
      %v2227 = vadd.f32 %v2040, %v2226
      %v2228 = vpop.f32.mrb[0].mxu0
      %2229 = vmatprep.mubr.f32.mxu0 0.0
      %v2230 = vand.u32 %v1497, 4294901760
      %v2231 = vsub.f32 %v1497, %v2230
      %v2232 = vand.u32 %v2231, 4294901760
      %2233 = vmatmul.mubr.f32.gmra.mrb[0].mxu0 %v2232
      %v2234 = vpop.f32.mrb[0].mxu0
      %v2235 = vadd.f32 %v2047, %v2234
      %v2236 = vpop.f32.mrb[0].mxu0
      %2237 = vmatprep.mubr.f32.mxu0 0.0
      %v2238 = vand.u32 %v1500, 4294901760
      %v2239 = vsub.f32 %v1500, %v2238
      %v2240 = vand.u32 %v2239, 4294901760
      %2241 = vmatmul.mubr.f32.gmra.mrb[0].mxu0 %v2240
      %v2242 = vpop.f32.mrb[0].mxu0
      %v2243 = vadd.f32 %v2054, %v2242
      %v2244 = vpop.f32.mrb[0].mxu0
      %2245 = vmatprep.mubr.f32.mxu0 0.0
      %v2246 = vand.u32 %v1503, 4294901760
      %v2247 = vsub.f32 %v1503, %v2246
      %v2248 = vand.u32 %v2247, 4294901760
      %2249 = vmatmul.mubr.f32.gmra.mrb[0].mxu0 %v2248
      %v2250 = vpop.f32.mrb[0].mxu0
      %v2251 = vadd.f32 %v2061, %v2250
      %v2252 = vpop.f32.mrb[0].mxu0
      %2253 = vmatprep.mubr.f32.mxu0 0.0
      %v2254 = vand.u32 %v1506, 4294901760
      %v2255 = vsub.f32 %v1506, %v2254
      %v2256 = vand.u32 %v2255, 4294901760
      %2257 = vmatmul.mubr.f32.gmra.mrb[0].mxu0 %v2256
      %v2258 = vpop.f32.mrb[0].mxu0
      %v2259 = vadd.f32 %v2068, %v2258
      %v2260 = vpop.f32.mrb[0].mxu0
      %2261 = vmatprep.mubr.f32.mxu0 0.0
      %v2262 = vand.u32 %v1509, 4294901760
      %v2263 = vsub.f32 %v1509, %v2262
      %v2264 = vand.u32 %v2263, 4294901760
      %2265 = vmatmul.mubr.f32.gmra.mrb[0].mxu0 %v2264
      %v2266 = vpop.f32.mrb[0].mxu0
      %v2267 = vadd.f32 %v2075, %v2266
      %v2268 = vpop.f32.mrb[0].mxu0
      %2269 = vmatprep.mubr.f32.mxu0 0.0
      %v2270 = vand.u32 %v1512, 4294901760
      %v2271 = vsub.f32 %v1512, %v2270
      %v2272 = vand.u32 %v2271, 4294901760
      %2273 = vmatmul.mubr.f32.gmra.mrb[0].mxu0 %v2272
      %v2274 = vpop.f32.mrb[0].mxu0
      %v2275 = vadd.f32 %v2082, %v2274
      %v2276 = vpop.f32.mrb[0].mxu0
      %2277 = vmatprep.mubr.f32.mxu0 0.0
      %v2278 = vand.u32 %v1515, 4294901760
      %v2279 = vsub.f32 %v1515, %v2278
      %v2280 = vand.u32 %v2279, 4294901760
      %2281 = vmatmul.mubr.f32.gmra.mrb[0].mxu0 %v2280
      %v2282 = vpop.f32.mrb[0].mxu0
      %v2283 = vadd.f32 %v2089, %v2282
      %v2284 = vpop.f32.mrb[0].mxu0
      %2285 = vmatprep.mubr.f32.mxu0 0.0
      %v2286 = vand.u32 %v1518, 4294901760
      %v2287 = vsub.f32 %v1518, %v2286
      %v2288 = vand.u32 %v2287, 4294901760
      %2289 = vmatmul.mubr.f32.gmra.mrb[0].mxu0 %v2288
      %v2290 = vpop.f32.mrb[0].mxu0
      %v2291 = vadd.f32 %v2096, %v2290
      %v2292 = vpop.f32.mrb[0].mxu0
      %2293 = vdwg.mxu0
      %2294 = vmatprep.subr.mxu0 0.0
      %v2295 = vand.u32 %v1469, 4294901760
      %v2296 = vsub.f32 %v1469, %v2295
      %v2297 = vand.u32 %v2296, 4294901760
      %2298 = vmatpush1.msra.mxu0 %v2297
      %2299 = vmatprep.subr.mxu0 0.0
      %v2300 = vand.u32 %v1470, 4294901760
      %v2301 = vsub.f32 %v1470, %v2300
      %v2302 = vand.u32 %v2301, 4294901760
      %2303 = vmatpush1.msra.mxu0 %v2302
      %2304 = vmatprep.subr.mxu0 0.0
      %2305 = vmatpush1.msra.mxu0 0.0
      %2306 = vmatprep.subr.mxu0 0.0
      %2307 = vmatpush1.msra.mxu0 0.0
      %2308 = vmatprep.subr.mxu0 0.0
      %2309 = vmatpush1.msra.mxu0 0.0
      %2310 = vmatprep.subr.mxu0 0.0
      %2311 = vmatpush1.msra.mxu0 0.0
      %2312 = vmatprep.subr.mxu0 0.0
      %2313 = vmatpush1.msra.mxu0 0.0
      %2314 = vmatprep.subr.mxu0 0.0
      %2315 = vmatpush1.msra.mxu0 0.0
      %2316 = vmatprep.subr.mxu0 0.0
      %2317 = vmatpush1.msra.mxu0 0.0
      %2318 = vmatprep.subr.mxu0 0.0
      %2319 = vmatpush1.msra.mxu0 0.0
      %2320 = vmatprep.subr.mxu0 0.0
      %2321 = vmatpush1.msra.mxu0 0.0
      %2322 = vmatprep.subr.mxu0 0.0
      %2323 = vmatpush1.msra.mxu0 0.0
      %2324 = vmatprep.subr.mxu0 0.0
      %2325 = vmatpush1.msra.mxu0 0.0
      %2326 = vmatprep.subr.mxu0 0.0
      %2327 = vmatpush1.msra.mxu0 0.0
      %2328 = vmatprep.subr.mxu0 0.0
      %2329 = vmatpush1.msra.mxu0 0.0
      %2330 = vmatprep.subr.mxu0 0.0
      %2331 = vmatpush1.msra.mxu0 0.0
      %2332 = vmatprep.subr.mxu0 0.0
      %2333 = vmatpush1.msra.mxu0 0.0
      %2334 = vmatprep.subr.mxu0 0.0
      %2335 = vmatpush1.msra.mxu0 0.0
      %2336 = vmatprep.subr.mxu0 0.0
      %2337 = vmatpush1.msra.mxu0 0.0
      %2338 = vmatprep.subr.mxu0 0.0
      %2339 = vmatpush1.msra.mxu0 0.0
      %2340 = vmatprep.subr.mxu0 0.0
      %2341 = vmatpush1.msra.mxu0 0.0
      %2342 = vmatprep.subr.mxu0 0.0
      %2343 = vmatpush1.msra.mxu0 0.0
      %2344 = vmatprep.subr.mxu0 0.0
      %2345 = vmatpush1.msra.mxu0 0.0
      %2346 = vmatprep.subr.mxu0 0.0
      %2347 = vmatpush1.msra.mxu0 0.0
      %2348 = vmatprep.subr.mxu0 0.0
      %2349 = vmatpush1.msra.mxu0 0.0
      %2350 = vmatprep.subr.mxu0 0.0
      %2351 = vmatpush1.msra.mxu0 0.0
      %2352 = vmatprep.subr.mxu0 0.0
      %2353 = vmatpush1.msra.mxu0 0.0
      %2354 = vmatprep.subr.mxu0 0.0
      %2355 = vmatpush1.msra.mxu0 0.0
      %2356 = vmatprep.subr.mxu0 0.0
      %2357 = vmatpush1.msra.mxu0 0.0
      %2358 = vmatprep.subr.mxu0 0.0
      %2359 = vmatpush1.msra.mxu0 0.0
      %2360 = vmatprep.subr.mxu0 0.0
      %2361 = vmatpush1.msra.mxu0 0.0
      %2362 = vmatprep.subr.mxu0 0.0
      %2363 = vmatpush1.msra.mxu0 0.0
      %2364 = vmatprep.mubr.f32.mxu0 0.0
      %v2365 = vand.u32 %v1473, 4294901760
      %2366 = vmatmul.mubr.f32.gmra.mrb[0].mxu0 %v2365
      %v2367 = vpop.f32.mrb[0].mxu0
      %v2368 = vadd.f32 %v2171, %v2367
      %v2369 = vpop.f32.mrb[0].mxu0
      %2370 = vmatprep.mubr.f32.mxu0 0.0
      %v2371 = vand.u32 %v1476, 4294901760
      %2372 = vmatmul.mubr.f32.gmra.mrb[0].mxu0 %v2371
      %v2373 = vpop.f32.mrb[0].mxu0
      %v2374 = vadd.f32 %v2179, %v2373
      %v2375 = vpop.f32.mrb[0].mxu0
      %2376 = vmatprep.mubr.f32.mxu0 0.0
      %v2377 = vand.u32 %v1479, 4294901760
      %2378 = vmatmul.mubr.f32.gmra.mrb[0].mxu0 %v2377
      %v2379 = vpop.f32.mrb[0].mxu0
      %v2380 = vadd.f32 %v2187, %v2379
      %v2381 = vpop.f32.mrb[0].mxu0
      %2382 = vmatprep.mubr.f32.mxu0 0.0
      %v2383 = vand.u32 %v1482, 4294901760
      %2384 = vmatmul.mubr.f32.gmra.mrb[0].mxu0 %v2383
      %v2385 = vpop.f32.mrb[0].mxu0
      %v2386 = vadd.f32 %v2195, %v2385
      %v2387 = vpop.f32.mrb[0].mxu0
      %2388 = vmatprep.mubr.f32.mxu0 0.0
      %v2389 = vand.u32 %v1485, 4294901760
      %2390 = vmatmul.mubr.f32.gmra.mrb[0].mxu0 %v2389
      %v2391 = vpop.f32.mrb[0].mxu0
      %v2392 = vadd.f32 %v2203, %v2391
      %v2393 = vpop.f32.mrb[0].mxu0
      %2394 = vmatprep.mubr.f32.mxu0 0.0
      %v2395 = vand.u32 %v1488, 4294901760
      %2396 = vmatmul.mubr.f32.gmra.mrb[0].mxu0 %v2395
      %v2397 = vpop.f32.mrb[0].mxu0
      %v2398 = vadd.f32 %v2211, %v2397
      %v2399 = vpop.f32.mrb[0].mxu0
      %2400 = vmatprep.mubr.f32.mxu0 0.0
      %v2401 = vand.u32 %v1491, 4294901760
      %2402 = vmatmul.mubr.f32.gmra.mrb[0].mxu0 %v2401
      %v2403 = vpop.f32.mrb[0].mxu0
      %v2404 = vadd.f32 %v2219, %v2403
      %v2405 = vpop.f32.mrb[0].mxu0
      %2406 = vmatprep.mubr.f32.mxu0 0.0
      %v2407 = vand.u32 %v1494, 4294901760
      %2408 = vmatmul.mubr.f32.gmra.mrb[0].mxu0 %v2407
      %v2409 = vpop.f32.mrb[0].mxu0
      %v2410 = vadd.f32 %v2227, %v2409
      %v2411 = vpop.f32.mrb[0].mxu0
      %2412 = vmatprep.mubr.f32.mxu0 0.0
      %v2413 = vand.u32 %v1497, 4294901760
      %2414 = vmatmul.mubr.f32.gmra.mrb[0].mxu0 %v2413
      %v2415 = vpop.f32.mrb[0].mxu0
      %v2416 = vadd.f32 %v2235, %v2415
      %v2417 = vpop.f32.mrb[0].mxu0
      %2418 = vmatprep.mubr.f32.mxu0 0.0
      %v2419 = vand.u32 %v1500, 4294901760
      %2420 = vmatmul.mubr.f32.gmra.mrb[0].mxu0 %v2419
      %v2421 = vpop.f32.mrb[0].mxu0
      %v2422 = vadd.f32 %v2243, %v2421
      %v2423 = vpop.f32.mrb[0].mxu0
      %2424 = vmatprep.mubr.f32.mxu0 0.0
      %v2425 = vand.u32 %v1503, 4294901760
      %2426 = vmatmul.mubr.f32.gmra.mrb[0].mxu0 %v2425
      %v2427 = vpop.f32.mrb[0].mxu0
      %v2428 = vadd.f32 %v2251, %v2427
      %v2429 = vpop.f32.mrb[0].mxu0
      %2430 = vmatprep.mubr.f32.mxu0 0.0
      %v2431 = vand.u32 %v1506, 4294901760
      %2432 = vmatmul.mubr.f32.gmra.mrb[0].mxu0 %v2431
      %v2433 = vpop.f32.mrb[0].mxu0
      %v2434 = vadd.f32 %v2259, %v2433
      %v2435 = vpop.f32.mrb[0].mxu0
      %2436 = vmatprep.mubr.f32.mxu0 0.0
      %v2437 = vand.u32 %v1509, 4294901760
      %2438 = vmatmul.mubr.f32.gmra.mrb[0].mxu0 %v2437
      %v2439 = vpop.f32.mrb[0].mxu0
      %v2440 = vadd.f32 %v2267, %v2439
      %v2441 = vpop.f32.mrb[0].mxu0
      %2442 = vmatprep.mubr.f32.mxu0 0.0
      %v2443 = vand.u32 %v1512, 4294901760
      %2444 = vmatmul.mubr.f32.gmra.mrb[0].mxu0 %v2443
      %v2445 = vpop.f32.mrb[0].mxu0
      %v2446 = vadd.f32 %v2275, %v2445
      %v2447 = vpop.f32.mrb[0].mxu0
      %2448 = vmatprep.mubr.f32.mxu0 0.0
      %v2449 = vand.u32 %v1515, 4294901760
      %2450 = vmatmul.mubr.f32.gmra.mrb[0].mxu0 %v2449
      %v2451 = vpop.f32.mrb[0].mxu0
      %v2452 = vadd.f32 %v2283, %v2451
      %v2453 = vpop.f32.mrb[0].mxu0
      %2454 = vmatprep.mubr.f32.mxu0 0.0
      %v2455 = vand.u32 %v1518, 4294901760
      %2456 = vmatmul.mubr.f32.gmra.mrb[0].mxu0 %v2455
      %v2457 = vpop.f32.mrb[0].mxu0
      %v2458 = vadd.f32 %v2291, %v2457
      %v2459 = vpop.f32.mrb[0].mxu0
      %2460 = vdwg.mxu0
      %2461 = vmatprep.subr.mxu0 0.0
      %v2462 = vand.u32 %v1469, 4294901760
      %2463 = vmatpush1.msra.mxu0 %v2462
      %2464 = vmatprep.subr.mxu0 0.0
      %v2465 = vand.u32 %v1470, 4294901760
      %2466 = vmatpush1.msra.mxu0 %v2465
      %2467 = vmatprep.subr.mxu0 0.0
      %2468 = vmatpush1.msra.mxu0 0.0
      %2469 = vmatprep.subr.mxu0 0.0
      %2470 = vmatpush1.msra.mxu0 0.0
      %2471 = vmatprep.subr.mxu0 0.0
      %2472 = vmatpush1.msra.mxu0 0.0
      %2473 = vmatprep.subr.mxu0 0.0
      %2474 = vmatpush1.msra.mxu0 0.0
      %2475 = vmatprep.subr.mxu0 0.0
      %2476 = vmatpush1.msra.mxu0 0.0
      %2477 = vmatprep.subr.mxu0 0.0
      %2478 = vmatpush1.msra.mxu0 0.0
      %2479 = vmatprep.subr.mxu0 0.0
      %2480 = vmatpush1.msra.mxu0 0.0
      %2481 = vmatprep.subr.mxu0 0.0
      %2482 = vmatpush1.msra.mxu0 0.0
      %2483 = vmatprep.subr.mxu0 0.0
      %2484 = vmatpush1.msra.mxu0 0.0
      %2485 = vmatprep.subr.mxu0 0.0
      %2486 = vmatpush1.msra.mxu0 0.0
      %2487 = vmatprep.subr.mxu0 0.0
      %2488 = vmatpush1.msra.mxu0 0.0
      %2489 = vmatprep.subr.mxu0 0.0
      %2490 = vmatpush1.msra.mxu0 0.0
      %2491 = vmatprep.subr.mxu0 0.0
      %2492 = vmatpush1.msra.mxu0 0.0
      %2493 = vmatprep.subr.mxu0 0.0
      %2494 = vmatpush1.msra.mxu0 0.0
      %2495 = vmatprep.subr.mxu0 0.0
      %2496 = vmatpush1.msra.mxu0 0.0
      %2497 = vmatprep.subr.mxu0 0.0
      %2498 = vmatpush1.msra.mxu0 0.0
      %2499 = vmatprep.subr.mxu0 0.0
      %2500 = vmatpush1.msra.mxu0 0.0
      %2501 = vmatprep.subr.mxu0 0.0
      %2502 = vmatpush1.msra.mxu0 0.0
      %2503 = vmatprep.subr.mxu0 0.0
      %2504 = vmatpush1.msra.mxu0 0.0
      %2505 = vmatprep.subr.mxu0 0.0
      %2506 = vmatpush1.msra.mxu0 0.0
      %2507 = vmatprep.subr.mxu0 0.0
      %2508 = vmatpush1.msra.mxu0 0.0
      %2509 = vmatprep.subr.mxu0 0.0
      %2510 = vmatpush1.msra.mxu0 0.0
      %2511 = vmatprep.subr.mxu0 0.0
      %2512 = vmatpush1.msra.mxu0 0.0
      %2513 = vmatprep.subr.mxu0 0.0
      %2514 = vmatpush1.msra.mxu0 0.0
      %2515 = vmatprep.subr.mxu0 0.0
      %2516 = vmatpush1.msra.mxu0 0.0
      %2517 = vmatprep.subr.mxu0 0.0
      %2518 = vmatpush1.msra.mxu0 0.0
      %2519 = vmatprep.subr.mxu0 0.0
      %2520 = vmatpush1.msra.mxu0 0.0
      %2521 = vmatprep.subr.mxu0 0.0
      %2522 = vmatpush1.msra.mxu0 0.0
      %2523 = vmatprep.subr.mxu0 0.0
      %2524 = vmatpush1.msra.mxu0 0.0
      %2525 = vmatprep.subr.mxu0 0.0
      %2526 = vmatpush1.msra.mxu0 0.0
      %2527 = vmatprep.mubr.f32.mxu0 0.0
      %v2528 = vand.u32 %v1473, 4294901760
      %2529 = vmatmul.mubr.f32.gmra.mrb[0].mxu0 %v2528
      %v2530 = vpop.f32.mrb[0].mxu0
      %v2531 = vadd.f32 %v2368, %v2530
      %v2532 = vpop.f32.mrb[0].mxu0
      %2533 = vmatprep.mubr.f32.mxu0 0.0
      %v2534 = vand.u32 %v1476, 4294901760
      %2535 = vmatmul.mubr.f32.gmra.mrb[0].mxu0 %v2534
      %v2536 = vpop.f32.mrb[0].mxu0
      %v2537 = vadd.f32 %v2374, %v2536
      %v2538 = vpop.f32.mrb[0].mxu0
      %2539 = vmatprep.mubr.f32.mxu0 0.0
      %v2540 = vand.u32 %v1479, 4294901760
      %2541 = vmatmul.mubr.f32.gmra.mrb[0].mxu0 %v2540
      %v2542 = vpop.f32.mrb[0].mxu0
      %v2543 = vadd.f32 %v2380, %v2542
      %v2544 = vpop.f32.mrb[0].mxu0
      %2545 = vmatprep.mubr.f32.mxu0 0.0
      %v2546 = vand.u32 %v1482, 4294901760
      %2547 = vmatmul.mubr.f32.gmra.mrb[0].mxu0 %v2546
      %v2548 = vpop.f32.mrb[0].mxu0
      %v2549 = vadd.f32 %v2386, %v2548
      %v2550 = vpop.f32.mrb[0].mxu0
      %2551 = vmatprep.mubr.f32.mxu0 0.0
      %v2552 = vand.u32 %v1485, 4294901760
      %2553 = vmatmul.mubr.f32.gmra.mrb[0].mxu0 %v2552
      %v2554 = vpop.f32.mrb[0].mxu0
      %v2555 = vadd.f32 %v2392, %v2554
      %v2556 = vpop.f32.mrb[0].mxu0
      %2557 = vmatprep.mubr.f32.mxu0 0.0
      %v2558 = vand.u32 %v1488, 4294901760
      %2559 = vmatmul.mubr.f32.gmra.mrb[0].mxu0 %v2558
      %v2560 = vpop.f32.mrb[0].mxu0
      %v2561 = vadd.f32 %v2398, %v2560
      %v2562 = vpop.f32.mrb[0].mxu0
      %2563 = vmatprep.mubr.f32.mxu0 0.0
      %v2564 = vand.u32 %v1491, 4294901760
      %2565 = vmatmul.mubr.f32.gmra.mrb[0].mxu0 %v2564
      %v2566 = vpop.f32.mrb[0].mxu0
      %v2567 = vadd.f32 %v2404, %v2566
      %v2568 = vpop.f32.mrb[0].mxu0
      %2569 = vmatprep.mubr.f32.mxu0 0.0
      %v2570 = vand.u32 %v1494, 4294901760
      %2571 = vmatmul.mubr.f32.gmra.mrb[0].mxu0 %v2570
      %v2572 = vpop.f32.mrb[0].mxu0
      %v2573 = vadd.f32 %v2410, %v2572
      %v2574 = vpop.f32.mrb[0].mxu0
      %2575 = vmatprep.mubr.f32.mxu0 0.0
      %v2576 = vand.u32 %v1497, 4294901760
      %2577 = vmatmul.mubr.f32.gmra.mrb[0].mxu0 %v2576
      %v2578 = vpop.f32.mrb[0].mxu0
      %v2579 = vadd.f32 %v2416, %v2578
      %v2580 = vpop.f32.mrb[0].mxu0
      %2581 = vmatprep.mubr.f32.mxu0 0.0
      %v2582 = vand.u32 %v1500, 4294901760
      %2583 = vmatmul.mubr.f32.gmra.mrb[0].mxu0 %v2582
      %v2584 = vpop.f32.mrb[0].mxu0
      %v2585 = vadd.f32 %v2422, %v2584
      %v2586 = vpop.f32.mrb[0].mxu0
      %2587 = vmatprep.mubr.f32.mxu0 0.0
      %v2588 = vand.u32 %v1503, 4294901760
      %2589 = vmatmul.mubr.f32.gmra.mrb[0].mxu0 %v2588
      %v2590 = vpop.f32.mrb[0].mxu0
      %v2591 = vadd.f32 %v2428, %v2590
      %v2592 = vpop.f32.mrb[0].mxu0
      %2593 = vmatprep.mubr.f32.mxu0 0.0
      %v2594 = vand.u32 %v1506, 4294901760
      %2595 = vmatmul.mubr.f32.gmra.mrb[0].mxu0 %v2594
      %v2596 = vpop.f32.mrb[0].mxu0
      %v2597 = vadd.f32 %v2434, %v2596
      %v2598 = vpop.f32.mrb[0].mxu0
      %2599 = vmatprep.mubr.f32.mxu0 0.0
      %v2600 = vand.u32 %v1509, 4294901760
      %2601 = vmatmul.mubr.f32.gmra.mrb[0].mxu0 %v2600
      %v2602 = vpop.f32.mrb[0].mxu0
      %v2603 = vadd.f32 %v2440, %v2602
      %v2604 = vpop.f32.mrb[0].mxu0
      %2605 = vmatprep.mubr.f32.mxu0 0.0
      %v2606 = vand.u32 %v1512, 4294901760
      %2607 = vmatmul.mubr.f32.gmra.mrb[0].mxu0 %v2606
      %v2608 = vpop.f32.mrb[0].mxu0
      %v2609 = vadd.f32 %v2446, %v2608
      %v2610 = vpop.f32.mrb[0].mxu0
      %2611 = vmatprep.mubr.f32.mxu0 0.0
      %v2612 = vand.u32 %v1515, 4294901760
      %2613 = vmatmul.mubr.f32.gmra.mrb[0].mxu0 %v2612
      %v2614 = vpop.f32.mrb[0].mxu0
      %v2615 = vadd.f32 %v2452, %v2614
      %v2616 = vpop.f32.mrb[0].mxu0
      %2617 = vmatprep.mubr.f32.mxu0 0.0
      %v2618 = vand.u32 %v1518, 4294901760
      %2619 = vmatmul.mubr.f32.gmra.mrb[0].mxu0 %v2618
      %v2620 = vpop.f32.mrb[0].mxu0
      %v2621 = vadd.f32 %v2458, %v2620
      %v2622 = vpop.f32.mrb[0].mxu0
      %2623 = vdwg.mxu0
      %2625 = vset.pattern.permute.xlu0 0
      %2626 = vperm.xlu0 %2625, %v198
      %v2627 = vpop.permute.xlu0 %2626
      %2630 = vset.pattern.permute.xlu0 0
      %2631 = vperm.xlu0 %2630, %v199
      %v2632 = vpop.permute.xlu0 %2631
      %2635 = vset.pattern.permute.xlu0 0
      %2636 = vperm.xlu0 %2635, %v200
      %v2637 = vpop.permute.xlu0 %2636
      %2640 = vset.pattern.permute.xlu0 0
      %2641 = vperm.xlu0 %2640, %v201
      %v2642 = vpop.permute.xlu0 %2641
      %2645 = vset.pattern.permute.xlu0 0
      %2646 = vperm.xlu0 %2645, %v202
      %v2647 = vpop.permute.xlu0 %2646
      %2650 = vset.pattern.permute.xlu0 0
      %2651 = vperm.xlu0 %2650, %v203
      %v2652 = vpop.permute.xlu0 %2651
      %2655 = vset.pattern.permute.xlu0 0
      %2656 = vperm.xlu0 %2655, %v204
      %v2657 = vpop.permute.xlu0 %2656
      %2660 = vset.pattern.permute.xlu0 0
      %2661 = vperm.xlu0 %2660, %v205
      %v2662 = vpop.permute.xlu0 %2661
      %2665 = vset.pattern.permute.xlu0 0
      %2666 = vperm.xlu0 %2665, %v206
      %v2667 = vpop.permute.xlu0 %2666
      %2670 = vset.pattern.permute.xlu0 0
      %2671 = vperm.xlu0 %2670, %v207
      %v2672 = vpop.permute.xlu0 %2671
      %2675 = vset.pattern.permute.xlu0 0
      %2676 = vperm.xlu0 %2675, %v208
      %v2677 = vpop.permute.xlu0 %2676
      %2680 = vset.pattern.permute.xlu0 0
      %2681 = vperm.xlu0 %2680, %v209
      %v2682 = vpop.permute.xlu0 %2681
      %2685 = vset.pattern.permute.xlu0 0
      %2686 = vperm.xlu0 %2685, %v210
      %v2687 = vpop.permute.xlu0 %2686
      %2690 = vset.pattern.permute.xlu0 0
      %2691 = vperm.xlu0 %2690, %v211
      %v2692 = vpop.permute.xlu0 %2691
      %2695 = vset.pattern.permute.xlu0 0
      %2696 = vperm.xlu0 %2695, %v212
      %v2697 = vpop.permute.xlu0 %2696
      %2700 = vset.pattern.permute.xlu0 0
      %2701 = vperm.xlu0 %2700, %v213
      %v2702 = vpop.permute.xlu0 %2701
      %v2704 = vadd.f32 %v2627, %v2531
      %v2705 = vadd.f32 %v2632, %v2537
      %v2706 = vadd.f32 %v2637, %v2543
      %v2707 = vadd.f32 %v2642, %v2549
      %v2708 = vadd.f32 %v2647, %v2555
      %v2709 = vadd.f32 %v2652, %v2561
      %v2710 = vadd.f32 %v2657, %v2567
      %v2711 = vadd.f32 %v2662, %v2573
      %v2712 = vadd.f32 %v2667, %v2579
      %v2713 = vadd.f32 %v2672, %v2585
      %v2714 = vadd.f32 %v2677, %v2591
      %v2715 = vadd.f32 %v2682, %v2597
      %v2716 = vadd.f32 %v2687, %v2603
      %v2717 = vadd.f32 %v2692, %v2609
      %v2718 = vadd.f32 %v2697, %v2615
      %v2719 = vadd.f32 %v2702, %v2621
      %s2720 = scalar_lea.vmem %s1, 128
      %v2721 = vld [vmem:[%s2720] sm:$0xff]
      %v2722 = vld [vmem:[%s2720 + $0x8] sm:$0xff]
      %v2723 = vld [vmem:[%s2720 + $0x10] sm:$0xff]
      %v2724 = vld [vmem:[%s2720 + $0x18] sm:$0xff]
      %v2725 = vld [vmem:[%s2720 + $0x20] sm:$0xff]
      %v2726 = vld [vmem:[%s2720 + $0x28] sm:$0xff]
      %v2727 = vld [vmem:[%s2720 + $0x30] sm:$0xff]
      %v2728 = vld [vmem:[%s2720 + $0x38] sm:$0xff]
      %v2729 = vld [vmem:[%s2720 + $0x40] sm:$0xff]
      %v2730 = vld [vmem:[%s2720 + $0x48] sm:$0xff]
      %v2731 = vld [vmem:[%s2720 + $0x50] sm:$0xff]
      %v2732 = vld [vmem:[%s2720 + $0x58] sm:$0xff]
      %v2733 = vld [vmem:[%s2720 + $0x60] sm:$0xff]
      %v2734 = vld [vmem:[%s2720 + $0x68] sm:$0xff]
      %v2735 = vld [vmem:[%s2720 + $0x70] sm:$0xff]
      %v2736 = vld [vmem:[%s2720 + $0x78] sm:$0xff]
      %v2738 = vsel %vm238, %v2721, 0
      %v2741 = vsel %vm238, %v2722, 0
      %v2744 = vsel %vm238, %v2723, 0
      %v2747 = vsel %vm238, %v2724, 0
      %v2750 = vsel %vm238, %v2725, 0
      %v2753 = vsel %vm238, %v2726, 0
      %v2756 = vsel %vm238, %v2727, 0
      %v2759 = vsel %vm238, %v2728, 0
      %v2762 = vsel %vm238, %v2729, 0
      %v2765 = vsel %vm238, %v2730, 0
      %v2768 = vsel %vm238, %v2731, 0
      %v2771 = vsel %vm238, %v2732, 0
      %v2774 = vsel %vm238, %v2733, 0
      %v2777 = vsel %vm238, %v2734, 0
      %v2780 = vsel %vm238, %v2735, 0
      %v2783 = vsel %vm238, %v2736, 0
      %2785 = vmatprep.subr.mxu0 0.0
      %v2786 = vand.u32 %v214, 4294901760
      %2787 = vmatpush1.msra.mxu0 %v2786
      %2788 = vmatprep.subr.mxu0 0.0
      %v2789 = vand.u32 %v215, 4294901760
      %2790 = vmatpush1.msra.mxu0 %v2789
      %2791 = vmatprep.subr.mxu0 0.0
      %v2792 = vand.u32 %v216, 4294901760
      %2793 = vmatpush1.msra.mxu0 %v2792
      %2794 = vmatprep.subr.mxu0 0.0
      %v2795 = vand.u32 %v217, 4294901760
      %2796 = vmatpush1.msra.mxu0 %v2795
      %2797 = vmatprep.subr.mxu0 0.0
      %v2798 = vand.u32 %v218, 4294901760
      %2799 = vmatpush1.msra.mxu0 %v2798
      %2800 = vmatprep.subr.mxu0 0.0
      %v2801 = vand.u32 %v219, 4294901760
      %2802 = vmatpush1.msra.mxu0 %v2801
      %2803 = vmatprep.subr.mxu0 0.0
      %v2804 = vand.u32 %v220, 4294901760
      %2805 = vmatpush1.msra.mxu0 %v2804
      %2806 = vmatprep.subr.mxu0 0.0
      %v2807 = vand.u32 %v221, 4294901760
      %2808 = vmatpush1.msra.mxu0 %v2807
      %2809 = vmatprep.subr.mxu0 0.0
      %2810 = vmatpush1.msra.mxu0 0.0
      %2811 = vmatprep.subr.mxu0 0.0
      %2812 = vmatpush1.msra.mxu0 0.0
      %2813 = vmatprep.subr.mxu0 0.0
      %2814 = vmatpush1.msra.mxu0 0.0
      %2815 = vmatprep.subr.mxu0 0.0
      %2816 = vmatpush1.msra.mxu0 0.0
      %2817 = vmatprep.subr.mxu0 0.0
      %2818 = vmatpush1.msra.mxu0 0.0
      %2819 = vmatprep.subr.mxu0 0.0
      %2820 = vmatpush1.msra.mxu0 0.0
      %2821 = vmatprep.subr.mxu0 0.0
      %2822 = vmatpush1.msra.mxu0 0.0
      %2823 = vmatprep.subr.mxu0 0.0
      %2824 = vmatpush1.msra.mxu0 0.0
      %2825 = vmatprep.subr.mxu0 0.0
      %2826 = vmatpush1.msra.mxu0 0.0
      %2827 = vmatprep.subr.mxu0 0.0
      %2828 = vmatpush1.msra.mxu0 0.0
      %2829 = vmatprep.subr.mxu0 0.0
      %2830 = vmatpush1.msra.mxu0 0.0
      %2831 = vmatprep.subr.mxu0 0.0
      %2832 = vmatpush1.msra.mxu0 0.0
      %2833 = vmatprep.subr.mxu0 0.0
      %2834 = vmatpush1.msra.mxu0 0.0
      %2835 = vmatprep.subr.mxu0 0.0
      %2836 = vmatpush1.msra.mxu0 0.0
      %2837 = vmatprep.subr.mxu0 0.0
      %2838 = vmatpush1.msra.mxu0 0.0
      %2839 = vmatprep.subr.mxu0 0.0
      %2840 = vmatpush1.msra.mxu0 0.0
      %2841 = vmatprep.subr.mxu0 0.0
      %2842 = vmatpush1.msra.mxu0 0.0
      %2843 = vmatprep.subr.mxu0 0.0
      %2844 = vmatpush1.msra.mxu0 0.0
      %2845 = vmatprep.subr.mxu0 0.0
      %2846 = vmatpush1.msra.mxu0 0.0
      %2847 = vmatprep.subr.mxu0 0.0
      %2848 = vmatpush1.msra.mxu0 0.0
      %2849 = vmatprep.subr.mxu0 0.0
      %2850 = vmatpush1.msra.mxu0 0.0
      %2851 = vmatprep.subr.mxu0 0.0
      %2852 = vmatpush1.msra.mxu0 0.0
      %2853 = vmatprep.subr.mxu0 0.0
      %2854 = vmatpush1.msra.mxu0 0.0
      %2855 = vmatprep.subr.mxu0 0.0
      %2856 = vmatpush1.msra.mxu0 0.0
      %2857 = vmatprep.mubr.f32.mxu0 0.0
      %v2858 = vand.u32 %v2738, 4294901760
      %v2859 = vsub.f32 %v2738, %v2858
      %v2860 = vand.u32 %v2859, 4294901760
      %v2861 = vsub.f32 %v2859, %v2860
      %v2862 = vand.u32 %v2861, 4294901760
      %2863 = vmatmul.mubr.f32.gmra.mrb[0].mxu0 %v2862
      %v2864 = vpop.f32.mrb[0].mxu0
      %v2865 = vadd.f32 0.0, %v2864
      %v2866 = vpop.f32.mrb[0].mxu0
      %2867 = vmatprep.mubr.f32.mxu0 0.0
      %v2868 = vand.u32 %v2741, 4294901760
      %v2869 = vsub.f32 %v2741, %v2868
      %v2870 = vand.u32 %v2869, 4294901760
      %v2871 = vsub.f32 %v2869, %v2870
      %v2872 = vand.u32 %v2871, 4294901760
      %2873 = vmatmul.mubr.f32.gmra.mrb[0].mxu0 %v2872
      %v2874 = vpop.f32.mrb[0].mxu0
      %v2875 = vadd.f32 0.0, %v2874
      %v2876 = vpop.f32.mrb[0].mxu0
      %2877 = vmatprep.mubr.f32.mxu0 0.0
      %v2878 = vand.u32 %v2744, 4294901760
      %v2879 = vsub.f32 %v2744, %v2878
      %v2880 = vand.u32 %v2879, 4294901760
      %v2881 = vsub.f32 %v2879, %v2880
      %v2882 = vand.u32 %v2881, 4294901760
      %2883 = vmatmul.mubr.f32.gmra.mrb[0].mxu0 %v2882
      %v2884 = vpop.f32.mrb[0].mxu0
      %v2885 = vadd.f32 0.0, %v2884
      %v2886 = vpop.f32.mrb[0].mxu0
      %2887 = vmatprep.mubr.f32.mxu0 0.0
      %v2888 = vand.u32 %v2747, 4294901760
      %v2889 = vsub.f32 %v2747, %v2888
      %v2890 = vand.u32 %v2889, 4294901760
      %v2891 = vsub.f32 %v2889, %v2890
      %v2892 = vand.u32 %v2891, 4294901760
      %2893 = vmatmul.mubr.f32.gmra.mrb[0].mxu0 %v2892
      %v2894 = vpop.f32.mrb[0].mxu0
      %v2895 = vadd.f32 0.0, %v2894
      %v2896 = vpop.f32.mrb[0].mxu0
      %2897 = vmatprep.mubr.f32.mxu0 0.0
      %v2898 = vand.u32 %v2750, 4294901760
      %v2899 = vsub.f32 %v2750, %v2898
      %v2900 = vand.u32 %v2899, 4294901760
      %v2901 = vsub.f32 %v2899, %v2900
      %v2902 = vand.u32 %v2901, 4294901760
      %2903 = vmatmul.mubr.f32.gmra.mrb[0].mxu0 %v2902
      %v2904 = vpop.f32.mrb[0].mxu0
      %v2905 = vadd.f32 0.0, %v2904
      %v2906 = vpop.f32.mrb[0].mxu0
      %2907 = vmatprep.mubr.f32.mxu0 0.0
      %v2908 = vand.u32 %v2753, 4294901760
      %v2909 = vsub.f32 %v2753, %v2908
      %v2910 = vand.u32 %v2909, 4294901760
      %v2911 = vsub.f32 %v2909, %v2910
      %v2912 = vand.u32 %v2911, 4294901760
      %2913 = vmatmul.mubr.f32.gmra.mrb[0].mxu0 %v2912
      %v2914 = vpop.f32.mrb[0].mxu0
      %v2915 = vadd.f32 0.0, %v2914
      %v2916 = vpop.f32.mrb[0].mxu0
      %2917 = vmatprep.mubr.f32.mxu0 0.0
      %v2918 = vand.u32 %v2756, 4294901760
      %v2919 = vsub.f32 %v2756, %v2918
      %v2920 = vand.u32 %v2919, 4294901760
      %v2921 = vsub.f32 %v2919, %v2920
      %v2922 = vand.u32 %v2921, 4294901760
      %2923 = vmatmul.mubr.f32.gmra.mrb[0].mxu0 %v2922
      %v2924 = vpop.f32.mrb[0].mxu0
      %v2925 = vadd.f32 0.0, %v2924
      %v2926 = vpop.f32.mrb[0].mxu0
      %2927 = vmatprep.mubr.f32.mxu0 0.0
      %v2928 = vand.u32 %v2759, 4294901760
      %v2929 = vsub.f32 %v2759, %v2928
      %v2930 = vand.u32 %v2929, 4294901760
      %v2931 = vsub.f32 %v2929, %v2930
      %v2932 = vand.u32 %v2931, 4294901760
      %2933 = vmatmul.mubr.f32.gmra.mrb[0].mxu0 %v2932
      %v2934 = vpop.f32.mrb[0].mxu0
      %v2935 = vadd.f32 0.0, %v2934
      %v2936 = vpop.f32.mrb[0].mxu0
      %2937 = vmatprep.mubr.f32.mxu0 0.0
      %v2938 = vand.u32 %v2762, 4294901760
      %v2939 = vsub.f32 %v2762, %v2938
      %v2940 = vand.u32 %v2939, 4294901760
      %v2941 = vsub.f32 %v2939, %v2940
      %v2942 = vand.u32 %v2941, 4294901760
      %2943 = vmatmul.mubr.f32.gmra.mrb[0].mxu0 %v2942
      %v2944 = vpop.f32.mrb[0].mxu0
      %v2945 = vadd.f32 0.0, %v2944
      %v2946 = vpop.f32.mrb[0].mxu0
      %2947 = vmatprep.mubr.f32.mxu0 0.0
      %v2948 = vand.u32 %v2765, 4294901760
      %v2949 = vsub.f32 %v2765, %v2948
      %v2950 = vand.u32 %v2949, 4294901760
      %v2951 = vsub.f32 %v2949, %v2950
      %v2952 = vand.u32 %v2951, 4294901760
      %2953 = vmatmul.mubr.f32.gmra.mrb[0].mxu0 %v2952
      %v2954 = vpop.f32.mrb[0].mxu0
      %v2955 = vadd.f32 0.0, %v2954
      %v2956 = vpop.f32.mrb[0].mxu0
      %2957 = vmatprep.mubr.f32.mxu0 0.0
      %v2958 = vand.u32 %v2768, 4294901760
      %v2959 = vsub.f32 %v2768, %v2958
      %v2960 = vand.u32 %v2959, 4294901760
      %v2961 = vsub.f32 %v2959, %v2960
      %v2962 = vand.u32 %v2961, 4294901760
      %2963 = vmatmul.mubr.f32.gmra.mrb[0].mxu0 %v2962
      %v2964 = vpop.f32.mrb[0].mxu0
      %v2965 = vadd.f32 0.0, %v2964
      %v2966 = vpop.f32.mrb[0].mxu0
      %2967 = vmatprep.mubr.f32.mxu0 0.0
      %v2968 = vand.u32 %v2771, 4294901760
      %v2969 = vsub.f32 %v2771, %v2968
      %v2970 = vand.u32 %v2969, 4294901760
      %v2971 = vsub.f32 %v2969, %v2970
      %v2972 = vand.u32 %v2971, 4294901760
      %2973 = vmatmul.mubr.f32.gmra.mrb[0].mxu0 %v2972
      %v2974 = vpop.f32.mrb[0].mxu0
      %v2975 = vadd.f32 0.0, %v2974
      %v2976 = vpop.f32.mrb[0].mxu0
      %2977 = vmatprep.mubr.f32.mxu0 0.0
      %v2978 = vand.u32 %v2774, 4294901760
      %v2979 = vsub.f32 %v2774, %v2978
      %v2980 = vand.u32 %v2979, 4294901760
      %v2981 = vsub.f32 %v2979, %v2980
      %v2982 = vand.u32 %v2981, 4294901760
      %2983 = vmatmul.mubr.f32.gmra.mrb[0].mxu0 %v2982
      %v2984 = vpop.f32.mrb[0].mxu0
      %v2985 = vadd.f32 0.0, %v2984
      %v2986 = vpop.f32.mrb[0].mxu0
      %2987 = vmatprep.mubr.f32.mxu0 0.0
      %v2988 = vand.u32 %v2777, 4294901760
      %v2989 = vsub.f32 %v2777, %v2988
      %v2990 = vand.u32 %v2989, 4294901760
      %v2991 = vsub.f32 %v2989, %v2990
      %v2992 = vand.u32 %v2991, 4294901760
      %2993 = vmatmul.mubr.f32.gmra.mrb[0].mxu0 %v2992
      %v2994 = vpop.f32.mrb[0].mxu0
      %v2995 = vadd.f32 0.0, %v2994
      %v2996 = vpop.f32.mrb[0].mxu0
      %2997 = vmatprep.mubr.f32.mxu0 0.0
      %v2998 = vand.u32 %v2780, 4294901760
      %v2999 = vsub.f32 %v2780, %v2998
      %v3000 = vand.u32 %v2999, 4294901760
      %v3001 = vsub.f32 %v2999, %v3000
      %v3002 = vand.u32 %v3001, 4294901760
      %3003 = vmatmul.mubr.f32.gmra.mrb[0].mxu0 %v3002
      %v3004 = vpop.f32.mrb[0].mxu0
      %v3005 = vadd.f32 0.0, %v3004
      %v3006 = vpop.f32.mrb[0].mxu0
      %3007 = vmatprep.mubr.f32.mxu0 0.0
      %v3008 = vand.u32 %v2783, 4294901760
      %v3009 = vsub.f32 %v2783, %v3008
      %v3010 = vand.u32 %v3009, 4294901760
      %v3011 = vsub.f32 %v3009, %v3010
      %v3012 = vand.u32 %v3011, 4294901760
      %3013 = vmatmul.mubr.f32.gmra.mrb[0].mxu0 %v3012
      %v3014 = vpop.f32.mrb[0].mxu0
      %v3015 = vadd.f32 0.0, %v3014
      %v3016 = vpop.f32.mrb[0].mxu0
      %3017 = vdwg.mxu0
      %3018 = vmatprep.subr.mxu0 0.0
      %v3019 = vand.u32 %v214, 4294901760
      %v3020 = vsub.f32 %v214, %v3019
      %v3021 = vand.u32 %v3020, 4294901760
      %v3022 = vsub.f32 %v3020, %v3021
      %v3023 = vand.u32 %v3022, 4294901760
      %3024 = vmatpush1.msra.mxu0 %v3023
      %3025 = vmatprep.subr.mxu0 0.0
      %v3026 = vand.u32 %v215, 4294901760
      %v3027 = vsub.f32 %v215, %v3026
      %v3028 = vand.u32 %v3027, 4294901760
      %v3029 = vsub.f32 %v3027, %v3028
      %v3030 = vand.u32 %v3029, 4294901760
      %3031 = vmatpush1.msra.mxu0 %v3030
      %3032 = vmatprep.subr.mxu0 0.0
      %v3033 = vand.u32 %v216, 4294901760
      %v3034 = vsub.f32 %v216, %v3033
      %v3035 = vand.u32 %v3034, 4294901760
      %v3036 = vsub.f32 %v3034, %v3035
      %v3037 = vand.u32 %v3036, 4294901760
      %3038 = vmatpush1.msra.mxu0 %v3037
      %3039 = vmatprep.subr.mxu0 0.0
      %v3040 = vand.u32 %v217, 4294901760
      %v3041 = vsub.f32 %v217, %v3040
      %v3042 = vand.u32 %v3041, 4294901760
      %v3043 = vsub.f32 %v3041, %v3042
      %v3044 = vand.u32 %v3043, 4294901760
      %3045 = vmatpush1.msra.mxu0 %v3044
      %3046 = vmatprep.subr.mxu0 0.0
      %v3047 = vand.u32 %v218, 4294901760
      %v3048 = vsub.f32 %v218, %v3047
      %v3049 = vand.u32 %v3048, 4294901760
      %v3050 = vsub.f32 %v3048, %v3049
      %v3051 = vand.u32 %v3050, 4294901760
      %3052 = vmatpush1.msra.mxu0 %v3051
      %3053 = vmatprep.subr.mxu0 0.0
      %v3054 = vand.u32 %v219, 4294901760
      %v3055 = vsub.f32 %v219, %v3054
      %v3056 = vand.u32 %v3055, 4294901760
      %v3057 = vsub.f32 %v3055, %v3056
      %v3058 = vand.u32 %v3057, 4294901760
      %3059 = vmatpush1.msra.mxu0 %v3058
      %3060 = vmatprep.subr.mxu0 0.0
      %v3061 = vand.u32 %v220, 4294901760
      %v3062 = vsub.f32 %v220, %v3061
      %v3063 = vand.u32 %v3062, 4294901760
      %v3064 = vsub.f32 %v3062, %v3063
      %v3065 = vand.u32 %v3064, 4294901760
      %3066 = vmatpush1.msra.mxu0 %v3065
      %3067 = vmatprep.subr.mxu0 0.0
      %v3068 = vand.u32 %v221, 4294901760
      %v3069 = vsub.f32 %v221, %v3068
      %v3070 = vand.u32 %v3069, 4294901760
      %v3071 = vsub.f32 %v3069, %v3070
      %v3072 = vand.u32 %v3071, 4294901760
      %3073 = vmatpush1.msra.mxu0 %v3072
      %3074 = vmatprep.subr.mxu0 0.0
      %3075 = vmatpush1.msra.mxu0 0.0
      %3076 = vmatprep.subr.mxu0 0.0
      %3077 = vmatpush1.msra.mxu0 0.0
      %3078 = vmatprep.subr.mxu0 0.0
      %3079 = vmatpush1.msra.mxu0 0.0
      %3080 = vmatprep.subr.mxu0 0.0
      %3081 = vmatpush1.msra.mxu0 0.0
      %3082 = vmatprep.subr.mxu0 0.0
      %3083 = vmatpush1.msra.mxu0 0.0
      %3084 = vmatprep.subr.mxu0 0.0
      %3085 = vmatpush1.msra.mxu0 0.0
      %3086 = vmatprep.subr.mxu0 0.0
      %3087 = vmatpush1.msra.mxu0 0.0
      %3088 = vmatprep.subr.mxu0 0.0
      %3089 = vmatpush1.msra.mxu0 0.0
      %3090 = vmatprep.subr.mxu0 0.0
      %3091 = vmatpush1.msra.mxu0 0.0
      %3092 = vmatprep.subr.mxu0 0.0
      %3093 = vmatpush1.msra.mxu0 0.0
      %3094 = vmatprep.subr.mxu0 0.0
      %3095 = vmatpush1.msra.mxu0 0.0
      %3096 = vmatprep.subr.mxu0 0.0
      %3097 = vmatpush1.msra.mxu0 0.0
      %3098 = vmatprep.subr.mxu0 0.0
      %3099 = vmatpush1.msra.mxu0 0.0
      %3100 = vmatprep.subr.mxu0 0.0
      %3101 = vmatpush1.msra.mxu0 0.0
      %3102 = vmatprep.subr.mxu0 0.0
      %3103 = vmatpush1.msra.mxu0 0.0
      %3104 = vmatprep.subr.mxu0 0.0
      %3105 = vmatpush1.msra.mxu0 0.0
      %3106 = vmatprep.subr.mxu0 0.0
      %3107 = vmatpush1.msra.mxu0 0.0
      %3108 = vmatprep.subr.mxu0 0.0
      %3109 = vmatpush1.msra.mxu0 0.0
      %3110 = vmatprep.subr.mxu0 0.0
      %3111 = vmatpush1.msra.mxu0 0.0
      %3112 = vmatprep.subr.mxu0 0.0
      %3113 = vmatpush1.msra.mxu0 0.0
      %3114 = vmatprep.subr.mxu0 0.0
      %3115 = vmatpush1.msra.mxu0 0.0
      %3116 = vmatprep.subr.mxu0 0.0
      %3117 = vmatpush1.msra.mxu0 0.0
      %3118 = vmatprep.subr.mxu0 0.0
      %3119 = vmatpush1.msra.mxu0 0.0
      %3120 = vmatprep.subr.mxu0 0.0
      %3121 = vmatpush1.msra.mxu0 0.0
      %3122 = vmatprep.mubr.f32.mxu0 0.0
      %v3123 = vand.u32 %v2738, 4294901760
      %3124 = vmatmul.mubr.f32.gmra.mrb[0].mxu0 %v3123
      %v3125 = vpop.f32.mrb[0].mxu0
      %v3126 = vadd.f32 %v2865, %v3125
      %v3127 = vpop.f32.mrb[0].mxu0
      %3128 = vmatprep.mubr.f32.mxu0 0.0
      %v3129 = vand.u32 %v2741, 4294901760
      %3130 = vmatmul.mubr.f32.gmra.mrb[0].mxu0 %v3129
      %v3131 = vpop.f32.mrb[0].mxu0
      %v3132 = vadd.f32 %v2875, %v3131
      %v3133 = vpop.f32.mrb[0].mxu0
      %3134 = vmatprep.mubr.f32.mxu0 0.0
      %v3135 = vand.u32 %v2744, 4294901760
      %3136 = vmatmul.mubr.f32.gmra.mrb[0].mxu0 %v3135
      %v3137 = vpop.f32.mrb[0].mxu0
      %v3138 = vadd.f32 %v2885, %v3137
      %v3139 = vpop.f32.mrb[0].mxu0
      %3140 = vmatprep.mubr.f32.mxu0 0.0
      %v3141 = vand.u32 %v2747, 4294901760
      %3142 = vmatmul.mubr.f32.gmra.mrb[0].mxu0 %v3141
      %v3143 = vpop.f32.mrb[0].mxu0
      %v3144 = vadd.f32 %v2895, %v3143
      %v3145 = vpop.f32.mrb[0].mxu0
      %3146 = vmatprep.mubr.f32.mxu0 0.0
      %v3147 = vand.u32 %v2750, 4294901760
      %3148 = vmatmul.mubr.f32.gmra.mrb[0].mxu0 %v3147
      %v3149 = vpop.f32.mrb[0].mxu0
      %v3150 = vadd.f32 %v2905, %v3149
      %v3151 = vpop.f32.mrb[0].mxu0
      %3152 = vmatprep.mubr.f32.mxu0 0.0
      %v3153 = vand.u32 %v2753, 4294901760
      %3154 = vmatmul.mubr.f32.gmra.mrb[0].mxu0 %v3153
      %v3155 = vpop.f32.mrb[0].mxu0
      %v3156 = vadd.f32 %v2915, %v3155
      %v3157 = vpop.f32.mrb[0].mxu0
      %3158 = vmatprep.mubr.f32.mxu0 0.0
      %v3159 = vand.u32 %v2756, 4294901760
      %3160 = vmatmul.mubr.f32.gmra.mrb[0].mxu0 %v3159
      %v3161 = vpop.f32.mrb[0].mxu0
      %v3162 = vadd.f32 %v2925, %v3161
      %v3163 = vpop.f32.mrb[0].mxu0
      %3164 = vmatprep.mubr.f32.mxu0 0.0
      %v3165 = vand.u32 %v2759, 4294901760
      %3166 = vmatmul.mubr.f32.gmra.mrb[0].mxu0 %v3165
      %v3167 = vpop.f32.mrb[0].mxu0
      %v3168 = vadd.f32 %v2935, %v3167
      %v3169 = vpop.f32.mrb[0].mxu0
      %3170 = vmatprep.mubr.f32.mxu0 0.0
      %v3171 = vand.u32 %v2762, 4294901760
      %3172 = vmatmul.mubr.f32.gmra.mrb[0].mxu0 %v3171
      %v3173 = vpop.f32.mrb[0].mxu0
      %v3174 = vadd.f32 %v2945, %v3173
      %v3175 = vpop.f32.mrb[0].mxu0
      %3176 = vmatprep.mubr.f32.mxu0 0.0
      %v3177 = vand.u32 %v2765, 4294901760
      %3178 = vmatmul.mubr.f32.gmra.mrb[0].mxu0 %v3177
      %v3179 = vpop.f32.mrb[0].mxu0
      %v3180 = vadd.f32 %v2955, %v3179
      %v3181 = vpop.f32.mrb[0].mxu0
      %3182 = vmatprep.mubr.f32.mxu0 0.0
      %v3183 = vand.u32 %v2768, 4294901760
      %3184 = vmatmul.mubr.f32.gmra.mrb[0].mxu0 %v3183
      %v3185 = vpop.f32.mrb[0].mxu0
      %v3186 = vadd.f32 %v2965, %v3185
      %v3187 = vpop.f32.mrb[0].mxu0
      %3188 = vmatprep.mubr.f32.mxu0 0.0
      %v3189 = vand.u32 %v2771, 4294901760
      %3190 = vmatmul.mubr.f32.gmra.mrb[0].mxu0 %v3189
      %v3191 = vpop.f32.mrb[0].mxu0
      %v3192 = vadd.f32 %v2975, %v3191
      %v3193 = vpop.f32.mrb[0].mxu0
      %3194 = vmatprep.mubr.f32.mxu0 0.0
      %v3195 = vand.u32 %v2774, 4294901760
      %3196 = vmatmul.mubr.f32.gmra.mrb[0].mxu0 %v3195
      %v3197 = vpop.f32.mrb[0].mxu0
      %v3198 = vadd.f32 %v2985, %v3197
      %v3199 = vpop.f32.mrb[0].mxu0
      %3200 = vmatprep.mubr.f32.mxu0 0.0
      %v3201 = vand.u32 %v2777, 4294901760
      %3202 = vmatmul.mubr.f32.gmra.mrb[0].mxu0 %v3201
      %v3203 = vpop.f32.mrb[0].mxu0
      %v3204 = vadd.f32 %v2995, %v3203
      %v3205 = vpop.f32.mrb[0].mxu0
      %3206 = vmatprep.mubr.f32.mxu0 0.0
      %v3207 = vand.u32 %v2780, 4294901760
      %3208 = vmatmul.mubr.f32.gmra.mrb[0].mxu0 %v3207
      %v3209 = vpop.f32.mrb[0].mxu0
      %v3210 = vadd.f32 %v3005, %v3209
      %v3211 = vpop.f32.mrb[0].mxu0
      %3212 = vmatprep.mubr.f32.mxu0 0.0
      %v3213 = vand.u32 %v2783, 4294901760
      %3214 = vmatmul.mubr.f32.gmra.mrb[0].mxu0 %v3213
      %v3215 = vpop.f32.mrb[0].mxu0
      %v3216 = vadd.f32 %v3015, %v3215
      %v3217 = vpop.f32.mrb[0].mxu0
      %3218 = vdwg.mxu0
      %3219 = vmatprep.subr.mxu0 0.0
      %v3220 = vand.u32 %v214, 4294901760
      %v3221 = vsub.f32 %v214, %v3220
      %3222 = vmatpush1.msra.mxu0 %v3221
      %3223 = vmatprep.subr.mxu0 0.0
      %v3224 = vand.u32 %v215, 4294901760
      %v3225 = vsub.f32 %v215, %v3224
      %3226 = vmatpush1.msra.mxu0 %v3225
      %3227 = vmatprep.subr.mxu0 0.0
      %v3228 = vand.u32 %v216, 4294901760
      %v3229 = vsub.f32 %v216, %v3228
      %3230 = vmatpush1.msra.mxu0 %v3229
      %3231 = vmatprep.subr.mxu0 0.0
      %v3232 = vand.u32 %v217, 4294901760
      %v3233 = vsub.f32 %v217, %v3232
      %3234 = vmatpush1.msra.mxu0 %v3233
      %3235 = vmatprep.subr.mxu0 0.0
      %v3236 = vand.u32 %v218, 4294901760
      %v3237 = vsub.f32 %v218, %v3236
      %3238 = vmatpush1.msra.mxu0 %v3237
      %3239 = vmatprep.subr.mxu0 0.0
      %v3240 = vand.u32 %v219, 4294901760
      %v3241 = vsub.f32 %v219, %v3240
      %3242 = vmatpush1.msra.mxu0 %v3241
      %3243 = vmatprep.subr.mxu0 0.0
      %v3244 = vand.u32 %v220, 4294901760
      %v3245 = vsub.f32 %v220, %v3244
      %3246 = vmatpush1.msra.mxu0 %v3245
      %3247 = vmatprep.subr.mxu0 0.0
      %v3248 = vand.u32 %v221, 4294901760
      %v3249 = vsub.f32 %v221, %v3248
      %3250 = vmatpush1.msra.mxu0 %v3249
      %3251 = vmatprep.subr.mxu0 0.0
      %3252 = vmatpush1.msra.mxu0 0.0
      %3253 = vmatprep.subr.mxu0 0.0
      %3254 = vmatpush1.msra.mxu0 0.0
      %3255 = vmatprep.subr.mxu0 0.0
      %3256 = vmatpush1.msra.mxu0 0.0
      %3257 = vmatprep.subr.mxu0 0.0
      %3258 = vmatpush1.msra.mxu0 0.0
      %3259 = vmatprep.subr.mxu0 0.0
      %3260 = vmatpush1.msra.mxu0 0.0
      %3261 = vmatprep.subr.mxu0 0.0
      %3262 = vmatpush1.msra.mxu0 0.0
      %3263 = vmatprep.subr.mxu0 0.0
      %3264 = vmatpush1.msra.mxu0 0.0
      %3265 = vmatprep.subr.mxu0 0.0
      %3266 = vmatpush1.msra.mxu0 0.0
      %3267 = vmatprep.subr.mxu0 0.0
      %3268 = vmatpush1.msra.mxu0 0.0
      %3269 = vmatprep.subr.mxu0 0.0
      %3270 = vmatpush1.msra.mxu0 0.0
      %3271 = vmatprep.subr.mxu0 0.0
      %3272 = vmatpush1.msra.mxu0 0.0
      %3273 = vmatprep.subr.mxu0 0.0
      %3274 = vmatpush1.msra.mxu0 0.0
      %3275 = vmatprep.subr.mxu0 0.0
      %3276 = vmatpush1.msra.mxu0 0.0
      %3277 = vmatprep.subr.mxu0 0.0
      %3278 = vmatpush1.msra.mxu0 0.0
      %3279 = vmatprep.subr.mxu0 0.0
      %3280 = vmatpush1.msra.mxu0 0.0
      %3281 = vmatprep.subr.mxu0 0.0
      %3282 = vmatpush1.msra.mxu0 0.0
      %3283 = vmatprep.subr.mxu0 0.0
      %3284 = vmatpush1.msra.mxu0 0.0
      %3285 = vmatprep.subr.mxu0 0.0
      %3286 = vmatpush1.msra.mxu0 0.0
      %3287 = vmatprep.subr.mxu0 0.0
      %3288 = vmatpush1.msra.mxu0 0.0
      %3289 = vmatprep.subr.mxu0 0.0
      %3290 = vmatpush1.msra.mxu0 0.0
      %3291 = vmatprep.subr.mxu0 0.0
      %3292 = vmatpush1.msra.mxu0 0.0
      %3293 = vmatprep.subr.mxu0 0.0
      %3294 = vmatpush1.msra.mxu0 0.0
      %3295 = vmatprep.subr.mxu0 0.0
      %3296 = vmatpush1.msra.mxu0 0.0
      %3297 = vmatprep.subr.mxu0 0.0
      %3298 = vmatpush1.msra.mxu0 0.0
      %3299 = vmatprep.mubr.f32.mxu0 0.0
      %v3300 = vand.u32 %v2738, 4294901760
      %v3301 = vsub.f32 %v2738, %v3300
      %3302 = vmatmul.mubr.f32.gmra.mrb[0].mxu0 %v3301
      %v3303 = vpop.f32.mrb[0].mxu0
      %v3304 = vadd.f32 %v3126, %v3303
      %v3305 = vpop.f32.mrb[0].mxu0
      %3306 = vmatprep.mubr.f32.mxu0 0.0
      %v3307 = vand.u32 %v2741, 4294901760
      %v3308 = vsub.f32 %v2741, %v3307
      %3309 = vmatmul.mubr.f32.gmra.mrb[0].mxu0 %v3308
      %v3310 = vpop.f32.mrb[0].mxu0
      %v3311 = vadd.f32 %v3132, %v3310
      %v3312 = vpop.f32.mrb[0].mxu0
      %3313 = vmatprep.mubr.f32.mxu0 0.0
      %v3314 = vand.u32 %v2744, 4294901760
      %v3315 = vsub.f32 %v2744, %v3314
      %3316 = vmatmul.mubr.f32.gmra.mrb[0].mxu0 %v3315
      %v3317 = vpop.f32.mrb[0].mxu0
      %v3318 = vadd.f32 %v3138, %v3317
      %v3319 = vpop.f32.mrb[0].mxu0
      %3320 = vmatprep.mubr.f32.mxu0 0.0
      %v3321 = vand.u32 %v2747, 4294901760
      %v3322 = vsub.f32 %v2747, %v3321
      %3323 = vmatmul.mubr.f32.gmra.mrb[0].mxu0 %v3322
      %v3324 = vpop.f32.mrb[0].mxu0
      %v3325 = vadd.f32 %v3144, %v3324
      %v3326 = vpop.f32.mrb[0].mxu0
      %3327 = vmatprep.mubr.f32.mxu0 0.0
      %v3328 = vand.u32 %v2750, 4294901760
      %v3329 = vsub.f32 %v2750, %v3328
      %3330 = vmatmul.mubr.f32.gmra.mrb[0].mxu0 %v3329
      %v3331 = vpop.f32.mrb[0].mxu0
      %v3332 = vadd.f32 %v3150, %v3331
      %v3333 = vpop.f32.mrb[0].mxu0
      %3334 = vmatprep.mubr.f32.mxu0 0.0
      %v3335 = vand.u32 %v2753, 4294901760
      %v3336 = vsub.f32 %v2753, %v3335
      %3337 = vmatmul.mubr.f32.gmra.mrb[0].mxu0 %v3336
      %v3338 = vpop.f32.mrb[0].mxu0
      %v3339 = vadd.f32 %v3156, %v3338
      %v3340 = vpop.f32.mrb[0].mxu0
      %3341 = vmatprep.mubr.f32.mxu0 0.0
      %v3342 = vand.u32 %v2756, 4294901760
      %v3343 = vsub.f32 %v2756, %v3342
      %3344 = vmatmul.mubr.f32.gmra.mrb[0].mxu0 %v3343
      %v3345 = vpop.f32.mrb[0].mxu0
      %v3346 = vadd.f32 %v3162, %v3345
      %v3347 = vpop.f32.mrb[0].mxu0
      %3348 = vmatprep.mubr.f32.mxu0 0.0
      %v3349 = vand.u32 %v2759, 4294901760
      %v3350 = vsub.f32 %v2759, %v3349
      %3351 = vmatmul.mubr.f32.gmra.mrb[0].mxu0 %v3350
      %v3352 = vpop.f32.mrb[0].mxu0
      %v3353 = vadd.f32 %v3168, %v3352
      %v3354 = vpop.f32.mrb[0].mxu0
      %3355 = vmatprep.mubr.f32.mxu0 0.0
      %v3356 = vand.u32 %v2762, 4294901760
      %v3357 = vsub.f32 %v2762, %v3356
      %3358 = vmatmul.mubr.f32.gmra.mrb[0].mxu0 %v3357
      %v3359 = vpop.f32.mrb[0].mxu0
      %v3360 = vadd.f32 %v3174, %v3359
      %v3361 = vpop.f32.mrb[0].mxu0
      %3362 = vmatprep.mubr.f32.mxu0 0.0
      %v3363 = vand.u32 %v2765, 4294901760
      %v3364 = vsub.f32 %v2765, %v3363
      %3365 = vmatmul.mubr.f32.gmra.mrb[0].mxu0 %v3364
      %v3366 = vpop.f32.mrb[0].mxu0
      %v3367 = vadd.f32 %v3180, %v3366
      %v3368 = vpop.f32.mrb[0].mxu0
      %3369 = vmatprep.mubr.f32.mxu0 0.0
      %v3370 = vand.u32 %v2768, 4294901760
      %v3371 = vsub.f32 %v2768, %v3370
      %3372 = vmatmul.mubr.f32.gmra.mrb[0].mxu0 %v3371
      %v3373 = vpop.f32.mrb[0].mxu0
      %v3374 = vadd.f32 %v3186, %v3373
      %v3375 = vpop.f32.mrb[0].mxu0
      %3376 = vmatprep.mubr.f32.mxu0 0.0
      %v3377 = vand.u32 %v2771, 4294901760
      %v3378 = vsub.f32 %v2771, %v3377
      %3379 = vmatmul.mubr.f32.gmra.mrb[0].mxu0 %v3378
      %v3380 = vpop.f32.mrb[0].mxu0
      %v3381 = vadd.f32 %v3192, %v3380
      %v3382 = vpop.f32.mrb[0].mxu0
      %3383 = vmatprep.mubr.f32.mxu0 0.0
      %v3384 = vand.u32 %v2774, 4294901760
      %v3385 = vsub.f32 %v2774, %v3384
      %3386 = vmatmul.mubr.f32.gmra.mrb[0].mxu0 %v3385
      %v3387 = vpop.f32.mrb[0].mxu0
      %v3388 = vadd.f32 %v3198, %v3387
      %v3389 = vpop.f32.mrb[0].mxu0
      %3390 = vmatprep.mubr.f32.mxu0 0.0
      %v3391 = vand.u32 %v2777, 4294901760
      %v3392 = vsub.f32 %v2777, %v3391
      %3393 = vmatmul.mubr.f32.gmra.mrb[0].mxu0 %v3392
      %v3394 = vpop.f32.mrb[0].mxu0
      %v3395 = vadd.f32 %v3204, %v3394
      %v3396 = vpop.f32.mrb[0].mxu0
      %3397 = vmatprep.mubr.f32.mxu0 0.0
      %v3398 = vand.u32 %v2780, 4294901760
      %v3399 = vsub.f32 %v2780, %v3398
      %3400 = vmatmul.mubr.f32.gmra.mrb[0].mxu0 %v3399
      %v3401 = vpop.f32.mrb[0].mxu0
      %v3402 = vadd.f32 %v3210, %v3401
      %v3403 = vpop.f32.mrb[0].mxu0
      %3404 = vmatprep.mubr.f32.mxu0 0.0
      %v3405 = vand.u32 %v2783, 4294901760
      %v3406 = vsub.f32 %v2783, %v3405
      %3407 = vmatmul.mubr.f32.gmra.mrb[0].mxu0 %v3406
      %v3408 = vpop.f32.mrb[0].mxu0
      %v3409 = vadd.f32 %v3216, %v3408
      %v3410 = vpop.f32.mrb[0].mxu0
      %3411 = vdwg.mxu0
      %3412 = vmatprep.subr.mxu0 0.0
      %v3413 = vand.u32 %v214, 4294901760
      %3414 = vmatpush1.msra.mxu0 %v3413
      %3415 = vmatprep.subr.mxu0 0.0
      %v3416 = vand.u32 %v215, 4294901760
      %3417 = vmatpush1.msra.mxu0 %v3416
      %3418 = vmatprep.subr.mxu0 0.0
      %v3419 = vand.u32 %v216, 4294901760
      %3420 = vmatpush1.msra.mxu0 %v3419
      %3421 = vmatprep.subr.mxu0 0.0
      %v3422 = vand.u32 %v217, 4294901760
      %3423 = vmatpush1.msra.mxu0 %v3422
      %3424 = vmatprep.subr.mxu0 0.0
      %v3425 = vand.u32 %v218, 4294901760
      %3426 = vmatpush1.msra.mxu0 %v3425
      %3427 = vmatprep.subr.mxu0 0.0
      %v3428 = vand.u32 %v219, 4294901760
      %3429 = vmatpush1.msra.mxu0 %v3428
      %3430 = vmatprep.subr.mxu0 0.0
      %v3431 = vand.u32 %v220, 4294901760
      %3432 = vmatpush1.msra.mxu0 %v3431
      %3433 = vmatprep.subr.mxu0 0.0
      %v3434 = vand.u32 %v221, 4294901760
      %3435 = vmatpush1.msra.mxu0 %v3434
      %3436 = vmatprep.subr.mxu0 0.0
      %3437 = vmatpush1.msra.mxu0 0.0
      %3438 = vmatprep.subr.mxu0 0.0
      %3439 = vmatpush1.msra.mxu0 0.0
      %3440 = vmatprep.subr.mxu0 0.0
      %3441 = vmatpush1.msra.mxu0 0.0
      %3442 = vmatprep.subr.mxu0 0.0
      %3443 = vmatpush1.msra.mxu0 0.0
      %3444 = vmatprep.subr.mxu0 0.0
      %3445 = vmatpush1.msra.mxu0 0.0
      %3446 = vmatprep.subr.mxu0 0.0
      %3447 = vmatpush1.msra.mxu0 0.0
      %3448 = vmatprep.subr.mxu0 0.0
      %3449 = vmatpush1.msra.mxu0 0.0
      %3450 = vmatprep.subr.mxu0 0.0
      %3451 = vmatpush1.msra.mxu0 0.0
      %3452 = vmatprep.subr.mxu0 0.0
      %3453 = vmatpush1.msra.mxu0 0.0
      %3454 = vmatprep.subr.mxu0 0.0
      %3455 = vmatpush1.msra.mxu0 0.0
      %3456 = vmatprep.subr.mxu0 0.0
      %3457 = vmatpush1.msra.mxu0 0.0
      %3458 = vmatprep.subr.mxu0 0.0
      %3459 = vmatpush1.msra.mxu0 0.0
      %3460 = vmatprep.subr.mxu0 0.0
      %3461 = vmatpush1.msra.mxu0 0.0
      %3462 = vmatprep.subr.mxu0 0.0
      %3463 = vmatpush1.msra.mxu0 0.0
      %3464 = vmatprep.subr.mxu0 0.0
      %3465 = vmatpush1.msra.mxu0 0.0
      %3466 = vmatprep.subr.mxu0 0.0
      %3467 = vmatpush1.msra.mxu0 0.0
      %3468 = vmatprep.subr.mxu0 0.0
      %3469 = vmatpush1.msra.mxu0 0.0
      %3470 = vmatprep.subr.mxu0 0.0
      %3471 = vmatpush1.msra.mxu0 0.0
      %3472 = vmatprep.subr.mxu0 0.0
      %3473 = vmatpush1.msra.mxu0 0.0
      %3474 = vmatprep.subr.mxu0 0.0
      %3475 = vmatpush1.msra.mxu0 0.0
      %3476 = vmatprep.subr.mxu0 0.0
      %3477 = vmatpush1.msra.mxu0 0.0
      %3478 = vmatprep.subr.mxu0 0.0
      %3479 = vmatpush1.msra.mxu0 0.0
      %3480 = vmatprep.subr.mxu0 0.0
      %3481 = vmatpush1.msra.mxu0 0.0
      %3482 = vmatprep.subr.mxu0 0.0
      %3483 = vmatpush1.msra.mxu0 0.0
      %3484 = vmatprep.mubr.f32.mxu0 0.0
      %v3485 = vand.u32 %v2738, 4294901760
      %v3486 = vsub.f32 %v2738, %v3485
      %v3487 = vand.u32 %v3486, 4294901760
      %3488 = vmatmul.mubr.f32.gmra.mrb[0].mxu0 %v3487
      %v3489 = vpop.f32.mrb[0].mxu0
      %v3490 = vadd.f32 %v3304, %v3489
      %v3491 = vpop.f32.mrb[0].mxu0
      %3492 = vmatprep.mubr.f32.mxu0 0.0
      %v3493 = vand.u32 %v2741, 4294901760
      %v3494 = vsub.f32 %v2741, %v3493
      %v3495 = vand.u32 %v3494, 4294901760
      %3496 = vmatmul.mubr.f32.gmra.mrb[0].mxu0 %v3495
      %v3497 = vpop.f32.mrb[0].mxu0
      %v3498 = vadd.f32 %v3311, %v3497
      %v3499 = vpop.f32.mrb[0].mxu0
      %3500 = vmatprep.mubr.f32.mxu0 0.0
      %v3501 = vand.u32 %v2744, 4294901760
      %v3502 = vsub.f32 %v2744, %v3501
      %v3503 = vand.u32 %v3502, 4294901760
      %3504 = vmatmul.mubr.f32.gmra.mrb[0].mxu0 %v3503
      %v3505 = vpop.f32.mrb[0].mxu0
      %v3506 = vadd.f32 %v3318, %v3505
      %v3507 = vpop.f32.mrb[0].mxu0
      %3508 = vmatprep.mubr.f32.mxu0 0.0
      %v3509 = vand.u32 %v2747, 4294901760
      %v3510 = vsub.f32 %v2747, %v3509
      %v3511 = vand.u32 %v3510, 4294901760
      %3512 = vmatmul.mubr.f32.gmra.mrb[0].mxu0 %v3511
      %v3513 = vpop.f32.mrb[0].mxu0
      %v3514 = vadd.f32 %v3325, %v3513
      %v3515 = vpop.f32.mrb[0].mxu0
      %3516 = vmatprep.mubr.f32.mxu0 0.0
      %v3517 = vand.u32 %v2750, 4294901760
      %v3518 = vsub.f32 %v2750, %v3517
      %v3519 = vand.u32 %v3518, 4294901760
      %3520 = vmatmul.mubr.f32.gmra.mrb[0].mxu0 %v3519
      %v3521 = vpop.f32.mrb[0].mxu0
      %v3522 = vadd.f32 %v3332, %v3521
      %v3523 = vpop.f32.mrb[0].mxu0
      %3524 = vmatprep.mubr.f32.mxu0 0.0
      %v3525 = vand.u32 %v2753, 4294901760
      %v3526 = vsub.f32 %v2753, %v3525
      %v3527 = vand.u32 %v3526, 4294901760
      %3528 = vmatmul.mubr.f32.gmra.mrb[0].mxu0 %v3527
      %v3529 = vpop.f32.mrb[0].mxu0
      %v3530 = vadd.f32 %v3339, %v3529
      %v3531 = vpop.f32.mrb[0].mxu0
      %3532 = vmatprep.mubr.f32.mxu0 0.0
      %v3533 = vand.u32 %v2756, 4294901760
      %v3534 = vsub.f32 %v2756, %v3533
      %v3535 = vand.u32 %v3534, 4294901760
      %3536 = vmatmul.mubr.f32.gmra.mrb[0].mxu0 %v3535
      %v3537 = vpop.f32.mrb[0].mxu0
      %v3538 = vadd.f32 %v3346, %v3537
      %v3539 = vpop.f32.mrb[0].mxu0
      %3540 = vmatprep.mubr.f32.mxu0 0.0
      %v3541 = vand.u32 %v2759, 4294901760
      %v3542 = vsub.f32 %v2759, %v3541
      %v3543 = vand.u32 %v3542, 4294901760
      %3544 = vmatmul.mubr.f32.gmra.mrb[0].mxu0 %v3543
      %v3545 = vpop.f32.mrb[0].mxu0
      %v3546 = vadd.f32 %v3353, %v3545
      %v3547 = vpop.f32.mrb[0].mxu0
      %3548 = vmatprep.mubr.f32.mxu0 0.0
      %v3549 = vand.u32 %v2762, 4294901760
      %v3550 = vsub.f32 %v2762, %v3549
      %v3551 = vand.u32 %v3550, 4294901760
      %3552 = vmatmul.mubr.f32.gmra.mrb[0].mxu0 %v3551
      %v3553 = vpop.f32.mrb[0].mxu0
      %v3554 = vadd.f32 %v3360, %v3553
      %v3555 = vpop.f32.mrb[0].mxu0
      %3556 = vmatprep.mubr.f32.mxu0 0.0
      %v3557 = vand.u32 %v2765, 4294901760
      %v3558 = vsub.f32 %v2765, %v3557
      %v3559 = vand.u32 %v3558, 4294901760
      %3560 = vmatmul.mubr.f32.gmra.mrb[0].mxu0 %v3559
      %v3561 = vpop.f32.mrb[0].mxu0
      %v3562 = vadd.f32 %v3367, %v3561
      %v3563 = vpop.f32.mrb[0].mxu0
      %3564 = vmatprep.mubr.f32.mxu0 0.0
      %v3565 = vand.u32 %v2768, 4294901760
      %v3566 = vsub.f32 %v2768, %v3565
      %v3567 = vand.u32 %v3566, 4294901760
      %3568 = vmatmul.mubr.f32.gmra.mrb[0].mxu0 %v3567
      %v3569 = vpop.f32.mrb[0].mxu0
      %v3570 = vadd.f32 %v3374, %v3569
      %v3571 = vpop.f32.mrb[0].mxu0
      %3572 = vmatprep.mubr.f32.mxu0 0.0
      %v3573 = vand.u32 %v2771, 4294901760
      %v3574 = vsub.f32 %v2771, %v3573
      %v3575 = vand.u32 %v3574, 4294901760
      %3576 = vmatmul.mubr.f32.gmra.mrb[0].mxu0 %v3575
      %v3577 = vpop.f32.mrb[0].mxu0
      %v3578 = vadd.f32 %v3381, %v3577
      %v3579 = vpop.f32.mrb[0].mxu0
      %3580 = vmatprep.mubr.f32.mxu0 0.0
      %v3581 = vand.u32 %v2774, 4294901760
      %v3582 = vsub.f32 %v2774, %v3581
      %v3583 = vand.u32 %v3582, 4294901760
      %3584 = vmatmul.mubr.f32.gmra.mrb[0].mxu0 %v3583
      %v3585 = vpop.f32.mrb[0].mxu0
      %v3586 = vadd.f32 %v3388, %v3585
      %v3587 = vpop.f32.mrb[0].mxu0
      %3588 = vmatprep.mubr.f32.mxu0 0.0
      %v3589 = vand.u32 %v2777, 4294901760
      %v3590 = vsub.f32 %v2777, %v3589
      %v3591 = vand.u32 %v3590, 4294901760
      %3592 = vmatmul.mubr.f32.gmra.mrb[0].mxu0 %v3591
      %v3593 = vpop.f32.mrb[0].mxu0
      %v3594 = vadd.f32 %v3395, %v3593
      %v3595 = vpop.f32.mrb[0].mxu0
      %3596 = vmatprep.mubr.f32.mxu0 0.0
      %v3597 = vand.u32 %v2780, 4294901760
      %v3598 = vsub.f32 %v2780, %v3597
      %v3599 = vand.u32 %v3598, 4294901760
      %3600 = vmatmul.mubr.f32.gmra.mrb[0].mxu0 %v3599
      %v3601 = vpop.f32.mrb[0].mxu0
      %v3602 = vadd.f32 %v3402, %v3601
      %v3603 = vpop.f32.mrb[0].mxu0
      %3604 = vmatprep.mubr.f32.mxu0 0.0
      %v3605 = vand.u32 %v2783, 4294901760
      %v3606 = vsub.f32 %v2783, %v3605
      %v3607 = vand.u32 %v3606, 4294901760
      %3608 = vmatmul.mubr.f32.gmra.mrb[0].mxu0 %v3607
      %v3609 = vpop.f32.mrb[0].mxu0
      %v3610 = vadd.f32 %v3409, %v3609
      %v3611 = vpop.f32.mrb[0].mxu0
      %3612 = vdwg.mxu0
      %3613 = vmatprep.subr.mxu0 0.0
      %v3614 = vand.u32 %v214, 4294901760
      %v3615 = vsub.f32 %v214, %v3614
      %v3616 = vand.u32 %v3615, 4294901760
      %3617 = vmatpush1.msra.mxu0 %v3616
      %3618 = vmatprep.subr.mxu0 0.0
      %v3619 = vand.u32 %v215, 4294901760
      %v3620 = vsub.f32 %v215, %v3619
      %v3621 = vand.u32 %v3620, 4294901760
      %3622 = vmatpush1.msra.mxu0 %v3621
      %3623 = vmatprep.subr.mxu0 0.0
      %v3624 = vand.u32 %v216, 4294901760
      %v3625 = vsub.f32 %v216, %v3624
      %v3626 = vand.u32 %v3625, 4294901760
      %3627 = vmatpush1.msra.mxu0 %v3626
      %3628 = vmatprep.subr.mxu0 0.0
      %v3629 = vand.u32 %v217, 4294901760
      %v3630 = vsub.f32 %v217, %v3629
      %v3631 = vand.u32 %v3630, 4294901760
      %3632 = vmatpush1.msra.mxu0 %v3631
      %3633 = vmatprep.subr.mxu0 0.0
      %v3634 = vand.u32 %v218, 4294901760
      %v3635 = vsub.f32 %v218, %v3634
      %v3636 = vand.u32 %v3635, 4294901760
      %3637 = vmatpush1.msra.mxu0 %v3636
      %3638 = vmatprep.subr.mxu0 0.0
      %v3639 = vand.u32 %v219, 4294901760
      %v3640 = vsub.f32 %v219, %v3639
      %v3641 = vand.u32 %v3640, 4294901760
      %3642 = vmatpush1.msra.mxu0 %v3641
      %3643 = vmatprep.subr.mxu0 0.0
      %v3644 = vand.u32 %v220, 4294901760
      %v3645 = vsub.f32 %v220, %v3644
      %v3646 = vand.u32 %v3645, 4294901760
      %3647 = vmatpush1.msra.mxu0 %v3646
      %3648 = vmatprep.subr.mxu0 0.0
      %v3649 = vand.u32 %v221, 4294901760
      %v3650 = vsub.f32 %v221, %v3649
      %v3651 = vand.u32 %v3650, 4294901760
      %3652 = vmatpush1.msra.mxu0 %v3651
      %3653 = vmatprep.subr.mxu0 0.0
      %3654 = vmatpush1.msra.mxu0 0.0
      %3655 = vmatprep.subr.mxu0 0.0
      %3656 = vmatpush1.msra.mxu0 0.0
      %3657 = vmatprep.subr.mxu0 0.0
      %3658 = vmatpush1.msra.mxu0 0.0
      %3659 = vmatprep.subr.mxu0 0.0
      %3660 = vmatpush1.msra.mxu0 0.0
      %3661 = vmatprep.subr.mxu0 0.0
      %3662 = vmatpush1.msra.mxu0 0.0
      %3663 = vmatprep.subr.mxu0 0.0
      %3664 = vmatpush1.msra.mxu0 0.0
      %3665 = vmatprep.subr.mxu0 0.0
      %3666 = vmatpush1.msra.mxu0 0.0
      %3667 = vmatprep.subr.mxu0 0.0
      %3668 = vmatpush1.msra.mxu0 0.0
      %3669 = vmatprep.subr.mxu0 0.0
      %3670 = vmatpush1.msra.mxu0 0.0
      %3671 = vmatprep.subr.mxu0 0.0
      %3672 = vmatpush1.msra.mxu0 0.0
      %3673 = vmatprep.subr.mxu0 0.0
      %3674 = vmatpush1.msra.mxu0 0.0
      %3675 = vmatprep.subr.mxu0 0.0
      %3676 = vmatpush1.msra.mxu0 0.0
      %3677 = vmatprep.subr.mxu0 0.0
      %3678 = vmatpush1.msra.mxu0 0.0
      %3679 = vmatprep.subr.mxu0 0.0
      %3680 = vmatpush1.msra.mxu0 0.0
      %3681 = vmatprep.subr.mxu0 0.0
      %3682 = vmatpush1.msra.mxu0 0.0
      %3683 = vmatprep.subr.mxu0 0.0
      %3684 = vmatpush1.msra.mxu0 0.0
      %3685 = vmatprep.subr.mxu0 0.0
      %3686 = vmatpush1.msra.mxu0 0.0
      %3687 = vmatprep.subr.mxu0 0.0
      %3688 = vmatpush1.msra.mxu0 0.0
      %3689 = vmatprep.subr.mxu0 0.0
      %3690 = vmatpush1.msra.mxu0 0.0
      %3691 = vmatprep.subr.mxu0 0.0
      %3692 = vmatpush1.msra.mxu0 0.0
      %3693 = vmatprep.subr.mxu0 0.0
      %3694 = vmatpush1.msra.mxu0 0.0
      %3695 = vmatprep.subr.mxu0 0.0
      %3696 = vmatpush1.msra.mxu0 0.0
      %3697 = vmatprep.subr.mxu0 0.0
      %3698 = vmatpush1.msra.mxu0 0.0
      %3699 = vmatprep.subr.mxu0 0.0
      %3700 = vmatpush1.msra.mxu0 0.0
      %3701 = vmatprep.mubr.f32.mxu0 0.0
      %v3702 = vand.u32 %v2738, 4294901760
      %3703 = vmatmul.mubr.f32.gmra.mrb[0].mxu0 %v3702
      %v3704 = vpop.f32.mrb[0].mxu0
      %v3705 = vadd.f32 %v3490, %v3704
      %v3706 = vpop.f32.mrb[0].mxu0
      %3707 = vmatprep.mubr.f32.mxu0 0.0
      %v3708 = vand.u32 %v2741, 4294901760
      %3709 = vmatmul.mubr.f32.gmra.mrb[0].mxu0 %v3708
      %v3710 = vpop.f32.mrb[0].mxu0
      %v3711 = vadd.f32 %v3498, %v3710
      %v3712 = vpop.f32.mrb[0].mxu0
      %3713 = vmatprep.mubr.f32.mxu0 0.0
      %v3714 = vand.u32 %v2744, 4294901760
      %3715 = vmatmul.mubr.f32.gmra.mrb[0].mxu0 %v3714
      %v3716 = vpop.f32.mrb[0].mxu0
      %v3717 = vadd.f32 %v3506, %v3716
      %v3718 = vpop.f32.mrb[0].mxu0
      %3719 = vmatprep.mubr.f32.mxu0 0.0
      %v3720 = vand.u32 %v2747, 4294901760
      %3721 = vmatmul.mubr.f32.gmra.mrb[0].mxu0 %v3720
      %v3722 = vpop.f32.mrb[0].mxu0
      %v3723 = vadd.f32 %v3514, %v3722
      %v3724 = vpop.f32.mrb[0].mxu0
      %3725 = vmatprep.mubr.f32.mxu0 0.0
      %v3726 = vand.u32 %v2750, 4294901760
      %3727 = vmatmul.mubr.f32.gmra.mrb[0].mxu0 %v3726
      %v3728 = vpop.f32.mrb[0].mxu0
      %v3729 = vadd.f32 %v3522, %v3728
      %v3730 = vpop.f32.mrb[0].mxu0
      %3731 = vmatprep.mubr.f32.mxu0 0.0
      %v3732 = vand.u32 %v2753, 4294901760
      %3733 = vmatmul.mubr.f32.gmra.mrb[0].mxu0 %v3732
      %v3734 = vpop.f32.mrb[0].mxu0
      %v3735 = vadd.f32 %v3530, %v3734
      %v3736 = vpop.f32.mrb[0].mxu0
      %3737 = vmatprep.mubr.f32.mxu0 0.0
      %v3738 = vand.u32 %v2756, 4294901760
      %3739 = vmatmul.mubr.f32.gmra.mrb[0].mxu0 %v3738
      %v3740 = vpop.f32.mrb[0].mxu0
      %v3741 = vadd.f32 %v3538, %v3740
      %v3742 = vpop.f32.mrb[0].mxu0
      %3743 = vmatprep.mubr.f32.mxu0 0.0
      %v3744 = vand.u32 %v2759, 4294901760
      %3745 = vmatmul.mubr.f32.gmra.mrb[0].mxu0 %v3744
      %v3746 = vpop.f32.mrb[0].mxu0
      %v3747 = vadd.f32 %v3546, %v3746
      %v3748 = vpop.f32.mrb[0].mxu0
      %3749 = vmatprep.mubr.f32.mxu0 0.0
      %v3750 = vand.u32 %v2762, 4294901760
      %3751 = vmatmul.mubr.f32.gmra.mrb[0].mxu0 %v3750
      %v3752 = vpop.f32.mrb[0].mxu0
      %v3753 = vadd.f32 %v3554, %v3752
      %v3754 = vpop.f32.mrb[0].mxu0
      %3755 = vmatprep.mubr.f32.mxu0 0.0
      %v3756 = vand.u32 %v2765, 4294901760
      %3757 = vmatmul.mubr.f32.gmra.mrb[0].mxu0 %v3756
      %v3758 = vpop.f32.mrb[0].mxu0
      %v3759 = vadd.f32 %v3562, %v3758
      %v3760 = vpop.f32.mrb[0].mxu0
      %3761 = vmatprep.mubr.f32.mxu0 0.0
      %v3762 = vand.u32 %v2768, 4294901760
      %3763 = vmatmul.mubr.f32.gmra.mrb[0].mxu0 %v3762
      %v3764 = vpop.f32.mrb[0].mxu0
      %v3765 = vadd.f32 %v3570, %v3764
      %v3766 = vpop.f32.mrb[0].mxu0
      %3767 = vmatprep.mubr.f32.mxu0 0.0
      %v3768 = vand.u32 %v2771, 4294901760
      %3769 = vmatmul.mubr.f32.gmra.mrb[0].mxu0 %v3768
      %v3770 = vpop.f32.mrb[0].mxu0
      %v3771 = vadd.f32 %v3578, %v3770
      %v3772 = vpop.f32.mrb[0].mxu0
      %3773 = vmatprep.mubr.f32.mxu0 0.0
      %v3774 = vand.u32 %v2774, 4294901760
      %3775 = vmatmul.mubr.f32.gmra.mrb[0].mxu0 %v3774
      %v3776 = vpop.f32.mrb[0].mxu0
      %v3777 = vadd.f32 %v3586, %v3776
      %v3778 = vpop.f32.mrb[0].mxu0
      %3779 = vmatprep.mubr.f32.mxu0 0.0
      %v3780 = vand.u32 %v2777, 4294901760
      %3781 = vmatmul.mubr.f32.gmra.mrb[0].mxu0 %v3780
      %v3782 = vpop.f32.mrb[0].mxu0
      %v3783 = vadd.f32 %v3594, %v3782
      %v3784 = vpop.f32.mrb[0].mxu0
      %3785 = vmatprep.mubr.f32.mxu0 0.0
      %v3786 = vand.u32 %v2780, 4294901760
      %3787 = vmatmul.mubr.f32.gmra.mrb[0].mxu0 %v3786
      %v3788 = vpop.f32.mrb[0].mxu0
      %v3789 = vadd.f32 %v3602, %v3788
      %v3790 = vpop.f32.mrb[0].mxu0
      %3791 = vmatprep.mubr.f32.mxu0 0.0
      %v3792 = vand.u32 %v2783, 4294901760
      %3793 = vmatmul.mubr.f32.gmra.mrb[0].mxu0 %v3792
      %v3794 = vpop.f32.mrb[0].mxu0
      %v3795 = vadd.f32 %v3610, %v3794
      %v3796 = vpop.f32.mrb[0].mxu0
      %3797 = vdwg.mxu0
      %3798 = vmatprep.subr.mxu0 0.0
      %v3799 = vand.u32 %v214, 4294901760
      %3800 = vmatpush1.msra.mxu0 %v3799
      %3801 = vmatprep.subr.mxu0 0.0
      %v3802 = vand.u32 %v215, 4294901760
      %3803 = vmatpush1.msra.mxu0 %v3802
      %3804 = vmatprep.subr.mxu0 0.0
      %v3805 = vand.u32 %v216, 4294901760
      %3806 = vmatpush1.msra.mxu0 %v3805
      %3807 = vmatprep.subr.mxu0 0.0
      %v3808 = vand.u32 %v217, 4294901760
      %3809 = vmatpush1.msra.mxu0 %v3808
      %3810 = vmatprep.subr.mxu0 0.0
      %v3811 = vand.u32 %v218, 4294901760
      %3812 = vmatpush1.msra.mxu0 %v3811
      %3813 = vmatprep.subr.mxu0 0.0
      %v3814 = vand.u32 %v219, 4294901760
      %3815 = vmatpush1.msra.mxu0 %v3814
      %3816 = vmatprep.subr.mxu0 0.0
      %v3817 = vand.u32 %v220, 4294901760
      %3818 = vmatpush1.msra.mxu0 %v3817
      %3819 = vmatprep.subr.mxu0 0.0
      %v3820 = vand.u32 %v221, 4294901760
      %3821 = vmatpush1.msra.mxu0 %v3820
      %3822 = vmatprep.subr.mxu0 0.0
      %3823 = vmatpush1.msra.mxu0 0.0
      %3824 = vmatprep.subr.mxu0 0.0
      %3825 = vmatpush1.msra.mxu0 0.0
      %3826 = vmatprep.subr.mxu0 0.0
      %3827 = vmatpush1.msra.mxu0 0.0
      %3828 = vmatprep.subr.mxu0 0.0
      %3829 = vmatpush1.msra.mxu0 0.0
      %3830 = vmatprep.subr.mxu0 0.0
      %3831 = vmatpush1.msra.mxu0 0.0
      %3832 = vmatprep.subr.mxu0 0.0
      %3833 = vmatpush1.msra.mxu0 0.0
      %3834 = vmatprep.subr.mxu0 0.0
      %3835 = vmatpush1.msra.mxu0 0.0
      %3836 = vmatprep.subr.mxu0 0.0
      %3837 = vmatpush1.msra.mxu0 0.0
      %3838 = vmatprep.subr.mxu0 0.0
      %3839 = vmatpush1.msra.mxu0 0.0
      %3840 = vmatprep.subr.mxu0 0.0
      %3841 = vmatpush1.msra.mxu0 0.0
      %3842 = vmatprep.subr.mxu0 0.0
      %3843 = vmatpush1.msra.mxu0 0.0
      %3844 = vmatprep.subr.mxu0 0.0
      %3845 = vmatpush1.msra.mxu0 0.0
      %3846 = vmatprep.subr.mxu0 0.0
      %3847 = vmatpush1.msra.mxu0 0.0
      %3848 = vmatprep.subr.mxu0 0.0
      %3849 = vmatpush1.msra.mxu0 0.0
      %3850 = vmatprep.subr.mxu0 0.0
      %3851 = vmatpush1.msra.mxu0 0.0
      %3852 = vmatprep.subr.mxu0 0.0
      %3853 = vmatpush1.msra.mxu0 0.0
      %3854 = vmatprep.subr.mxu0 0.0
      %3855 = vmatpush1.msra.mxu0 0.0
      %3856 = vmatprep.subr.mxu0 0.0
      %3857 = vmatpush1.msra.mxu0 0.0
      %3858 = vmatprep.subr.mxu0 0.0
      %3859 = vmatpush1.msra.mxu0 0.0
      %3860 = vmatprep.subr.mxu0 0.0
      %3861 = vmatpush1.msra.mxu0 0.0
      %3862 = vmatprep.subr.mxu0 0.0
      %3863 = vmatpush1.msra.mxu0 0.0
      %3864 = vmatprep.subr.mxu0 0.0
      %3865 = vmatpush1.msra.mxu0 0.0
      %3866 = vmatprep.subr.mxu0 0.0
      %3867 = vmatpush1.msra.mxu0 0.0
      %3868 = vmatprep.subr.mxu0 0.0
      %3869 = vmatpush1.msra.mxu0 0.0
      %3870 = vmatprep.mubr.f32.mxu0 0.0
      %v3871 = vand.u32 %v2738, 4294901760
      %3872 = vmatmul.mubr.f32.gmra.mrb[0].mxu0 %v3871
      %v3873 = vpop.f32.mrb[0].mxu0
      %v3874 = vadd.f32 %v3705, %v3873
      %v3875 = vpop.f32.mrb[0].mxu0
      %3876 = vmatprep.mubr.f32.mxu0 0.0
      %v3877 = vand.u32 %v2741, 4294901760
      %3878 = vmatmul.mubr.f32.gmra.mrb[0].mxu0 %v3877
      %v3879 = vpop.f32.mrb[0].mxu0
      %v3880 = vadd.f32 %v3711, %v3879
      %v3881 = vpop.f32.mrb[0].mxu0
      %3882 = vmatprep.mubr.f32.mxu0 0.0
      %v3883 = vand.u32 %v2744, 4294901760
      %3884 = vmatmul.mubr.f32.gmra.mrb[0].mxu0 %v3883
      %v3885 = vpop.f32.mrb[0].mxu0
      %v3886 = vadd.f32 %v3717, %v3885
      %v3887 = vpop.f32.mrb[0].mxu0
      %3888 = vmatprep.mubr.f32.mxu0 0.0
      %v3889 = vand.u32 %v2747, 4294901760
      %3890 = vmatmul.mubr.f32.gmra.mrb[0].mxu0 %v3889
      %v3891 = vpop.f32.mrb[0].mxu0
      %v3892 = vadd.f32 %v3723, %v3891
      %v3893 = vpop.f32.mrb[0].mxu0
      %3894 = vmatprep.mubr.f32.mxu0 0.0
      %v3895 = vand.u32 %v2750, 4294901760
      %3896 = vmatmul.mubr.f32.gmra.mrb[0].mxu0 %v3895
      %v3897 = vpop.f32.mrb[0].mxu0
      %v3898 = vadd.f32 %v3729, %v3897
      %v3899 = vpop.f32.mrb[0].mxu0
      %3900 = vmatprep.mubr.f32.mxu0 0.0
      %v3901 = vand.u32 %v2753, 4294901760
      %3902 = vmatmul.mubr.f32.gmra.mrb[0].mxu0 %v3901
      %v3903 = vpop.f32.mrb[0].mxu0
      %v3904 = vadd.f32 %v3735, %v3903
      %v3905 = vpop.f32.mrb[0].mxu0
      %3906 = vmatprep.mubr.f32.mxu0 0.0
      %v3907 = vand.u32 %v2756, 4294901760
      %3908 = vmatmul.mubr.f32.gmra.mrb[0].mxu0 %v3907
      %v3909 = vpop.f32.mrb[0].mxu0
      %v3910 = vadd.f32 %v3741, %v3909
      %v3911 = vpop.f32.mrb[0].mxu0
      %3912 = vmatprep.mubr.f32.mxu0 0.0
      %v3913 = vand.u32 %v2759, 4294901760
      %3914 = vmatmul.mubr.f32.gmra.mrb[0].mxu0 %v3913
      %v3915 = vpop.f32.mrb[0].mxu0
      %v3916 = vadd.f32 %v3747, %v3915
      %v3917 = vpop.f32.mrb[0].mxu0
      %3918 = vmatprep.mubr.f32.mxu0 0.0
      %v3919 = vand.u32 %v2762, 4294901760
      %3920 = vmatmul.mubr.f32.gmra.mrb[0].mxu0 %v3919
      %v3921 = vpop.f32.mrb[0].mxu0
      %v3922 = vadd.f32 %v3753, %v3921
      %v3923 = vpop.f32.mrb[0].mxu0
      %3924 = vmatprep.mubr.f32.mxu0 0.0
      %v3925 = vand.u32 %v2765, 4294901760
      %3926 = vmatmul.mubr.f32.gmra.mrb[0].mxu0 %v3925
      %v3927 = vpop.f32.mrb[0].mxu0
      %v3928 = vadd.f32 %v3759, %v3927
      %v3929 = vpop.f32.mrb[0].mxu0
      %3930 = vmatprep.mubr.f32.mxu0 0.0
      %v3931 = vand.u32 %v2768, 4294901760
      %3932 = vmatmul.mubr.f32.gmra.mrb[0].mxu0 %v3931
      %v3933 = vpop.f32.mrb[0].mxu0
      %v3934 = vadd.f32 %v3765, %v3933
      %v3935 = vpop.f32.mrb[0].mxu0
      %3936 = vmatprep.mubr.f32.mxu0 0.0
      %v3937 = vand.u32 %v2771, 4294901760
      %3938 = vmatmul.mubr.f32.gmra.mrb[0].mxu0 %v3937
      %v3939 = vpop.f32.mrb[0].mxu0
      %v3940 = vadd.f32 %v3771, %v3939
      %v3941 = vpop.f32.mrb[0].mxu0
      %3942 = vmatprep.mubr.f32.mxu0 0.0
      %v3943 = vand.u32 %v2774, 4294901760
      %3944 = vmatmul.mubr.f32.gmra.mrb[0].mxu0 %v3943
      %v3945 = vpop.f32.mrb[0].mxu0
      %v3946 = vadd.f32 %v3777, %v3945
      %v3947 = vpop.f32.mrb[0].mxu0
      %3948 = vmatprep.mubr.f32.mxu0 0.0
      %v3949 = vand.u32 %v2777, 4294901760
      %3950 = vmatmul.mubr.f32.gmra.mrb[0].mxu0 %v3949
      %v3951 = vpop.f32.mrb[0].mxu0
      %v3952 = vadd.f32 %v3783, %v3951
      %v3953 = vpop.f32.mrb[0].mxu0
      %3954 = vmatprep.mubr.f32.mxu0 0.0
      %v3955 = vand.u32 %v2780, 4294901760
      %3956 = vmatmul.mubr.f32.gmra.mrb[0].mxu0 %v3955
      %v3957 = vpop.f32.mrb[0].mxu0
      %v3958 = vadd.f32 %v3789, %v3957
      %v3959 = vpop.f32.mrb[0].mxu0
      %3960 = vmatprep.mubr.f32.mxu0 0.0
      %v3961 = vand.u32 %v2783, 4294901760
      %3962 = vmatmul.mubr.f32.gmra.mrb[0].mxu0 %v3961
      %v3963 = vpop.f32.mrb[0].mxu0
      %v3964 = vadd.f32 %v3795, %v3963
      %v3965 = vpop.f32.mrb[0].mxu0
      %3966 = vdwg.mxu0
      %s3967 = scalar_lea.vmem %s2, 16
      %v3968 = vld [vmem:[%s3967] sm:$0xff]
      %v3969 = vld [vmem:[%s3967 + $0x8] sm:$0xff]
      %v3971 = vsel %vm1471, %v3874, 0
      %v3974 = vsel %vm1471, %v3880, 0
      %v3977 = vsel %vm1471, %v3886, 0
      %v3980 = vsel %vm1471, %v3892, 0
      %v3983 = vsel %vm1471, %v3898, 0
      %v3986 = vsel %vm1471, %v3904, 0
      %v3989 = vsel %vm1471, %v3910, 0
      %v3992 = vsel %vm1471, %v3916, 0
      %v3995 = vsel %vm1471, %v3922, 0
      %v3998 = vsel %vm1471, %v3928, 0
      %v4001 = vsel %vm1471, %v3934, 0
      %v4004 = vsel %vm1471, %v3940, 0
      %v4007 = vsel %vm1471, %v3946, 0
      %v4010 = vsel %vm1471, %v3952, 0
      %v4013 = vsel %vm1471, %v3958, 0
      %v4016 = vsel %vm1471, %v3964, 0
      %4018 = vmatprep.subr.mxu0 0.0
      %v4019 = vand.u32 %v3968, 4294901760
      %4020 = vmatpush1.msra.mxu0 %v4019
      %4021 = vmatprep.subr.mxu0 0.0
      %v4022 = vand.u32 %v3969, 4294901760
      %4023 = vmatpush1.msra.mxu0 %v4022
      %4024 = vmatprep.subr.mxu0 0.0
      %4025 = vmatpush1.msra.mxu0 0.0
      %4026 = vmatprep.subr.mxu0 0.0
      %4027 = vmatpush1.msra.mxu0 0.0
      %4028 = vmatprep.subr.mxu0 0.0
      %4029 = vmatpush1.msra.mxu0 0.0
      %4030 = vmatprep.subr.mxu0 0.0
      %4031 = vmatpush1.msra.mxu0 0.0
      %4032 = vmatprep.subr.mxu0 0.0
      %4033 = vmatpush1.msra.mxu0 0.0
      %4034 = vmatprep.subr.mxu0 0.0
      %4035 = vmatpush1.msra.mxu0 0.0
      %4036 = vmatprep.subr.mxu0 0.0
      %4037 = vmatpush1.msra.mxu0 0.0
      %4038 = vmatprep.subr.mxu0 0.0
      %4039 = vmatpush1.msra.mxu0 0.0
      %4040 = vmatprep.subr.mxu0 0.0
      %4041 = vmatpush1.msra.mxu0 0.0
      %4042 = vmatprep.subr.mxu0 0.0
      %4043 = vmatpush1.msra.mxu0 0.0
      %4044 = vmatprep.subr.mxu0 0.0
      %4045 = vmatpush1.msra.mxu0 0.0
      %4046 = vmatprep.subr.mxu0 0.0
      %4047 = vmatpush1.msra.mxu0 0.0
      %4048 = vmatprep.subr.mxu0 0.0
      %4049 = vmatpush1.msra.mxu0 0.0
      %4050 = vmatprep.subr.mxu0 0.0
      %4051 = vmatpush1.msra.mxu0 0.0
      %4052 = vmatprep.subr.mxu0 0.0
      %4053 = vmatpush1.msra.mxu0 0.0
      %4054 = vmatprep.subr.mxu0 0.0
      %4055 = vmatpush1.msra.mxu0 0.0
      %4056 = vmatprep.subr.mxu0 0.0
      %4057 = vmatpush1.msra.mxu0 0.0
      %4058 = vmatprep.subr.mxu0 0.0
      %4059 = vmatpush1.msra.mxu0 0.0
      %4060 = vmatprep.subr.mxu0 0.0
      %4061 = vmatpush1.msra.mxu0 0.0
      %4062 = vmatprep.subr.mxu0 0.0
      %4063 = vmatpush1.msra.mxu0 0.0
      %4064 = vmatprep.subr.mxu0 0.0
      %4065 = vmatpush1.msra.mxu0 0.0
      %4066 = vmatprep.subr.mxu0 0.0
      %4067 = vmatpush1.msra.mxu0 0.0
      %4068 = vmatprep.subr.mxu0 0.0
      %4069 = vmatpush1.msra.mxu0 0.0
      %4070 = vmatprep.subr.mxu0 0.0
      %4071 = vmatpush1.msra.mxu0 0.0
      %4072 = vmatprep.subr.mxu0 0.0
      %4073 = vmatpush1.msra.mxu0 0.0
      %4074 = vmatprep.subr.mxu0 0.0
      %4075 = vmatpush1.msra.mxu0 0.0
      %4076 = vmatprep.subr.mxu0 0.0
      %4077 = vmatpush1.msra.mxu0 0.0
      %4078 = vmatprep.subr.mxu0 0.0
      %4079 = vmatpush1.msra.mxu0 0.0
      %4080 = vmatprep.subr.mxu0 0.0
      %4081 = vmatpush1.msra.mxu0 0.0
      %4082 = vmatprep.subr.mxu0 0.0
      %4083 = vmatpush1.msra.mxu0 0.0
      %4084 = vmatprep.mubr.f32.mxu0 0.0
      %v4085 = vand.u32 %v3971, 4294901760
      %v4086 = vsub.f32 %v3971, %v4085
      %v4087 = vand.u32 %v4086, 4294901760
      %v4088 = vsub.f32 %v4086, %v4087
      %v4089 = vand.u32 %v4088, 4294901760
      %4090 = vmatmul.mubr.f32.gmra.mrb[0].mxu0 %v4089
      %v4091 = vpop.f32.mrb[0].mxu0
      %v4092 = vadd.f32 0.0, %v4091
      %v4093 = vpop.f32.mrb[0].mxu0
      %4094 = vmatprep.mubr.f32.mxu0 0.0
      %v4095 = vand.u32 %v3974, 4294901760
      %v4096 = vsub.f32 %v3974, %v4095
      %v4097 = vand.u32 %v4096, 4294901760
      %v4098 = vsub.f32 %v4096, %v4097
      %v4099 = vand.u32 %v4098, 4294901760
      %4100 = vmatmul.mubr.f32.gmra.mrb[0].mxu0 %v4099
      %v4101 = vpop.f32.mrb[0].mxu0
      %v4102 = vadd.f32 0.0, %v4101
      %v4103 = vpop.f32.mrb[0].mxu0
      %4104 = vmatprep.mubr.f32.mxu0 0.0
      %v4105 = vand.u32 %v3977, 4294901760
      %v4106 = vsub.f32 %v3977, %v4105
      %v4107 = vand.u32 %v4106, 4294901760
      %v4108 = vsub.f32 %v4106, %v4107
      %v4109 = vand.u32 %v4108, 4294901760
      %4110 = vmatmul.mubr.f32.gmra.mrb[0].mxu0 %v4109
      %v4111 = vpop.f32.mrb[0].mxu0
      %v4112 = vadd.f32 0.0, %v4111
      %v4113 = vpop.f32.mrb[0].mxu0
      %4114 = vmatprep.mubr.f32.mxu0 0.0
      %v4115 = vand.u32 %v3980, 4294901760
      %v4116 = vsub.f32 %v3980, %v4115
      %v4117 = vand.u32 %v4116, 4294901760
      %v4118 = vsub.f32 %v4116, %v4117
      %v4119 = vand.u32 %v4118, 4294901760
      %4120 = vmatmul.mubr.f32.gmra.mrb[0].mxu0 %v4119
      %v4121 = vpop.f32.mrb[0].mxu0
      %v4122 = vadd.f32 0.0, %v4121
      %v4123 = vpop.f32.mrb[0].mxu0
      %4124 = vmatprep.mubr.f32.mxu0 0.0
      %v4125 = vand.u32 %v3983, 4294901760
      %v4126 = vsub.f32 %v3983, %v4125
      %v4127 = vand.u32 %v4126, 4294901760
      %v4128 = vsub.f32 %v4126, %v4127
      %v4129 = vand.u32 %v4128, 4294901760
      %4130 = vmatmul.mubr.f32.gmra.mrb[0].mxu0 %v4129
      %v4131 = vpop.f32.mrb[0].mxu0
      %v4132 = vadd.f32 0.0, %v4131
      %v4133 = vpop.f32.mrb[0].mxu0
      %4134 = vmatprep.mubr.f32.mxu0 0.0
      %v4135 = vand.u32 %v3986, 4294901760
      %v4136 = vsub.f32 %v3986, %v4135
      %v4137 = vand.u32 %v4136, 4294901760
      %v4138 = vsub.f32 %v4136, %v4137
      %v4139 = vand.u32 %v4138, 4294901760
      %4140 = vmatmul.mubr.f32.gmra.mrb[0].mxu0 %v4139
      %v4141 = vpop.f32.mrb[0].mxu0
      %v4142 = vadd.f32 0.0, %v4141
      %v4143 = vpop.f32.mrb[0].mxu0
      %4144 = vmatprep.mubr.f32.mxu0 0.0
      %v4145 = vand.u32 %v3989, 4294901760
      %v4146 = vsub.f32 %v3989, %v4145
      %v4147 = vand.u32 %v4146, 4294901760
      %v4148 = vsub.f32 %v4146, %v4147
      %v4149 = vand.u32 %v4148, 4294901760
      %4150 = vmatmul.mubr.f32.gmra.mrb[0].mxu0 %v4149
      %v4151 = vpop.f32.mrb[0].mxu0
      %v4152 = vadd.f32 0.0, %v4151
      %v4153 = vpop.f32.mrb[0].mxu0
      %4154 = vmatprep.mubr.f32.mxu0 0.0
      %v4155 = vand.u32 %v3992, 4294901760
      %v4156 = vsub.f32 %v3992, %v4155
      %v4157 = vand.u32 %v4156, 4294901760
      %v4158 = vsub.f32 %v4156, %v4157
      %v4159 = vand.u32 %v4158, 4294901760
      %4160 = vmatmul.mubr.f32.gmra.mrb[0].mxu0 %v4159
      %v4161 = vpop.f32.mrb[0].mxu0
      %v4162 = vadd.f32 0.0, %v4161
      %v4163 = vpop.f32.mrb[0].mxu0
      %4164 = vmatprep.mubr.f32.mxu0 0.0
      %v4165 = vand.u32 %v3995, 4294901760
      %v4166 = vsub.f32 %v3995, %v4165
      %v4167 = vand.u32 %v4166, 4294901760
      %v4168 = vsub.f32 %v4166, %v4167
      %v4169 = vand.u32 %v4168, 4294901760
      %4170 = vmatmul.mubr.f32.gmra.mrb[0].mxu0 %v4169
      %v4171 = vpop.f32.mrb[0].mxu0
      %v4172 = vadd.f32 0.0, %v4171
      %v4173 = vpop.f32.mrb[0].mxu0
      %4174 = vmatprep.mubr.f32.mxu0 0.0
      %v4175 = vand.u32 %v3998, 4294901760
      %v4176 = vsub.f32 %v3998, %v4175
      %v4177 = vand.u32 %v4176, 4294901760
      %v4178 = vsub.f32 %v4176, %v4177
      %v4179 = vand.u32 %v4178, 4294901760
      %4180 = vmatmul.mubr.f32.gmra.mrb[0].mxu0 %v4179
      %v4181 = vpop.f32.mrb[0].mxu0
      %v4182 = vadd.f32 0.0, %v4181
      %v4183 = vpop.f32.mrb[0].mxu0
      %4184 = vmatprep.mubr.f32.mxu0 0.0
      %v4185 = vand.u32 %v4001, 4294901760
      %v4186 = vsub.f32 %v4001, %v4185
      %v4187 = vand.u32 %v4186, 4294901760
      %v4188 = vsub.f32 %v4186, %v4187
      %v4189 = vand.u32 %v4188, 4294901760
      %4190 = vmatmul.mubr.f32.gmra.mrb[0].mxu0 %v4189
      %v4191 = vpop.f32.mrb[0].mxu0
      %v4192 = vadd.f32 0.0, %v4191
      %v4193 = vpop.f32.mrb[0].mxu0
      %4194 = vmatprep.mubr.f32.mxu0 0.0
      %v4195 = vand.u32 %v4004, 4294901760
      %v4196 = vsub.f32 %v4004, %v4195
      %v4197 = vand.u32 %v4196, 4294901760
      %v4198 = vsub.f32 %v4196, %v4197
      %v4199 = vand.u32 %v4198, 4294901760
      %4200 = vmatmul.mubr.f32.gmra.mrb[0].mxu0 %v4199
      %v4201 = vpop.f32.mrb[0].mxu0
      %v4202 = vadd.f32 0.0, %v4201
      %v4203 = vpop.f32.mrb[0].mxu0
      %4204 = vmatprep.mubr.f32.mxu0 0.0
      %v4205 = vand.u32 %v4007, 4294901760
      %v4206 = vsub.f32 %v4007, %v4205
      %v4207 = vand.u32 %v4206, 4294901760
      %v4208 = vsub.f32 %v4206, %v4207
      %v4209 = vand.u32 %v4208, 4294901760
      %4210 = vmatmul.mubr.f32.gmra.mrb[0].mxu0 %v4209
      %v4211 = vpop.f32.mrb[0].mxu0
      %v4212 = vadd.f32 0.0, %v4211
      %v4213 = vpop.f32.mrb[0].mxu0
      %4214 = vmatprep.mubr.f32.mxu0 0.0
      %v4215 = vand.u32 %v4010, 4294901760
      %v4216 = vsub.f32 %v4010, %v4215
      %v4217 = vand.u32 %v4216, 4294901760
      %v4218 = vsub.f32 %v4216, %v4217
      %v4219 = vand.u32 %v4218, 4294901760
      %4220 = vmatmul.mubr.f32.gmra.mrb[0].mxu0 %v4219
      %v4221 = vpop.f32.mrb[0].mxu0
      %v4222 = vadd.f32 0.0, %v4221
      %v4223 = vpop.f32.mrb[0].mxu0
      %4224 = vmatprep.mubr.f32.mxu0 0.0
      %v4225 = vand.u32 %v4013, 4294901760
      %v4226 = vsub.f32 %v4013, %v4225
      %v4227 = vand.u32 %v4226, 4294901760
      %v4228 = vsub.f32 %v4226, %v4227
      %v4229 = vand.u32 %v4228, 4294901760
      %4230 = vmatmul.mubr.f32.gmra.mrb[0].mxu0 %v4229
      %v4231 = vpop.f32.mrb[0].mxu0
      %v4232 = vadd.f32 0.0, %v4231
      %v4233 = vpop.f32.mrb[0].mxu0
      %4234 = vmatprep.mubr.f32.mxu0 0.0
      %v4235 = vand.u32 %v4016, 4294901760
      %v4236 = vsub.f32 %v4016, %v4235
      %v4237 = vand.u32 %v4236, 4294901760
      %v4238 = vsub.f32 %v4236, %v4237
      %v4239 = vand.u32 %v4238, 4294901760
      %4240 = vmatmul.mubr.f32.gmra.mrb[0].mxu0 %v4239
      %v4241 = vpop.f32.mrb[0].mxu0
      %v4242 = vadd.f32 0.0, %v4241
      %v4243 = vpop.f32.mrb[0].mxu0
      %4244 = vdwg.mxu0
      %4245 = vmatprep.subr.mxu0 0.0
      %v4246 = vand.u32 %v3968, 4294901760
      %v4247 = vsub.f32 %v3968, %v4246
      %v4248 = vand.u32 %v4247, 4294901760
      %v4249 = vsub.f32 %v4247, %v4248
      %v4250 = vand.u32 %v4249, 4294901760
      %4251 = vmatpush1.msra.mxu0 %v4250
      %4252 = vmatprep.subr.mxu0 0.0
      %v4253 = vand.u32 %v3969, 4294901760
      %v4254 = vsub.f32 %v3969, %v4253
      %v4255 = vand.u32 %v4254, 4294901760
      %v4256 = vsub.f32 %v4254, %v4255
      %v4257 = vand.u32 %v4256, 4294901760
      %4258 = vmatpush1.msra.mxu0 %v4257
      %4259 = vmatprep.subr.mxu0 0.0
      %4260 = vmatpush1.msra.mxu0 0.0
      %4261 = vmatprep.subr.mxu0 0.0
      %4262 = vmatpush1.msra.mxu0 0.0
      %4263 = vmatprep.subr.mxu0 0.0
      %4264 = vmatpush1.msra.mxu0 0.0
      %4265 = vmatprep.subr.mxu0 0.0
      %4266 = vmatpush1.msra.mxu0 0.0
      %4267 = vmatprep.subr.mxu0 0.0
      %4268 = vmatpush1.msra.mxu0 0.0
      %4269 = vmatprep.subr.mxu0 0.0
      %4270 = vmatpush1.msra.mxu0 0.0
      %4271 = vmatprep.subr.mxu0 0.0
      %4272 = vmatpush1.msra.mxu0 0.0
      %4273 = vmatprep.subr.mxu0 0.0
      %4274 = vmatpush1.msra.mxu0 0.0
      %4275 = vmatprep.subr.mxu0 0.0
      %4276 = vmatpush1.msra.mxu0 0.0
      %4277 = vmatprep.subr.mxu0 0.0
      %4278 = vmatpush1.msra.mxu0 0.0
      %4279 = vmatprep.subr.mxu0 0.0
      %4280 = vmatpush1.msra.mxu0 0.0
      %4281 = vmatprep.subr.mxu0 0.0
      %4282 = vmatpush1.msra.mxu0 0.0
      %4283 = vmatprep.subr.mxu0 0.0
      %4284 = vmatpush1.msra.mxu0 0.0
      %4285 = vmatprep.subr.mxu0 0.0
      %4286 = vmatpush1.msra.mxu0 0.0
      %4287 = vmatprep.subr.mxu0 0.0
      %4288 = vmatpush1.msra.mxu0 0.0
      %4289 = vmatprep.subr.mxu0 0.0
      %4290 = vmatpush1.msra.mxu0 0.0
      %4291 = vmatprep.subr.mxu0 0.0
      %4292 = vmatpush1.msra.mxu0 0.0
      %4293 = vmatprep.subr.mxu0 0.0
      %4294 = vmatpush1.msra.mxu0 0.0
      %4295 = vmatprep.subr.mxu0 0.0
      %4296 = vmatpush1.msra.mxu0 0.0
      %4297 = vmatprep.subr.mxu0 0.0
      %4298 = vmatpush1.msra.mxu0 0.0
      %4299 = vmatprep.subr.mxu0 0.0
      %4300 = vmatpush1.msra.mxu0 0.0
      %4301 = vmatprep.subr.mxu0 0.0
      %4302 = vmatpush1.msra.mxu0 0.0
      %4303 = vmatprep.subr.mxu0 0.0
      %4304 = vmatpush1.msra.mxu0 0.0
      %4305 = vmatprep.subr.mxu0 0.0
      %4306 = vmatpush1.msra.mxu0 0.0
      %4307 = vmatprep.subr.mxu0 0.0
      %4308 = vmatpush1.msra.mxu0 0.0
      %4309 = vmatprep.subr.mxu0 0.0
      %4310 = vmatpush1.msra.mxu0 0.0
      %4311 = vmatprep.subr.mxu0 0.0
      %4312 = vmatpush1.msra.mxu0 0.0
      %4313 = vmatprep.subr.mxu0 0.0
      %4314 = vmatpush1.msra.mxu0 0.0
      %4315 = vmatprep.subr.mxu0 0.0
      %4316 = vmatpush1.msra.mxu0 0.0
      %4317 = vmatprep.subr.mxu0 0.0
      %4318 = vmatpush1.msra.mxu0 0.0
      %4319 = vmatprep.mubr.f32.mxu0 0.0
      %v4320 = vand.u32 %v3971, 4294901760
      %4321 = vmatmul.mubr.f32.gmra.mrb[0].mxu0 %v4320
      %v4322 = vpop.f32.mrb[0].mxu0
      %v4323 = vadd.f32 %v4092, %v4322
      %v4324 = vpop.f32.mrb[0].mxu0
      %4325 = vmatprep.mubr.f32.mxu0 0.0
      %v4326 = vand.u32 %v3974, 4294901760
      %4327 = vmatmul.mubr.f32.gmra.mrb[0].mxu0 %v4326
      %v4328 = vpop.f32.mrb[0].mxu0
      %v4329 = vadd.f32 %v4102, %v4328
      %v4330 = vpop.f32.mrb[0].mxu0
      %4331 = vmatprep.mubr.f32.mxu0 0.0
      %v4332 = vand.u32 %v3977, 4294901760
      %4333 = vmatmul.mubr.f32.gmra.mrb[0].mxu0 %v4332
      %v4334 = vpop.f32.mrb[0].mxu0
      %v4335 = vadd.f32 %v4112, %v4334
      %v4336 = vpop.f32.mrb[0].mxu0
      %4337 = vmatprep.mubr.f32.mxu0 0.0
      %v4338 = vand.u32 %v3980, 4294901760
      %4339 = vmatmul.mubr.f32.gmra.mrb[0].mxu0 %v4338
      %v4340 = vpop.f32.mrb[0].mxu0
      %v4341 = vadd.f32 %v4122, %v4340
      %v4342 = vpop.f32.mrb[0].mxu0
      %4343 = vmatprep.mubr.f32.mxu0 0.0
      %v4344 = vand.u32 %v3983, 4294901760
      %4345 = vmatmul.mubr.f32.gmra.mrb[0].mxu0 %v4344
      %v4346 = vpop.f32.mrb[0].mxu0
      %v4347 = vadd.f32 %v4132, %v4346
      %v4348 = vpop.f32.mrb[0].mxu0
      %4349 = vmatprep.mubr.f32.mxu0 0.0
      %v4350 = vand.u32 %v3986, 4294901760
      %4351 = vmatmul.mubr.f32.gmra.mrb[0].mxu0 %v4350
      %v4352 = vpop.f32.mrb[0].mxu0
      %v4353 = vadd.f32 %v4142, %v4352
      %v4354 = vpop.f32.mrb[0].mxu0
      %4355 = vmatprep.mubr.f32.mxu0 0.0
      %v4356 = vand.u32 %v3989, 4294901760
      %4357 = vmatmul.mubr.f32.gmra.mrb[0].mxu0 %v4356
      %v4358 = vpop.f32.mrb[0].mxu0
      %v4359 = vadd.f32 %v4152, %v4358
      %v4360 = vpop.f32.mrb[0].mxu0
      %4361 = vmatprep.mubr.f32.mxu0 0.0
      %v4362 = vand.u32 %v3992, 4294901760
      %4363 = vmatmul.mubr.f32.gmra.mrb[0].mxu0 %v4362
      %v4364 = vpop.f32.mrb[0].mxu0
      %v4365 = vadd.f32 %v4162, %v4364
      %v4366 = vpop.f32.mrb[0].mxu0
      %4367 = vmatprep.mubr.f32.mxu0 0.0
      %v4368 = vand.u32 %v3995, 4294901760
      %4369 = vmatmul.mubr.f32.gmra.mrb[0].mxu0 %v4368
      %v4370 = vpop.f32.mrb[0].mxu0
      %v4371 = vadd.f32 %v4172, %v4370
      %v4372 = vpop.f32.mrb[0].mxu0
      %4373 = vmatprep.mubr.f32.mxu0 0.0
      %v4374 = vand.u32 %v3998, 4294901760
      %4375 = vmatmul.mubr.f32.gmra.mrb[0].mxu0 %v4374
      %v4376 = vpop.f32.mrb[0].mxu0
      %v4377 = vadd.f32 %v4182, %v4376
      %v4378 = vpop.f32.mrb[0].mxu0
      %4379 = vmatprep.mubr.f32.mxu0 0.0
      %v4380 = vand.u32 %v4001, 4294901760
      %4381 = vmatmul.mubr.f32.gmra.mrb[0].mxu0 %v4380
      %v4382 = vpop.f32.mrb[0].mxu0
      %v4383 = vadd.f32 %v4192, %v4382
      %v4384 = vpop.f32.mrb[0].mxu0
      %4385 = vmatprep.mubr.f32.mxu0 0.0
      %v4386 = vand.u32 %v4004, 4294901760
      %4387 = vmatmul.mubr.f32.gmra.mrb[0].mxu0 %v4386
      %v4388 = vpop.f32.mrb[0].mxu0
      %v4389 = vadd.f32 %v4202, %v4388
      %v4390 = vpop.f32.mrb[0].mxu0
      %4391 = vmatprep.mubr.f32.mxu0 0.0
      %v4392 = vand.u32 %v4007, 4294901760
      %4393 = vmatmul.mubr.f32.gmra.mrb[0].mxu0 %v4392
      %v4394 = vpop.f32.mrb[0].mxu0
      %v4395 = vadd.f32 %v4212, %v4394
      %v4396 = vpop.f32.mrb[0].mxu0
      %4397 = vmatprep.mubr.f32.mxu0 0.0
      %v4398 = vand.u32 %v4010, 4294901760
      %4399 = vmatmul.mubr.f32.gmra.mrb[0].mxu0 %v4398
      %v4400 = vpop.f32.mrb[0].mxu0
      %v4401 = vadd.f32 %v4222, %v4400
      %v4402 = vpop.f32.mrb[0].mxu0
      %4403 = vmatprep.mubr.f32.mxu0 0.0
      %v4404 = vand.u32 %v4013, 4294901760
      %4405 = vmatmul.mubr.f32.gmra.mrb[0].mxu0 %v4404
      %v4406 = vpop.f32.mrb[0].mxu0
      %v4407 = vadd.f32 %v4232, %v4406
      %v4408 = vpop.f32.mrb[0].mxu0
      %4409 = vmatprep.mubr.f32.mxu0 0.0
      %v4410 = vand.u32 %v4016, 4294901760
      %4411 = vmatmul.mubr.f32.gmra.mrb[0].mxu0 %v4410
      %v4412 = vpop.f32.mrb[0].mxu0
      %v4413 = vadd.f32 %v4242, %v4412
      %v4414 = vpop.f32.mrb[0].mxu0
      %4415 = vdwg.mxu0
      %4416 = vmatprep.subr.mxu0 0.0
      %v4417 = vand.u32 %v3968, 4294901760
      %v4418 = vsub.f32 %v3968, %v4417
      %4419 = vmatpush1.msra.mxu0 %v4418
      %4420 = vmatprep.subr.mxu0 0.0
      %v4421 = vand.u32 %v3969, 4294901760
      %v4422 = vsub.f32 %v3969, %v4421
      %4423 = vmatpush1.msra.mxu0 %v4422
      %4424 = vmatprep.subr.mxu0 0.0
      %4425 = vmatpush1.msra.mxu0 0.0
      %4426 = vmatprep.subr.mxu0 0.0
      %4427 = vmatpush1.msra.mxu0 0.0
      %4428 = vmatprep.subr.mxu0 0.0
      %4429 = vmatpush1.msra.mxu0 0.0
      %4430 = vmatprep.subr.mxu0 0.0
      %4431 = vmatpush1.msra.mxu0 0.0
      %4432 = vmatprep.subr.mxu0 0.0
      %4433 = vmatpush1.msra.mxu0 0.0
      %4434 = vmatprep.subr.mxu0 0.0
      %4435 = vmatpush1.msra.mxu0 0.0
      %4436 = vmatprep.subr.mxu0 0.0
      %4437 = vmatpush1.msra.mxu0 0.0
      %4438 = vmatprep.subr.mxu0 0.0
      %4439 = vmatpush1.msra.mxu0 0.0
      %4440 = vmatprep.subr.mxu0 0.0
      %4441 = vmatpush1.msra.mxu0 0.0
      %4442 = vmatprep.subr.mxu0 0.0
      %4443 = vmatpush1.msra.mxu0 0.0
      %4444 = vmatprep.subr.mxu0 0.0
      %4445 = vmatpush1.msra.mxu0 0.0
      %4446 = vmatprep.subr.mxu0 0.0
      %4447 = vmatpush1.msra.mxu0 0.0
      %4448 = vmatprep.subr.mxu0 0.0
      %4449 = vmatpush1.msra.mxu0 0.0
      %4450 = vmatprep.subr.mxu0 0.0
      %4451 = vmatpush1.msra.mxu0 0.0
      %4452 = vmatprep.subr.mxu0 0.0
      %4453 = vmatpush1.msra.mxu0 0.0
      %4454 = vmatprep.subr.mxu0 0.0
      %4455 = vmatpush1.msra.mxu0 0.0
      %4456 = vmatprep.subr.mxu0 0.0
      %4457 = vmatpush1.msra.mxu0 0.0
      %4458 = vmatprep.subr.mxu0 0.0
      %4459 = vmatpush1.msra.mxu0 0.0
      %4460 = vmatprep.subr.mxu0 0.0
      %4461 = vmatpush1.msra.mxu0 0.0
      %4462 = vmatprep.subr.mxu0 0.0
      %4463 = vmatpush1.msra.mxu0 0.0
      %4464 = vmatprep.subr.mxu0 0.0
      %4465 = vmatpush1.msra.mxu0 0.0
      %4466 = vmatprep.subr.mxu0 0.0
      %4467 = vmatpush1.msra.mxu0 0.0
      %4468 = vmatprep.subr.mxu0 0.0
      %4469 = vmatpush1.msra.mxu0 0.0
      %4470 = vmatprep.subr.mxu0 0.0
      %4471 = vmatpush1.msra.mxu0 0.0
      %4472 = vmatprep.subr.mxu0 0.0
      %4473 = vmatpush1.msra.mxu0 0.0
      %4474 = vmatprep.subr.mxu0 0.0
      %4475 = vmatpush1.msra.mxu0 0.0
      %4476 = vmatprep.subr.mxu0 0.0
      %4477 = vmatpush1.msra.mxu0 0.0
      %4478 = vmatprep.subr.mxu0 0.0
      %4479 = vmatpush1.msra.mxu0 0.0
      %4480 = vmatprep.subr.mxu0 0.0
      %4481 = vmatpush1.msra.mxu0 0.0
      %4482 = vmatprep.subr.mxu0 0.0
      %4483 = vmatpush1.msra.mxu0 0.0
      %4484 = vmatprep.mubr.f32.mxu0 0.0
      %v4485 = vand.u32 %v3971, 4294901760
      %v4486 = vsub.f32 %v3971, %v4485
      %4487 = vmatmul.mubr.f32.gmra.mrb[0].mxu0 %v4486
      %v4488 = vpop.f32.mrb[0].mxu0
      %v4489 = vadd.f32 %v4323, %v4488
      %v4490 = vpop.f32.mrb[0].mxu0
      %4491 = vmatprep.mubr.f32.mxu0 0.0
      %v4492 = vand.u32 %v3974, 4294901760
      %v4493 = vsub.f32 %v3974, %v4492
      %4494 = vmatmul.mubr.f32.gmra.mrb[0].mxu0 %v4493
      %v4495 = vpop.f32.mrb[0].mxu0
      %v4496 = vadd.f32 %v4329, %v4495
      %v4497 = vpop.f32.mrb[0].mxu0
      %4498 = vmatprep.mubr.f32.mxu0 0.0
      %v4499 = vand.u32 %v3977, 4294901760
      %v4500 = vsub.f32 %v3977, %v4499
      %4501 = vmatmul.mubr.f32.gmra.mrb[0].mxu0 %v4500
      %v4502 = vpop.f32.mrb[0].mxu0
      %v4503 = vadd.f32 %v4335, %v4502
      %v4504 = vpop.f32.mrb[0].mxu0
      %4505 = vmatprep.mubr.f32.mxu0 0.0
      %v4506 = vand.u32 %v3980, 4294901760
      %v4507 = vsub.f32 %v3980, %v4506
      %4508 = vmatmul.mubr.f32.gmra.mrb[0].mxu0 %v4507
      %v4509 = vpop.f32.mrb[0].mxu0
      %v4510 = vadd.f32 %v4341, %v4509
      %v4511 = vpop.f32.mrb[0].mxu0
      %4512 = vmatprep.mubr.f32.mxu0 0.0
      %v4513 = vand.u32 %v3983, 4294901760
      %v4514 = vsub.f32 %v3983, %v4513
      %4515 = vmatmul.mubr.f32.gmra.mrb[0].mxu0 %v4514
      %v4516 = vpop.f32.mrb[0].mxu0
      %v4517 = vadd.f32 %v4347, %v4516
      %v4518 = vpop.f32.mrb[0].mxu0
      %4519 = vmatprep.mubr.f32.mxu0 0.0
      %v4520 = vand.u32 %v3986, 4294901760
      %v4521 = vsub.f32 %v3986, %v4520
      %4522 = vmatmul.mubr.f32.gmra.mrb[0].mxu0 %v4521
      %v4523 = vpop.f32.mrb[0].mxu0
      %v4524 = vadd.f32 %v4353, %v4523
      %v4525 = vpop.f32.mrb[0].mxu0
      %4526 = vmatprep.mubr.f32.mxu0 0.0
      %v4527 = vand.u32 %v3989, 4294901760
      %v4528 = vsub.f32 %v3989, %v4527
      %4529 = vmatmul.mubr.f32.gmra.mrb[0].mxu0 %v4528
      %v4530 = vpop.f32.mrb[0].mxu0
      %v4531 = vadd.f32 %v4359, %v4530
      %v4532 = vpop.f32.mrb[0].mxu0
      %4533 = vmatprep.mubr.f32.mxu0 0.0
      %v4534 = vand.u32 %v3992, 4294901760
      %v4535 = vsub.f32 %v3992, %v4534
      %4536 = vmatmul.mubr.f32.gmra.mrb[0].mxu0 %v4535
      %v4537 = vpop.f32.mrb[0].mxu0
      %v4538 = vadd.f32 %v4365, %v4537
      %v4539 = vpop.f32.mrb[0].mxu0
      %4540 = vmatprep.mubr.f32.mxu0 0.0
      %v4541 = vand.u32 %v3995, 4294901760
      %v4542 = vsub.f32 %v3995, %v4541
      %4543 = vmatmul.mubr.f32.gmra.mrb[0].mxu0 %v4542
      %v4544 = vpop.f32.mrb[0].mxu0
      %v4545 = vadd.f32 %v4371, %v4544
      %v4546 = vpop.f32.mrb[0].mxu0
      %4547 = vmatprep.mubr.f32.mxu0 0.0
      %v4548 = vand.u32 %v3998, 4294901760
      %v4549 = vsub.f32 %v3998, %v4548
      %4550 = vmatmul.mubr.f32.gmra.mrb[0].mxu0 %v4549
      %v4551 = vpop.f32.mrb[0].mxu0
      %v4552 = vadd.f32 %v4377, %v4551
      %v4553 = vpop.f32.mrb[0].mxu0
      %4554 = vmatprep.mubr.f32.mxu0 0.0
      %v4555 = vand.u32 %v4001, 4294901760
      %v4556 = vsub.f32 %v4001, %v4555
      %4557 = vmatmul.mubr.f32.gmra.mrb[0].mxu0 %v4556
      %v4558 = vpop.f32.mrb[0].mxu0
      %v4559 = vadd.f32 %v4383, %v4558
      %v4560 = vpop.f32.mrb[0].mxu0
      %4561 = vmatprep.mubr.f32.mxu0 0.0
      %v4562 = vand.u32 %v4004, 4294901760
      %v4563 = vsub.f32 %v4004, %v4562
      %4564 = vmatmul.mubr.f32.gmra.mrb[0].mxu0 %v4563
      %v4565 = vpop.f32.mrb[0].mxu0
      %v4566 = vadd.f32 %v4389, %v4565
      %v4567 = vpop.f32.mrb[0].mxu0
      %4568 = vmatprep.mubr.f32.mxu0 0.0
      %v4569 = vand.u32 %v4007, 4294901760
      %v4570 = vsub.f32 %v4007, %v4569
      %4571 = vmatmul.mubr.f32.gmra.mrb[0].mxu0 %v4570
      %v4572 = vpop.f32.mrb[0].mxu0
      %v4573 = vadd.f32 %v4395, %v4572
      %v4574 = vpop.f32.mrb[0].mxu0
      %4575 = vmatprep.mubr.f32.mxu0 0.0
      %v4576 = vand.u32 %v4010, 4294901760
      %v4577 = vsub.f32 %v4010, %v4576
      %4578 = vmatmul.mubr.f32.gmra.mrb[0].mxu0 %v4577
      %v4579 = vpop.f32.mrb[0].mxu0
      %v4580 = vadd.f32 %v4401, %v4579
      %v4581 = vpop.f32.mrb[0].mxu0
      %4582 = vmatprep.mubr.f32.mxu0 0.0
      %v4583 = vand.u32 %v4013, 4294901760
      %v4584 = vsub.f32 %v4013, %v4583
      %4585 = vmatmul.mubr.f32.gmra.mrb[0].mxu0 %v4584
      %v4586 = vpop.f32.mrb[0].mxu0
      %v4587 = vadd.f32 %v4407, %v4586
      %v4588 = vpop.f32.mrb[0].mxu0
      %4589 = vmatprep.mubr.f32.mxu0 0.0
      %v4590 = vand.u32 %v4016, 4294901760
      %v4591 = vsub.f32 %v4016, %v4590
      %4592 = vmatmul.mubr.f32.gmra.mrb[0].mxu0 %v4591
      %v4593 = vpop.f32.mrb[0].mxu0
      %v4594 = vadd.f32 %v4413, %v4593
      %v4595 = vpop.f32.mrb[0].mxu0
      %4596 = vdwg.mxu0
      %4597 = vmatprep.subr.mxu0 0.0
      %v4598 = vand.u32 %v3968, 4294901760
      %4599 = vmatpush1.msra.mxu0 %v4598
      %4600 = vmatprep.subr.mxu0 0.0
      %v4601 = vand.u32 %v3969, 4294901760
      %4602 = vmatpush1.msra.mxu0 %v4601
      %4603 = vmatprep.subr.mxu0 0.0
      %4604 = vmatpush1.msra.mxu0 0.0
      %4605 = vmatprep.subr.mxu0 0.0
      %4606 = vmatpush1.msra.mxu0 0.0
      %4607 = vmatprep.subr.mxu0 0.0
      %4608 = vmatpush1.msra.mxu0 0.0
      %4609 = vmatprep.subr.mxu0 0.0
      %4610 = vmatpush1.msra.mxu0 0.0
      %4611 = vmatprep.subr.mxu0 0.0
      %4612 = vmatpush1.msra.mxu0 0.0
      %4613 = vmatprep.subr.mxu0 0.0
      %4614 = vmatpush1.msra.mxu0 0.0
      %4615 = vmatprep.subr.mxu0 0.0
      %4616 = vmatpush1.msra.mxu0 0.0
      %4617 = vmatprep.subr.mxu0 0.0
      %4618 = vmatpush1.msra.mxu0 0.0
      %4619 = vmatprep.subr.mxu0 0.0
      %4620 = vmatpush1.msra.mxu0 0.0
      %4621 = vmatprep.subr.mxu0 0.0
      %4622 = vmatpush1.msra.mxu0 0.0
      %4623 = vmatprep.subr.mxu0 0.0
      %4624 = vmatpush1.msra.mxu0 0.0
      %4625 = vmatprep.subr.mxu0 0.0
      %4626 = vmatpush1.msra.mxu0 0.0
      %4627 = vmatprep.subr.mxu0 0.0
      %4628 = vmatpush1.msra.mxu0 0.0
      %4629 = vmatprep.subr.mxu0 0.0
      %4630 = vmatpush1.msra.mxu0 0.0
      %4631 = vmatprep.subr.mxu0 0.0
      %4632 = vmatpush1.msra.mxu0 0.0
      %4633 = vmatprep.subr.mxu0 0.0
      %4634 = vmatpush1.msra.mxu0 0.0
      %4635 = vmatprep.subr.mxu0 0.0
      %4636 = vmatpush1.msra.mxu0 0.0
      %4637 = vmatprep.subr.mxu0 0.0
      %4638 = vmatpush1.msra.mxu0 0.0
      %4639 = vmatprep.subr.mxu0 0.0
      %4640 = vmatpush1.msra.mxu0 0.0
      %4641 = vmatprep.subr.mxu0 0.0
      %4642 = vmatpush1.msra.mxu0 0.0
      %4643 = vmatprep.subr.mxu0 0.0
      %4644 = vmatpush1.msra.mxu0 0.0
      %4645 = vmatprep.subr.mxu0 0.0
      %4646 = vmatpush1.msra.mxu0 0.0
      %4647 = vmatprep.subr.mxu0 0.0
      %4648 = vmatpush1.msra.mxu0 0.0
      %4649 = vmatprep.subr.mxu0 0.0
      %4650 = vmatpush1.msra.mxu0 0.0
      %4651 = vmatprep.subr.mxu0 0.0
      %4652 = vmatpush1.msra.mxu0 0.0
      %4653 = vmatprep.subr.mxu0 0.0
      %4654 = vmatpush1.msra.mxu0 0.0
      %4655 = vmatprep.subr.mxu0 0.0
      %4656 = vmatpush1.msra.mxu0 0.0
      %4657 = vmatprep.subr.mxu0 0.0
      %4658 = vmatpush1.msra.mxu0 0.0
      %4659 = vmatprep.subr.mxu0 0.0
      %4660 = vmatpush1.msra.mxu0 0.0
      %4661 = vmatprep.subr.mxu0 0.0
      %4662 = vmatpush1.msra.mxu0 0.0
      %4663 = vmatprep.mubr.f32.mxu0 0.0
      %v4664 = vand.u32 %v3971, 4294901760
      %v4665 = vsub.f32 %v3971, %v4664
      %v4666 = vand.u32 %v4665, 4294901760
      %4667 = vmatmul.mubr.f32.gmra.mrb[0].mxu0 %v4666
      %v4668 = vpop.f32.mrb[0].mxu0
      %v4669 = vadd.f32 %v4489, %v4668
      %v4670 = vpop.f32.mrb[0].mxu0
      %4671 = vmatprep.mubr.f32.mxu0 0.0
      %v4672 = vand.u32 %v3974, 4294901760
      %v4673 = vsub.f32 %v3974, %v4672
      %v4674 = vand.u32 %v4673, 4294901760
      %4675 = vmatmul.mubr.f32.gmra.mrb[0].mxu0 %v4674
      %v4676 = vpop.f32.mrb[0].mxu0
      %v4677 = vadd.f32 %v4496, %v4676
      %v4678 = vpop.f32.mrb[0].mxu0
      %4679 = vmatprep.mubr.f32.mxu0 0.0
      %v4680 = vand.u32 %v3977, 4294901760
      %v4681 = vsub.f32 %v3977, %v4680
      %v4682 = vand.u32 %v4681, 4294901760
      %4683 = vmatmul.mubr.f32.gmra.mrb[0].mxu0 %v4682
      %v4684 = vpop.f32.mrb[0].mxu0
      %v4685 = vadd.f32 %v4503, %v4684
      %v4686 = vpop.f32.mrb[0].mxu0
      %4687 = vmatprep.mubr.f32.mxu0 0.0
      %v4688 = vand.u32 %v3980, 4294901760
      %v4689 = vsub.f32 %v3980, %v4688
      %v4690 = vand.u32 %v4689, 4294901760
      %4691 = vmatmul.mubr.f32.gmra.mrb[0].mxu0 %v4690
      %v4692 = vpop.f32.mrb[0].mxu0
      %v4693 = vadd.f32 %v4510, %v4692
      %v4694 = vpop.f32.mrb[0].mxu0
      %4695 = vmatprep.mubr.f32.mxu0 0.0
      %v4696 = vand.u32 %v3983, 4294901760
      %v4697 = vsub.f32 %v3983, %v4696
      %v4698 = vand.u32 %v4697, 4294901760
      %4699 = vmatmul.mubr.f32.gmra.mrb[0].mxu0 %v4698
      %v4700 = vpop.f32.mrb[0].mxu0
      %v4701 = vadd.f32 %v4517, %v4700
      %v4702 = vpop.f32.mrb[0].mxu0
      %4703 = vmatprep.mubr.f32.mxu0 0.0
      %v4704 = vand.u32 %v3986, 4294901760
      %v4705 = vsub.f32 %v3986, %v4704
      %v4706 = vand.u32 %v4705, 4294901760
      %4707 = vmatmul.mubr.f32.gmra.mrb[0].mxu0 %v4706
      %v4708 = vpop.f32.mrb[0].mxu0
      %v4709 = vadd.f32 %v4524, %v4708
      %v4710 = vpop.f32.mrb[0].mxu0
      %4711 = vmatprep.mubr.f32.mxu0 0.0
      %v4712 = vand.u32 %v3989, 4294901760
      %v4713 = vsub.f32 %v3989, %v4712
      %v4714 = vand.u32 %v4713, 4294901760
      %4715 = vmatmul.mubr.f32.gmra.mrb[0].mxu0 %v4714
      %v4716 = vpop.f32.mrb[0].mxu0
      %v4717 = vadd.f32 %v4531, %v4716
      %v4718 = vpop.f32.mrb[0].mxu0
      %4719 = vmatprep.mubr.f32.mxu0 0.0
      %v4720 = vand.u32 %v3992, 4294901760
      %v4721 = vsub.f32 %v3992, %v4720
      %v4722 = vand.u32 %v4721, 4294901760
      %4723 = vmatmul.mubr.f32.gmra.mrb[0].mxu0 %v4722
      %v4724 = vpop.f32.mrb[0].mxu0
      %v4725 = vadd.f32 %v4538, %v4724
      %v4726 = vpop.f32.mrb[0].mxu0
      %4727 = vmatprep.mubr.f32.mxu0 0.0
      %v4728 = vand.u32 %v3995, 4294901760
      %v4729 = vsub.f32 %v3995, %v4728
      %v4730 = vand.u32 %v4729, 4294901760
      %4731 = vmatmul.mubr.f32.gmra.mrb[0].mxu0 %v4730
      %v4732 = vpop.f32.mrb[0].mxu0
      %v4733 = vadd.f32 %v4545, %v4732
      %v4734 = vpop.f32.mrb[0].mxu0
      %4735 = vmatprep.mubr.f32.mxu0 0.0
      %v4736 = vand.u32 %v3998, 4294901760
      %v4737 = vsub.f32 %v3998, %v4736
      %v4738 = vand.u32 %v4737, 4294901760
      %4739 = vmatmul.mubr.f32.gmra.mrb[0].mxu0 %v4738
      %v4740 = vpop.f32.mrb[0].mxu0
      %v4741 = vadd.f32 %v4552, %v4740
      %v4742 = vpop.f32.mrb[0].mxu0
      %4743 = vmatprep.mubr.f32.mxu0 0.0
      %v4744 = vand.u32 %v4001, 4294901760
      %v4745 = vsub.f32 %v4001, %v4744
      %v4746 = vand.u32 %v4745, 4294901760
      %4747 = vmatmul.mubr.f32.gmra.mrb[0].mxu0 %v4746
      %v4748 = vpop.f32.mrb[0].mxu0
      %v4749 = vadd.f32 %v4559, %v4748
      %v4750 = vpop.f32.mrb[0].mxu0
      %4751 = vmatprep.mubr.f32.mxu0 0.0
      %v4752 = vand.u32 %v4004, 4294901760
      %v4753 = vsub.f32 %v4004, %v4752
      %v4754 = vand.u32 %v4753, 4294901760
      %4755 = vmatmul.mubr.f32.gmra.mrb[0].mxu0 %v4754
      %v4756 = vpop.f32.mrb[0].mxu0
      %v4757 = vadd.f32 %v4566, %v4756
      %v4758 = vpop.f32.mrb[0].mxu0
      %4759 = vmatprep.mubr.f32.mxu0 0.0
      %v4760 = vand.u32 %v4007, 4294901760
      %v4761 = vsub.f32 %v4007, %v4760
      %v4762 = vand.u32 %v4761, 4294901760
      %4763 = vmatmul.mubr.f32.gmra.mrb[0].mxu0 %v4762
      %v4764 = vpop.f32.mrb[0].mxu0
      %v4765 = vadd.f32 %v4573, %v4764
      %v4766 = vpop.f32.mrb[0].mxu0
      %4767 = vmatprep.mubr.f32.mxu0 0.0
      %v4768 = vand.u32 %v4010, 4294901760
      %v4769 = vsub.f32 %v4010, %v4768
      %v4770 = vand.u32 %v4769, 4294901760
      %4771 = vmatmul.mubr.f32.gmra.mrb[0].mxu0 %v4770
      %v4772 = vpop.f32.mrb[0].mxu0
      %v4773 = vadd.f32 %v4580, %v4772
      %v4774 = vpop.f32.mrb[0].mxu0
      %4775 = vmatprep.mubr.f32.mxu0 0.0
      %v4776 = vand.u32 %v4013, 4294901760
      %v4777 = vsub.f32 %v4013, %v4776
      %v4778 = vand.u32 %v4777, 4294901760
      %4779 = vmatmul.mubr.f32.gmra.mrb[0].mxu0 %v4778
      %v4780 = vpop.f32.mrb[0].mxu0
      %v4781 = vadd.f32 %v4587, %v4780
      %v4782 = vpop.f32.mrb[0].mxu0
      %4783 = vmatprep.mubr.f32.mxu0 0.0
      %v4784 = vand.u32 %v4016, 4294901760
      %v4785 = vsub.f32 %v4016, %v4784
      %v4786 = vand.u32 %v4785, 4294901760
      %4787 = vmatmul.mubr.f32.gmra.mrb[0].mxu0 %v4786
      %v4788 = vpop.f32.mrb[0].mxu0
      %v4789 = vadd.f32 %v4594, %v4788
      %v4790 = vpop.f32.mrb[0].mxu0
      %4791 = vdwg.mxu0
      %4792 = vmatprep.subr.mxu0 0.0
      %v4793 = vand.u32 %v3968, 4294901760
      %v4794 = vsub.f32 %v3968, %v4793
      %v4795 = vand.u32 %v4794, 4294901760
      %4796 = vmatpush1.msra.mxu0 %v4795
      %4797 = vmatprep.subr.mxu0 0.0
      %v4798 = vand.u32 %v3969, 4294901760
      %v4799 = vsub.f32 %v3969, %v4798
      %v4800 = vand.u32 %v4799, 4294901760
      %4801 = vmatpush1.msra.mxu0 %v4800
      %4802 = vmatprep.subr.mxu0 0.0
      %4803 = vmatpush1.msra.mxu0 0.0
      %4804 = vmatprep.subr.mxu0 0.0
      %4805 = vmatpush1.msra.mxu0 0.0
      %4806 = vmatprep.subr.mxu0 0.0
      %4807 = vmatpush1.msra.mxu0 0.0
      %4808 = vmatprep.subr.mxu0 0.0
      %4809 = vmatpush1.msra.mxu0 0.0
      %4810 = vmatprep.subr.mxu0 0.0
      %4811 = vmatpush1.msra.mxu0 0.0
      %4812 = vmatprep.subr.mxu0 0.0
      %4813 = vmatpush1.msra.mxu0 0.0
      %4814 = vmatprep.subr.mxu0 0.0
      %4815 = vmatpush1.msra.mxu0 0.0
      %4816 = vmatprep.subr.mxu0 0.0
      %4817 = vmatpush1.msra.mxu0 0.0
      %4818 = vmatprep.subr.mxu0 0.0
      %4819 = vmatpush1.msra.mxu0 0.0
      %4820 = vmatprep.subr.mxu0 0.0
      %4821 = vmatpush1.msra.mxu0 0.0
      %4822 = vmatprep.subr.mxu0 0.0
      %4823 = vmatpush1.msra.mxu0 0.0
      %4824 = vmatprep.subr.mxu0 0.0
      %4825 = vmatpush1.msra.mxu0 0.0
      %4826 = vmatprep.subr.mxu0 0.0
      %4827 = vmatpush1.msra.mxu0 0.0
      %4828 = vmatprep.subr.mxu0 0.0
      %4829 = vmatpush1.msra.mxu0 0.0
      %4830 = vmatprep.subr.mxu0 0.0
      %4831 = vmatpush1.msra.mxu0 0.0
      %4832 = vmatprep.subr.mxu0 0.0
      %4833 = vmatpush1.msra.mxu0 0.0
      %4834 = vmatprep.subr.mxu0 0.0
      %4835 = vmatpush1.msra.mxu0 0.0
      %4836 = vmatprep.subr.mxu0 0.0
      %4837 = vmatpush1.msra.mxu0 0.0
      %4838 = vmatprep.subr.mxu0 0.0
      %4839 = vmatpush1.msra.mxu0 0.0
      %4840 = vmatprep.subr.mxu0 0.0
      %4841 = vmatpush1.msra.mxu0 0.0
      %4842 = vmatprep.subr.mxu0 0.0
      %4843 = vmatpush1.msra.mxu0 0.0
      %4844 = vmatprep.subr.mxu0 0.0
      %4845 = vmatpush1.msra.mxu0 0.0
      %4846 = vmatprep.subr.mxu0 0.0
      %4847 = vmatpush1.msra.mxu0 0.0
      %4848 = vmatprep.subr.mxu0 0.0
      %4849 = vmatpush1.msra.mxu0 0.0
      %4850 = vmatprep.subr.mxu0 0.0
      %4851 = vmatpush1.msra.mxu0 0.0
      %4852 = vmatprep.subr.mxu0 0.0
      %4853 = vmatpush1.msra.mxu0 0.0
      %4854 = vmatprep.subr.mxu0 0.0
      %4855 = vmatpush1.msra.mxu0 0.0
      %4856 = vmatprep.subr.mxu0 0.0
      %4857 = vmatpush1.msra.mxu0 0.0
      %4858 = vmatprep.subr.mxu0 0.0
      %4859 = vmatpush1.msra.mxu0 0.0
      %4860 = vmatprep.subr.mxu0 0.0
      %4861 = vmatpush1.msra.mxu0 0.0
      %4862 = vmatprep.mubr.f32.mxu0 0.0
      %v4863 = vand.u32 %v3971, 4294901760
      %4864 = vmatmul.mubr.f32.gmra.mrb[0].mxu0 %v4863
      %v4865 = vpop.f32.mrb[0].mxu0
      %v4866 = vadd.f32 %v4669, %v4865
      %v4867 = vpop.f32.mrb[0].mxu0
      %4868 = vmatprep.mubr.f32.mxu0 0.0
      %v4869 = vand.u32 %v3974, 4294901760
      %4870 = vmatmul.mubr.f32.gmra.mrb[0].mxu0 %v4869
      %v4871 = vpop.f32.mrb[0].mxu0
      %v4872 = vadd.f32 %v4677, %v4871
      %v4873 = vpop.f32.mrb[0].mxu0
      %4874 = vmatprep.mubr.f32.mxu0 0.0
      %v4875 = vand.u32 %v3977, 4294901760
      %4876 = vmatmul.mubr.f32.gmra.mrb[0].mxu0 %v4875
      %v4877 = vpop.f32.mrb[0].mxu0
      %v4878 = vadd.f32 %v4685, %v4877
      %v4879 = vpop.f32.mrb[0].mxu0
      %4880 = vmatprep.mubr.f32.mxu0 0.0
      %v4881 = vand.u32 %v3980, 4294901760
      %4882 = vmatmul.mubr.f32.gmra.mrb[0].mxu0 %v4881
      %v4883 = vpop.f32.mrb[0].mxu0
      %v4884 = vadd.f32 %v4693, %v4883
      %v4885 = vpop.f32.mrb[0].mxu0
      %4886 = vmatprep.mubr.f32.mxu0 0.0
      %v4887 = vand.u32 %v3983, 4294901760
      %4888 = vmatmul.mubr.f32.gmra.mrb[0].mxu0 %v4887
      %v4889 = vpop.f32.mrb[0].mxu0
      %v4890 = vadd.f32 %v4701, %v4889
      %v4891 = vpop.f32.mrb[0].mxu0
      %4892 = vmatprep.mubr.f32.mxu0 0.0
      %v4893 = vand.u32 %v3986, 4294901760
      %4894 = vmatmul.mubr.f32.gmra.mrb[0].mxu0 %v4893
      %v4895 = vpop.f32.mrb[0].mxu0
      %v4896 = vadd.f32 %v4709, %v4895
      %v4897 = vpop.f32.mrb[0].mxu0
      %4898 = vmatprep.mubr.f32.mxu0 0.0
      %v4899 = vand.u32 %v3989, 4294901760
      %4900 = vmatmul.mubr.f32.gmra.mrb[0].mxu0 %v4899
      %v4901 = vpop.f32.mrb[0].mxu0
      %v4902 = vadd.f32 %v4717, %v4901
      %v4903 = vpop.f32.mrb[0].mxu0
      %4904 = vmatprep.mubr.f32.mxu0 0.0
      %v4905 = vand.u32 %v3992, 4294901760
      %4906 = vmatmul.mubr.f32.gmra.mrb[0].mxu0 %v4905
      %v4907 = vpop.f32.mrb[0].mxu0
      %v4908 = vadd.f32 %v4725, %v4907
      %v4909 = vpop.f32.mrb[0].mxu0
      %4910 = vmatprep.mubr.f32.mxu0 0.0
      %v4911 = vand.u32 %v3995, 4294901760
      %4912 = vmatmul.mubr.f32.gmra.mrb[0].mxu0 %v4911
      %v4913 = vpop.f32.mrb[0].mxu0
      %v4914 = vadd.f32 %v4733, %v4913
      %v4915 = vpop.f32.mrb[0].mxu0
      %4916 = vmatprep.mubr.f32.mxu0 0.0
      %v4917 = vand.u32 %v3998, 4294901760
      %4918 = vmatmul.mubr.f32.gmra.mrb[0].mxu0 %v4917
      %v4919 = vpop.f32.mrb[0].mxu0
      %v4920 = vadd.f32 %v4741, %v4919
      %v4921 = vpop.f32.mrb[0].mxu0
      %4922 = vmatprep.mubr.f32.mxu0 0.0
      %v4923 = vand.u32 %v4001, 4294901760
      %4924 = vmatmul.mubr.f32.gmra.mrb[0].mxu0 %v4923
      %v4925 = vpop.f32.mrb[0].mxu0
      %v4926 = vadd.f32 %v4749, %v4925
      %v4927 = vpop.f32.mrb[0].mxu0
      %4928 = vmatprep.mubr.f32.mxu0 0.0
      %v4929 = vand.u32 %v4004, 4294901760
      %4930 = vmatmul.mubr.f32.gmra.mrb[0].mxu0 %v4929
      %v4931 = vpop.f32.mrb[0].mxu0
      %v4932 = vadd.f32 %v4757, %v4931
      %v4933 = vpop.f32.mrb[0].mxu0
      %4934 = vmatprep.mubr.f32.mxu0 0.0
      %v4935 = vand.u32 %v4007, 4294901760
      %4936 = vmatmul.mubr.f32.gmra.mrb[0].mxu0 %v4935
      %v4937 = vpop.f32.mrb[0].mxu0
      %v4938 = vadd.f32 %v4765, %v4937
      %v4939 = vpop.f32.mrb[0].mxu0
      %4940 = vmatprep.mubr.f32.mxu0 0.0
      %v4941 = vand.u32 %v4010, 4294901760
      %4942 = vmatmul.mubr.f32.gmra.mrb[0].mxu0 %v4941
      %v4943 = vpop.f32.mrb[0].mxu0
      %v4944 = vadd.f32 %v4773, %v4943
      %v4945 = vpop.f32.mrb[0].mxu0
      %4946 = vmatprep.mubr.f32.mxu0 0.0
      %v4947 = vand.u32 %v4013, 4294901760
      %4948 = vmatmul.mubr.f32.gmra.mrb[0].mxu0 %v4947
      %v4949 = vpop.f32.mrb[0].mxu0
      %v4950 = vadd.f32 %v4781, %v4949
      %v4951 = vpop.f32.mrb[0].mxu0
      %4952 = vmatprep.mubr.f32.mxu0 0.0
      %v4953 = vand.u32 %v4016, 4294901760
      %4954 = vmatmul.mubr.f32.gmra.mrb[0].mxu0 %v4953
      %v4955 = vpop.f32.mrb[0].mxu0
      %v4956 = vadd.f32 %v4789, %v4955
      %v4957 = vpop.f32.mrb[0].mxu0
      %4958 = vdwg.mxu0
      %4959 = vmatprep.subr.mxu0 0.0
      %v4960 = vand.u32 %v3968, 4294901760
      %4961 = vmatpush1.msra.mxu0 %v4960
      %4962 = vmatprep.subr.mxu0 0.0
      %v4963 = vand.u32 %v3969, 4294901760
      %4964 = vmatpush1.msra.mxu0 %v4963
      %4965 = vmatprep.subr.mxu0 0.0
      %4966 = vmatpush1.msra.mxu0 0.0
      %4967 = vmatprep.subr.mxu0 0.0
      %4968 = vmatpush1.msra.mxu0 0.0
      %4969 = vmatprep.subr.mxu0 0.0
      %4970 = vmatpush1.msra.mxu0 0.0
      %4971 = vmatprep.subr.mxu0 0.0
      %4972 = vmatpush1.msra.mxu0 0.0
      %4973 = vmatprep.subr.mxu0 0.0
      %4974 = vmatpush1.msra.mxu0 0.0
      %4975 = vmatprep.subr.mxu0 0.0
      %4976 = vmatpush1.msra.mxu0 0.0
      %4977 = vmatprep.subr.mxu0 0.0
      %4978 = vmatpush1.msra.mxu0 0.0
      %4979 = vmatprep.subr.mxu0 0.0
      %4980 = vmatpush1.msra.mxu0 0.0
      %4981 = vmatprep.subr.mxu0 0.0
      %4982 = vmatpush1.msra.mxu0 0.0
      %4983 = vmatprep.subr.mxu0 0.0
      %4984 = vmatpush1.msra.mxu0 0.0
      %4985 = vmatprep.subr.mxu0 0.0
      %4986 = vmatpush1.msra.mxu0 0.0
      %4987 = vmatprep.subr.mxu0 0.0
      %4988 = vmatpush1.msra.mxu0 0.0
      %4989 = vmatprep.subr.mxu0 0.0
      %4990 = vmatpush1.msra.mxu0 0.0
      %4991 = vmatprep.subr.mxu0 0.0
      %4992 = vmatpush1.msra.mxu0 0.0
      %4993 = vmatprep.subr.mxu0 0.0
      %4994 = vmatpush1.msra.mxu0 0.0
      %4995 = vmatprep.subr.mxu0 0.0
      %4996 = vmatpush1.msra.mxu0 0.0
      %4997 = vmatprep.subr.mxu0 0.0
      %4998 = vmatpush1.msra.mxu0 0.0
      %4999 = vmatprep.subr.mxu0 0.0
      %5000 = vmatpush1.msra.mxu0 0.0
      %5001 = vmatprep.subr.mxu0 0.0
      %5002 = vmatpush1.msra.mxu0 0.0
      %5003 = vmatprep.subr.mxu0 0.0
      %5004 = vmatpush1.msra.mxu0 0.0
      %5005 = vmatprep.subr.mxu0 0.0
      %5006 = vmatpush1.msra.mxu0 0.0
      %5007 = vmatprep.subr.mxu0 0.0
      %5008 = vmatpush1.msra.mxu0 0.0
      %5009 = vmatprep.subr.mxu0 0.0
      %5010 = vmatpush1.msra.mxu0 0.0
      %5011 = vmatprep.subr.mxu0 0.0
      %5012 = vmatpush1.msra.mxu0 0.0
      %5013 = vmatprep.subr.mxu0 0.0
      %5014 = vmatpush1.msra.mxu0 0.0
      %5015 = vmatprep.subr.mxu0 0.0
      %5016 = vmatpush1.msra.mxu0 0.0
      %5017 = vmatprep.subr.mxu0 0.0
      %5018 = vmatpush1.msra.mxu0 0.0
      %5019 = vmatprep.subr.mxu0 0.0
      %5020 = vmatpush1.msra.mxu0 0.0
      %5021 = vmatprep.subr.mxu0 0.0
      %5022 = vmatpush1.msra.mxu0 0.0
      %5023 = vmatprep.subr.mxu0 0.0
      %5024 = vmatpush1.msra.mxu0 0.0
      %5025 = vmatprep.mubr.f32.mxu0 0.0
      %v5026 = vand.u32 %v3971, 4294901760
      %5027 = vmatmul.mubr.f32.gmra.mrb[0].mxu0 %v5026
      %v5028 = vpop.f32.mrb[0].mxu0
      %v5029 = vadd.f32 %v4866, %v5028
      %v5030 = vpop.f32.mrb[0].mxu0
      %5031 = vmatprep.mubr.f32.mxu0 0.0
      %v5032 = vand.u32 %v3974, 4294901760
      %5033 = vmatmul.mubr.f32.gmra.mrb[0].mxu0 %v5032
      %v5034 = vpop.f32.mrb[0].mxu0
      %v5035 = vadd.f32 %v4872, %v5034
      %v5036 = vpop.f32.mrb[0].mxu0
      %5037 = vmatprep.mubr.f32.mxu0 0.0
      %v5038 = vand.u32 %v3977, 4294901760
      %5039 = vmatmul.mubr.f32.gmra.mrb[0].mxu0 %v5038
      %v5040 = vpop.f32.mrb[0].mxu0
      %v5041 = vadd.f32 %v4878, %v5040
      %v5042 = vpop.f32.mrb[0].mxu0
      %5043 = vmatprep.mubr.f32.mxu0 0.0
      %v5044 = vand.u32 %v3980, 4294901760
      %5045 = vmatmul.mubr.f32.gmra.mrb[0].mxu0 %v5044
      %v5046 = vpop.f32.mrb[0].mxu0
      %v5047 = vadd.f32 %v4884, %v5046
      %v5048 = vpop.f32.mrb[0].mxu0
      %5049 = vmatprep.mubr.f32.mxu0 0.0
      %v5050 = vand.u32 %v3983, 4294901760
      %5051 = vmatmul.mubr.f32.gmra.mrb[0].mxu0 %v5050
      %v5052 = vpop.f32.mrb[0].mxu0
      %v5053 = vadd.f32 %v4890, %v5052
      %v5054 = vpop.f32.mrb[0].mxu0
      %5055 = vmatprep.mubr.f32.mxu0 0.0
      %v5056 = vand.u32 %v3986, 4294901760
      %5057 = vmatmul.mubr.f32.gmra.mrb[0].mxu0 %v5056
      %v5058 = vpop.f32.mrb[0].mxu0
      %v5059 = vadd.f32 %v4896, %v5058
      %v5060 = vpop.f32.mrb[0].mxu0
      %5061 = vmatprep.mubr.f32.mxu0 0.0
      %v5062 = vand.u32 %v3989, 4294901760
      %5063 = vmatmul.mubr.f32.gmra.mrb[0].mxu0 %v5062
      %v5064 = vpop.f32.mrb[0].mxu0
      %v5065 = vadd.f32 %v4902, %v5064
      %v5066 = vpop.f32.mrb[0].mxu0
      %5067 = vmatprep.mubr.f32.mxu0 0.0
      %v5068 = vand.u32 %v3992, 4294901760
      %5069 = vmatmul.mubr.f32.gmra.mrb[0].mxu0 %v5068
      %v5070 = vpop.f32.mrb[0].mxu0
      %v5071 = vadd.f32 %v4908, %v5070
      %v5072 = vpop.f32.mrb[0].mxu0
      %5073 = vmatprep.mubr.f32.mxu0 0.0
      %v5074 = vand.u32 %v3995, 4294901760
      %5075 = vmatmul.mubr.f32.gmra.mrb[0].mxu0 %v5074
      %v5076 = vpop.f32.mrb[0].mxu0
      %v5077 = vadd.f32 %v4914, %v5076
      %v5078 = vpop.f32.mrb[0].mxu0
      %5079 = vmatprep.mubr.f32.mxu0 0.0
      %v5080 = vand.u32 %v3998, 4294901760
      %5081 = vmatmul.mubr.f32.gmra.mrb[0].mxu0 %v5080
      %v5082 = vpop.f32.mrb[0].mxu0
      %v5083 = vadd.f32 %v4920, %v5082
      %v5084 = vpop.f32.mrb[0].mxu0
      %5085 = vmatprep.mubr.f32.mxu0 0.0
      %v5086 = vand.u32 %v4001, 4294901760
      %5087 = vmatmul.mubr.f32.gmra.mrb[0].mxu0 %v5086
      %v5088 = vpop.f32.mrb[0].mxu0
      %v5089 = vadd.f32 %v4926, %v5088
      %v5090 = vpop.f32.mrb[0].mxu0
      %5091 = vmatprep.mubr.f32.mxu0 0.0
      %v5092 = vand.u32 %v4004, 4294901760
      %5093 = vmatmul.mubr.f32.gmra.mrb[0].mxu0 %v5092
      %v5094 = vpop.f32.mrb[0].mxu0
      %v5095 = vadd.f32 %v4932, %v5094
      %v5096 = vpop.f32.mrb[0].mxu0
      %5097 = vmatprep.mubr.f32.mxu0 0.0
      %v5098 = vand.u32 %v4007, 4294901760
      %5099 = vmatmul.mubr.f32.gmra.mrb[0].mxu0 %v5098
      %v5100 = vpop.f32.mrb[0].mxu0
      %v5101 = vadd.f32 %v4938, %v5100
      %v5102 = vpop.f32.mrb[0].mxu0
      %5103 = vmatprep.mubr.f32.mxu0 0.0
      %v5104 = vand.u32 %v4010, 4294901760
      %5105 = vmatmul.mubr.f32.gmra.mrb[0].mxu0 %v5104
      %v5106 = vpop.f32.mrb[0].mxu0
      %v5107 = vadd.f32 %v4944, %v5106
      %v5108 = vpop.f32.mrb[0].mxu0
      %5109 = vmatprep.mubr.f32.mxu0 0.0
      %v5110 = vand.u32 %v4013, 4294901760
      %5111 = vmatmul.mubr.f32.gmra.mrb[0].mxu0 %v5110
      %v5112 = vpop.f32.mrb[0].mxu0
      %v5113 = vadd.f32 %v4950, %v5112
      %v5114 = vpop.f32.mrb[0].mxu0
      %5115 = vmatprep.mubr.f32.mxu0 0.0
      %v5116 = vand.u32 %v4016, 4294901760
      %5117 = vmatmul.mubr.f32.gmra.mrb[0].mxu0 %v5116
      %v5118 = vpop.f32.mrb[0].mxu0
      %v5119 = vadd.f32 %v4956, %v5118
      %v5120 = vpop.f32.mrb[0].mxu0
      %5121 = vdwg.mxu0
      %v5122 = vadd.f32 %v2704, %v5029
      %v5123 = vadd.f32 %v2705, %v5035
      %v5124 = vadd.f32 %v2706, %v5041
      %v5125 = vadd.f32 %v2707, %v5047
      %v5126 = vadd.f32 %v2708, %v5053
      %v5127 = vadd.f32 %v2709, %v5059
      %v5128 = vadd.f32 %v2710, %v5065
      %v5129 = vadd.f32 %v2711, %v5071
      %v5130 = vadd.f32 %v2712, %v5077
      %v5131 = vadd.f32 %v2713, %v5083
      %v5132 = vadd.f32 %v2714, %v5089
      %v5133 = vadd.f32 %v2715, %v5095
      %v5134 = vadd.f32 %v2716, %v5101
      %v5135 = vadd.f32 %v2717, %v5107
      %v5136 = vadd.f32 %v2718, %v5113
      %v5137 = vadd.f32 %v2719, %v5119
      %s5138 = scalar_lea.vmem %s1, 256
      %v5139 = vld [vmem:[%s5138] sm:$0xff]
      %v5140 = vld [vmem:[%s5138 + $0x8] sm:$0xff]
      %v5141 = vld [vmem:[%s5138 + $0x10] sm:$0xff]
      %v5142 = vld [vmem:[%s5138 + $0x18] sm:$0xff]
      %v5143 = vld [vmem:[%s5138 + $0x20] sm:$0xff]
      %v5144 = vld [vmem:[%s5138 + $0x28] sm:$0xff]
      %v5145 = vld [vmem:[%s5138 + $0x30] sm:$0xff]
      %v5146 = vld [vmem:[%s5138 + $0x38] sm:$0xff]
      %v5147 = vld [vmem:[%s5138 + $0x40] sm:$0xff]
      %v5148 = vld [vmem:[%s5138 + $0x48] sm:$0xff]
      %v5149 = vld [vmem:[%s5138 + $0x50] sm:$0xff]
      %v5150 = vld [vmem:[%s5138 + $0x58] sm:$0xff]
      %v5151 = vld [vmem:[%s5138 + $0x60] sm:$0xff]
      %v5152 = vld [vmem:[%s5138 + $0x68] sm:$0xff]
      %v5153 = vld [vmem:[%s5138 + $0x70] sm:$0xff]
      %v5154 = vld [vmem:[%s5138 + $0x78] sm:$0xff]
      %v5156 = vsel %vm238, %v5139, 0
      %v5159 = vsel %vm238, %v5140, 0
      %v5162 = vsel %vm238, %v5141, 0
      %v5165 = vsel %vm238, %v5142, 0
      %v5168 = vsel %vm238, %v5143, 0
      %v5171 = vsel %vm238, %v5144, 0
      %v5174 = vsel %vm238, %v5145, 0
      %v5177 = vsel %vm238, %v5146, 0
      %v5180 = vsel %vm238, %v5147, 0
      %v5183 = vsel %vm238, %v5148, 0
      %v5186 = vsel %vm238, %v5149, 0
      %v5189 = vsel %vm238, %v5150, 0
      %v5192 = vsel %vm238, %v5151, 0
      %v5195 = vsel %vm238, %v5152, 0
      %v5198 = vsel %vm238, %v5153, 0
      %v5201 = vsel %vm238, %v5154, 0
      %5203 = vmatprep.subr.mxu0 0.0
      %v5204 = vand.u32 %v214, 4294901760
      %5205 = vmatpush1.msra.mxu0 %v5204
      %5206 = vmatprep.subr.mxu0 0.0
      %v5207 = vand.u32 %v215, 4294901760
      %5208 = vmatpush1.msra.mxu0 %v5207
      %5209 = vmatprep.subr.mxu0 0.0
      %v5210 = vand.u32 %v216, 4294901760
      %5211 = vmatpush1.msra.mxu0 %v5210
      %5212 = vmatprep.subr.mxu0 0.0
      %v5213 = vand.u32 %v217, 4294901760
      %5214 = vmatpush1.msra.mxu0 %v5213
      %5215 = vmatprep.subr.mxu0 0.0
      %v5216 = vand.u32 %v218, 4294901760
      %5217 = vmatpush1.msra.mxu0 %v5216
      %5218 = vmatprep.subr.mxu0 0.0
      %v5219 = vand.u32 %v219, 4294901760
      %5220 = vmatpush1.msra.mxu0 %v5219
      %5221 = vmatprep.subr.mxu0 0.0
      %v5222 = vand.u32 %v220, 4294901760
      %5223 = vmatpush1.msra.mxu0 %v5222
      %5224 = vmatprep.subr.mxu0 0.0
      %v5225 = vand.u32 %v221, 4294901760
      %5226 = vmatpush1.msra.mxu0 %v5225
      %5227 = vmatprep.subr.mxu0 0.0
      %5228 = vmatpush1.msra.mxu0 0.0
      %5229 = vmatprep.subr.mxu0 0.0
      %5230 = vmatpush1.msra.mxu0 0.0
      %5231 = vmatprep.subr.mxu0 0.0
      %5232 = vmatpush1.msra.mxu0 0.0
      %5233 = vmatprep.subr.mxu0 0.0
      %5234 = vmatpush1.msra.mxu0 0.0
      %5235 = vmatprep.subr.mxu0 0.0
      %5236 = vmatpush1.msra.mxu0 0.0
      %5237 = vmatprep.subr.mxu0 0.0
      %5238 = vmatpush1.msra.mxu0 0.0
      %5239 = vmatprep.subr.mxu0 0.0
      %5240 = vmatpush1.msra.mxu0 0.0
      %5241 = vmatprep.subr.mxu0 0.0
      %5242 = vmatpush1.msra.mxu0 0.0
      %5243 = vmatprep.subr.mxu0 0.0
      %5244 = vmatpush1.msra.mxu0 0.0
      %5245 = vmatprep.subr.mxu0 0.0
      %5246 = vmatpush1.msra.mxu0 0.0
      %5247 = vmatprep.subr.mxu0 0.0
      %5248 = vmatpush1.msra.mxu0 0.0
      %5249 = vmatprep.subr.mxu0 0.0
      %5250 = vmatpush1.msra.mxu0 0.0
      %5251 = vmatprep.subr.mxu0 0.0
      %5252 = vmatpush1.msra.mxu0 0.0
      %5253 = vmatprep.subr.mxu0 0.0
      %5254 = vmatpush1.msra.mxu0 0.0
      %5255 = vmatprep.subr.mxu0 0.0
      %5256 = vmatpush1.msra.mxu0 0.0
      %5257 = vmatprep.subr.mxu0 0.0
      %5258 = vmatpush1.msra.mxu0 0.0
      %5259 = vmatprep.subr.mxu0 0.0
      %5260 = vmatpush1.msra.mxu0 0.0
      %5261 = vmatprep.subr.mxu0 0.0
      %5262 = vmatpush1.msra.mxu0 0.0
      %5263 = vmatprep.subr.mxu0 0.0
      %5264 = vmatpush1.msra.mxu0 0.0
      %5265 = vmatprep.subr.mxu0 0.0
      %5266 = vmatpush1.msra.mxu0 0.0
      %5267 = vmatprep.subr.mxu0 0.0
      %5268 = vmatpush1.msra.mxu0 0.0
      %5269 = vmatprep.subr.mxu0 0.0
      %5270 = vmatpush1.msra.mxu0 0.0
      %5271 = vmatprep.subr.mxu0 0.0
      %5272 = vmatpush1.msra.mxu0 0.0
      %5273 = vmatprep.subr.mxu0 0.0
      %5274 = vmatpush1.msra.mxu0 0.0
      %5275 = vmatprep.mubr.f32.mxu0 0.0
      %v5276 = vand.u32 %v5156, 4294901760
      %v5277 = vsub.f32 %v5156, %v5276
      %v5278 = vand.u32 %v5277, 4294901760
      %v5279 = vsub.f32 %v5277, %v5278
      %v5280 = vand.u32 %v5279, 4294901760
      %5281 = vmatmul.mubr.f32.gmra.mrb[0].mxu0 %v5280
      %v5282 = vpop.f32.mrb[0].mxu0
      %v5283 = vadd.f32 0.0, %v5282
      %v5284 = vpop.f32.mrb[0].mxu0
      %5285 = vmatprep.mubr.f32.mxu0 0.0
      %v5286 = vand.u32 %v5159, 4294901760
      %v5287 = vsub.f32 %v5159, %v5286
      %v5288 = vand.u32 %v5287, 4294901760
      %v5289 = vsub.f32 %v5287, %v5288
      %v5290 = vand.u32 %v5289, 4294901760
      %5291 = vmatmul.mubr.f32.gmra.mrb[0].mxu0 %v5290
      %v5292 = vpop.f32.mrb[0].mxu0
      %v5293 = vadd.f32 0.0, %v5292
      %v5294 = vpop.f32.mrb[0].mxu0
      %5295 = vmatprep.mubr.f32.mxu0 0.0
      %v5296 = vand.u32 %v5162, 4294901760
      %v5297 = vsub.f32 %v5162, %v5296
      %v5298 = vand.u32 %v5297, 4294901760
      %v5299 = vsub.f32 %v5297, %v5298
      %v5300 = vand.u32 %v5299, 4294901760
      %5301 = vmatmul.mubr.f32.gmra.mrb[0].mxu0 %v5300
      %v5302 = vpop.f32.mrb[0].mxu0
      %v5303 = vadd.f32 0.0, %v5302
      %v5304 = vpop.f32.mrb[0].mxu0
      %5305 = vmatprep.mubr.f32.mxu0 0.0
      %v5306 = vand.u32 %v5165, 4294901760
      %v5307 = vsub.f32 %v5165, %v5306
      %v5308 = vand.u32 %v5307, 4294901760
      %v5309 = vsub.f32 %v5307, %v5308
      %v5310 = vand.u32 %v5309, 4294901760
      %5311 = vmatmul.mubr.f32.gmra.mrb[0].mxu0 %v5310
      %v5312 = vpop.f32.mrb[0].mxu0
      %v5313 = vadd.f32 0.0, %v5312
      %v5314 = vpop.f32.mrb[0].mxu0
      %5315 = vmatprep.mubr.f32.mxu0 0.0
      %v5316 = vand.u32 %v5168, 4294901760
      %v5317 = vsub.f32 %v5168, %v5316
      %v5318 = vand.u32 %v5317, 4294901760
      %v5319 = vsub.f32 %v5317, %v5318
      %v5320 = vand.u32 %v5319, 4294901760
      %5321 = vmatmul.mubr.f32.gmra.mrb[0].mxu0 %v5320
      %v5322 = vpop.f32.mrb[0].mxu0
      %v5323 = vadd.f32 0.0, %v5322
      %v5324 = vpop.f32.mrb[0].mxu0
      %5325 = vmatprep.mubr.f32.mxu0 0.0
      %v5326 = vand.u32 %v5171, 4294901760
      %v5327 = vsub.f32 %v5171, %v5326
      %v5328 = vand.u32 %v5327, 4294901760
      %v5329 = vsub.f32 %v5327, %v5328
      %v5330 = vand.u32 %v5329, 4294901760
      %5331 = vmatmul.mubr.f32.gmra.mrb[0].mxu0 %v5330
      %v5332 = vpop.f32.mrb[0].mxu0
      %v5333 = vadd.f32 0.0, %v5332
      %v5334 = vpop.f32.mrb[0].mxu0
      %5335 = vmatprep.mubr.f32.mxu0 0.0
      %v5336 = vand.u32 %v5174, 4294901760
      %v5337 = vsub.f32 %v5174, %v5336
      %v5338 = vand.u32 %v5337, 4294901760
      %v5339 = vsub.f32 %v5337, %v5338
      %v5340 = vand.u32 %v5339, 4294901760
      %5341 = vmatmul.mubr.f32.gmra.mrb[0].mxu0 %v5340
      %v5342 = vpop.f32.mrb[0].mxu0
      %v5343 = vadd.f32 0.0, %v5342
      %v5344 = vpop.f32.mrb[0].mxu0
      %5345 = vmatprep.mubr.f32.mxu0 0.0
      %v5346 = vand.u32 %v5177, 4294901760
      %v5347 = vsub.f32 %v5177, %v5346
      %v5348 = vand.u32 %v5347, 4294901760
      %v5349 = vsub.f32 %v5347, %v5348
      %v5350 = vand.u32 %v5349, 4294901760
      %5351 = vmatmul.mubr.f32.gmra.mrb[0].mxu0 %v5350
      %v5352 = vpop.f32.mrb[0].mxu0
      %v5353 = vadd.f32 0.0, %v5352
      %v5354 = vpop.f32.mrb[0].mxu0
      %5355 = vmatprep.mubr.f32.mxu0 0.0
      %v5356 = vand.u32 %v5180, 4294901760
      %v5357 = vsub.f32 %v5180, %v5356
      %v5358 = vand.u32 %v5357, 4294901760
      %v5359 = vsub.f32 %v5357, %v5358
      %v5360 = vand.u32 %v5359, 4294901760
      %5361 = vmatmul.mubr.f32.gmra.mrb[0].mxu0 %v5360
      %v5362 = vpop.f32.mrb[0].mxu0
      %v5363 = vadd.f32 0.0, %v5362
      %v5364 = vpop.f32.mrb[0].mxu0
      %5365 = vmatprep.mubr.f32.mxu0 0.0
      %v5366 = vand.u32 %v5183, 4294901760
      %v5367 = vsub.f32 %v5183, %v5366
      %v5368 = vand.u32 %v5367, 4294901760
      %v5369 = vsub.f32 %v5367, %v5368
      %v5370 = vand.u32 %v5369, 4294901760
      %5371 = vmatmul.mubr.f32.gmra.mrb[0].mxu0 %v5370
      %v5372 = vpop.f32.mrb[0].mxu0
      %v5373 = vadd.f32 0.0, %v5372
      %v5374 = vpop.f32.mrb[0].mxu0
      %5375 = vmatprep.mubr.f32.mxu0 0.0
      %v5376 = vand.u32 %v5186, 4294901760
      %v5377 = vsub.f32 %v5186, %v5376
      %v5378 = vand.u32 %v5377, 4294901760
      %v5379 = vsub.f32 %v5377, %v5378
      %v5380 = vand.u32 %v5379, 4294901760
      %5381 = vmatmul.mubr.f32.gmra.mrb[0].mxu0 %v5380
      %v5382 = vpop.f32.mrb[0].mxu0
      %v5383 = vadd.f32 0.0, %v5382
      %v5384 = vpop.f32.mrb[0].mxu0
      %5385 = vmatprep.mubr.f32.mxu0 0.0
      %v5386 = vand.u32 %v5189, 4294901760
      %v5387 = vsub.f32 %v5189, %v5386
      %v5388 = vand.u32 %v5387, 4294901760
      %v5389 = vsub.f32 %v5387, %v5388
      %v5390 = vand.u32 %v5389, 4294901760
      %5391 = vmatmul.mubr.f32.gmra.mrb[0].mxu0 %v5390
      %v5392 = vpop.f32.mrb[0].mxu0
      %v5393 = vadd.f32 0.0, %v5392
      %v5394 = vpop.f32.mrb[0].mxu0
      %5395 = vmatprep.mubr.f32.mxu0 0.0
      %v5396 = vand.u32 %v5192, 4294901760
      %v5397 = vsub.f32 %v5192, %v5396
      %v5398 = vand.u32 %v5397, 4294901760
      %v5399 = vsub.f32 %v5397, %v5398
      %v5400 = vand.u32 %v5399, 4294901760
      %5401 = vmatmul.mubr.f32.gmra.mrb[0].mxu0 %v5400
      %v5402 = vpop.f32.mrb[0].mxu0
      %v5403 = vadd.f32 0.0, %v5402
      %v5404 = vpop.f32.mrb[0].mxu0
      %5405 = vmatprep.mubr.f32.mxu0 0.0
      %v5406 = vand.u32 %v5195, 4294901760
      %v5407 = vsub.f32 %v5195, %v5406
      %v5408 = vand.u32 %v5407, 4294901760
      %v5409 = vsub.f32 %v5407, %v5408
      %v5410 = vand.u32 %v5409, 4294901760
      %5411 = vmatmul.mubr.f32.gmra.mrb[0].mxu0 %v5410
      %v5412 = vpop.f32.mrb[0].mxu0
      %v5413 = vadd.f32 0.0, %v5412
      %v5414 = vpop.f32.mrb[0].mxu0
      %5415 = vmatprep.mubr.f32.mxu0 0.0
      %v5416 = vand.u32 %v5198, 4294901760
      %v5417 = vsub.f32 %v5198, %v5416
      %v5418 = vand.u32 %v5417, 4294901760
      %v5419 = vsub.f32 %v5417, %v5418
      %v5420 = vand.u32 %v5419, 4294901760
      %5421 = vmatmul.mubr.f32.gmra.mrb[0].mxu0 %v5420
      %v5422 = vpop.f32.mrb[0].mxu0
      %v5423 = vadd.f32 0.0, %v5422
      %v5424 = vpop.f32.mrb[0].mxu0
      %5425 = vmatprep.mubr.f32.mxu0 0.0
      %v5426 = vand.u32 %v5201, 4294901760
      %v5427 = vsub.f32 %v5201, %v5426
      %v5428 = vand.u32 %v5427, 4294901760
      %v5429 = vsub.f32 %v5427, %v5428
      %v5430 = vand.u32 %v5429, 4294901760
      %5431 = vmatmul.mubr.f32.gmra.mrb[0].mxu0 %v5430
      %v5432 = vpop.f32.mrb[0].mxu0
      %v5433 = vadd.f32 0.0, %v5432
      %v5434 = vpop.f32.mrb[0].mxu0
      %5435 = vdwg.mxu0
      %5436 = vmatprep.subr.mxu0 0.0
      %v5437 = vand.u32 %v214, 4294901760
      %v5438 = vsub.f32 %v214, %v5437
      %v5439 = vand.u32 %v5438, 4294901760
      %v5440 = vsub.f32 %v5438, %v5439
      %v5441 = vand.u32 %v5440, 4294901760
      %5442 = vmatpush1.msra.mxu0 %v5441
      %5443 = vmatprep.subr.mxu0 0.0
      %v5444 = vand.u32 %v215, 4294901760
      %v5445 = vsub.f32 %v215, %v5444
      %v5446 = vand.u32 %v5445, 4294901760
      %v5447 = vsub.f32 %v5445, %v5446
      %v5448 = vand.u32 %v5447, 4294901760
      %5449 = vmatpush1.msra.mxu0 %v5448
      %5450 = vmatprep.subr.mxu0 0.0
      %v5451 = vand.u32 %v216, 4294901760
      %v5452 = vsub.f32 %v216, %v5451
      %v5453 = vand.u32 %v5452, 4294901760
      %v5454 = vsub.f32 %v5452, %v5453
      %v5455 = vand.u32 %v5454, 4294901760
      %5456 = vmatpush1.msra.mxu0 %v5455
      %5457 = vmatprep.subr.mxu0 0.0
      %v5458 = vand.u32 %v217, 4294901760
      %v5459 = vsub.f32 %v217, %v5458
      %v5460 = vand.u32 %v5459, 4294901760
      %v5461 = vsub.f32 %v5459, %v5460
      %v5462 = vand.u32 %v5461, 4294901760
      %5463 = vmatpush1.msra.mxu0 %v5462
      %5464 = vmatprep.subr.mxu0 0.0
      %v5465 = vand.u32 %v218, 4294901760
      %v5466 = vsub.f32 %v218, %v5465
      %v5467 = vand.u32 %v5466, 4294901760
      %v5468 = vsub.f32 %v5466, %v5467
      %v5469 = vand.u32 %v5468, 4294901760
      %5470 = vmatpush1.msra.mxu0 %v5469
      %5471 = vmatprep.subr.mxu0 0.0
      %v5472 = vand.u32 %v219, 4294901760
      %v5473 = vsub.f32 %v219, %v5472
      %v5474 = vand.u32 %v5473, 4294901760
      %v5475 = vsub.f32 %v5473, %v5474
      %v5476 = vand.u32 %v5475, 4294901760
      %5477 = vmatpush1.msra.mxu0 %v5476
      %5478 = vmatprep.subr.mxu0 0.0
      %v5479 = vand.u32 %v220, 4294901760
      %v5480 = vsub.f32 %v220, %v5479
      %v5481 = vand.u32 %v5480, 4294901760
      %v5482 = vsub.f32 %v5480, %v5481
      %v5483 = vand.u32 %v5482, 4294901760
      %5484 = vmatpush1.msra.mxu0 %v5483
      %5485 = vmatprep.subr.mxu0 0.0
      %v5486 = vand.u32 %v221, 4294901760
      %v5487 = vsub.f32 %v221, %v5486
      %v5488 = vand.u32 %v5487, 4294901760
      %v5489 = vsub.f32 %v5487, %v5488
      %v5490 = vand.u32 %v5489, 4294901760
      %5491 = vmatpush1.msra.mxu0 %v5490
      %5492 = vmatprep.subr.mxu0 0.0
      %5493 = vmatpush1.msra.mxu0 0.0
      %5494 = vmatprep.subr.mxu0 0.0
      %5495 = vmatpush1.msra.mxu0 0.0
      %5496 = vmatprep.subr.mxu0 0.0
      %5497 = vmatpush1.msra.mxu0 0.0
      %5498 = vmatprep.subr.mxu0 0.0
      %5499 = vmatpush1.msra.mxu0 0.0
      %5500 = vmatprep.subr.mxu0 0.0
      %5501 = vmatpush1.msra.mxu0 0.0
      %5502 = vmatprep.subr.mxu0 0.0
      %5503 = vmatpush1.msra.mxu0 0.0
      %5504 = vmatprep.subr.mxu0 0.0
      %5505 = vmatpush1.msra.mxu0 0.0
      %5506 = vmatprep.subr.mxu0 0.0
      %5507 = vmatpush1.msra.mxu0 0.0
      %5508 = vmatprep.subr.mxu0 0.0
      %5509 = vmatpush1.msra.mxu0 0.0
      %5510 = vmatprep.subr.mxu0 0.0
      %5511 = vmatpush1.msra.mxu0 0.0
      %5512 = vmatprep.subr.mxu0 0.0
      %5513 = vmatpush1.msra.mxu0 0.0
      %5514 = vmatprep.subr.mxu0 0.0
      %5515 = vmatpush1.msra.mxu0 0.0
      %5516 = vmatprep.subr.mxu0 0.0
      %5517 = vmatpush1.msra.mxu0 0.0
      %5518 = vmatprep.subr.mxu0 0.0
      %5519 = vmatpush1.msra.mxu0 0.0
      %5520 = vmatprep.subr.mxu0 0.0
      %5521 = vmatpush1.msra.mxu0 0.0
      %5522 = vmatprep.subr.mxu0 0.0
      %5523 = vmatpush1.msra.mxu0 0.0
      %5524 = vmatprep.subr.mxu0 0.0
      %5525 = vmatpush1.msra.mxu0 0.0
      %5526 = vmatprep.subr.mxu0 0.0
      %5527 = vmatpush1.msra.mxu0 0.0
      %5528 = vmatprep.subr.mxu0 0.0
      %5529 = vmatpush1.msra.mxu0 0.0
      %5530 = vmatprep.subr.mxu0 0.0
      %5531 = vmatpush1.msra.mxu0 0.0
      %5532 = vmatprep.subr.mxu0 0.0
      %5533 = vmatpush1.msra.mxu0 0.0
      %5534 = vmatprep.subr.mxu0 0.0
      %5535 = vmatpush1.msra.mxu0 0.0
      %5536 = vmatprep.subr.mxu0 0.0
      %5537 = vmatpush1.msra.mxu0 0.0
      %5538 = vmatprep.subr.mxu0 0.0
      %5539 = vmatpush1.msra.mxu0 0.0
      %5540 = vmatprep.mubr.f32.mxu0 0.0
      %v5541 = vand.u32 %v5156, 4294901760
      %5542 = vmatmul.mubr.f32.gmra.mrb[0].mxu0 %v5541
      %v5543 = vpop.f32.mrb[0].mxu0
      %v5544 = vadd.f32 %v5283, %v5543
      %v5545 = vpop.f32.mrb[0].mxu0
      %5546 = vmatprep.mubr.f32.mxu0 0.0
      %v5547 = vand.u32 %v5159, 4294901760
      %5548 = vmatmul.mubr.f32.gmra.mrb[0].mxu0 %v5547
      %v5549 = vpop.f32.mrb[0].mxu0
      %v5550 = vadd.f32 %v5293, %v5549
      %v5551 = vpop.f32.mrb[0].mxu0
      %5552 = vmatprep.mubr.f32.mxu0 0.0
      %v5553 = vand.u32 %v5162, 4294901760
      %5554 = vmatmul.mubr.f32.gmra.mrb[0].mxu0 %v5553
      %v5555 = vpop.f32.mrb[0].mxu0
      %v5556 = vadd.f32 %v5303, %v5555
      %v5557 = vpop.f32.mrb[0].mxu0
      %5558 = vmatprep.mubr.f32.mxu0 0.0
      %v5559 = vand.u32 %v5165, 4294901760
      %5560 = vmatmul.mubr.f32.gmra.mrb[0].mxu0 %v5559
      %v5561 = vpop.f32.mrb[0].mxu0
      %v5562 = vadd.f32 %v5313, %v5561
      %v5563 = vpop.f32.mrb[0].mxu0
      %5564 = vmatprep.mubr.f32.mxu0 0.0
      %v5565 = vand.u32 %v5168, 4294901760
      %5566 = vmatmul.mubr.f32.gmra.mrb[0].mxu0 %v5565
      %v5567 = vpop.f32.mrb[0].mxu0
      %v5568 = vadd.f32 %v5323, %v5567
      %v5569 = vpop.f32.mrb[0].mxu0
      %5570 = vmatprep.mubr.f32.mxu0 0.0
      %v5571 = vand.u32 %v5171, 4294901760
      %5572 = vmatmul.mubr.f32.gmra.mrb[0].mxu0 %v5571
      %v5573 = vpop.f32.mrb[0].mxu0
      %v5574 = vadd.f32 %v5333, %v5573
      %v5575 = vpop.f32.mrb[0].mxu0
      %5576 = vmatprep.mubr.f32.mxu0 0.0
      %v5577 = vand.u32 %v5174, 4294901760
      %5578 = vmatmul.mubr.f32.gmra.mrb[0].mxu0 %v5577
      %v5579 = vpop.f32.mrb[0].mxu0
      %v5580 = vadd.f32 %v5343, %v5579
      %v5581 = vpop.f32.mrb[0].mxu0
      %5582 = vmatprep.mubr.f32.mxu0 0.0
      %v5583 = vand.u32 %v5177, 4294901760
      %5584 = vmatmul.mubr.f32.gmra.mrb[0].mxu0 %v5583
      %v5585 = vpop.f32.mrb[0].mxu0
      %v5586 = vadd.f32 %v5353, %v5585
      %v5587 = vpop.f32.mrb[0].mxu0
      %5588 = vmatprep.mubr.f32.mxu0 0.0
      %v5589 = vand.u32 %v5180, 4294901760
      %5590 = vmatmul.mubr.f32.gmra.mrb[0].mxu0 %v5589
      %v5591 = vpop.f32.mrb[0].mxu0
      %v5592 = vadd.f32 %v5363, %v5591
      %v5593 = vpop.f32.mrb[0].mxu0
      %5594 = vmatprep.mubr.f32.mxu0 0.0
      %v5595 = vand.u32 %v5183, 4294901760
      %5596 = vmatmul.mubr.f32.gmra.mrb[0].mxu0 %v5595
      %v5597 = vpop.f32.mrb[0].mxu0
      %v5598 = vadd.f32 %v5373, %v5597
      %v5599 = vpop.f32.mrb[0].mxu0
      %5600 = vmatprep.mubr.f32.mxu0 0.0
      %v5601 = vand.u32 %v5186, 4294901760
      %5602 = vmatmul.mubr.f32.gmra.mrb[0].mxu0 %v5601
      %v5603 = vpop.f32.mrb[0].mxu0
      %v5604 = vadd.f32 %v5383, %v5603
      %v5605 = vpop.f32.mrb[0].mxu0
      %5606 = vmatprep.mubr.f32.mxu0 0.0
      %v5607 = vand.u32 %v5189, 4294901760
      %5608 = vmatmul.mubr.f32.gmra.mrb[0].mxu0 %v5607
      %v5609 = vpop.f32.mrb[0].mxu0
      %v5610 = vadd.f32 %v5393, %v5609
      %v5611 = vpop.f32.mrb[0].mxu0
      %5612 = vmatprep.mubr.f32.mxu0 0.0
      %v5613 = vand.u32 %v5192, 4294901760
      %5614 = vmatmul.mubr.f32.gmra.mrb[0].mxu0 %v5613
      %v5615 = vpop.f32.mrb[0].mxu0
      %v5616 = vadd.f32 %v5403, %v5615
      %v5617 = vpop.f32.mrb[0].mxu0
      %5618 = vmatprep.mubr.f32.mxu0 0.0
      %v5619 = vand.u32 %v5195, 4294901760
      %5620 = vmatmul.mubr.f32.gmra.mrb[0].mxu0 %v5619
      %v5621 = vpop.f32.mrb[0].mxu0
      %v5622 = vadd.f32 %v5413, %v5621
      %v5623 = vpop.f32.mrb[0].mxu0
      %5624 = vmatprep.mubr.f32.mxu0 0.0
      %v5625 = vand.u32 %v5198, 4294901760
      %5626 = vmatmul.mubr.f32.gmra.mrb[0].mxu0 %v5625
      %v5627 = vpop.f32.mrb[0].mxu0
      %v5628 = vadd.f32 %v5423, %v5627
      %v5629 = vpop.f32.mrb[0].mxu0
      %5630 = vmatprep.mubr.f32.mxu0 0.0
      %v5631 = vand.u32 %v5201, 4294901760
      %5632 = vmatmul.mubr.f32.gmra.mrb[0].mxu0 %v5631
      %v5633 = vpop.f32.mrb[0].mxu0
      %v5634 = vadd.f32 %v5433, %v5633
      %v5635 = vpop.f32.mrb[0].mxu0
      %5636 = vdwg.mxu0
      %5637 = vmatprep.subr.mxu0 0.0
      %v5638 = vand.u32 %v214, 4294901760
      %v5639 = vsub.f32 %v214, %v5638
      %5640 = vmatpush1.msra.mxu0 %v5639
      %5641 = vmatprep.subr.mxu0 0.0
      %v5642 = vand.u32 %v215, 4294901760
      %v5643 = vsub.f32 %v215, %v5642
      %5644 = vmatpush1.msra.mxu0 %v5643
      %5645 = vmatprep.subr.mxu0 0.0
      %v5646 = vand.u32 %v216, 4294901760
      %v5647 = vsub.f32 %v216, %v5646
      %5648 = vmatpush1.msra.mxu0 %v5647
      %5649 = vmatprep.subr.mxu0 0.0
      %v5650 = vand.u32 %v217, 4294901760
      %v5651 = vsub.f32 %v217, %v5650
      %5652 = vmatpush1.msra.mxu0 %v5651
      %5653 = vmatprep.subr.mxu0 0.0
      %v5654 = vand.u32 %v218, 4294901760
      %v5655 = vsub.f32 %v218, %v5654
      %5656 = vmatpush1.msra.mxu0 %v5655
      %5657 = vmatprep.subr.mxu0 0.0
      %v5658 = vand.u32 %v219, 4294901760
      %v5659 = vsub.f32 %v219, %v5658
      %5660 = vmatpush1.msra.mxu0 %v5659
      %5661 = vmatprep.subr.mxu0 0.0
      %v5662 = vand.u32 %v220, 4294901760
      %v5663 = vsub.f32 %v220, %v5662
      %5664 = vmatpush1.msra.mxu0 %v5663
      %5665 = vmatprep.subr.mxu0 0.0
      %v5666 = vand.u32 %v221, 4294901760
      %v5667 = vsub.f32 %v221, %v5666
      %5668 = vmatpush1.msra.mxu0 %v5667
      %5669 = vmatprep.subr.mxu0 0.0
      %5670 = vmatpush1.msra.mxu0 0.0
      %5671 = vmatprep.subr.mxu0 0.0
      %5672 = vmatpush1.msra.mxu0 0.0
      %5673 = vmatprep.subr.mxu0 0.0
      %5674 = vmatpush1.msra.mxu0 0.0
      %5675 = vmatprep.subr.mxu0 0.0
      %5676 = vmatpush1.msra.mxu0 0.0
      %5677 = vmatprep.subr.mxu0 0.0
      %5678 = vmatpush1.msra.mxu0 0.0
      %5679 = vmatprep.subr.mxu0 0.0
      %5680 = vmatpush1.msra.mxu0 0.0
      %5681 = vmatprep.subr.mxu0 0.0
      %5682 = vmatpush1.msra.mxu0 0.0
      %5683 = vmatprep.subr.mxu0 0.0
      %5684 = vmatpush1.msra.mxu0 0.0
      %5685 = vmatprep.subr.mxu0 0.0
      %5686 = vmatpush1.msra.mxu0 0.0
      %5687 = vmatprep.subr.mxu0 0.0
      %5688 = vmatpush1.msra.mxu0 0.0
      %5689 = vmatprep.subr.mxu0 0.0
      %5690 = vmatpush1.msra.mxu0 0.0
      %5691 = vmatprep.subr.mxu0 0.0
      %5692 = vmatpush1.msra.mxu0 0.0
      %5693 = vmatprep.subr.mxu0 0.0
      %5694 = vmatpush1.msra.mxu0 0.0
      %5695 = vmatprep.subr.mxu0 0.0
      %5696 = vmatpush1.msra.mxu0 0.0
      %5697 = vmatprep.subr.mxu0 0.0
      %5698 = vmatpush1.msra.mxu0 0.0
      %5699 = vmatprep.subr.mxu0 0.0
      %5700 = vmatpush1.msra.mxu0 0.0
      %5701 = vmatprep.subr.mxu0 0.0
      %5702 = vmatpush1.msra.mxu0 0.0
      %5703 = vmatprep.subr.mxu0 0.0
      %5704 = vmatpush1.msra.mxu0 0.0
      %5705 = vmatprep.subr.mxu0 0.0
      %5706 = vmatpush1.msra.mxu0 0.0
      %5707 = vmatprep.subr.mxu0 0.0
      %5708 = vmatpush1.msra.mxu0 0.0
      %5709 = vmatprep.subr.mxu0 0.0
      %5710 = vmatpush1.msra.mxu0 0.0
      %5711 = vmatprep.subr.mxu0 0.0
      %5712 = vmatpush1.msra.mxu0 0.0
      %5713 = vmatprep.subr.mxu0 0.0
      %5714 = vmatpush1.msra.mxu0 0.0
      %5715 = vmatprep.subr.mxu0 0.0
      %5716 = vmatpush1.msra.mxu0 0.0
      %5717 = vmatprep.mubr.f32.mxu0 0.0
      %v5718 = vand.u32 %v5156, 4294901760
      %v5719 = vsub.f32 %v5156, %v5718
      %5720 = vmatmul.mubr.f32.gmra.mrb[0].mxu0 %v5719
      %v5721 = vpop.f32.mrb[0].mxu0
      %v5722 = vadd.f32 %v5544, %v5721
      %v5723 = vpop.f32.mrb[0].mxu0
      %5724 = vmatprep.mubr.f32.mxu0 0.0
      %v5725 = vand.u32 %v5159, 4294901760
      %v5726 = vsub.f32 %v5159, %v5725
      %5727 = vmatmul.mubr.f32.gmra.mrb[0].mxu0 %v5726
      %v5728 = vpop.f32.mrb[0].mxu0
      %v5729 = vadd.f32 %v5550, %v5728
      %v5730 = vpop.f32.mrb[0].mxu0
      %5731 = vmatprep.mubr.f32.mxu0 0.0
      %v5732 = vand.u32 %v5162, 4294901760
      %v5733 = vsub.f32 %v5162, %v5732
      %5734 = vmatmul.mubr.f32.gmra.mrb[0].mxu0 %v5733
      %v5735 = vpop.f32.mrb[0].mxu0
      %v5736 = vadd.f32 %v5556, %v5735
      %v5737 = vpop.f32.mrb[0].mxu0
      %5738 = vmatprep.mubr.f32.mxu0 0.0
      %v5739 = vand.u32 %v5165, 4294901760
      %v5740 = vsub.f32 %v5165, %v5739
      %5741 = vmatmul.mubr.f32.gmra.mrb[0].mxu0 %v5740
      %v5742 = vpop.f32.mrb[0].mxu0
      %v5743 = vadd.f32 %v5562, %v5742
      %v5744 = vpop.f32.mrb[0].mxu0
      %5745 = vmatprep.mubr.f32.mxu0 0.0
      %v5746 = vand.u32 %v5168, 4294901760
      %v5747 = vsub.f32 %v5168, %v5746
      %5748 = vmatmul.mubr.f32.gmra.mrb[0].mxu0 %v5747
      %v5749 = vpop.f32.mrb[0].mxu0
      %v5750 = vadd.f32 %v5568, %v5749
      %v5751 = vpop.f32.mrb[0].mxu0
      %5752 = vmatprep.mubr.f32.mxu0 0.0
      %v5753 = vand.u32 %v5171, 4294901760
      %v5754 = vsub.f32 %v5171, %v5753
      %5755 = vmatmul.mubr.f32.gmra.mrb[0].mxu0 %v5754
      %v5756 = vpop.f32.mrb[0].mxu0
      %v5757 = vadd.f32 %v5574, %v5756
      %v5758 = vpop.f32.mrb[0].mxu0
      %5759 = vmatprep.mubr.f32.mxu0 0.0
      %v5760 = vand.u32 %v5174, 4294901760
      %v5761 = vsub.f32 %v5174, %v5760
      %5762 = vmatmul.mubr.f32.gmra.mrb[0].mxu0 %v5761
      %v5763 = vpop.f32.mrb[0].mxu0
      %v5764 = vadd.f32 %v5580, %v5763
      %v5765 = vpop.f32.mrb[0].mxu0
      %5766 = vmatprep.mubr.f32.mxu0 0.0
      %v5767 = vand.u32 %v5177, 4294901760
      %v5768 = vsub.f32 %v5177, %v5767
      %5769 = vmatmul.mubr.f32.gmra.mrb[0].mxu0 %v5768
      %v5770 = vpop.f32.mrb[0].mxu0
      %v5771 = vadd.f32 %v5586, %v5770
      %v5772 = vpop.f32.mrb[0].mxu0
      %5773 = vmatprep.mubr.f32.mxu0 0.0
      %v5774 = vand.u32 %v5180, 4294901760
      %v5775 = vsub.f32 %v5180, %v5774
      %5776 = vmatmul.mubr.f32.gmra.mrb[0].mxu0 %v5775
      %v5777 = vpop.f32.mrb[0].mxu0
      %v5778 = vadd.f32 %v5592, %v5777
      %v5779 = vpop.f32.mrb[0].mxu0
      %5780 = vmatprep.mubr.f32.mxu0 0.0
      %v5781 = vand.u32 %v5183, 4294901760
      %v5782 = vsub.f32 %v5183, %v5781
      %5783 = vmatmul.mubr.f32.gmra.mrb[0].mxu0 %v5782
      %v5784 = vpop.f32.mrb[0].mxu0
      %v5785 = vadd.f32 %v5598, %v5784
      %v5786 = vpop.f32.mrb[0].mxu0
      %5787 = vmatprep.mubr.f32.mxu0 0.0
      %v5788 = vand.u32 %v5186, 4294901760
      %v5789 = vsub.f32 %v5186, %v5788
      %5790 = vmatmul.mubr.f32.gmra.mrb[0].mxu0 %v5789
      %v5791 = vpop.f32.mrb[0].mxu0
      %v5792 = vadd.f32 %v5604, %v5791
      %v5793 = vpop.f32.mrb[0].mxu0
      %5794 = vmatprep.mubr.f32.mxu0 0.0
      %v5795 = vand.u32 %v5189, 4294901760
      %v5796 = vsub.f32 %v5189, %v5795
      %5797 = vmatmul.mubr.f32.gmra.mrb[0].mxu0 %v5796
      %v5798 = vpop.f32.mrb[0].mxu0
      %v5799 = vadd.f32 %v5610, %v5798
      %v5800 = vpop.f32.mrb[0].mxu0
      %5801 = vmatprep.mubr.f32.mxu0 0.0
      %v5802 = vand.u32 %v5192, 4294901760
      %v5803 = vsub.f32 %v5192, %v5802
      %5804 = vmatmul.mubr.f32.gmra.mrb[0].mxu0 %v5803
      %v5805 = vpop.f32.mrb[0].mxu0
      %v5806 = vadd.f32 %v5616, %v5805
      %v5807 = vpop.f32.mrb[0].mxu0
      %5808 = vmatprep.mubr.f32.mxu0 0.0
      %v5809 = vand.u32 %v5195, 4294901760
      %v5810 = vsub.f32 %v5195, %v5809
      %5811 = vmatmul.mubr.f32.gmra.mrb[0].mxu0 %v5810
      %v5812 = vpop.f32.mrb[0].mxu0
      %v5813 = vadd.f32 %v5622, %v5812
      %v5814 = vpop.f32.mrb[0].mxu0
      %5815 = vmatprep.mubr.f32.mxu0 0.0
      %v5816 = vand.u32 %v5198, 4294901760
      %v5817 = vsub.f32 %v5198, %v5816
      %5818 = vmatmul.mubr.f32.gmra.mrb[0].mxu0 %v5817
      %v5819 = vpop.f32.mrb[0].mxu0
      %v5820 = vadd.f32 %v5628, %v5819
      %v5821 = vpop.f32.mrb[0].mxu0
      %5822 = vmatprep.mubr.f32.mxu0 0.0
      %v5823 = vand.u32 %v5201, 4294901760
      %v5824 = vsub.f32 %v5201, %v5823
      %5825 = vmatmul.mubr.f32.gmra.mrb[0].mxu0 %v5824
      %v5826 = vpop.f32.mrb[0].mxu0
      %v5827 = vadd.f32 %v5634, %v5826
      %v5828 = vpop.f32.mrb[0].mxu0
      %5829 = vdwg.mxu0
      %5830 = vmatprep.subr.mxu0 0.0
      %v5831 = vand.u32 %v214, 4294901760
      %5832 = vmatpush1.msra.mxu0 %v5831
      %5833 = vmatprep.subr.mxu0 0.0
      %v5834 = vand.u32 %v215, 4294901760
      %5835 = vmatpush1.msra.mxu0 %v5834
      %5836 = vmatprep.subr.mxu0 0.0
      %v5837 = vand.u32 %v216, 4294901760
      %5838 = vmatpush1.msra.mxu0 %v5837
      %5839 = vmatprep.subr.mxu0 0.0
      %v5840 = vand.u32 %v217, 4294901760
      %5841 = vmatpush1.msra.mxu0 %v5840
      %5842 = vmatprep.subr.mxu0 0.0
      %v5843 = vand.u32 %v218, 4294901760
      %5844 = vmatpush1.msra.mxu0 %v5843
      %5845 = vmatprep.subr.mxu0 0.0
      %v5846 = vand.u32 %v219, 4294901760
      %5847 = vmatpush1.msra.mxu0 %v5846
      %5848 = vmatprep.subr.mxu0 0.0
      %v5849 = vand.u32 %v220, 4294901760
      %5850 = vmatpush1.msra.mxu0 %v5849
      %5851 = vmatprep.subr.mxu0 0.0
      %v5852 = vand.u32 %v221, 4294901760
      %5853 = vmatpush1.msra.mxu0 %v5852
      %5854 = vmatprep.subr.mxu0 0.0
      %5855 = vmatpush1.msra.mxu0 0.0
      %5856 = vmatprep.subr.mxu0 0.0
      %5857 = vmatpush1.msra.mxu0 0.0
      %5858 = vmatprep.subr.mxu0 0.0
      %5859 = vmatpush1.msra.mxu0 0.0
      %5860 = vmatprep.subr.mxu0 0.0
      %5861 = vmatpush1.msra.mxu0 0.0
      %5862 = vmatprep.subr.mxu0 0.0
      %5863 = vmatpush1.msra.mxu0 0.0
      %5864 = vmatprep.subr.mxu0 0.0
      %5865 = vmatpush1.msra.mxu0 0.0
      %5866 = vmatprep.subr.mxu0 0.0
      %5867 = vmatpush1.msra.mxu0 0.0
      %5868 = vmatprep.subr.mxu0 0.0
      %5869 = vmatpush1.msra.mxu0 0.0
      %5870 = vmatprep.subr.mxu0 0.0
      %5871 = vmatpush1.msra.mxu0 0.0
      %5872 = vmatprep.subr.mxu0 0.0
      %5873 = vmatpush1.msra.mxu0 0.0
      %5874 = vmatprep.subr.mxu0 0.0
      %5875 = vmatpush1.msra.mxu0 0.0
      %5876 = vmatprep.subr.mxu0 0.0
      %5877 = vmatpush1.msra.mxu0 0.0
      %5878 = vmatprep.subr.mxu0 0.0
      %5879 = vmatpush1.msra.mxu0 0.0
      %5880 = vmatprep.subr.mxu0 0.0
      %5881 = vmatpush1.msra.mxu0 0.0
      %5882 = vmatprep.subr.mxu0 0.0
      %5883 = vmatpush1.msra.mxu0 0.0
      %5884 = vmatprep.subr.mxu0 0.0
      %5885 = vmatpush1.msra.mxu0 0.0
      %5886 = vmatprep.subr.mxu0 0.0
      %5887 = vmatpush1.msra.mxu0 0.0
      %5888 = vmatprep.subr.mxu0 0.0
      %5889 = vmatpush1.msra.mxu0 0.0
      %5890 = vmatprep.subr.mxu0 0.0
      %5891 = vmatpush1.msra.mxu0 0.0
      %5892 = vmatprep.subr.mxu0 0.0
      %5893 = vmatpush1.msra.mxu0 0.0
      %5894 = vmatprep.subr.mxu0 0.0
      %5895 = vmatpush1.msra.mxu0 0.0
      %5896 = vmatprep.subr.mxu0 0.0
      %5897 = vmatpush1.msra.mxu0 0.0
      %5898 = vmatprep.subr.mxu0 0.0
      %5899 = vmatpush1.msra.mxu0 0.0
      %5900 = vmatprep.subr.mxu0 0.0
      %5901 = vmatpush1.msra.mxu0 0.0
      %5902 = vmatprep.mubr.f32.mxu0 0.0
      %v5903 = vand.u32 %v5156, 4294901760
      %v5904 = vsub.f32 %v5156, %v5903
      %v5905 = vand.u32 %v5904, 4294901760
      %5906 = vmatmul.mubr.f32.gmra.mrb[0].mxu0 %v5905
      %v5907 = vpop.f32.mrb[0].mxu0
      %v5908 = vadd.f32 %v5722, %v5907
      %v5909 = vpop.f32.mrb[0].mxu0
      %5910 = vmatprep.mubr.f32.mxu0 0.0
      %v5911 = vand.u32 %v5159, 4294901760
      %v5912 = vsub.f32 %v5159, %v5911
      %v5913 = vand.u32 %v5912, 4294901760
      %5914 = vmatmul.mubr.f32.gmra.mrb[0].mxu0 %v5913
      %v5915 = vpop.f32.mrb[0].mxu0
      %v5916 = vadd.f32 %v5729, %v5915
      %v5917 = vpop.f32.mrb[0].mxu0
      %5918 = vmatprep.mubr.f32.mxu0 0.0
      %v5919 = vand.u32 %v5162, 4294901760
      %v5920 = vsub.f32 %v5162, %v5919
      %v5921 = vand.u32 %v5920, 4294901760
      %5922 = vmatmul.mubr.f32.gmra.mrb[0].mxu0 %v5921
      %v5923 = vpop.f32.mrb[0].mxu0
      %v5924 = vadd.f32 %v5736, %v5923
      %v5925 = vpop.f32.mrb[0].mxu0
      %5926 = vmatprep.mubr.f32.mxu0 0.0
      %v5927 = vand.u32 %v5165, 4294901760
      %v5928 = vsub.f32 %v5165, %v5927
      %v5929 = vand.u32 %v5928, 4294901760
      %5930 = vmatmul.mubr.f32.gmra.mrb[0].mxu0 %v5929
      %v5931 = vpop.f32.mrb[0].mxu0
      %v5932 = vadd.f32 %v5743, %v5931
      %v5933 = vpop.f32.mrb[0].mxu0
      %5934 = vmatprep.mubr.f32.mxu0 0.0
      %v5935 = vand.u32 %v5168, 4294901760
      %v5936 = vsub.f32 %v5168, %v5935
      %v5937 = vand.u32 %v5936, 4294901760
      %5938 = vmatmul.mubr.f32.gmra.mrb[0].mxu0 %v5937
      %v5939 = vpop.f32.mrb[0].mxu0
      %v5940 = vadd.f32 %v5750, %v5939
      %v5941 = vpop.f32.mrb[0].mxu0
      %5942 = vmatprep.mubr.f32.mxu0 0.0
      %v5943 = vand.u32 %v5171, 4294901760
      %v5944 = vsub.f32 %v5171, %v5943
      %v5945 = vand.u32 %v5944, 4294901760
      %5946 = vmatmul.mubr.f32.gmra.mrb[0].mxu0 %v5945
      %v5947 = vpop.f32.mrb[0].mxu0
      %v5948 = vadd.f32 %v5757, %v5947
      %v5949 = vpop.f32.mrb[0].mxu0
      %5950 = vmatprep.mubr.f32.mxu0 0.0
      %v5951 = vand.u32 %v5174, 4294901760
      %v5952 = vsub.f32 %v5174, %v5951
      %v5953 = vand.u32 %v5952, 4294901760
      %5954 = vmatmul.mubr.f32.gmra.mrb[0].mxu0 %v5953
      %v5955 = vpop.f32.mrb[0].mxu0
      %v5956 = vadd.f32 %v5764, %v5955
      %v5957 = vpop.f32.mrb[0].mxu0
      %5958 = vmatprep.mubr.f32.mxu0 0.0
      %v5959 = vand.u32 %v5177, 4294901760
      %v5960 = vsub.f32 %v5177, %v5959
      %v5961 = vand.u32 %v5960, 4294901760
      %5962 = vmatmul.mubr.f32.gmra.mrb[0].mxu0 %v5961
      %v5963 = vpop.f32.mrb[0].mxu0
      %v5964 = vadd.f32 %v5771, %v5963
      %v5965 = vpop.f32.mrb[0].mxu0
      %5966 = vmatprep.mubr.f32.mxu0 0.0
      %v5967 = vand.u32 %v5180, 4294901760
      %v5968 = vsub.f32 %v5180, %v5967
      %v5969 = vand.u32 %v5968, 4294901760
      %5970 = vmatmul.mubr.f32.gmra.mrb[0].mxu0 %v5969
      %v5971 = vpop.f32.mrb[0].mxu0
      %v5972 = vadd.f32 %v5778, %v5971
      %v5973 = vpop.f32.mrb[0].mxu0
      %5974 = vmatprep.mubr.f32.mxu0 0.0
      %v5975 = vand.u32 %v5183, 4294901760
      %v5976 = vsub.f32 %v5183, %v5975
      %v5977 = vand.u32 %v5976, 4294901760
      %5978 = vmatmul.mubr.f32.gmra.mrb[0].mxu0 %v5977
      %v5979 = vpop.f32.mrb[0].mxu0
      %v5980 = vadd.f32 %v5785, %v5979
      %v5981 = vpop.f32.mrb[0].mxu0
      %5982 = vmatprep.mubr.f32.mxu0 0.0
      %v5983 = vand.u32 %v5186, 4294901760
      %v5984 = vsub.f32 %v5186, %v5983
      %v5985 = vand.u32 %v5984, 4294901760
      %5986 = vmatmul.mubr.f32.gmra.mrb[0].mxu0 %v5985
      %v5987 = vpop.f32.mrb[0].mxu0
      %v5988 = vadd.f32 %v5792, %v5987
      %v5989 = vpop.f32.mrb[0].mxu0
      %5990 = vmatprep.mubr.f32.mxu0 0.0
      %v5991 = vand.u32 %v5189, 4294901760
      %v5992 = vsub.f32 %v5189, %v5991
      %v5993 = vand.u32 %v5992, 4294901760
      %5994 = vmatmul.mubr.f32.gmra.mrb[0].mxu0 %v5993
      %v5995 = vpop.f32.mrb[0].mxu0
      %v5996 = vadd.f32 %v5799, %v5995
      %v5997 = vpop.f32.mrb[0].mxu0
      %5998 = vmatprep.mubr.f32.mxu0 0.0
      %v5999 = vand.u32 %v5192, 4294901760
      %v6000 = vsub.f32 %v5192, %v5999
      %v6001 = vand.u32 %v6000, 4294901760
      %6002 = vmatmul.mubr.f32.gmra.mrb[0].mxu0 %v6001
      %v6003 = vpop.f32.mrb[0].mxu0
      %v6004 = vadd.f32 %v5806, %v6003
      %v6005 = vpop.f32.mrb[0].mxu0
      %6006 = vmatprep.mubr.f32.mxu0 0.0
      %v6007 = vand.u32 %v5195, 4294901760
      %v6008 = vsub.f32 %v5195, %v6007
      %v6009 = vand.u32 %v6008, 4294901760
      %6010 = vmatmul.mubr.f32.gmra.mrb[0].mxu0 %v6009
      %v6011 = vpop.f32.mrb[0].mxu0
      %v6012 = vadd.f32 %v5813, %v6011
      %v6013 = vpop.f32.mrb[0].mxu0
      %6014 = vmatprep.mubr.f32.mxu0 0.0
      %v6015 = vand.u32 %v5198, 4294901760
      %v6016 = vsub.f32 %v5198, %v6015
      %v6017 = vand.u32 %v6016, 4294901760
      %6018 = vmatmul.mubr.f32.gmra.mrb[0].mxu0 %v6017
      %v6019 = vpop.f32.mrb[0].mxu0
      %v6020 = vadd.f32 %v5820, %v6019
      %v6021 = vpop.f32.mrb[0].mxu0
      %6022 = vmatprep.mubr.f32.mxu0 0.0
      %v6023 = vand.u32 %v5201, 4294901760
      %v6024 = vsub.f32 %v5201, %v6023
      %v6025 = vand.u32 %v6024, 4294901760
      %6026 = vmatmul.mubr.f32.gmra.mrb[0].mxu0 %v6025
      %v6027 = vpop.f32.mrb[0].mxu0
      %v6028 = vadd.f32 %v5827, %v6027
      %v6029 = vpop.f32.mrb[0].mxu0
      %6030 = vdwg.mxu0
      %6031 = vmatprep.subr.mxu0 0.0
      %v6032 = vand.u32 %v214, 4294901760
      %v6033 = vsub.f32 %v214, %v6032
      %v6034 = vand.u32 %v6033, 4294901760
      %6035 = vmatpush1.msra.mxu0 %v6034
      %6036 = vmatprep.subr.mxu0 0.0
      %v6037 = vand.u32 %v215, 4294901760
      %v6038 = vsub.f32 %v215, %v6037
      %v6039 = vand.u32 %v6038, 4294901760
      %6040 = vmatpush1.msra.mxu0 %v6039
      %6041 = vmatprep.subr.mxu0 0.0
      %v6042 = vand.u32 %v216, 4294901760
      %v6043 = vsub.f32 %v216, %v6042
      %v6044 = vand.u32 %v6043, 4294901760
      %6045 = vmatpush1.msra.mxu0 %v6044
      %6046 = vmatprep.subr.mxu0 0.0
      %v6047 = vand.u32 %v217, 4294901760
      %v6048 = vsub.f32 %v217, %v6047
      %v6049 = vand.u32 %v6048, 4294901760
      %6050 = vmatpush1.msra.mxu0 %v6049
      %6051 = vmatprep.subr.mxu0 0.0
      %v6052 = vand.u32 %v218, 4294901760
      %v6053 = vsub.f32 %v218, %v6052
      %v6054 = vand.u32 %v6053, 4294901760
      %6055 = vmatpush1.msra.mxu0 %v6054
      %6056 = vmatprep.subr.mxu0 0.0
      %v6057 = vand.u32 %v219, 4294901760
      %v6058 = vsub.f32 %v219, %v6057
      %v6059 = vand.u32 %v6058, 4294901760
      %6060 = vmatpush1.msra.mxu0 %v6059
      %6061 = vmatprep.subr.mxu0 0.0
      %v6062 = vand.u32 %v220, 4294901760
      %v6063 = vsub.f32 %v220, %v6062
      %v6064 = vand.u32 %v6063, 4294901760
      %6065 = vmatpush1.msra.mxu0 %v6064
      %6066 = vmatprep.subr.mxu0 0.0
      %v6067 = vand.u32 %v221, 4294901760
      %v6068 = vsub.f32 %v221, %v6067
      %v6069 = vand.u32 %v6068, 4294901760
      %6070 = vmatpush1.msra.mxu0 %v6069
      %6071 = vmatprep.subr.mxu0 0.0
      %6072 = vmatpush1.msra.mxu0 0.0
      %6073 = vmatprep.subr.mxu0 0.0
      %6074 = vmatpush1.msra.mxu0 0.0
      %6075 = vmatprep.subr.mxu0 0.0
      %6076 = vmatpush1.msra.mxu0 0.0
      %6077 = vmatprep.subr.mxu0 0.0
      %6078 = vmatpush1.msra.mxu0 0.0
      %6079 = vmatprep.subr.mxu0 0.0
      %6080 = vmatpush1.msra.mxu0 0.0
      %6081 = vmatprep.subr.mxu0 0.0
      %6082 = vmatpush1.msra.mxu0 0.0
      %6083 = vmatprep.subr.mxu0 0.0
      %6084 = vmatpush1.msra.mxu0 0.0
      %6085 = vmatprep.subr.mxu0 0.0
      %6086 = vmatpush1.msra.mxu0 0.0
      %6087 = vmatprep.subr.mxu0 0.0
      %6088 = vmatpush1.msra.mxu0 0.0
      %6089 = vmatprep.subr.mxu0 0.0
      %6090 = vmatpush1.msra.mxu0 0.0
      %6091 = vmatprep.subr.mxu0 0.0
      %6092 = vmatpush1.msra.mxu0 0.0
      %6093 = vmatprep.subr.mxu0 0.0
      %6094 = vmatpush1.msra.mxu0 0.0
      %6095 = vmatprep.subr.mxu0 0.0
      %6096 = vmatpush1.msra.mxu0 0.0
      %6097 = vmatprep.subr.mxu0 0.0
      %6098 = vmatpush1.msra.mxu0 0.0
      %6099 = vmatprep.subr.mxu0 0.0
      %6100 = vmatpush1.msra.mxu0 0.0
      %6101 = vmatprep.subr.mxu0 0.0
      %6102 = vmatpush1.msra.mxu0 0.0
      %6103 = vmatprep.subr.mxu0 0.0
      %6104 = vmatpush1.msra.mxu0 0.0
      %6105 = vmatprep.subr.mxu0 0.0
      %6106 = vmatpush1.msra.mxu0 0.0
      %6107 = vmatprep.subr.mxu0 0.0
      %6108 = vmatpush1.msra.mxu0 0.0
      %6109 = vmatprep.subr.mxu0 0.0
      %6110 = vmatpush1.msra.mxu0 0.0
      %6111 = vmatprep.subr.mxu0 0.0
      %6112 = vmatpush1.msra.mxu0 0.0
      %6113 = vmatprep.subr.mxu0 0.0
      %6114 = vmatpush1.msra.mxu0 0.0
      %6115 = vmatprep.subr.mxu0 0.0
      %6116 = vmatpush1.msra.mxu0 0.0
      %6117 = vmatprep.subr.mxu0 0.0
      %6118 = vmatpush1.msra.mxu0 0.0
      %6119 = vmatprep.mubr.f32.mxu0 0.0
      %v6120 = vand.u32 %v5156, 4294901760
      %6121 = vmatmul.mubr.f32.gmra.mrb[0].mxu0 %v6120
      %v6122 = vpop.f32.mrb[0].mxu0
      %v6123 = vadd.f32 %v5908, %v6122
      %v6124 = vpop.f32.mrb[0].mxu0
      %6125 = vmatprep.mubr.f32.mxu0 0.0
      %v6126 = vand.u32 %v5159, 4294901760
      %6127 = vmatmul.mubr.f32.gmra.mrb[0].mxu0 %v6126
      %v6128 = vpop.f32.mrb[0].mxu0
      %v6129 = vadd.f32 %v5916, %v6128
      %v6130 = vpop.f32.mrb[0].mxu0
      %6131 = vmatprep.mubr.f32.mxu0 0.0
      %v6132 = vand.u32 %v5162, 4294901760
      %6133 = vmatmul.mubr.f32.gmra.mrb[0].mxu0 %v6132
      %v6134 = vpop.f32.mrb[0].mxu0
      %v6135 = vadd.f32 %v5924, %v6134
      %v6136 = vpop.f32.mrb[0].mxu0
      %6137 = vmatprep.mubr.f32.mxu0 0.0
      %v6138 = vand.u32 %v5165, 4294901760
      %6139 = vmatmul.mubr.f32.gmra.mrb[0].mxu0 %v6138
      %v6140 = vpop.f32.mrb[0].mxu0
      %v6141 = vadd.f32 %v5932, %v6140
      %v6142 = vpop.f32.mrb[0].mxu0
      %6143 = vmatprep.mubr.f32.mxu0 0.0
      %v6144 = vand.u32 %v5168, 4294901760
      %6145 = vmatmul.mubr.f32.gmra.mrb[0].mxu0 %v6144
      %v6146 = vpop.f32.mrb[0].mxu0
      %v6147 = vadd.f32 %v5940, %v6146
      %v6148 = vpop.f32.mrb[0].mxu0
      %6149 = vmatprep.mubr.f32.mxu0 0.0
      %v6150 = vand.u32 %v5171, 4294901760
      %6151 = vmatmul.mubr.f32.gmra.mrb[0].mxu0 %v6150
      %v6152 = vpop.f32.mrb[0].mxu0
      %v6153 = vadd.f32 %v5948, %v6152
      %v6154 = vpop.f32.mrb[0].mxu0
      %6155 = vmatprep.mubr.f32.mxu0 0.0
      %v6156 = vand.u32 %v5174, 4294901760
      %6157 = vmatmul.mubr.f32.gmra.mrb[0].mxu0 %v6156
      %v6158 = vpop.f32.mrb[0].mxu0
      %v6159 = vadd.f32 %v5956, %v6158
      %v6160 = vpop.f32.mrb[0].mxu0
      %6161 = vmatprep.mubr.f32.mxu0 0.0
      %v6162 = vand.u32 %v5177, 4294901760
      %6163 = vmatmul.mubr.f32.gmra.mrb[0].mxu0 %v6162
      %v6164 = vpop.f32.mrb[0].mxu0
      %v6165 = vadd.f32 %v5964, %v6164
      %v6166 = vpop.f32.mrb[0].mxu0
      %6167 = vmatprep.mubr.f32.mxu0 0.0
      %v6168 = vand.u32 %v5180, 4294901760
      %6169 = vmatmul.mubr.f32.gmra.mrb[0].mxu0 %v6168
      %v6170 = vpop.f32.mrb[0].mxu0
      %v6171 = vadd.f32 %v5972, %v6170
      %v6172 = vpop.f32.mrb[0].mxu0
      %6173 = vmatprep.mubr.f32.mxu0 0.0
      %v6174 = vand.u32 %v5183, 4294901760
      %6175 = vmatmul.mubr.f32.gmra.mrb[0].mxu0 %v6174
      %v6176 = vpop.f32.mrb[0].mxu0
      %v6177 = vadd.f32 %v5980, %v6176
      %v6178 = vpop.f32.mrb[0].mxu0
      %6179 = vmatprep.mubr.f32.mxu0 0.0
      %v6180 = vand.u32 %v5186, 4294901760
      %6181 = vmatmul.mubr.f32.gmra.mrb[0].mxu0 %v6180
      %v6182 = vpop.f32.mrb[0].mxu0
      %v6183 = vadd.f32 %v5988, %v6182
      %v6184 = vpop.f32.mrb[0].mxu0
      %6185 = vmatprep.mubr.f32.mxu0 0.0
      %v6186 = vand.u32 %v5189, 4294901760
      %6187 = vmatmul.mubr.f32.gmra.mrb[0].mxu0 %v6186
      %v6188 = vpop.f32.mrb[0].mxu0
      %v6189 = vadd.f32 %v5996, %v6188
      %v6190 = vpop.f32.mrb[0].mxu0
      %6191 = vmatprep.mubr.f32.mxu0 0.0
      %v6192 = vand.u32 %v5192, 4294901760
      %6193 = vmatmul.mubr.f32.gmra.mrb[0].mxu0 %v6192
      %v6194 = vpop.f32.mrb[0].mxu0
      %v6195 = vadd.f32 %v6004, %v6194
      %v6196 = vpop.f32.mrb[0].mxu0
      %6197 = vmatprep.mubr.f32.mxu0 0.0
      %v6198 = vand.u32 %v5195, 4294901760
      %6199 = vmatmul.mubr.f32.gmra.mrb[0].mxu0 %v6198
      %v6200 = vpop.f32.mrb[0].mxu0
      %v6201 = vadd.f32 %v6012, %v6200
      %v6202 = vpop.f32.mrb[0].mxu0
      %6203 = vmatprep.mubr.f32.mxu0 0.0
      %v6204 = vand.u32 %v5198, 4294901760
      %6205 = vmatmul.mubr.f32.gmra.mrb[0].mxu0 %v6204
      %v6206 = vpop.f32.mrb[0].mxu0
      %v6207 = vadd.f32 %v6020, %v6206
      %v6208 = vpop.f32.mrb[0].mxu0
      %6209 = vmatprep.mubr.f32.mxu0 0.0
      %v6210 = vand.u32 %v5201, 4294901760
      %6211 = vmatmul.mubr.f32.gmra.mrb[0].mxu0 %v6210
      %v6212 = vpop.f32.mrb[0].mxu0
      %v6213 = vadd.f32 %v6028, %v6212
      %v6214 = vpop.f32.mrb[0].mxu0
      %6215 = vdwg.mxu0
      %6216 = vmatprep.subr.mxu0 0.0
      %v6217 = vand.u32 %v214, 4294901760
      %6218 = vmatpush1.msra.mxu0 %v6217
      %6219 = vmatprep.subr.mxu0 0.0
      %v6220 = vand.u32 %v215, 4294901760
      %6221 = vmatpush1.msra.mxu0 %v6220
      %6222 = vmatprep.subr.mxu0 0.0
      %v6223 = vand.u32 %v216, 4294901760
      %6224 = vmatpush1.msra.mxu0 %v6223
      %6225 = vmatprep.subr.mxu0 0.0
      %v6226 = vand.u32 %v217, 4294901760
      %6227 = vmatpush1.msra.mxu0 %v6226
      %6228 = vmatprep.subr.mxu0 0.0
      %v6229 = vand.u32 %v218, 4294901760
      %6230 = vmatpush1.msra.mxu0 %v6229
      %6231 = vmatprep.subr.mxu0 0.0
      %v6232 = vand.u32 %v219, 4294901760
      %6233 = vmatpush1.msra.mxu0 %v6232
      %6234 = vmatprep.subr.mxu0 0.0
      %v6235 = vand.u32 %v220, 4294901760
      %6236 = vmatpush1.msra.mxu0 %v6235
      %6237 = vmatprep.subr.mxu0 0.0
      %v6238 = vand.u32 %v221, 4294901760
      %6239 = vmatpush1.msra.mxu0 %v6238
      %6240 = vmatprep.subr.mxu0 0.0
      %6241 = vmatpush1.msra.mxu0 0.0
      %6242 = vmatprep.subr.mxu0 0.0
      %6243 = vmatpush1.msra.mxu0 0.0
      %6244 = vmatprep.subr.mxu0 0.0
      %6245 = vmatpush1.msra.mxu0 0.0
      %6246 = vmatprep.subr.mxu0 0.0
      %6247 = vmatpush1.msra.mxu0 0.0
      %6248 = vmatprep.subr.mxu0 0.0
      %6249 = vmatpush1.msra.mxu0 0.0
      %6250 = vmatprep.subr.mxu0 0.0
      %6251 = vmatpush1.msra.mxu0 0.0
      %6252 = vmatprep.subr.mxu0 0.0
      %6253 = vmatpush1.msra.mxu0 0.0
      %6254 = vmatprep.subr.mxu0 0.0
      %6255 = vmatpush1.msra.mxu0 0.0
      %6256 = vmatprep.subr.mxu0 0.0
      %6257 = vmatpush1.msra.mxu0 0.0
      %6258 = vmatprep.subr.mxu0 0.0
      %6259 = vmatpush1.msra.mxu0 0.0
      %6260 = vmatprep.subr.mxu0 0.0
      %6261 = vmatpush1.msra.mxu0 0.0
      %6262 = vmatprep.subr.mxu0 0.0
      %6263 = vmatpush1.msra.mxu0 0.0
      %6264 = vmatprep.subr.mxu0 0.0
      %6265 = vmatpush1.msra.mxu0 0.0
      %6266 = vmatprep.subr.mxu0 0.0
      %6267 = vmatpush1.msra.mxu0 0.0
      %6268 = vmatprep.subr.mxu0 0.0
      %6269 = vmatpush1.msra.mxu0 0.0
      %6270 = vmatprep.subr.mxu0 0.0
      %6271 = vmatpush1.msra.mxu0 0.0
      %6272 = vmatprep.subr.mxu0 0.0
      %6273 = vmatpush1.msra.mxu0 0.0
      %6274 = vmatprep.subr.mxu0 0.0
      %6275 = vmatpush1.msra.mxu0 0.0
      %6276 = vmatprep.subr.mxu0 0.0
      %6277 = vmatpush1.msra.mxu0 0.0
      %6278 = vmatprep.subr.mxu0 0.0
      %6279 = vmatpush1.msra.mxu0 0.0
      %6280 = vmatprep.subr.mxu0 0.0
      %6281 = vmatpush1.msra.mxu0 0.0
      %6282 = vmatprep.subr.mxu0 0.0
      %6283 = vmatpush1.msra.mxu0 0.0
      %6284 = vmatprep.subr.mxu0 0.0
      %6285 = vmatpush1.msra.mxu0 0.0
      %6286 = vmatprep.subr.mxu0 0.0
      %6287 = vmatpush1.msra.mxu0 0.0
      %6288 = vmatprep.mubr.f32.mxu0 0.0
      %v6289 = vand.u32 %v5156, 4294901760
      %6290 = vmatmul.mubr.f32.gmra.mrb[0].mxu0 %v6289
      %v6291 = vpop.f32.mrb[0].mxu0
      %v6292 = vadd.f32 %v6123, %v6291
      %v6293 = vpop.f32.mrb[0].mxu0
      %6294 = vmatprep.mubr.f32.mxu0 0.0
      %v6295 = vand.u32 %v5159, 4294901760
      %6296 = vmatmul.mubr.f32.gmra.mrb[0].mxu0 %v6295
      %v6297 = vpop.f32.mrb[0].mxu0
      %v6298 = vadd.f32 %v6129, %v6297
      %v6299 = vpop.f32.mrb[0].mxu0
      %6300 = vmatprep.mubr.f32.mxu0 0.0
      %v6301 = vand.u32 %v5162, 4294901760
      %6302 = vmatmul.mubr.f32.gmra.mrb[0].mxu0 %v6301
      %v6303 = vpop.f32.mrb[0].mxu0
      %v6304 = vadd.f32 %v6135, %v6303
      %v6305 = vpop.f32.mrb[0].mxu0
      %6306 = vmatprep.mubr.f32.mxu0 0.0
      %v6307 = vand.u32 %v5165, 4294901760
      %6308 = vmatmul.mubr.f32.gmra.mrb[0].mxu0 %v6307
      %v6309 = vpop.f32.mrb[0].mxu0
      %v6310 = vadd.f32 %v6141, %v6309
      %v6311 = vpop.f32.mrb[0].mxu0
      %6312 = vmatprep.mubr.f32.mxu0 0.0
      %v6313 = vand.u32 %v5168, 4294901760
      %6314 = vmatmul.mubr.f32.gmra.mrb[0].mxu0 %v6313
      %v6315 = vpop.f32.mrb[0].mxu0
      %v6316 = vadd.f32 %v6147, %v6315
      %v6317 = vpop.f32.mrb[0].mxu0
      %6318 = vmatprep.mubr.f32.mxu0 0.0
      %v6319 = vand.u32 %v5171, 4294901760
      %6320 = vmatmul.mubr.f32.gmra.mrb[0].mxu0 %v6319
      %v6321 = vpop.f32.mrb[0].mxu0
      %v6322 = vadd.f32 %v6153, %v6321
      %v6323 = vpop.f32.mrb[0].mxu0
      %6324 = vmatprep.mubr.f32.mxu0 0.0
      %v6325 = vand.u32 %v5174, 4294901760
      %6326 = vmatmul.mubr.f32.gmra.mrb[0].mxu0 %v6325
      %v6327 = vpop.f32.mrb[0].mxu0
      %v6328 = vadd.f32 %v6159, %v6327
      %v6329 = vpop.f32.mrb[0].mxu0
      %6330 = vmatprep.mubr.f32.mxu0 0.0
      %v6331 = vand.u32 %v5177, 4294901760
      %6332 = vmatmul.mubr.f32.gmra.mrb[0].mxu0 %v6331
      %v6333 = vpop.f32.mrb[0].mxu0
      %v6334 = vadd.f32 %v6165, %v6333
      %v6335 = vpop.f32.mrb[0].mxu0
      %6336 = vmatprep.mubr.f32.mxu0 0.0
      %v6337 = vand.u32 %v5180, 4294901760
      %6338 = vmatmul.mubr.f32.gmra.mrb[0].mxu0 %v6337
      %v6339 = vpop.f32.mrb[0].mxu0
      %v6340 = vadd.f32 %v6171, %v6339
      %v6341 = vpop.f32.mrb[0].mxu0
      %6342 = vmatprep.mubr.f32.mxu0 0.0
      %v6343 = vand.u32 %v5183, 4294901760
      %6344 = vmatmul.mubr.f32.gmra.mrb[0].mxu0 %v6343
      %v6345 = vpop.f32.mrb[0].mxu0
      %v6346 = vadd.f32 %v6177, %v6345
      %v6347 = vpop.f32.mrb[0].mxu0
      %6348 = vmatprep.mubr.f32.mxu0 0.0
      %v6349 = vand.u32 %v5186, 4294901760
      %6350 = vmatmul.mubr.f32.gmra.mrb[0].mxu0 %v6349
      %v6351 = vpop.f32.mrb[0].mxu0
      %v6352 = vadd.f32 %v6183, %v6351
      %v6353 = vpop.f32.mrb[0].mxu0
      %6354 = vmatprep.mubr.f32.mxu0 0.0
      %v6355 = vand.u32 %v5189, 4294901760
      %6356 = vmatmul.mubr.f32.gmra.mrb[0].mxu0 %v6355
      %v6357 = vpop.f32.mrb[0].mxu0
      %v6358 = vadd.f32 %v6189, %v6357
      %v6359 = vpop.f32.mrb[0].mxu0
      %6360 = vmatprep.mubr.f32.mxu0 0.0
      %v6361 = vand.u32 %v5192, 4294901760
      %6362 = vmatmul.mubr.f32.gmra.mrb[0].mxu0 %v6361
      %v6363 = vpop.f32.mrb[0].mxu0
      %v6364 = vadd.f32 %v6195, %v6363
      %v6365 = vpop.f32.mrb[0].mxu0
      %6366 = vmatprep.mubr.f32.mxu0 0.0
      %v6367 = vand.u32 %v5195, 4294901760
      %6368 = vmatmul.mubr.f32.gmra.mrb[0].mxu0 %v6367
      %v6369 = vpop.f32.mrb[0].mxu0
      %v6370 = vadd.f32 %v6201, %v6369
      %v6371 = vpop.f32.mrb[0].mxu0
      %6372 = vmatprep.mubr.f32.mxu0 0.0
      %v6373 = vand.u32 %v5198, 4294901760
      %6374 = vmatmul.mubr.f32.gmra.mrb[0].mxu0 %v6373
      %v6375 = vpop.f32.mrb[0].mxu0
      %v6376 = vadd.f32 %v6207, %v6375
      %v6377 = vpop.f32.mrb[0].mxu0
      %6378 = vmatprep.mubr.f32.mxu0 0.0
      %v6379 = vand.u32 %v5201, 4294901760
      %6380 = vmatmul.mubr.f32.gmra.mrb[0].mxu0 %v6379
      %v6381 = vpop.f32.mrb[0].mxu0
      %v6382 = vadd.f32 %v6213, %v6381
      %v6383 = vpop.f32.mrb[0].mxu0
      %6384 = vdwg.mxu0
      %s6385 = scalar_lea.vmem %s2, 32
      %v6386 = vld [vmem:[%s6385] sm:$0xff]
      %v6387 = vld [vmem:[%s6385 + $0x8] sm:$0xff]
      %v6389 = vsel %vm1471, %v6292, 0
      %v6392 = vsel %vm1471, %v6298, 0
      %v6395 = vsel %vm1471, %v6304, 0
      %v6398 = vsel %vm1471, %v6310, 0
      %v6401 = vsel %vm1471, %v6316, 0
      %v6404 = vsel %vm1471, %v6322, 0
      %v6407 = vsel %vm1471, %v6328, 0
      %v6410 = vsel %vm1471, %v6334, 0
      %v6413 = vsel %vm1471, %v6340, 0
      %v6416 = vsel %vm1471, %v6346, 0
      %v6419 = vsel %vm1471, %v6352, 0
      %v6422 = vsel %vm1471, %v6358, 0
      %v6425 = vsel %vm1471, %v6364, 0
      %v6428 = vsel %vm1471, %v6370, 0
      %v6431 = vsel %vm1471, %v6376, 0
      %v6434 = vsel %vm1471, %v6382, 0
      %6436 = vmatprep.subr.mxu0 0.0
      %v6437 = vand.u32 %v6386, 4294901760
      %6438 = vmatpush1.msra.mxu0 %v6437
      %6439 = vmatprep.subr.mxu0 0.0
      %v6440 = vand.u32 %v6387, 4294901760
      %6441 = vmatpush1.msra.mxu0 %v6440
      %6442 = vmatprep.subr.mxu0 0.0
      %6443 = vmatpush1.msra.mxu0 0.0
      %6444 = vmatprep.subr.mxu0 0.0
      %6445 = vmatpush1.msra.mxu0 0.0
      %6446 = vmatprep.subr.mxu0 0.0
      %6447 = vmatpush1.msra.mxu0 0.0
      %6448 = vmatprep.subr.mxu0 0.0
      %6449 = vmatpush1.msra.mxu0 0.0
      %6450 = vmatprep.subr.mxu0 0.0
      %6451 = vmatpush1.msra.mxu0 0.0
      %6452 = vmatprep.subr.mxu0 0.0
      %6453 = vmatpush1.msra.mxu0 0.0
      %6454 = vmatprep.subr.mxu0 0.0
      %6455 = vmatpush1.msra.mxu0 0.0
      %6456 = vmatprep.subr.mxu0 0.0
      %6457 = vmatpush1.msra.mxu0 0.0
      %6458 = vmatprep.subr.mxu0 0.0
      %6459 = vmatpush1.msra.mxu0 0.0
      %6460 = vmatprep.subr.mxu0 0.0
      %6461 = vmatpush1.msra.mxu0 0.0
      %6462 = vmatprep.subr.mxu0 0.0
      %6463 = vmatpush1.msra.mxu0 0.0
      %6464 = vmatprep.subr.mxu0 0.0
      %6465 = vmatpush1.msra.mxu0 0.0
      %6466 = vmatprep.subr.mxu0 0.0
      %6467 = vmatpush1.msra.mxu0 0.0
      %6468 = vmatprep.subr.mxu0 0.0
      %6469 = vmatpush1.msra.mxu0 0.0
      %6470 = vmatprep.subr.mxu0 0.0
      %6471 = vmatpush1.msra.mxu0 0.0
      %6472 = vmatprep.subr.mxu0 0.0
      %6473 = vmatpush1.msra.mxu0 0.0
      %6474 = vmatprep.subr.mxu0 0.0
      %6475 = vmatpush1.msra.mxu0 0.0
      %6476 = vmatprep.subr.mxu0 0.0
      %6477 = vmatpush1.msra.mxu0 0.0
      %6478 = vmatprep.subr.mxu0 0.0
      %6479 = vmatpush1.msra.mxu0 0.0
      %6480 = vmatprep.subr.mxu0 0.0
      %6481 = vmatpush1.msra.mxu0 0.0
      %6482 = vmatprep.subr.mxu0 0.0
      %6483 = vmatpush1.msra.mxu0 0.0
      %6484 = vmatprep.subr.mxu0 0.0
      %6485 = vmatpush1.msra.mxu0 0.0
      %6486 = vmatprep.subr.mxu0 0.0
      %6487 = vmatpush1.msra.mxu0 0.0
      %6488 = vmatprep.subr.mxu0 0.0
      %6489 = vmatpush1.msra.mxu0 0.0
      %6490 = vmatprep.subr.mxu0 0.0
      %6491 = vmatpush1.msra.mxu0 0.0
      %6492 = vmatprep.subr.mxu0 0.0
      %6493 = vmatpush1.msra.mxu0 0.0
      %6494 = vmatprep.subr.mxu0 0.0
      %6495 = vmatpush1.msra.mxu0 0.0
      %6496 = vmatprep.subr.mxu0 0.0
      %6497 = vmatpush1.msra.mxu0 0.0
      %6498 = vmatprep.subr.mxu0 0.0
      %6499 = vmatpush1.msra.mxu0 0.0
      %6500 = vmatprep.subr.mxu0 0.0
      %6501 = vmatpush1.msra.mxu0 0.0
      %6502 = vmatprep.mubr.f32.mxu0 0.0
      %v6503 = vand.u32 %v6389, 4294901760
      %v6504 = vsub.f32 %v6389, %v6503
      %v6505 = vand.u32 %v6504, 4294901760
      %v6506 = vsub.f32 %v6504, %v6505
      %v6507 = vand.u32 %v6506, 4294901760
      %6508 = vmatmul.mubr.f32.gmra.mrb[0].mxu0 %v6507
      %v6509 = vpop.f32.mrb[0].mxu0
      %v6510 = vadd.f32 0.0, %v6509
      %v6511 = vpop.f32.mrb[0].mxu0
      %6512 = vmatprep.mubr.f32.mxu0 0.0
      %v6513 = vand.u32 %v6392, 4294901760
      %v6514 = vsub.f32 %v6392, %v6513
      %v6515 = vand.u32 %v6514, 4294901760
      %v6516 = vsub.f32 %v6514, %v6515
      %v6517 = vand.u32 %v6516, 4294901760
      %6518 = vmatmul.mubr.f32.gmra.mrb[0].mxu0 %v6517
      %v6519 = vpop.f32.mrb[0].mxu0
      %v6520 = vadd.f32 0.0, %v6519
      %v6521 = vpop.f32.mrb[0].mxu0
      %6522 = vmatprep.mubr.f32.mxu0 0.0
      %v6523 = vand.u32 %v6395, 4294901760
      %v6524 = vsub.f32 %v6395, %v6523
      %v6525 = vand.u32 %v6524, 4294901760
      %v6526 = vsub.f32 %v6524, %v6525
      %v6527 = vand.u32 %v6526, 4294901760
      %6528 = vmatmul.mubr.f32.gmra.mrb[0].mxu0 %v6527
      %v6529 = vpop.f32.mrb[0].mxu0
      %v6530 = vadd.f32 0.0, %v6529
      %v6531 = vpop.f32.mrb[0].mxu0
      %6532 = vmatprep.mubr.f32.mxu0 0.0
      %v6533 = vand.u32 %v6398, 4294901760
      %v6534 = vsub.f32 %v6398, %v6533
      %v6535 = vand.u32 %v6534, 4294901760
      %v6536 = vsub.f32 %v6534, %v6535
      %v6537 = vand.u32 %v6536, 4294901760
      %6538 = vmatmul.mubr.f32.gmra.mrb[0].mxu0 %v6537
      %v6539 = vpop.f32.mrb[0].mxu0
      %v6540 = vadd.f32 0.0, %v6539
      %v6541 = vpop.f32.mrb[0].mxu0
      %6542 = vmatprep.mubr.f32.mxu0 0.0
      %v6543 = vand.u32 %v6401, 4294901760
      %v6544 = vsub.f32 %v6401, %v6543
      %v6545 = vand.u32 %v6544, 4294901760
      %v6546 = vsub.f32 %v6544, %v6545
      %v6547 = vand.u32 %v6546, 4294901760
      %6548 = vmatmul.mubr.f32.gmra.mrb[0].mxu0 %v6547
      %v6549 = vpop.f32.mrb[0].mxu0
      %v6550 = vadd.f32 0.0, %v6549
      %v6551 = vpop.f32.mrb[0].mxu0
      %6552 = vmatprep.mubr.f32.mxu0 0.0
      %v6553 = vand.u32 %v6404, 4294901760
      %v6554 = vsub.f32 %v6404, %v6553
      %v6555 = vand.u32 %v6554, 4294901760
      %v6556 = vsub.f32 %v6554, %v6555
      %v6557 = vand.u32 %v6556, 4294901760
      %6558 = vmatmul.mubr.f32.gmra.mrb[0].mxu0 %v6557
      %v6559 = vpop.f32.mrb[0].mxu0
      %v6560 = vadd.f32 0.0, %v6559
      %v6561 = vpop.f32.mrb[0].mxu0
      %6562 = vmatprep.mubr.f32.mxu0 0.0
      %v6563 = vand.u32 %v6407, 4294901760
      %v6564 = vsub.f32 %v6407, %v6563
      %v6565 = vand.u32 %v6564, 4294901760
      %v6566 = vsub.f32 %v6564, %v6565
      %v6567 = vand.u32 %v6566, 4294901760
      %6568 = vmatmul.mubr.f32.gmra.mrb[0].mxu0 %v6567
      %v6569 = vpop.f32.mrb[0].mxu0
      %v6570 = vadd.f32 0.0, %v6569
      %v6571 = vpop.f32.mrb[0].mxu0
      %6572 = vmatprep.mubr.f32.mxu0 0.0
      %v6573 = vand.u32 %v6410, 4294901760
      %v6574 = vsub.f32 %v6410, %v6573
      %v6575 = vand.u32 %v6574, 4294901760
      %v6576 = vsub.f32 %v6574, %v6575
      %v6577 = vand.u32 %v6576, 4294901760
      %6578 = vmatmul.mubr.f32.gmra.mrb[0].mxu0 %v6577
      %v6579 = vpop.f32.mrb[0].mxu0
      %v6580 = vadd.f32 0.0, %v6579
      %v6581 = vpop.f32.mrb[0].mxu0
      %6582 = vmatprep.mubr.f32.mxu0 0.0
      %v6583 = vand.u32 %v6413, 4294901760
      %v6584 = vsub.f32 %v6413, %v6583
      %v6585 = vand.u32 %v6584, 4294901760
      %v6586 = vsub.f32 %v6584, %v6585
      %v6587 = vand.u32 %v6586, 4294901760
      %6588 = vmatmul.mubr.f32.gmra.mrb[0].mxu0 %v6587
      %v6589 = vpop.f32.mrb[0].mxu0
      %v6590 = vadd.f32 0.0, %v6589
      %v6591 = vpop.f32.mrb[0].mxu0
      %6592 = vmatprep.mubr.f32.mxu0 0.0
      %v6593 = vand.u32 %v6416, 4294901760
      %v6594 = vsub.f32 %v6416, %v6593
      %v6595 = vand.u32 %v6594, 4294901760
      %v6596 = vsub.f32 %v6594, %v6595
      %v6597 = vand.u32 %v6596, 4294901760
      %6598 = vmatmul.mubr.f32.gmra.mrb[0].mxu0 %v6597
      %v6599 = vpop.f32.mrb[0].mxu0
      %v6600 = vadd.f32 0.0, %v6599
      %v6601 = vpop.f32.mrb[0].mxu0
      %6602 = vmatprep.mubr.f32.mxu0 0.0
      %v6603 = vand.u32 %v6419, 4294901760
      %v6604 = vsub.f32 %v6419, %v6603
      %v6605 = vand.u32 %v6604, 4294901760
      %v6606 = vsub.f32 %v6604, %v6605
      %v6607 = vand.u32 %v6606, 4294901760
      %6608 = vmatmul.mubr.f32.gmra.mrb[0].mxu0 %v6607
      %v6609 = vpop.f32.mrb[0].mxu0
      %v6610 = vadd.f32 0.0, %v6609
      %v6611 = vpop.f32.mrb[0].mxu0
      %6612 = vmatprep.mubr.f32.mxu0 0.0
      %v6613 = vand.u32 %v6422, 4294901760
      %v6614 = vsub.f32 %v6422, %v6613
      %v6615 = vand.u32 %v6614, 4294901760
      %v6616 = vsub.f32 %v6614, %v6615
      %v6617 = vand.u32 %v6616, 4294901760
      %6618 = vmatmul.mubr.f32.gmra.mrb[0].mxu0 %v6617
      %v6619 = vpop.f32.mrb[0].mxu0
      %v6620 = vadd.f32 0.0, %v6619
      %v6621 = vpop.f32.mrb[0].mxu0
      %6622 = vmatprep.mubr.f32.mxu0 0.0
      %v6623 = vand.u32 %v6425, 4294901760
      %v6624 = vsub.f32 %v6425, %v6623
      %v6625 = vand.u32 %v6624, 4294901760
      %v6626 = vsub.f32 %v6624, %v6625
      %v6627 = vand.u32 %v6626, 4294901760
      %6628 = vmatmul.mubr.f32.gmra.mrb[0].mxu0 %v6627
      %v6629 = vpop.f32.mrb[0].mxu0
      %v6630 = vadd.f32 0.0, %v6629
      %v6631 = vpop.f32.mrb[0].mxu0
      %6632 = vmatprep.mubr.f32.mxu0 0.0
      %v6633 = vand.u32 %v6428, 4294901760
      %v6634 = vsub.f32 %v6428, %v6633
      %v6635 = vand.u32 %v6634, 4294901760
      %v6636 = vsub.f32 %v6634, %v6635
      %v6637 = vand.u32 %v6636, 4294901760
      %6638 = vmatmul.mubr.f32.gmra.mrb[0].mxu0 %v6637
      %v6639 = vpop.f32.mrb[0].mxu0
      %v6640 = vadd.f32 0.0, %v6639
      %v6641 = vpop.f32.mrb[0].mxu0
      %6642 = vmatprep.mubr.f32.mxu0 0.0
      %v6643 = vand.u32 %v6431, 4294901760
      %v6644 = vsub.f32 %v6431, %v6643
      %v6645 = vand.u32 %v6644, 4294901760
      %v6646 = vsub.f32 %v6644, %v6645
      %v6647 = vand.u32 %v6646, 4294901760
      %6648 = vmatmul.mubr.f32.gmra.mrb[0].mxu0 %v6647
      %v6649 = vpop.f32.mrb[0].mxu0
      %v6650 = vadd.f32 0.0, %v6649
      %v6651 = vpop.f32.mrb[0].mxu0
      %6652 = vmatprep.mubr.f32.mxu0 0.0
      %v6653 = vand.u32 %v6434, 4294901760
      %v6654 = vsub.f32 %v6434, %v6653
      %v6655 = vand.u32 %v6654, 4294901760
      %v6656 = vsub.f32 %v6654, %v6655
      %v6657 = vand.u32 %v6656, 4294901760
      %6658 = vmatmul.mubr.f32.gmra.mrb[0].mxu0 %v6657
      %v6659 = vpop.f32.mrb[0].mxu0
      %v6660 = vadd.f32 0.0, %v6659
      %v6661 = vpop.f32.mrb[0].mxu0
      %6662 = vdwg.mxu0
      %6663 = vmatprep.subr.mxu0 0.0
      %v6664 = vand.u32 %v6386, 4294901760
      %v6665 = vsub.f32 %v6386, %v6664
      %v6666 = vand.u32 %v6665, 4294901760
      %v6667 = vsub.f32 %v6665, %v6666
      %v6668 = vand.u32 %v6667, 4294901760
      %6669 = vmatpush1.msra.mxu0 %v6668
      %6670 = vmatprep.subr.mxu0 0.0
      %v6671 = vand.u32 %v6387, 4294901760
      %v6672 = vsub.f32 %v6387, %v6671
      %v6673 = vand.u32 %v6672, 4294901760
      %v6674 = vsub.f32 %v6672, %v6673
      %v6675 = vand.u32 %v6674, 4294901760
      %6676 = vmatpush1.msra.mxu0 %v6675
      %6677 = vmatprep.subr.mxu0 0.0
      %6678 = vmatpush1.msra.mxu0 0.0
      %6679 = vmatprep.subr.mxu0 0.0
      %6680 = vmatpush1.msra.mxu0 0.0
      %6681 = vmatprep.subr.mxu0 0.0
      %6682 = vmatpush1.msra.mxu0 0.0
      %6683 = vmatprep.subr.mxu0 0.0
      %6684 = vmatpush1.msra.mxu0 0.0
      %6685 = vmatprep.subr.mxu0 0.0
      %6686 = vmatpush1.msra.mxu0 0.0
      %6687 = vmatprep.subr.mxu0 0.0
      %6688 = vmatpush1.msra.mxu0 0.0
      %6689 = vmatprep.subr.mxu0 0.0
      %6690 = vmatpush1.msra.mxu0 0.0
      %6691 = vmatprep.subr.mxu0 0.0
      %6692 = vmatpush1.msra.mxu0 0.0
      %6693 = vmatprep.subr.mxu0 0.0
      %6694 = vmatpush1.msra.mxu0 0.0
      %6695 = vmatprep.subr.mxu0 0.0
      %6696 = vmatpush1.msra.mxu0 0.0
      %6697 = vmatprep.subr.mxu0 0.0
      %6698 = vmatpush1.msra.mxu0 0.0
      %6699 = vmatprep.subr.mxu0 0.0
      %6700 = vmatpush1.msra.mxu0 0.0
      %6701 = vmatprep.subr.mxu0 0.0
      %6702 = vmatpush1.msra.mxu0 0.0
      %6703 = vmatprep.subr.mxu0 0.0
      %6704 = vmatpush1.msra.mxu0 0.0
      %6705 = vmatprep.subr.mxu0 0.0
      %6706 = vmatpush1.msra.mxu0 0.0
      %6707 = vmatprep.subr.mxu0 0.0
      %6708 = vmatpush1.msra.mxu0 0.0
      %6709 = vmatprep.subr.mxu0 0.0
      %6710 = vmatpush1.msra.mxu0 0.0
      %6711 = vmatprep.subr.mxu0 0.0
      %6712 = vmatpush1.msra.mxu0 0.0
      %6713 = vmatprep.subr.mxu0 0.0
      %6714 = vmatpush1.msra.mxu0 0.0
      %6715 = vmatprep.subr.mxu0 0.0
      %6716 = vmatpush1.msra.mxu0 0.0
      %6717 = vmatprep.subr.mxu0 0.0
      %6718 = vmatpush1.msra.mxu0 0.0
      %6719 = vmatprep.subr.mxu0 0.0
      %6720 = vmatpush1.msra.mxu0 0.0
      %6721 = vmatprep.subr.mxu0 0.0
      %6722 = vmatpush1.msra.mxu0 0.0
      %6723 = vmatprep.subr.mxu0 0.0
      %6724 = vmatpush1.msra.mxu0 0.0
      %6725 = vmatprep.subr.mxu0 0.0
      %6726 = vmatpush1.msra.mxu0 0.0
      %6727 = vmatprep.subr.mxu0 0.0
      %6728 = vmatpush1.msra.mxu0 0.0
      %6729 = vmatprep.subr.mxu0 0.0
      %6730 = vmatpush1.msra.mxu0 0.0
      %6731 = vmatprep.subr.mxu0 0.0
      %6732 = vmatpush1.msra.mxu0 0.0
      %6733 = vmatprep.subr.mxu0 0.0
      %6734 = vmatpush1.msra.mxu0 0.0
      %6735 = vmatprep.subr.mxu0 0.0
      %6736 = vmatpush1.msra.mxu0 0.0
      %6737 = vmatprep.mubr.f32.mxu0 0.0
      %v6738 = vand.u32 %v6389, 4294901760
      %6739 = vmatmul.mubr.f32.gmra.mrb[0].mxu0 %v6738
      %v6740 = vpop.f32.mrb[0].mxu0
      %v6741 = vadd.f32 %v6510, %v6740
      %v6742 = vpop.f32.mrb[0].mxu0
      %6743 = vmatprep.mubr.f32.mxu0 0.0
      %v6744 = vand.u32 %v6392, 4294901760
      %6745 = vmatmul.mubr.f32.gmra.mrb[0].mxu0 %v6744
      %v6746 = vpop.f32.mrb[0].mxu0
      %v6747 = vadd.f32 %v6520, %v6746
      %v6748 = vpop.f32.mrb[0].mxu0
      %6749 = vmatprep.mubr.f32.mxu0 0.0
      %v6750 = vand.u32 %v6395, 4294901760
      %6751 = vmatmul.mubr.f32.gmra.mrb[0].mxu0 %v6750
      %v6752 = vpop.f32.mrb[0].mxu0
      %v6753 = vadd.f32 %v6530, %v6752
      %v6754 = vpop.f32.mrb[0].mxu0
      %6755 = vmatprep.mubr.f32.mxu0 0.0
      %v6756 = vand.u32 %v6398, 4294901760
      %6757 = vmatmul.mubr.f32.gmra.mrb[0].mxu0 %v6756
      %v6758 = vpop.f32.mrb[0].mxu0
      %v6759 = vadd.f32 %v6540, %v6758
      %v6760 = vpop.f32.mrb[0].mxu0
      %6761 = vmatprep.mubr.f32.mxu0 0.0
      %v6762 = vand.u32 %v6401, 4294901760
      %6763 = vmatmul.mubr.f32.gmra.mrb[0].mxu0 %v6762
      %v6764 = vpop.f32.mrb[0].mxu0
      %v6765 = vadd.f32 %v6550, %v6764
      %v6766 = vpop.f32.mrb[0].mxu0
      %6767 = vmatprep.mubr.f32.mxu0 0.0
      %v6768 = vand.u32 %v6404, 4294901760
      %6769 = vmatmul.mubr.f32.gmra.mrb[0].mxu0 %v6768
      %v6770 = vpop.f32.mrb[0].mxu0
      %v6771 = vadd.f32 %v6560, %v6770
      %v6772 = vpop.f32.mrb[0].mxu0
      %6773 = vmatprep.mubr.f32.mxu0 0.0
      %v6774 = vand.u32 %v6407, 4294901760
      %6775 = vmatmul.mubr.f32.gmra.mrb[0].mxu0 %v6774
      %v6776 = vpop.f32.mrb[0].mxu0
      %v6777 = vadd.f32 %v6570, %v6776
      %v6778 = vpop.f32.mrb[0].mxu0
      %6779 = vmatprep.mubr.f32.mxu0 0.0
      %v6780 = vand.u32 %v6410, 4294901760
      %6781 = vmatmul.mubr.f32.gmra.mrb[0].mxu0 %v6780
      %v6782 = vpop.f32.mrb[0].mxu0
      %v6783 = vadd.f32 %v6580, %v6782
      %v6784 = vpop.f32.mrb[0].mxu0
      %6785 = vmatprep.mubr.f32.mxu0 0.0
      %v6786 = vand.u32 %v6413, 4294901760
      %6787 = vmatmul.mubr.f32.gmra.mrb[0].mxu0 %v6786
      %v6788 = vpop.f32.mrb[0].mxu0
      %v6789 = vadd.f32 %v6590, %v6788
      %v6790 = vpop.f32.mrb[0].mxu0
      %6791 = vmatprep.mubr.f32.mxu0 0.0
      %v6792 = vand.u32 %v6416, 4294901760
      %6793 = vmatmul.mubr.f32.gmra.mrb[0].mxu0 %v6792
      %v6794 = vpop.f32.mrb[0].mxu0
      %v6795 = vadd.f32 %v6600, %v6794
      %v6796 = vpop.f32.mrb[0].mxu0
      %6797 = vmatprep.mubr.f32.mxu0 0.0
      %v6798 = vand.u32 %v6419, 4294901760
      %6799 = vmatmul.mubr.f32.gmra.mrb[0].mxu0 %v6798
      %v6800 = vpop.f32.mrb[0].mxu0
      %v6801 = vadd.f32 %v6610, %v6800
      %v6802 = vpop.f32.mrb[0].mxu0
      %6803 = vmatprep.mubr.f32.mxu0 0.0
      %v6804 = vand.u32 %v6422, 4294901760
      %6805 = vmatmul.mubr.f32.gmra.mrb[0].mxu0 %v6804
      %v6806 = vpop.f32.mrb[0].mxu0
      %v6807 = vadd.f32 %v6620, %v6806
      %v6808 = vpop.f32.mrb[0].mxu0
      %6809 = vmatprep.mubr.f32.mxu0 0.0
      %v6810 = vand.u32 %v6425, 4294901760
      %6811 = vmatmul.mubr.f32.gmra.mrb[0].mxu0 %v6810
      %v6812 = vpop.f32.mrb[0].mxu0
      %v6813 = vadd.f32 %v6630, %v6812
      %v6814 = vpop.f32.mrb[0].mxu0
      %6815 = vmatprep.mubr.f32.mxu0 0.0
      %v6816 = vand.u32 %v6428, 4294901760
      %6817 = vmatmul.mubr.f32.gmra.mrb[0].mxu0 %v6816
      %v6818 = vpop.f32.mrb[0].mxu0
      %v6819 = vadd.f32 %v6640, %v6818
      %v6820 = vpop.f32.mrb[0].mxu0
      %6821 = vmatprep.mubr.f32.mxu0 0.0
      %v6822 = vand.u32 %v6431, 4294901760
      %6823 = vmatmul.mubr.f32.gmra.mrb[0].mxu0 %v6822
      %v6824 = vpop.f32.mrb[0].mxu0
      %v6825 = vadd.f32 %v6650, %v6824
      %v6826 = vpop.f32.mrb[0].mxu0
      %6827 = vmatprep.mubr.f32.mxu0 0.0
      %v6828 = vand.u32 %v6434, 4294901760
      %6829 = vmatmul.mubr.f32.gmra.mrb[0].mxu0 %v6828
      %v6830 = vpop.f32.mrb[0].mxu0
      %v6831 = vadd.f32 %v6660, %v6830
      %v6832 = vpop.f32.mrb[0].mxu0
      %6833 = vdwg.mxu0
      %6834 = vmatprep.subr.mxu0 0.0
      %v6835 = vand.u32 %v6386, 4294901760
      %v6836 = vsub.f32 %v6386, %v6835
      %6837 = vmatpush1.msra.mxu0 %v6836
      %6838 = vmatprep.subr.mxu0 0.0
      %v6839 = vand.u32 %v6387, 4294901760
      %v6840 = vsub.f32 %v6387, %v6839
      %6841 = vmatpush1.msra.mxu0 %v6840
      %6842 = vmatprep.subr.mxu0 0.0
      %6843 = vmatpush1.msra.mxu0 0.0
      %6844 = vmatprep.subr.mxu0 0.0
      %6845 = vmatpush1.msra.mxu0 0.0
      %6846 = vmatprep.subr.mxu0 0.0
      %6847 = vmatpush1.msra.mxu0 0.0
      %6848 = vmatprep.subr.mxu0 0.0
      %6849 = vmatpush1.msra.mxu0 0.0
      %6850 = vmatprep.subr.mxu0 0.0
      %6851 = vmatpush1.msra.mxu0 0.0
      %6852 = vmatprep.subr.mxu0 0.0
      %6853 = vmatpush1.msra.mxu0 0.0
      %6854 = vmatprep.subr.mxu0 0.0
      %6855 = vmatpush1.msra.mxu0 0.0
      %6856 = vmatprep.subr.mxu0 0.0
      %6857 = vmatpush1.msra.mxu0 0.0
      %6858 = vmatprep.subr.mxu0 0.0
      %6859 = vmatpush1.msra.mxu0 0.0
      %6860 = vmatprep.subr.mxu0 0.0
      %6861 = vmatpush1.msra.mxu0 0.0
      %6862 = vmatprep.subr.mxu0 0.0
      %6863 = vmatpush1.msra.mxu0 0.0
      %6864 = vmatprep.subr.mxu0 0.0
      %6865 = vmatpush1.msra.mxu0 0.0
      %6866 = vmatprep.subr.mxu0 0.0
      %6867 = vmatpush1.msra.mxu0 0.0
      %6868 = vmatprep.subr.mxu0 0.0
      %6869 = vmatpush1.msra.mxu0 0.0
      %6870 = vmatprep.subr.mxu0 0.0
      %6871 = vmatpush1.msra.mxu0 0.0
      %6872 = vmatprep.subr.mxu0 0.0
      %6873 = vmatpush1.msra.mxu0 0.0
      %6874 = vmatprep.subr.mxu0 0.0
      %6875 = vmatpush1.msra.mxu0 0.0
      %6876 = vmatprep.subr.mxu0 0.0
      %6877 = vmatpush1.msra.mxu0 0.0
      %6878 = vmatprep.subr.mxu0 0.0
      %6879 = vmatpush1.msra.mxu0 0.0
      %6880 = vmatprep.subr.mxu0 0.0
      %6881 = vmatpush1.msra.mxu0 0.0
      %6882 = vmatprep.subr.mxu0 0.0
      %6883 = vmatpush1.msra.mxu0 0.0
      %6884 = vmatprep.subr.mxu0 0.0
      %6885 = vmatpush1.msra.mxu0 0.0
      %6886 = vmatprep.subr.mxu0 0.0
      %6887 = vmatpush1.msra.mxu0 0.0
      %6888 = vmatprep.subr.mxu0 0.0
      %6889 = vmatpush1.msra.mxu0 0.0
      %6890 = vmatprep.subr.mxu0 0.0
      %6891 = vmatpush1.msra.mxu0 0.0
      %6892 = vmatprep.subr.mxu0 0.0
      %6893 = vmatpush1.msra.mxu0 0.0
      %6894 = vmatprep.subr.mxu0 0.0
      %6895 = vmatpush1.msra.mxu0 0.0
      %6896 = vmatprep.subr.mxu0 0.0
      %6897 = vmatpush1.msra.mxu0 0.0
      %6898 = vmatprep.subr.mxu0 0.0
      %6899 = vmatpush1.msra.mxu0 0.0
      %6900 = vmatprep.subr.mxu0 0.0
      %6901 = vmatpush1.msra.mxu0 0.0
      %6902 = vmatprep.mubr.f32.mxu0 0.0
      %v6903 = vand.u32 %v6389, 4294901760
      %v6904 = vsub.f32 %v6389, %v6903
      %6905 = vmatmul.mubr.f32.gmra.mrb[0].mxu0 %v6904
      %v6906 = vpop.f32.mrb[0].mxu0
      %v6907 = vadd.f32 %v6741, %v6906
      %v6908 = vpop.f32.mrb[0].mxu0
      %6909 = vmatprep.mubr.f32.mxu0 0.0
      %v6910 = vand.u32 %v6392, 4294901760
      %v6911 = vsub.f32 %v6392, %v6910
      %6912 = vmatmul.mubr.f32.gmra.mrb[0].mxu0 %v6911
      %v6913 = vpop.f32.mrb[0].mxu0
      %v6914 = vadd.f32 %v6747, %v6913
      %v6915 = vpop.f32.mrb[0].mxu0
      %6916 = vmatprep.mubr.f32.mxu0 0.0
      %v6917 = vand.u32 %v6395, 4294901760
      %v6918 = vsub.f32 %v6395, %v6917
      %6919 = vmatmul.mubr.f32.gmra.mrb[0].mxu0 %v6918
      %v6920 = vpop.f32.mrb[0].mxu0
      %v6921 = vadd.f32 %v6753, %v6920
      %v6922 = vpop.f32.mrb[0].mxu0
      %6923 = vmatprep.mubr.f32.mxu0 0.0
      %v6924 = vand.u32 %v6398, 4294901760
      %v6925 = vsub.f32 %v6398, %v6924
      %6926 = vmatmul.mubr.f32.gmra.mrb[0].mxu0 %v6925
      %v6927 = vpop.f32.mrb[0].mxu0
      %v6928 = vadd.f32 %v6759, %v6927
      %v6929 = vpop.f32.mrb[0].mxu0
      %6930 = vmatprep.mubr.f32.mxu0 0.0
      %v6931 = vand.u32 %v6401, 4294901760
      %v6932 = vsub.f32 %v6401, %v6931
      %6933 = vmatmul.mubr.f32.gmra.mrb[0].mxu0 %v6932
      %v6934 = vpop.f32.mrb[0].mxu0
      %v6935 = vadd.f32 %v6765, %v6934
      %v6936 = vpop.f32.mrb[0].mxu0
      %6937 = vmatprep.mubr.f32.mxu0 0.0
      %v6938 = vand.u32 %v6404, 4294901760
      %v6939 = vsub.f32 %v6404, %v6938
      %6940 = vmatmul.mubr.f32.gmra.mrb[0].mxu0 %v6939
      %v6941 = vpop.f32.mrb[0].mxu0
      %v6942 = vadd.f32 %v6771, %v6941
      %v6943 = vpop.f32.mrb[0].mxu0
      %6944 = vmatprep.mubr.f32.mxu0 0.0
      %v6945 = vand.u32 %v6407, 4294901760
      %v6946 = vsub.f32 %v6407, %v6945
      %6947 = vmatmul.mubr.f32.gmra.mrb[0].mxu0 %v6946
      %v6948 = vpop.f32.mrb[0].mxu0
      %v6949 = vadd.f32 %v6777, %v6948
      %v6950 = vpop.f32.mrb[0].mxu0
      %6951 = vmatprep.mubr.f32.mxu0 0.0
      %v6952 = vand.u32 %v6410, 4294901760
      %v6953 = vsub.f32 %v6410, %v6952
      %6954 = vmatmul.mubr.f32.gmra.mrb[0].mxu0 %v6953
      %v6955 = vpop.f32.mrb[0].mxu0
      %v6956 = vadd.f32 %v6783, %v6955
      %v6957 = vpop.f32.mrb[0].mxu0
      %6958 = vmatprep.mubr.f32.mxu0 0.0
      %v6959 = vand.u32 %v6413, 4294901760
      %v6960 = vsub.f32 %v6413, %v6959
      %6961 = vmatmul.mubr.f32.gmra.mrb[0].mxu0 %v6960
      %v6962 = vpop.f32.mrb[0].mxu0
      %v6963 = vadd.f32 %v6789, %v6962
      %v6964 = vpop.f32.mrb[0].mxu0
      %6965 = vmatprep.mubr.f32.mxu0 0.0
      %v6966 = vand.u32 %v6416, 4294901760
      %v6967 = vsub.f32 %v6416, %v6966
      %6968 = vmatmul.mubr.f32.gmra.mrb[0].mxu0 %v6967
      %v6969 = vpop.f32.mrb[0].mxu0
      %v6970 = vadd.f32 %v6795, %v6969
      %v6971 = vpop.f32.mrb[0].mxu0
      %6972 = vmatprep.mubr.f32.mxu0 0.0
      %v6973 = vand.u32 %v6419, 4294901760
      %v6974 = vsub.f32 %v6419, %v6973
      %6975 = vmatmul.mubr.f32.gmra.mrb[0].mxu0 %v6974
      %v6976 = vpop.f32.mrb[0].mxu0
      %v6977 = vadd.f32 %v6801, %v6976
      %v6978 = vpop.f32.mrb[0].mxu0
      %6979 = vmatprep.mubr.f32.mxu0 0.0
      %v6980 = vand.u32 %v6422, 4294901760
      %v6981 = vsub.f32 %v6422, %v6980
      %6982 = vmatmul.mubr.f32.gmra.mrb[0].mxu0 %v6981
      %v6983 = vpop.f32.mrb[0].mxu0
      %v6984 = vadd.f32 %v6807, %v6983
      %v6985 = vpop.f32.mrb[0].mxu0
      %6986 = vmatprep.mubr.f32.mxu0 0.0
      %v6987 = vand.u32 %v6425, 4294901760
      %v6988 = vsub.f32 %v6425, %v6987
      %6989 = vmatmul.mubr.f32.gmra.mrb[0].mxu0 %v6988
      %v6990 = vpop.f32.mrb[0].mxu0
      %v6991 = vadd.f32 %v6813, %v6990
      %v6992 = vpop.f32.mrb[0].mxu0
      %6993 = vmatprep.mubr.f32.mxu0 0.0
      %v6994 = vand.u32 %v6428, 4294901760
      %v6995 = vsub.f32 %v6428, %v6994
      %6996 = vmatmul.mubr.f32.gmra.mrb[0].mxu0 %v6995
      %v6997 = vpop.f32.mrb[0].mxu0
      %v6998 = vadd.f32 %v6819, %v6997
      %v6999 = vpop.f32.mrb[0].mxu0
      %7000 = vmatprep.mubr.f32.mxu0 0.0
      %v7001 = vand.u32 %v6431, 4294901760
      %v7002 = vsub.f32 %v6431, %v7001
      %7003 = vmatmul.mubr.f32.gmra.mrb[0].mxu0 %v7002
      %v7004 = vpop.f32.mrb[0].mxu0
      %v7005 = vadd.f32 %v6825, %v7004
      %v7006 = vpop.f32.mrb[0].mxu0
      %7007 = vmatprep.mubr.f32.mxu0 0.0
      %v7008 = vand.u32 %v6434, 4294901760
      %v7009 = vsub.f32 %v6434, %v7008
      %7010 = vmatmul.mubr.f32.gmra.mrb[0].mxu0 %v7009
      %v7011 = vpop.f32.mrb[0].mxu0
      %v7012 = vadd.f32 %v6831, %v7011
      %v7013 = vpop.f32.mrb[0].mxu0
      %7014 = vdwg.mxu0
      %7015 = vmatprep.subr.mxu0 0.0
      %v7016 = vand.u32 %v6386, 4294901760
      %7017 = vmatpush1.msra.mxu0 %v7016
      %7018 = vmatprep.subr.mxu0 0.0
      %v7019 = vand.u32 %v6387, 4294901760
      %7020 = vmatpush1.msra.mxu0 %v7019
      %7021 = vmatprep.subr.mxu0 0.0
      %7022 = vmatpush1.msra.mxu0 0.0
      %7023 = vmatprep.subr.mxu0 0.0
      %7024 = vmatpush1.msra.mxu0 0.0
      %7025 = vmatprep.subr.mxu0 0.0
      %7026 = vmatpush1.msra.mxu0 0.0
      %7027 = vmatprep.subr.mxu0 0.0
      %7028 = vmatpush1.msra.mxu0 0.0
      %7029 = vmatprep.subr.mxu0 0.0
      %7030 = vmatpush1.msra.mxu0 0.0
      %7031 = vmatprep.subr.mxu0 0.0
      %7032 = vmatpush1.msra.mxu0 0.0
      %7033 = vmatprep.subr.mxu0 0.0
      %7034 = vmatpush1.msra.mxu0 0.0
      %7035 = vmatprep.subr.mxu0 0.0
      %7036 = vmatpush1.msra.mxu0 0.0
      %7037 = vmatprep.subr.mxu0 0.0
      %7038 = vmatpush1.msra.mxu0 0.0
      %7039 = vmatprep.subr.mxu0 0.0
      %7040 = vmatpush1.msra.mxu0 0.0
      %7041 = vmatprep.subr.mxu0 0.0
      %7042 = vmatpush1.msra.mxu0 0.0
      %7043 = vmatprep.subr.mxu0 0.0
      %7044 = vmatpush1.msra.mxu0 0.0
      %7045 = vmatprep.subr.mxu0 0.0
      %7046 = vmatpush1.msra.mxu0 0.0
      %7047 = vmatprep.subr.mxu0 0.0
      %7048 = vmatpush1.msra.mxu0 0.0
      %7049 = vmatprep.subr.mxu0 0.0
      %7050 = vmatpush1.msra.mxu0 0.0
      %7051 = vmatprep.subr.mxu0 0.0
      %7052 = vmatpush1.msra.mxu0 0.0
      %7053 = vmatprep.subr.mxu0 0.0
      %7054 = vmatpush1.msra.mxu0 0.0
      %7055 = vmatprep.subr.mxu0 0.0
      %7056 = vmatpush1.msra.mxu0 0.0
      %7057 = vmatprep.subr.mxu0 0.0
      %7058 = vmatpush1.msra.mxu0 0.0
      %7059 = vmatprep.subr.mxu0 0.0
      %7060 = vmatpush1.msra.mxu0 0.0
      %7061 = vmatprep.subr.mxu0 0.0
      %7062 = vmatpush1.msra.mxu0 0.0
      %7063 = vmatprep.subr.mxu0 0.0
      %7064 = vmatpush1.msra.mxu0 0.0
      %7065 = vmatprep.subr.mxu0 0.0
      %7066 = vmatpush1.msra.mxu0 0.0
      %7067 = vmatprep.subr.mxu0 0.0
      %7068 = vmatpush1.msra.mxu0 0.0
      %7069 = vmatprep.subr.mxu0 0.0
      %7070 = vmatpush1.msra.mxu0 0.0
      %7071 = vmatprep.subr.mxu0 0.0
      %7072 = vmatpush1.msra.mxu0 0.0
      %7073 = vmatprep.subr.mxu0 0.0
      %7074 = vmatpush1.msra.mxu0 0.0
      %7075 = vmatprep.subr.mxu0 0.0
      %7076 = vmatpush1.msra.mxu0 0.0
      %7077 = vmatprep.subr.mxu0 0.0
      %7078 = vmatpush1.msra.mxu0 0.0
      %7079 = vmatprep.subr.mxu0 0.0
      %7080 = vmatpush1.msra.mxu0 0.0
      %7081 = vmatprep.mubr.f32.mxu0 0.0
      %v7082 = vand.u32 %v6389, 4294901760
      %v7083 = vsub.f32 %v6389, %v7082
      %v7084 = vand.u32 %v7083, 4294901760
      %7085 = vmatmul.mubr.f32.gmra.mrb[0].mxu0 %v7084
      %v7086 = vpop.f32.mrb[0].mxu0
      %v7087 = vadd.f32 %v6907, %v7086
      %v7088 = vpop.f32.mrb[0].mxu0
      %7089 = vmatprep.mubr.f32.mxu0 0.0
      %v7090 = vand.u32 %v6392, 4294901760
      %v7091 = vsub.f32 %v6392, %v7090
      %v7092 = vand.u32 %v7091, 4294901760
      %7093 = vmatmul.mubr.f32.gmra.mrb[0].mxu0 %v7092
      %v7094 = vpop.f32.mrb[0].mxu0
      %v7095 = vadd.f32 %v6914, %v7094
      %v7096 = vpop.f32.mrb[0].mxu0
      %7097 = vmatprep.mubr.f32.mxu0 0.0
      %v7098 = vand.u32 %v6395, 4294901760
      %v7099 = vsub.f32 %v6395, %v7098
      %v7100 = vand.u32 %v7099, 4294901760
      %7101 = vmatmul.mubr.f32.gmra.mrb[0].mxu0 %v7100
      %v7102 = vpop.f32.mrb[0].mxu0
      %v7103 = vadd.f32 %v6921, %v7102
      %v7104 = vpop.f32.mrb[0].mxu0
      %7105 = vmatprep.mubr.f32.mxu0 0.0
      %v7106 = vand.u32 %v6398, 4294901760
      %v7107 = vsub.f32 %v6398, %v7106
      %v7108 = vand.u32 %v7107, 4294901760
      %7109 = vmatmul.mubr.f32.gmra.mrb[0].mxu0 %v7108
      %v7110 = vpop.f32.mrb[0].mxu0
      %v7111 = vadd.f32 %v6928, %v7110
      %v7112 = vpop.f32.mrb[0].mxu0
      %7113 = vmatprep.mubr.f32.mxu0 0.0
      %v7114 = vand.u32 %v6401, 4294901760
      %v7115 = vsub.f32 %v6401, %v7114
      %v7116 = vand.u32 %v7115, 4294901760
      %7117 = vmatmul.mubr.f32.gmra.mrb[0].mxu0 %v7116
      %v7118 = vpop.f32.mrb[0].mxu0
      %v7119 = vadd.f32 %v6935, %v7118
      %v7120 = vpop.f32.mrb[0].mxu0
      %7121 = vmatprep.mubr.f32.mxu0 0.0
      %v7122 = vand.u32 %v6404, 4294901760
      %v7123 = vsub.f32 %v6404, %v7122
      %v7124 = vand.u32 %v7123, 4294901760
      %7125 = vmatmul.mubr.f32.gmra.mrb[0].mxu0 %v7124
      %v7126 = vpop.f32.mrb[0].mxu0
      %v7127 = vadd.f32 %v6942, %v7126
      %v7128 = vpop.f32.mrb[0].mxu0
      %7129 = vmatprep.mubr.f32.mxu0 0.0
      %v7130 = vand.u32 %v6407, 4294901760
      %v7131 = vsub.f32 %v6407, %v7130
      %v7132 = vand.u32 %v7131, 4294901760
      %7133 = vmatmul.mubr.f32.gmra.mrb[0].mxu0 %v7132
      %v7134 = vpop.f32.mrb[0].mxu0
      %v7135 = vadd.f32 %v6949, %v7134
      %v7136 = vpop.f32.mrb[0].mxu0
      %7137 = vmatprep.mubr.f32.mxu0 0.0
      %v7138 = vand.u32 %v6410, 4294901760
      %v7139 = vsub.f32 %v6410, %v7138
      %v7140 = vand.u32 %v7139, 4294901760
      %7141 = vmatmul.mubr.f32.gmra.mrb[0].mxu0 %v7140
      %v7142 = vpop.f32.mrb[0].mxu0
      %v7143 = vadd.f32 %v6956, %v7142
      %v7144 = vpop.f32.mrb[0].mxu0
      %7145 = vmatprep.mubr.f32.mxu0 0.0
      %v7146 = vand.u32 %v6413, 4294901760
      %v7147 = vsub.f32 %v6413, %v7146
      %v7148 = vand.u32 %v7147, 4294901760
      %7149 = vmatmul.mubr.f32.gmra.mrb[0].mxu0 %v7148
      %v7150 = vpop.f32.mrb[0].mxu0
      %v7151 = vadd.f32 %v6963, %v7150
      %v7152 = vpop.f32.mrb[0].mxu0
      %7153 = vmatprep.mubr.f32.mxu0 0.0
      %v7154 = vand.u32 %v6416, 4294901760
      %v7155 = vsub.f32 %v6416, %v7154
      %v7156 = vand.u32 %v7155, 4294901760
      %7157 = vmatmul.mubr.f32.gmra.mrb[0].mxu0 %v7156
      %v7158 = vpop.f32.mrb[0].mxu0
      %v7159 = vadd.f32 %v6970, %v7158
      %v7160 = vpop.f32.mrb[0].mxu0
      %7161 = vmatprep.mubr.f32.mxu0 0.0
      %v7162 = vand.u32 %v6419, 4294901760
      %v7163 = vsub.f32 %v6419, %v7162
      %v7164 = vand.u32 %v7163, 4294901760
      %7165 = vmatmul.mubr.f32.gmra.mrb[0].mxu0 %v7164
      %v7166 = vpop.f32.mrb[0].mxu0
      %v7167 = vadd.f32 %v6977, %v7166
      %v7168 = vpop.f32.mrb[0].mxu0
      %7169 = vmatprep.mubr.f32.mxu0 0.0
      %v7170 = vand.u32 %v6422, 4294901760
      %v7171 = vsub.f32 %v6422, %v7170
      %v7172 = vand.u32 %v7171, 4294901760
      %7173 = vmatmul.mubr.f32.gmra.mrb[0].mxu0 %v7172
      %v7174 = vpop.f32.mrb[0].mxu0
      %v7175 = vadd.f32 %v6984, %v7174
      %v7176 = vpop.f32.mrb[0].mxu0
      %7177 = vmatprep.mubr.f32.mxu0 0.0
      %v7178 = vand.u32 %v6425, 4294901760
      %v7179 = vsub.f32 %v6425, %v7178
      %v7180 = vand.u32 %v7179, 4294901760
      %7181 = vmatmul.mubr.f32.gmra.mrb[0].mxu0 %v7180
      %v7182 = vpop.f32.mrb[0].mxu0
      %v7183 = vadd.f32 %v6991, %v7182
      %v7184 = vpop.f32.mrb[0].mxu0
      %7185 = vmatprep.mubr.f32.mxu0 0.0
      %v7186 = vand.u32 %v6428, 4294901760
      %v7187 = vsub.f32 %v6428, %v7186
      %v7188 = vand.u32 %v7187, 4294901760
      %7189 = vmatmul.mubr.f32.gmra.mrb[0].mxu0 %v7188
      %v7190 = vpop.f32.mrb[0].mxu0
      %v7191 = vadd.f32 %v6998, %v7190
      %v7192 = vpop.f32.mrb[0].mxu0
      %7193 = vmatprep.mubr.f32.mxu0 0.0
      %v7194 = vand.u32 %v6431, 4294901760
      %v7195 = vsub.f32 %v6431, %v7194
      %v7196 = vand.u32 %v7195, 4294901760
      %7197 = vmatmul.mubr.f32.gmra.mrb[0].mxu0 %v7196
      %v7198 = vpop.f32.mrb[0].mxu0
      %v7199 = vadd.f32 %v7005, %v7198
      %v7200 = vpop.f32.mrb[0].mxu0
      %7201 = vmatprep.mubr.f32.mxu0 0.0
      %v7202 = vand.u32 %v6434, 4294901760
      %v7203 = vsub.f32 %v6434, %v7202
      %v7204 = vand.u32 %v7203, 4294901760
      %7205 = vmatmul.mubr.f32.gmra.mrb[0].mxu0 %v7204
      %v7206 = vpop.f32.mrb[0].mxu0
      %v7207 = vadd.f32 %v7012, %v7206
      %v7208 = vpop.f32.mrb[0].mxu0
      %7209 = vdwg.mxu0
      %7210 = vmatprep.subr.mxu0 0.0
      %v7211 = vand.u32 %v6386, 4294901760
      %v7212 = vsub.f32 %v6386, %v7211
      %v7213 = vand.u32 %v7212, 4294901760
      %7214 = vmatpush1.msra.mxu0 %v7213
      %7215 = vmatprep.subr.mxu0 0.0
      %v7216 = vand.u32 %v6387, 4294901760
      %v7217 = vsub.f32 %v6387, %v7216
      %v7218 = vand.u32 %v7217, 4294901760
      %7219 = vmatpush1.msra.mxu0 %v7218
      %7220 = vmatprep.subr.mxu0 0.0
      %7221 = vmatpush1.msra.mxu0 0.0
      %7222 = vmatprep.subr.mxu0 0.0
      %7223 = vmatpush1.msra.mxu0 0.0
      %7224 = vmatprep.subr.mxu0 0.0
      %7225 = vmatpush1.msra.mxu0 0.0
      %7226 = vmatprep.subr.mxu0 0.0
      %7227 = vmatpush1.msra.mxu0 0.0
      %7228 = vmatprep.subr.mxu0 0.0
      %7229 = vmatpush1.msra.mxu0 0.0
      %7230 = vmatprep.subr.mxu0 0.0
      %7231 = vmatpush1.msra.mxu0 0.0
      %7232 = vmatprep.subr.mxu0 0.0
      %7233 = vmatpush1.msra.mxu0 0.0
      %7234 = vmatprep.subr.mxu0 0.0
      %7235 = vmatpush1.msra.mxu0 0.0
      %7236 = vmatprep.subr.mxu0 0.0
      %7237 = vmatpush1.msra.mxu0 0.0
      %7238 = vmatprep.subr.mxu0 0.0
      %7239 = vmatpush1.msra.mxu0 0.0
      %7240 = vmatprep.subr.mxu0 0.0
      %7241 = vmatpush1.msra.mxu0 0.0
      %7242 = vmatprep.subr.mxu0 0.0
      %7243 = vmatpush1.msra.mxu0 0.0
      %7244 = vmatprep.subr.mxu0 0.0
      %7245 = vmatpush1.msra.mxu0 0.0
      %7246 = vmatprep.subr.mxu0 0.0
      %7247 = vmatpush1.msra.mxu0 0.0
      %7248 = vmatprep.subr.mxu0 0.0
      %7249 = vmatpush1.msra.mxu0 0.0
      %7250 = vmatprep.subr.mxu0 0.0
      %7251 = vmatpush1.msra.mxu0 0.0
      %7252 = vmatprep.subr.mxu0 0.0
      %7253 = vmatpush1.msra.mxu0 0.0
      %7254 = vmatprep.subr.mxu0 0.0
      %7255 = vmatpush1.msra.mxu0 0.0
      %7256 = vmatprep.subr.mxu0 0.0
      %7257 = vmatpush1.msra.mxu0 0.0
      %7258 = vmatprep.subr.mxu0 0.0
      %7259 = vmatpush1.msra.mxu0 0.0
      %7260 = vmatprep.subr.mxu0 0.0
      %7261 = vmatpush1.msra.mxu0 0.0
      %7262 = vmatprep.subr.mxu0 0.0
      %7263 = vmatpush1.msra.mxu0 0.0
      %7264 = vmatprep.subr.mxu0 0.0
      %7265 = vmatpush1.msra.mxu0 0.0
      %7266 = vmatprep.subr.mxu0 0.0
      %7267 = vmatpush1.msra.mxu0 0.0
      %7268 = vmatprep.subr.mxu0 0.0
      %7269 = vmatpush1.msra.mxu0 0.0
      %7270 = vmatprep.subr.mxu0 0.0
      %7271 = vmatpush1.msra.mxu0 0.0
      %7272 = vmatprep.subr.mxu0 0.0
      %7273 = vmatpush1.msra.mxu0 0.0
      %7274 = vmatprep.subr.mxu0 0.0
      %7275 = vmatpush1.msra.mxu0 0.0
      %7276 = vmatprep.subr.mxu0 0.0
      %7277 = vmatpush1.msra.mxu0 0.0
      %7278 = vmatprep.subr.mxu0 0.0
      %7279 = vmatpush1.msra.mxu0 0.0
      %7280 = vmatprep.mubr.f32.mxu0 0.0
      %v7281 = vand.u32 %v6389, 4294901760
      %7282 = vmatmul.mubr.f32.gmra.mrb[0].mxu0 %v7281
      %v7283 = vpop.f32.mrb[0].mxu0
      %v7284 = vadd.f32 %v7087, %v7283
      %v7285 = vpop.f32.mrb[0].mxu0
      %7286 = vmatprep.mubr.f32.mxu0 0.0
      %v7287 = vand.u32 %v6392, 4294901760
      %7288 = vmatmul.mubr.f32.gmra.mrb[0].mxu0 %v7287
      %v7289 = vpop.f32.mrb[0].mxu0
      %v7290 = vadd.f32 %v7095, %v7289
      %v7291 = vpop.f32.mrb[0].mxu0
      %7292 = vmatprep.mubr.f32.mxu0 0.0
      %v7293 = vand.u32 %v6395, 4294901760
      %7294 = vmatmul.mubr.f32.gmra.mrb[0].mxu0 %v7293
      %v7295 = vpop.f32.mrb[0].mxu0
      %v7296 = vadd.f32 %v7103, %v7295
      %v7297 = vpop.f32.mrb[0].mxu0
      %7298 = vmatprep.mubr.f32.mxu0 0.0
      %v7299 = vand.u32 %v6398, 4294901760
      %7300 = vmatmul.mubr.f32.gmra.mrb[0].mxu0 %v7299
      %v7301 = vpop.f32.mrb[0].mxu0
      %v7302 = vadd.f32 %v7111, %v7301
      %v7303 = vpop.f32.mrb[0].mxu0
      %7304 = vmatprep.mubr.f32.mxu0 0.0
      %v7305 = vand.u32 %v6401, 4294901760
      %7306 = vmatmul.mubr.f32.gmra.mrb[0].mxu0 %v7305
      %v7307 = vpop.f32.mrb[0].mxu0
      %v7308 = vadd.f32 %v7119, %v7307
      %v7309 = vpop.f32.mrb[0].mxu0
      %7310 = vmatprep.mubr.f32.mxu0 0.0
      %v7311 = vand.u32 %v6404, 4294901760
      %7312 = vmatmul.mubr.f32.gmra.mrb[0].mxu0 %v7311
      %v7313 = vpop.f32.mrb[0].mxu0
      %v7314 = vadd.f32 %v7127, %v7313
      %v7315 = vpop.f32.mrb[0].mxu0
      %7316 = vmatprep.mubr.f32.mxu0 0.0
      %v7317 = vand.u32 %v6407, 4294901760
      %7318 = vmatmul.mubr.f32.gmra.mrb[0].mxu0 %v7317
      %v7319 = vpop.f32.mrb[0].mxu0
      %v7320 = vadd.f32 %v7135, %v7319
      %v7321 = vpop.f32.mrb[0].mxu0
      %7322 = vmatprep.mubr.f32.mxu0 0.0
      %v7323 = vand.u32 %v6410, 4294901760
      %7324 = vmatmul.mubr.f32.gmra.mrb[0].mxu0 %v7323
      %v7325 = vpop.f32.mrb[0].mxu0
      %v7326 = vadd.f32 %v7143, %v7325
      %v7327 = vpop.f32.mrb[0].mxu0
      %7328 = vmatprep.mubr.f32.mxu0 0.0
      %v7329 = vand.u32 %v6413, 4294901760
      %7330 = vmatmul.mubr.f32.gmra.mrb[0].mxu0 %v7329
      %v7331 = vpop.f32.mrb[0].mxu0
      %v7332 = vadd.f32 %v7151, %v7331
      %v7333 = vpop.f32.mrb[0].mxu0
      %7334 = vmatprep.mubr.f32.mxu0 0.0
      %v7335 = vand.u32 %v6416, 4294901760
      %7336 = vmatmul.mubr.f32.gmra.mrb[0].mxu0 %v7335
      %v7337 = vpop.f32.mrb[0].mxu0
      %v7338 = vadd.f32 %v7159, %v7337
      %v7339 = vpop.f32.mrb[0].mxu0
      %7340 = vmatprep.mubr.f32.mxu0 0.0
      %v7341 = vand.u32 %v6419, 4294901760
      %7342 = vmatmul.mubr.f32.gmra.mrb[0].mxu0 %v7341
      %v7343 = vpop.f32.mrb[0].mxu0
      %v7344 = vadd.f32 %v7167, %v7343
      %v7345 = vpop.f32.mrb[0].mxu0
      %7346 = vmatprep.mubr.f32.mxu0 0.0
      %v7347 = vand.u32 %v6422, 4294901760
      %7348 = vmatmul.mubr.f32.gmra.mrb[0].mxu0 %v7347
      %v7349 = vpop.f32.mrb[0].mxu0
      %v7350 = vadd.f32 %v7175, %v7349
      %v7351 = vpop.f32.mrb[0].mxu0
      %7352 = vmatprep.mubr.f32.mxu0 0.0
      %v7353 = vand.u32 %v6425, 4294901760
      %7354 = vmatmul.mubr.f32.gmra.mrb[0].mxu0 %v7353
      %v7355 = vpop.f32.mrb[0].mxu0
      %v7356 = vadd.f32 %v7183, %v7355
      %v7357 = vpop.f32.mrb[0].mxu0
      %7358 = vmatprep.mubr.f32.mxu0 0.0
      %v7359 = vand.u32 %v6428, 4294901760
      %7360 = vmatmul.mubr.f32.gmra.mrb[0].mxu0 %v7359
      %v7361 = vpop.f32.mrb[0].mxu0
      %v7362 = vadd.f32 %v7191, %v7361
      %v7363 = vpop.f32.mrb[0].mxu0
      %7364 = vmatprep.mubr.f32.mxu0 0.0
      %v7365 = vand.u32 %v6431, 4294901760
      %7366 = vmatmul.mubr.f32.gmra.mrb[0].mxu0 %v7365
      %v7367 = vpop.f32.mrb[0].mxu0
      %v7368 = vadd.f32 %v7199, %v7367
      %v7369 = vpop.f32.mrb[0].mxu0
      %7370 = vmatprep.mubr.f32.mxu0 0.0
      %v7371 = vand.u32 %v6434, 4294901760
      %7372 = vmatmul.mubr.f32.gmra.mrb[0].mxu0 %v7371
      %v7373 = vpop.f32.mrb[0].mxu0
      %v7374 = vadd.f32 %v7207, %v7373
      %v7375 = vpop.f32.mrb[0].mxu0
      %7376 = vdwg.mxu0
      %7377 = vmatprep.subr.mxu0 0.0
      %v7378 = vand.u32 %v6386, 4294901760
      %7379 = vmatpush1.msra.mxu0 %v7378
      %7380 = vmatprep.subr.mxu0 0.0
      %v7381 = vand.u32 %v6387, 4294901760
      %7382 = vmatpush1.msra.mxu0 %v7381
      %7383 = vmatprep.subr.mxu0 0.0
      %7384 = vmatpush1.msra.mxu0 0.0
      %7385 = vmatprep.subr.mxu0 0.0
      %7386 = vmatpush1.msra.mxu0 0.0
      %7387 = vmatprep.subr.mxu0 0.0
      %7388 = vmatpush1.msra.mxu0 0.0
      %7389 = vmatprep.subr.mxu0 0.0
      %7390 = vmatpush1.msra.mxu0 0.0
      %7391 = vmatprep.subr.mxu0 0.0
      %7392 = vmatpush1.msra.mxu0 0.0
      %7393 = vmatprep.subr.mxu0 0.0
      %7394 = vmatpush1.msra.mxu0 0.0
      %7395 = vmatprep.subr.mxu0 0.0
      %7396 = vmatpush1.msra.mxu0 0.0
      %7397 = vmatprep.subr.mxu0 0.0
      %7398 = vmatpush1.msra.mxu0 0.0
      %7399 = vmatprep.subr.mxu0 0.0
      %7400 = vmatpush1.msra.mxu0 0.0
      %7401 = vmatprep.subr.mxu0 0.0
      %7402 = vmatpush1.msra.mxu0 0.0
      %7403 = vmatprep.subr.mxu0 0.0
      %7404 = vmatpush1.msra.mxu0 0.0
      %7405 = vmatprep.subr.mxu0 0.0
      %7406 = vmatpush1.msra.mxu0 0.0
      %7407 = vmatprep.subr.mxu0 0.0
      %7408 = vmatpush1.msra.mxu0 0.0
      %7409 = vmatprep.subr.mxu0 0.0
      %7410 = vmatpush1.msra.mxu0 0.0
      %7411 = vmatprep.subr.mxu0 0.0
      %7412 = vmatpush1.msra.mxu0 0.0
      %7413 = vmatprep.subr.mxu0 0.0
      %7414 = vmatpush1.msra.mxu0 0.0
      %7415 = vmatprep.subr.mxu0 0.0
      %7416 = vmatpush1.msra.mxu0 0.0
      %7417 = vmatprep.subr.mxu0 0.0
      %7418 = vmatpush1.msra.mxu0 0.0
      %7419 = vmatprep.subr.mxu0 0.0
      %7420 = vmatpush1.msra.mxu0 0.0
      %7421 = vmatprep.subr.mxu0 0.0
      %7422 = vmatpush1.msra.mxu0 0.0
      %7423 = vmatprep.subr.mxu0 0.0
      %7424 = vmatpush1.msra.mxu0 0.0
      %7425 = vmatprep.subr.mxu0 0.0
      %7426 = vmatpush1.msra.mxu0 0.0
      %7427 = vmatprep.subr.mxu0 0.0
      %7428 = vmatpush1.msra.mxu0 0.0
      %7429 = vmatprep.subr.mxu0 0.0
      %7430 = vmatpush1.msra.mxu0 0.0
      %7431 = vmatprep.subr.mxu0 0.0
      %7432 = vmatpush1.msra.mxu0 0.0
      %7433 = vmatprep.subr.mxu0 0.0
      %7434 = vmatpush1.msra.mxu0 0.0
      %7435 = vmatprep.subr.mxu0 0.0
      %7436 = vmatpush1.msra.mxu0 0.0
      %7437 = vmatprep.subr.mxu0 0.0
      %7438 = vmatpush1.msra.mxu0 0.0
      %7439 = vmatprep.subr.mxu0 0.0
      %7440 = vmatpush1.msra.mxu0 0.0
      %7441 = vmatprep.subr.mxu0 0.0
      %7442 = vmatpush1.msra.mxu0 0.0
      %7443 = vmatprep.mubr.f32.mxu0 0.0
      %v7444 = vand.u32 %v6389, 4294901760
      %7445 = vmatmul.mubr.f32.gmra.mrb[0].mxu0 %v7444
      %v7446 = vpop.f32.mrb[0].mxu0
      %v7447 = vadd.f32 %v7284, %v7446
      %v7448 = vpop.f32.mrb[0].mxu0
      %7449 = vmatprep.mubr.f32.mxu0 0.0
      %v7450 = vand.u32 %v6392, 4294901760
      %7451 = vmatmul.mubr.f32.gmra.mrb[0].mxu0 %v7450
      %v7452 = vpop.f32.mrb[0].mxu0
      %v7453 = vadd.f32 %v7290, %v7452
      %v7454 = vpop.f32.mrb[0].mxu0
      %7455 = vmatprep.mubr.f32.mxu0 0.0
      %v7456 = vand.u32 %v6395, 4294901760
      %7457 = vmatmul.mubr.f32.gmra.mrb[0].mxu0 %v7456
      %v7458 = vpop.f32.mrb[0].mxu0
      %v7459 = vadd.f32 %v7296, %v7458
      %v7460 = vpop.f32.mrb[0].mxu0
      %7461 = vmatprep.mubr.f32.mxu0 0.0
      %v7462 = vand.u32 %v6398, 4294901760
      %7463 = vmatmul.mubr.f32.gmra.mrb[0].mxu0 %v7462
      %v7464 = vpop.f32.mrb[0].mxu0
      %v7465 = vadd.f32 %v7302, %v7464
      %v7466 = vpop.f32.mrb[0].mxu0
      %7467 = vmatprep.mubr.f32.mxu0 0.0
      %v7468 = vand.u32 %v6401, 4294901760
      %7469 = vmatmul.mubr.f32.gmra.mrb[0].mxu0 %v7468
      %v7470 = vpop.f32.mrb[0].mxu0
      %v7471 = vadd.f32 %v7308, %v7470
      %v7472 = vpop.f32.mrb[0].mxu0
      %7473 = vmatprep.mubr.f32.mxu0 0.0
      %v7474 = vand.u32 %v6404, 4294901760
      %7475 = vmatmul.mubr.f32.gmra.mrb[0].mxu0 %v7474
      %v7476 = vpop.f32.mrb[0].mxu0
      %v7477 = vadd.f32 %v7314, %v7476
      %v7478 = vpop.f32.mrb[0].mxu0
      %7479 = vmatprep.mubr.f32.mxu0 0.0
      %v7480 = vand.u32 %v6407, 4294901760
      %7481 = vmatmul.mubr.f32.gmra.mrb[0].mxu0 %v7480
      %v7482 = vpop.f32.mrb[0].mxu0
      %v7483 = vadd.f32 %v7320, %v7482
      %v7484 = vpop.f32.mrb[0].mxu0
      %7485 = vmatprep.mubr.f32.mxu0 0.0
      %v7486 = vand.u32 %v6410, 4294901760
      %7487 = vmatmul.mubr.f32.gmra.mrb[0].mxu0 %v7486
      %v7488 = vpop.f32.mrb[0].mxu0
      %v7489 = vadd.f32 %v7326, %v7488
      %v7490 = vpop.f32.mrb[0].mxu0
      %7491 = vmatprep.mubr.f32.mxu0 0.0
      %v7492 = vand.u32 %v6413, 4294901760
      %7493 = vmatmul.mubr.f32.gmra.mrb[0].mxu0 %v7492
      %v7494 = vpop.f32.mrb[0].mxu0
      %v7495 = vadd.f32 %v7332, %v7494
      %v7496 = vpop.f32.mrb[0].mxu0
      %7497 = vmatprep.mubr.f32.mxu0 0.0
      %v7498 = vand.u32 %v6416, 4294901760
      %7499 = vmatmul.mubr.f32.gmra.mrb[0].mxu0 %v7498
      %v7500 = vpop.f32.mrb[0].mxu0
      %v7501 = vadd.f32 %v7338, %v7500
      %v7502 = vpop.f32.mrb[0].mxu0
      %7503 = vmatprep.mubr.f32.mxu0 0.0
      %v7504 = vand.u32 %v6419, 4294901760
      %7505 = vmatmul.mubr.f32.gmra.mrb[0].mxu0 %v7504
      %v7506 = vpop.f32.mrb[0].mxu0
      %v7507 = vadd.f32 %v7344, %v7506
      %v7508 = vpop.f32.mrb[0].mxu0
      %7509 = vmatprep.mubr.f32.mxu0 0.0
      %v7510 = vand.u32 %v6422, 4294901760
      %7511 = vmatmul.mubr.f32.gmra.mrb[0].mxu0 %v7510
      %v7512 = vpop.f32.mrb[0].mxu0
      %v7513 = vadd.f32 %v7350, %v7512
      %v7514 = vpop.f32.mrb[0].mxu0
      %7515 = vmatprep.mubr.f32.mxu0 0.0
      %v7516 = vand.u32 %v6425, 4294901760
      %7517 = vmatmul.mubr.f32.gmra.mrb[0].mxu0 %v7516
      %v7518 = vpop.f32.mrb[0].mxu0
      %v7519 = vadd.f32 %v7356, %v7518
      %v7520 = vpop.f32.mrb[0].mxu0
      %7521 = vmatprep.mubr.f32.mxu0 0.0
      %v7522 = vand.u32 %v6428, 4294901760
      %7523 = vmatmul.mubr.f32.gmra.mrb[0].mxu0 %v7522
      %v7524 = vpop.f32.mrb[0].mxu0
      %v7525 = vadd.f32 %v7362, %v7524
      %v7526 = vpop.f32.mrb[0].mxu0
      %7527 = vmatprep.mubr.f32.mxu0 0.0
      %v7528 = vand.u32 %v6431, 4294901760
      %7529 = vmatmul.mubr.f32.gmra.mrb[0].mxu0 %v7528
      %v7530 = vpop.f32.mrb[0].mxu0
      %v7531 = vadd.f32 %v7368, %v7530
      %v7532 = vpop.f32.mrb[0].mxu0
      %7533 = vmatprep.mubr.f32.mxu0 0.0
      %v7534 = vand.u32 %v6434, 4294901760
      %7535 = vmatmul.mubr.f32.gmra.mrb[0].mxu0 %v7534
      %v7536 = vpop.f32.mrb[0].mxu0
      %v7537 = vadd.f32 %v7374, %v7536
      %v7538 = vpop.f32.mrb[0].mxu0
      %7539 = vdwg.mxu0
      %v7540 = vadd.f32 %v5122, %v7447
      %v7541 = vadd.f32 %v5123, %v7453
      %v7542 = vadd.f32 %v5124, %v7459
      %v7543 = vadd.f32 %v5125, %v7465
      %v7544 = vadd.f32 %v5126, %v7471
      %v7545 = vadd.f32 %v5127, %v7477
      %v7546 = vadd.f32 %v5128, %v7483
      %v7547 = vadd.f32 %v5129, %v7489
      %v7548 = vadd.f32 %v5130, %v7495
      %v7549 = vadd.f32 %v5131, %v7501
      %v7550 = vadd.f32 %v5132, %v7507
      %v7551 = vadd.f32 %v5133, %v7513
      %v7552 = vadd.f32 %v5134, %v7519
      %v7553 = vadd.f32 %v5135, %v7525
      %v7554 = vadd.f32 %v5136, %v7531
      %v7555 = vadd.f32 %v5137, %v7537
      %s7556 = scalar_lea.vmem %s1, 384
      %v7557 = vld [vmem:[%s7556] sm:$0xff]
      %v7558 = vld [vmem:[%s7556 + $0x8] sm:$0xff]
      %v7559 = vld [vmem:[%s7556 + $0x10] sm:$0xff]
      %v7560 = vld [vmem:[%s7556 + $0x18] sm:$0xff]
      %v7561 = vld [vmem:[%s7556 + $0x20] sm:$0xff]
      %v7562 = vld [vmem:[%s7556 + $0x28] sm:$0xff]
      %v7563 = vld [vmem:[%s7556 + $0x30] sm:$0xff]
      %v7564 = vld [vmem:[%s7556 + $0x38] sm:$0xff]
      %v7565 = vld [vmem:[%s7556 + $0x40] sm:$0xff]
      %v7566 = vld [vmem:[%s7556 + $0x48] sm:$0xff]
      %v7567 = vld [vmem:[%s7556 + $0x50] sm:$0xff]
      %v7568 = vld [vmem:[%s7556 + $0x58] sm:$0xff]
      %v7569 = vld [vmem:[%s7556 + $0x60] sm:$0xff]
      %v7570 = vld [vmem:[%s7556 + $0x68] sm:$0xff]
      %v7571 = vld [vmem:[%s7556 + $0x70] sm:$0xff]
      %v7572 = vld [vmem:[%s7556 + $0x78] sm:$0xff]
      %v7574 = vsel %vm238, %v7557, 0
      %v7577 = vsel %vm238, %v7558, 0
      %v7580 = vsel %vm238, %v7559, 0
      %v7583 = vsel %vm238, %v7560, 0
      %v7586 = vsel %vm238, %v7561, 0
      %v7589 = vsel %vm238, %v7562, 0
      %v7592 = vsel %vm238, %v7563, 0
      %v7595 = vsel %vm238, %v7564, 0
      %v7598 = vsel %vm238, %v7565, 0
      %v7601 = vsel %vm238, %v7566, 0
      %v7604 = vsel %vm238, %v7567, 0
      %v7607 = vsel %vm238, %v7568, 0
      %v7610 = vsel %vm238, %v7569, 0
      %v7613 = vsel %vm238, %v7570, 0
      %v7616 = vsel %vm238, %v7571, 0
      %v7619 = vsel %vm238, %v7572, 0
      %7621 = vmatprep.subr.mxu0 0.0
      %v7622 = vand.u32 %v214, 4294901760
      %7623 = vmatpush1.msra.mxu0 %v7622
      %7624 = vmatprep.subr.mxu0 0.0
      %v7625 = vand.u32 %v215, 4294901760
      %7626 = vmatpush1.msra.mxu0 %v7625
      %7627 = vmatprep.subr.mxu0 0.0
      %v7628 = vand.u32 %v216, 4294901760
      %7629 = vmatpush1.msra.mxu0 %v7628
      %7630 = vmatprep.subr.mxu0 0.0
      %v7631 = vand.u32 %v217, 4294901760
      %7632 = vmatpush1.msra.mxu0 %v7631
      %7633 = vmatprep.subr.mxu0 0.0
      %v7634 = vand.u32 %v218, 4294901760
      %7635 = vmatpush1.msra.mxu0 %v7634
      %7636 = vmatprep.subr.mxu0 0.0
      %v7637 = vand.u32 %v219, 4294901760
      %7638 = vmatpush1.msra.mxu0 %v7637
      %7639 = vmatprep.subr.mxu0 0.0
      %v7640 = vand.u32 %v220, 4294901760
      %7641 = vmatpush1.msra.mxu0 %v7640
      %7642 = vmatprep.subr.mxu0 0.0
      %v7643 = vand.u32 %v221, 4294901760
      %7644 = vmatpush1.msra.mxu0 %v7643
      %7645 = vmatprep.subr.mxu0 0.0
      %7646 = vmatpush1.msra.mxu0 0.0
      %7647 = vmatprep.subr.mxu0 0.0
      %7648 = vmatpush1.msra.mxu0 0.0
      %7649 = vmatprep.subr.mxu0 0.0
      %7650 = vmatpush1.msra.mxu0 0.0
      %7651 = vmatprep.subr.mxu0 0.0
      %7652 = vmatpush1.msra.mxu0 0.0
      %7653 = vmatprep.subr.mxu0 0.0
      %7654 = vmatpush1.msra.mxu0 0.0
      %7655 = vmatprep.subr.mxu0 0.0
      %7656 = vmatpush1.msra.mxu0 0.0
      %7657 = vmatprep.subr.mxu0 0.0
      %7658 = vmatpush1.msra.mxu0 0.0
      %7659 = vmatprep.subr.mxu0 0.0
      %7660 = vmatpush1.msra.mxu0 0.0
      %7661 = vmatprep.subr.mxu0 0.0
      %7662 = vmatpush1.msra.mxu0 0.0
      %7663 = vmatprep.subr.mxu0 0.0
      %7664 = vmatpush1.msra.mxu0 0.0
      %7665 = vmatprep.subr.mxu0 0.0
      %7666 = vmatpush1.msra.mxu0 0.0
      %7667 = vmatprep.subr.mxu0 0.0
      %7668 = vmatpush1.msra.mxu0 0.0
      %7669 = vmatprep.subr.mxu0 0.0
      %7670 = vmatpush1.msra.mxu0 0.0
      %7671 = vmatprep.subr.mxu0 0.0
      %7672 = vmatpush1.msra.mxu0 0.0
      %7673 = vmatprep.subr.mxu0 0.0
      %7674 = vmatpush1.msra.mxu0 0.0
      %7675 = vmatprep.subr.mxu0 0.0
      %7676 = vmatpush1.msra.mxu0 0.0
      %7677 = vmatprep.subr.mxu0 0.0
      %7678 = vmatpush1.msra.mxu0 0.0
      %7679 = vmatprep.subr.mxu0 0.0
      %7680 = vmatpush1.msra.mxu0 0.0
      %7681 = vmatprep.subr.mxu0 0.0
      %7682 = vmatpush1.msra.mxu0 0.0
      %7683 = vmatprep.subr.mxu0 0.0
      %7684 = vmatpush1.msra.mxu0 0.0
      %7685 = vmatprep.subr.mxu0 0.0
      %7686 = vmatpush1.msra.mxu0 0.0
      %7687 = vmatprep.subr.mxu0 0.0
      %7688 = vmatpush1.msra.mxu0 0.0
      %7689 = vmatprep.subr.mxu0 0.0
      %7690 = vmatpush1.msra.mxu0 0.0
      %7691 = vmatprep.subr.mxu0 0.0
      %7692 = vmatpush1.msra.mxu0 0.0
      %7693 = vmatprep.mubr.f32.mxu0 0.0
      %v7694 = vand.u32 %v7574, 4294901760
      %v7695 = vsub.f32 %v7574, %v7694
      %v7696 = vand.u32 %v7695, 4294901760
      %v7697 = vsub.f32 %v7695, %v7696
      %v7698 = vand.u32 %v7697, 4294901760
      %7699 = vmatmul.mubr.f32.gmra.mrb[0].mxu0 %v7698
      %v7700 = vpop.f32.mrb[0].mxu0
      %v7701 = vadd.f32 0.0, %v7700
      %v7702 = vpop.f32.mrb[0].mxu0
      %7703 = vmatprep.mubr.f32.mxu0 0.0
      %v7704 = vand.u32 %v7577, 4294901760
      %v7705 = vsub.f32 %v7577, %v7704
      %v7706 = vand.u32 %v7705, 4294901760
      %v7707 = vsub.f32 %v7705, %v7706
      %v7708 = vand.u32 %v7707, 4294901760
      %7709 = vmatmul.mubr.f32.gmra.mrb[0].mxu0 %v7708
      %v7710 = vpop.f32.mrb[0].mxu0
      %v7711 = vadd.f32 0.0, %v7710
      %v7712 = vpop.f32.mrb[0].mxu0
      %7713 = vmatprep.mubr.f32.mxu0 0.0
      %v7714 = vand.u32 %v7580, 4294901760
      %v7715 = vsub.f32 %v7580, %v7714
      %v7716 = vand.u32 %v7715, 4294901760
      %v7717 = vsub.f32 %v7715, %v7716
      %v7718 = vand.u32 %v7717, 4294901760
      %7719 = vmatmul.mubr.f32.gmra.mrb[0].mxu0 %v7718
      %v7720 = vpop.f32.mrb[0].mxu0
      %v7721 = vadd.f32 0.0, %v7720
      %v7722 = vpop.f32.mrb[0].mxu0
      %7723 = vmatprep.mubr.f32.mxu0 0.0
      %v7724 = vand.u32 %v7583, 4294901760
      %v7725 = vsub.f32 %v7583, %v7724
      %v7726 = vand.u32 %v7725, 4294901760
      %v7727 = vsub.f32 %v7725, %v7726
      %v7728 = vand.u32 %v7727, 4294901760
      %7729 = vmatmul.mubr.f32.gmra.mrb[0].mxu0 %v7728
      %v7730 = vpop.f32.mrb[0].mxu0
      %v7731 = vadd.f32 0.0, %v7730
      %v7732 = vpop.f32.mrb[0].mxu0
      %7733 = vmatprep.mubr.f32.mxu0 0.0
      %v7734 = vand.u32 %v7586, 4294901760
      %v7735 = vsub.f32 %v7586, %v7734
      %v7736 = vand.u32 %v7735, 4294901760
      %v7737 = vsub.f32 %v7735, %v7736
      %v7738 = vand.u32 %v7737, 4294901760
      %7739 = vmatmul.mubr.f32.gmra.mrb[0].mxu0 %v7738
      %v7740 = vpop.f32.mrb[0].mxu0
      %v7741 = vadd.f32 0.0, %v7740
      %v7742 = vpop.f32.mrb[0].mxu0
      %7743 = vmatprep.mubr.f32.mxu0 0.0
      %v7744 = vand.u32 %v7589, 4294901760
      %v7745 = vsub.f32 %v7589, %v7744
      %v7746 = vand.u32 %v7745, 4294901760
      %v7747 = vsub.f32 %v7745, %v7746
      %v7748 = vand.u32 %v7747, 4294901760
      %7749 = vmatmul.mubr.f32.gmra.mrb[0].mxu0 %v7748
      %v7750 = vpop.f32.mrb[0].mxu0
      %v7751 = vadd.f32 0.0, %v7750
      %v7752 = vpop.f32.mrb[0].mxu0
      %7753 = vmatprep.mubr.f32.mxu0 0.0
      %v7754 = vand.u32 %v7592, 4294901760
      %v7755 = vsub.f32 %v7592, %v7754
      %v7756 = vand.u32 %v7755, 4294901760
      %v7757 = vsub.f32 %v7755, %v7756
      %v7758 = vand.u32 %v7757, 4294901760
      %7759 = vmatmul.mubr.f32.gmra.mrb[0].mxu0 %v7758
      %v7760 = vpop.f32.mrb[0].mxu0
      %v7761 = vadd.f32 0.0, %v7760
      %v7762 = vpop.f32.mrb[0].mxu0
      %7763 = vmatprep.mubr.f32.mxu0 0.0
      %v7764 = vand.u32 %v7595, 4294901760
      %v7765 = vsub.f32 %v7595, %v7764
      %v7766 = vand.u32 %v7765, 4294901760
      %v7767 = vsub.f32 %v7765, %v7766
      %v7768 = vand.u32 %v7767, 4294901760
      %7769 = vmatmul.mubr.f32.gmra.mrb[0].mxu0 %v7768
      %v7770 = vpop.f32.mrb[0].mxu0
      %v7771 = vadd.f32 0.0, %v7770
      %v7772 = vpop.f32.mrb[0].mxu0
      %7773 = vmatprep.mubr.f32.mxu0 0.0
      %v7774 = vand.u32 %v7598, 4294901760
      %v7775 = vsub.f32 %v7598, %v7774
      %v7776 = vand.u32 %v7775, 4294901760
      %v7777 = vsub.f32 %v7775, %v7776
      %v7778 = vand.u32 %v7777, 4294901760
      %7779 = vmatmul.mubr.f32.gmra.mrb[0].mxu0 %v7778
      %v7780 = vpop.f32.mrb[0].mxu0
      %v7781 = vadd.f32 0.0, %v7780
      %v7782 = vpop.f32.mrb[0].mxu0
      %7783 = vmatprep.mubr.f32.mxu0 0.0
      %v7784 = vand.u32 %v7601, 4294901760
      %v7785 = vsub.f32 %v7601, %v7784
      %v7786 = vand.u32 %v7785, 4294901760
      %v7787 = vsub.f32 %v7785, %v7786
      %v7788 = vand.u32 %v7787, 4294901760
      %7789 = vmatmul.mubr.f32.gmra.mrb[0].mxu0 %v7788
      %v7790 = vpop.f32.mrb[0].mxu0
      %v7791 = vadd.f32 0.0, %v7790
      %v7792 = vpop.f32.mrb[0].mxu0
      %7793 = vmatprep.mubr.f32.mxu0 0.0
      %v7794 = vand.u32 %v7604, 4294901760
      %v7795 = vsub.f32 %v7604, %v7794
      %v7796 = vand.u32 %v7795, 4294901760
      %v7797 = vsub.f32 %v7795, %v7796
      %v7798 = vand.u32 %v7797, 4294901760
      %7799 = vmatmul.mubr.f32.gmra.mrb[0].mxu0 %v7798
      %v7800 = vpop.f32.mrb[0].mxu0
      %v7801 = vadd.f32 0.0, %v7800
      %v7802 = vpop.f32.mrb[0].mxu0
      %7803 = vmatprep.mubr.f32.mxu0 0.0
      %v7804 = vand.u32 %v7607, 4294901760
      %v7805 = vsub.f32 %v7607, %v7804
      %v7806 = vand.u32 %v7805, 4294901760
      %v7807 = vsub.f32 %v7805, %v7806
      %v7808 = vand.u32 %v7807, 4294901760
      %7809 = vmatmul.mubr.f32.gmra.mrb[0].mxu0 %v7808
      %v7810 = vpop.f32.mrb[0].mxu0
      %v7811 = vadd.f32 0.0, %v7810
      %v7812 = vpop.f32.mrb[0].mxu0
      %7813 = vmatprep.mubr.f32.mxu0 0.0
      %v7814 = vand.u32 %v7610, 4294901760
      %v7815 = vsub.f32 %v7610, %v7814
      %v7816 = vand.u32 %v7815, 4294901760
      %v7817 = vsub.f32 %v7815, %v7816
      %v7818 = vand.u32 %v7817, 4294901760
      %7819 = vmatmul.mubr.f32.gmra.mrb[0].mxu0 %v7818
      %v7820 = vpop.f32.mrb[0].mxu0
      %v7821 = vadd.f32 0.0, %v7820
      %v7822 = vpop.f32.mrb[0].mxu0
      %7823 = vmatprep.mubr.f32.mxu0 0.0
      %v7824 = vand.u32 %v7613, 4294901760
      %v7825 = vsub.f32 %v7613, %v7824
      %v7826 = vand.u32 %v7825, 4294901760
      %v7827 = vsub.f32 %v7825, %v7826
      %v7828 = vand.u32 %v7827, 4294901760
      %7829 = vmatmul.mubr.f32.gmra.mrb[0].mxu0 %v7828
      %v7830 = vpop.f32.mrb[0].mxu0
      %v7831 = vadd.f32 0.0, %v7830
      %v7832 = vpop.f32.mrb[0].mxu0
      %7833 = vmatprep.mubr.f32.mxu0 0.0
      %v7834 = vand.u32 %v7616, 4294901760
      %v7835 = vsub.f32 %v7616, %v7834
      %v7836 = vand.u32 %v7835, 4294901760
      %v7837 = vsub.f32 %v7835, %v7836
      %v7838 = vand.u32 %v7837, 4294901760
      %7839 = vmatmul.mubr.f32.gmra.mrb[0].mxu0 %v7838
      %v7840 = vpop.f32.mrb[0].mxu0
      %v7841 = vadd.f32 0.0, %v7840
      %v7842 = vpop.f32.mrb[0].mxu0
      %7843 = vmatprep.mubr.f32.mxu0 0.0
      %v7844 = vand.u32 %v7619, 4294901760
      %v7845 = vsub.f32 %v7619, %v7844
      %v7846 = vand.u32 %v7845, 4294901760
      %v7847 = vsub.f32 %v7845, %v7846
      %v7848 = vand.u32 %v7847, 4294901760
      %7849 = vmatmul.mubr.f32.gmra.mrb[0].mxu0 %v7848
      %v7850 = vpop.f32.mrb[0].mxu0
      %v7851 = vadd.f32 0.0, %v7850
      %v7852 = vpop.f32.mrb[0].mxu0
      %7853 = vdwg.mxu0
      %7854 = vmatprep.subr.mxu0 0.0
      %v7855 = vand.u32 %v214, 4294901760
      %v7856 = vsub.f32 %v214, %v7855
      %v7857 = vand.u32 %v7856, 4294901760
      %v7858 = vsub.f32 %v7856, %v7857
      %v7859 = vand.u32 %v7858, 4294901760
      %7860 = vmatpush1.msra.mxu0 %v7859
      %7861 = vmatprep.subr.mxu0 0.0
      %v7862 = vand.u32 %v215, 4294901760
      %v7863 = vsub.f32 %v215, %v7862
      %v7864 = vand.u32 %v7863, 4294901760
      %v7865 = vsub.f32 %v7863, %v7864
      %v7866 = vand.u32 %v7865, 4294901760
      %7867 = vmatpush1.msra.mxu0 %v7866
      %7868 = vmatprep.subr.mxu0 0.0
      %v7869 = vand.u32 %v216, 4294901760
      %v7870 = vsub.f32 %v216, %v7869
      %v7871 = vand.u32 %v7870, 4294901760
      %v7872 = vsub.f32 %v7870, %v7871
      %v7873 = vand.u32 %v7872, 4294901760
      %7874 = vmatpush1.msra.mxu0 %v7873
      %7875 = vmatprep.subr.mxu0 0.0
      %v7876 = vand.u32 %v217, 4294901760
      %v7877 = vsub.f32 %v217, %v7876
      %v7878 = vand.u32 %v7877, 4294901760
      %v7879 = vsub.f32 %v7877, %v7878
      %v7880 = vand.u32 %v7879, 4294901760
      %7881 = vmatpush1.msra.mxu0 %v7880
      %7882 = vmatprep.subr.mxu0 0.0
      %v7883 = vand.u32 %v218, 4294901760
      %v7884 = vsub.f32 %v218, %v7883
      %v7885 = vand.u32 %v7884, 4294901760
      %v7886 = vsub.f32 %v7884, %v7885
      %v7887 = vand.u32 %v7886, 4294901760
      %7888 = vmatpush1.msra.mxu0 %v7887
      %7889 = vmatprep.subr.mxu0 0.0
      %v7890 = vand.u32 %v219, 4294901760
      %v7891 = vsub.f32 %v219, %v7890
      %v7892 = vand.u32 %v7891, 4294901760
      %v7893 = vsub.f32 %v7891, %v7892
      %v7894 = vand.u32 %v7893, 4294901760
      %7895 = vmatpush1.msra.mxu0 %v7894
      %7896 = vmatprep.subr.mxu0 0.0
      %v7897 = vand.u32 %v220, 4294901760
      %v7898 = vsub.f32 %v220, %v7897
      %v7899 = vand.u32 %v7898, 4294901760
      %v7900 = vsub.f32 %v7898, %v7899
      %v7901 = vand.u32 %v7900, 4294901760
      %7902 = vmatpush1.msra.mxu0 %v7901
      %7903 = vmatprep.subr.mxu0 0.0
      %v7904 = vand.u32 %v221, 4294901760
      %v7905 = vsub.f32 %v221, %v7904
      %v7906 = vand.u32 %v7905, 4294901760
      %v7907 = vsub.f32 %v7905, %v7906
      %v7908 = vand.u32 %v7907, 4294901760
      %7909 = vmatpush1.msra.mxu0 %v7908
      %7910 = vmatprep.subr.mxu0 0.0
      %7911 = vmatpush1.msra.mxu0 0.0
      %7912 = vmatprep.subr.mxu0 0.0
      %7913 = vmatpush1.msra.mxu0 0.0
      %7914 = vmatprep.subr.mxu0 0.0
      %7915 = vmatpush1.msra.mxu0 0.0
      %7916 = vmatprep.subr.mxu0 0.0
      %7917 = vmatpush1.msra.mxu0 0.0
      %7918 = vmatprep.subr.mxu0 0.0
      %7919 = vmatpush1.msra.mxu0 0.0
      %7920 = vmatprep.subr.mxu0 0.0
      %7921 = vmatpush1.msra.mxu0 0.0
      %7922 = vmatprep.subr.mxu0 0.0
      %7923 = vmatpush1.msra.mxu0 0.0
      %7924 = vmatprep.subr.mxu0 0.0
      %7925 = vmatpush1.msra.mxu0 0.0
      %7926 = vmatprep.subr.mxu0 0.0
      %7927 = vmatpush1.msra.mxu0 0.0
      %7928 = vmatprep.subr.mxu0 0.0
      %7929 = vmatpush1.msra.mxu0 0.0
      %7930 = vmatprep.subr.mxu0 0.0
      %7931 = vmatpush1.msra.mxu0 0.0
      %7932 = vmatprep.subr.mxu0 0.0
      %7933 = vmatpush1.msra.mxu0 0.0
      %7934 = vmatprep.subr.mxu0 0.0
      %7935 = vmatpush1.msra.mxu0 0.0
      %7936 = vmatprep.subr.mxu0 0.0
      %7937 = vmatpush1.msra.mxu0 0.0
      %7938 = vmatprep.subr.mxu0 0.0
      %7939 = vmatpush1.msra.mxu0 0.0
      %7940 = vmatprep.subr.mxu0 0.0
      %7941 = vmatpush1.msra.mxu0 0.0
      %7942 = vmatprep.subr.mxu0 0.0
      %7943 = vmatpush1.msra.mxu0 0.0
      %7944 = vmatprep.subr.mxu0 0.0
      %7945 = vmatpush1.msra.mxu0 0.0
      %7946 = vmatprep.subr.mxu0 0.0
      %7947 = vmatpush1.msra.mxu0 0.0
      %7948 = vmatprep.subr.mxu0 0.0
      %7949 = vmatpush1.msra.mxu0 0.0
      %7950 = vmatprep.subr.mxu0 0.0
      %7951 = vmatpush1.msra.mxu0 0.0
      %7952 = vmatprep.subr.mxu0 0.0
      %7953 = vmatpush1.msra.mxu0 0.0
      %7954 = vmatprep.subr.mxu0 0.0
      %7955 = vmatpush1.msra.mxu0 0.0
      %7956 = vmatprep.subr.mxu0 0.0
      %7957 = vmatpush1.msra.mxu0 0.0
      %7958 = vmatprep.mubr.f32.mxu0 0.0
      %v7959 = vand.u32 %v7574, 4294901760
      %7960 = vmatmul.mubr.f32.gmra.mrb[0].mxu0 %v7959
      %v7961 = vpop.f32.mrb[0].mxu0
      %v7962 = vadd.f32 %v7701, %v7961
      %v7963 = vpop.f32.mrb[0].mxu0
      %7964 = vmatprep.mubr.f32.mxu0 0.0
      %v7965 = vand.u32 %v7577, 4294901760
      %7966 = vmatmul.mubr.f32.gmra.mrb[0].mxu0 %v7965
      %v7967 = vpop.f32.mrb[0].mxu0
      %v7968 = vadd.f32 %v7711, %v7967
      %v7969 = vpop.f32.mrb[0].mxu0
      %7970 = vmatprep.mubr.f32.mxu0 0.0
      %v7971 = vand.u32 %v7580, 4294901760
      %7972 = vmatmul.mubr.f32.gmra.mrb[0].mxu0 %v7971
      %v7973 = vpop.f32.mrb[0].mxu0
      %v7974 = vadd.f32 %v7721, %v7973
      %v7975 = vpop.f32.mrb[0].mxu0
      %7976 = vmatprep.mubr.f32.mxu0 0.0
      %v7977 = vand.u32 %v7583, 4294901760
      %7978 = vmatmul.mubr.f32.gmra.mrb[0].mxu0 %v7977
      %v7979 = vpop.f32.mrb[0].mxu0
      %v7980 = vadd.f32 %v7731, %v7979
      %v7981 = vpop.f32.mrb[0].mxu0
      %7982 = vmatprep.mubr.f32.mxu0 0.0
      %v7983 = vand.u32 %v7586, 4294901760
      %7984 = vmatmul.mubr.f32.gmra.mrb[0].mxu0 %v7983
      %v7985 = vpop.f32.mrb[0].mxu0
      %v7986 = vadd.f32 %v7741, %v7985
      %v7987 = vpop.f32.mrb[0].mxu0
      %7988 = vmatprep.mubr.f32.mxu0 0.0
      %v7989 = vand.u32 %v7589, 4294901760
      %7990 = vmatmul.mubr.f32.gmra.mrb[0].mxu0 %v7989
      %v7991 = vpop.f32.mrb[0].mxu0
      %v7992 = vadd.f32 %v7751, %v7991
      %v7993 = vpop.f32.mrb[0].mxu0
      %7994 = vmatprep.mubr.f32.mxu0 0.0
      %v7995 = vand.u32 %v7592, 4294901760
      %7996 = vmatmul.mubr.f32.gmra.mrb[0].mxu0 %v7995
      %v7997 = vpop.f32.mrb[0].mxu0
      %v7998 = vadd.f32 %v7761, %v7997
      %v7999 = vpop.f32.mrb[0].mxu0
      %8000 = vmatprep.mubr.f32.mxu0 0.0
      %v8001 = vand.u32 %v7595, 4294901760
      %8002 = vmatmul.mubr.f32.gmra.mrb[0].mxu0 %v8001
      %v8003 = vpop.f32.mrb[0].mxu0
      %v8004 = vadd.f32 %v7771, %v8003
      %v8005 = vpop.f32.mrb[0].mxu0
      %8006 = vmatprep.mubr.f32.mxu0 0.0
      %v8007 = vand.u32 %v7598, 4294901760
      %8008 = vmatmul.mubr.f32.gmra.mrb[0].mxu0 %v8007
      %v8009 = vpop.f32.mrb[0].mxu0
      %v8010 = vadd.f32 %v7781, %v8009
      %v8011 = vpop.f32.mrb[0].mxu0
      %8012 = vmatprep.mubr.f32.mxu0 0.0
      %v8013 = vand.u32 %v7601, 4294901760
      %8014 = vmatmul.mubr.f32.gmra.mrb[0].mxu0 %v8013
      %v8015 = vpop.f32.mrb[0].mxu0
      %v8016 = vadd.f32 %v7791, %v8015
      %v8017 = vpop.f32.mrb[0].mxu0
      %8018 = vmatprep.mubr.f32.mxu0 0.0
      %v8019 = vand.u32 %v7604, 4294901760
      %8020 = vmatmul.mubr.f32.gmra.mrb[0].mxu0 %v8019
      %v8021 = vpop.f32.mrb[0].mxu0
      %v8022 = vadd.f32 %v7801, %v8021
      %v8023 = vpop.f32.mrb[0].mxu0
      %8024 = vmatprep.mubr.f32.mxu0 0.0
      %v8025 = vand.u32 %v7607, 4294901760
      %8026 = vmatmul.mubr.f32.gmra.mrb[0].mxu0 %v8025
      %v8027 = vpop.f32.mrb[0].mxu0
      %v8028 = vadd.f32 %v7811, %v8027
      %v8029 = vpop.f32.mrb[0].mxu0
      %8030 = vmatprep.mubr.f32.mxu0 0.0
      %v8031 = vand.u32 %v7610, 4294901760
      %8032 = vmatmul.mubr.f32.gmra.mrb[0].mxu0 %v8031
      %v8033 = vpop.f32.mrb[0].mxu0
      %v8034 = vadd.f32 %v7821, %v8033
      %v8035 = vpop.f32.mrb[0].mxu0
      %8036 = vmatprep.mubr.f32.mxu0 0.0
      %v8037 = vand.u32 %v7613, 4294901760
      %8038 = vmatmul.mubr.f32.gmra.mrb[0].mxu0 %v8037
      %v8039 = vpop.f32.mrb[0].mxu0
      %v8040 = vadd.f32 %v7831, %v8039
      %v8041 = vpop.f32.mrb[0].mxu0
      %8042 = vmatprep.mubr.f32.mxu0 0.0
      %v8043 = vand.u32 %v7616, 4294901760
      %8044 = vmatmul.mubr.f32.gmra.mrb[0].mxu0 %v8043
      %v8045 = vpop.f32.mrb[0].mxu0
      %v8046 = vadd.f32 %v7841, %v8045
      %v8047 = vpop.f32.mrb[0].mxu0
      %8048 = vmatprep.mubr.f32.mxu0 0.0
      %v8049 = vand.u32 %v7619, 4294901760
      %8050 = vmatmul.mubr.f32.gmra.mrb[0].mxu0 %v8049
      %v8051 = vpop.f32.mrb[0].mxu0
      %v8052 = vadd.f32 %v7851, %v8051
      %v8053 = vpop.f32.mrb[0].mxu0
      %8054 = vdwg.mxu0
      %8055 = vmatprep.subr.mxu0 0.0
      %v8056 = vand.u32 %v214, 4294901760
      %v8057 = vsub.f32 %v214, %v8056
      %8058 = vmatpush1.msra.mxu0 %v8057
      %8059 = vmatprep.subr.mxu0 0.0
      %v8060 = vand.u32 %v215, 4294901760
      %v8061 = vsub.f32 %v215, %v8060
      %8062 = vmatpush1.msra.mxu0 %v8061
      %8063 = vmatprep.subr.mxu0 0.0
      %v8064 = vand.u32 %v216, 4294901760
      %v8065 = vsub.f32 %v216, %v8064
      %8066 = vmatpush1.msra.mxu0 %v8065
      %8067 = vmatprep.subr.mxu0 0.0
      %v8068 = vand.u32 %v217, 4294901760
      %v8069 = vsub.f32 %v217, %v8068
      %8070 = vmatpush1.msra.mxu0 %v8069
      %8071 = vmatprep.subr.mxu0 0.0
      %v8072 = vand.u32 %v218, 4294901760
      %v8073 = vsub.f32 %v218, %v8072
      %8074 = vmatpush1.msra.mxu0 %v8073
      %8075 = vmatprep.subr.mxu0 0.0
      %v8076 = vand.u32 %v219, 4294901760
      %v8077 = vsub.f32 %v219, %v8076
      %8078 = vmatpush1.msra.mxu0 %v8077
      %8079 = vmatprep.subr.mxu0 0.0
      %v8080 = vand.u32 %v220, 4294901760
      %v8081 = vsub.f32 %v220, %v8080
      %8082 = vmatpush1.msra.mxu0 %v8081
      %8083 = vmatprep.subr.mxu0 0.0
      %v8084 = vand.u32 %v221, 4294901760
      %v8085 = vsub.f32 %v221, %v8084
      %8086 = vmatpush1.msra.mxu0 %v8085
      %8087 = vmatprep.subr.mxu0 0.0
      %8088 = vmatpush1.msra.mxu0 0.0
      %8089 = vmatprep.subr.mxu0 0.0
      %8090 = vmatpush1.msra.mxu0 0.0
      %8091 = vmatprep.subr.mxu0 0.0
      %8092 = vmatpush1.msra.mxu0 0.0
      %8093 = vmatprep.subr.mxu0 0.0
      %8094 = vmatpush1.msra.mxu0 0.0
      %8095 = vmatprep.subr.mxu0 0.0
      %8096 = vmatpush1.msra.mxu0 0.0
      %8097 = vmatprep.subr.mxu0 0.0
      %8098 = vmatpush1.msra.mxu0 0.0
      %8099 = vmatprep.subr.mxu0 0.0
      %8100 = vmatpush1.msra.mxu0 0.0
      %8101 = vmatprep.subr.mxu0 0.0
      %8102 = vmatpush1.msra.mxu0 0.0
      %8103 = vmatprep.subr.mxu0 0.0
      %8104 = vmatpush1.msra.mxu0 0.0
      %8105 = vmatprep.subr.mxu0 0.0
      %8106 = vmatpush1.msra.mxu0 0.0
      %8107 = vmatprep.subr.mxu0 0.0
      %8108 = vmatpush1.msra.mxu0 0.0
      %8109 = vmatprep.subr.mxu0 0.0
      %8110 = vmatpush1.msra.mxu0 0.0
      %8111 = vmatprep.subr.mxu0 0.0
      %8112 = vmatpush1.msra.mxu0 0.0
      %8113 = vmatprep.subr.mxu0 0.0
      %8114 = vmatpush1.msra.mxu0 0.0
      %8115 = vmatprep.subr.mxu0 0.0
      %8116 = vmatpush1.msra.mxu0 0.0
      %8117 = vmatprep.subr.mxu0 0.0
      %8118 = vmatpush1.msra.mxu0 0.0
      %8119 = vmatprep.subr.mxu0 0.0
      %8120 = vmatpush1.msra.mxu0 0.0
      %8121 = vmatprep.subr.mxu0 0.0
      %8122 = vmatpush1.msra.mxu0 0.0
      %8123 = vmatprep.subr.mxu0 0.0
      %8124 = vmatpush1.msra.mxu0 0.0
      %8125 = vmatprep.subr.mxu0 0.0
      %8126 = vmatpush1.msra.mxu0 0.0
      %8127 = vmatprep.subr.mxu0 0.0
      %8128 = vmatpush1.msra.mxu0 0.0
      %8129 = vmatprep.subr.mxu0 0.0
      %8130 = vmatpush1.msra.mxu0 0.0
      %8131 = vmatprep.subr.mxu0 0.0
      %8132 = vmatpush1.msra.mxu0 0.0
      %8133 = vmatprep.subr.mxu0 0.0
      %8134 = vmatpush1.msra.mxu0 0.0
      %8135 = vmatprep.mubr.f32.mxu0 0.0
      %v8136 = vand.u32 %v7574, 4294901760
      %v8137 = vsub.f32 %v7574, %v8136
      %8138 = vmatmul.mubr.f32.gmra.mrb[0].mxu0 %v8137
      %v8139 = vpop.f32.mrb[0].mxu0
      %v8140 = vadd.f32 %v7962, %v8139
      %v8141 = vpop.f32.mrb[0].mxu0
      %8142 = vmatprep.mubr.f32.mxu0 0.0
      %v8143 = vand.u32 %v7577, 4294901760
      %v8144 = vsub.f32 %v7577, %v8143
      %8145 = vmatmul.mubr.f32.gmra.mrb[0].mxu0 %v8144
      %v8146 = vpop.f32.mrb[0].mxu0
      %v8147 = vadd.f32 %v7968, %v8146
      %v8148 = vpop.f32.mrb[0].mxu0
      %8149 = vmatprep.mubr.f32.mxu0 0.0
      %v8150 = vand.u32 %v7580, 4294901760
      %v8151 = vsub.f32 %v7580, %v8150
      %8152 = vmatmul.mubr.f32.gmra.mrb[0].mxu0 %v8151
      %v8153 = vpop.f32.mrb[0].mxu0
      %v8154 = vadd.f32 %v7974, %v8153
      %v8155 = vpop.f32.mrb[0].mxu0
      %8156 = vmatprep.mubr.f32.mxu0 0.0
      %v8157 = vand.u32 %v7583, 4294901760
      %v8158 = vsub.f32 %v7583, %v8157
      %8159 = vmatmul.mubr.f32.gmra.mrb[0].mxu0 %v8158
      %v8160 = vpop.f32.mrb[0].mxu0
      %v8161 = vadd.f32 %v7980, %v8160
      %v8162 = vpop.f32.mrb[0].mxu0
      %8163 = vmatprep.mubr.f32.mxu0 0.0
      %v8164 = vand.u32 %v7586, 4294901760
      %v8165 = vsub.f32 %v7586, %v8164
      %8166 = vmatmul.mubr.f32.gmra.mrb[0].mxu0 %v8165
      %v8167 = vpop.f32.mrb[0].mxu0
      %v8168 = vadd.f32 %v7986, %v8167
      %v8169 = vpop.f32.mrb[0].mxu0
      %8170 = vmatprep.mubr.f32.mxu0 0.0
      %v8171 = vand.u32 %v7589, 4294901760
      %v8172 = vsub.f32 %v7589, %v8171
      %8173 = vmatmul.mubr.f32.gmra.mrb[0].mxu0 %v8172
      %v8174 = vpop.f32.mrb[0].mxu0
      %v8175 = vadd.f32 %v7992, %v8174
      %v8176 = vpop.f32.mrb[0].mxu0
      %8177 = vmatprep.mubr.f32.mxu0 0.0
      %v8178 = vand.u32 %v7592, 4294901760
      %v8179 = vsub.f32 %v7592, %v8178
      %8180 = vmatmul.mubr.f32.gmra.mrb[0].mxu0 %v8179
      %v8181 = vpop.f32.mrb[0].mxu0
      %v8182 = vadd.f32 %v7998, %v8181
      %v8183 = vpop.f32.mrb[0].mxu0
      %8184 = vmatprep.mubr.f32.mxu0 0.0
      %v8185 = vand.u32 %v7595, 4294901760
      %v8186 = vsub.f32 %v7595, %v8185
      %8187 = vmatmul.mubr.f32.gmra.mrb[0].mxu0 %v8186
      %v8188 = vpop.f32.mrb[0].mxu0
      %v8189 = vadd.f32 %v8004, %v8188
      %v8190 = vpop.f32.mrb[0].mxu0
      %8191 = vmatprep.mubr.f32.mxu0 0.0
      %v8192 = vand.u32 %v7598, 4294901760
      %v8193 = vsub.f32 %v7598, %v8192
      %8194 = vmatmul.mubr.f32.gmra.mrb[0].mxu0 %v8193
      %v8195 = vpop.f32.mrb[0].mxu0
      %v8196 = vadd.f32 %v8010, %v8195
      %v8197 = vpop.f32.mrb[0].mxu0
      %8198 = vmatprep.mubr.f32.mxu0 0.0
      %v8199 = vand.u32 %v7601, 4294901760
      %v8200 = vsub.f32 %v7601, %v8199
      %8201 = vmatmul.mubr.f32.gmra.mrb[0].mxu0 %v8200
      %v8202 = vpop.f32.mrb[0].mxu0
      %v8203 = vadd.f32 %v8016, %v8202
      %v8204 = vpop.f32.mrb[0].mxu0
      %8205 = vmatprep.mubr.f32.mxu0 0.0
      %v8206 = vand.u32 %v7604, 4294901760
      %v8207 = vsub.f32 %v7604, %v8206
      %8208 = vmatmul.mubr.f32.gmra.mrb[0].mxu0 %v8207
      %v8209 = vpop.f32.mrb[0].mxu0
      %v8210 = vadd.f32 %v8022, %v8209
      %v8211 = vpop.f32.mrb[0].mxu0
      %8212 = vmatprep.mubr.f32.mxu0 0.0
      %v8213 = vand.u32 %v7607, 4294901760
      %v8214 = vsub.f32 %v7607, %v8213
      %8215 = vmatmul.mubr.f32.gmra.mrb[0].mxu0 %v8214
      %v8216 = vpop.f32.mrb[0].mxu0
      %v8217 = vadd.f32 %v8028, %v8216
      %v8218 = vpop.f32.mrb[0].mxu0
      %8219 = vmatprep.mubr.f32.mxu0 0.0
      %v8220 = vand.u32 %v7610, 4294901760
      %v8221 = vsub.f32 %v7610, %v8220
      %8222 = vmatmul.mubr.f32.gmra.mrb[0].mxu0 %v8221
      %v8223 = vpop.f32.mrb[0].mxu0
      %v8224 = vadd.f32 %v8034, %v8223
      %v8225 = vpop.f32.mrb[0].mxu0
      %8226 = vmatprep.mubr.f32.mxu0 0.0
      %v8227 = vand.u32 %v7613, 4294901760
      %v8228 = vsub.f32 %v7613, %v8227
      %8229 = vmatmul.mubr.f32.gmra.mrb[0].mxu0 %v8228
      %v8230 = vpop.f32.mrb[0].mxu0
      %v8231 = vadd.f32 %v8040, %v8230
      %v8232 = vpop.f32.mrb[0].mxu0
      %8233 = vmatprep.mubr.f32.mxu0 0.0
      %v8234 = vand.u32 %v7616, 4294901760
      %v8235 = vsub.f32 %v7616, %v8234
      %8236 = vmatmul.mubr.f32.gmra.mrb[0].mxu0 %v8235
      %v8237 = vpop.f32.mrb[0].mxu0
      %v8238 = vadd.f32 %v8046, %v8237
      %v8239 = vpop.f32.mrb[0].mxu0
      %8240 = vmatprep.mubr.f32.mxu0 0.0
      %v8241 = vand.u32 %v7619, 4294901760
      %v8242 = vsub.f32 %v7619, %v8241
      %8243 = vmatmul.mubr.f32.gmra.mrb[0].mxu0 %v8242
      %v8244 = vpop.f32.mrb[0].mxu0
      %v8245 = vadd.f32 %v8052, %v8244
      %v8246 = vpop.f32.mrb[0].mxu0
      %8247 = vdwg.mxu0
      %8248 = vmatprep.subr.mxu0 0.0
      %v8249 = vand.u32 %v214, 4294901760
      %8250 = vmatpush1.msra.mxu0 %v8249
      %8251 = vmatprep.subr.mxu0 0.0
      %v8252 = vand.u32 %v215, 4294901760
      %8253 = vmatpush1.msra.mxu0 %v8252
      %8254 = vmatprep.subr.mxu0 0.0
      %v8255 = vand.u32 %v216, 4294901760
      %8256 = vmatpush1.msra.mxu0 %v8255
      %8257 = vmatprep.subr.mxu0 0.0
      %v8258 = vand.u32 %v217, 4294901760
      %8259 = vmatpush1.msra.mxu0 %v8258
      %8260 = vmatprep.subr.mxu0 0.0
      %v8261 = vand.u32 %v218, 4294901760
      %8262 = vmatpush1.msra.mxu0 %v8261
      %8263 = vmatprep.subr.mxu0 0.0
      %v8264 = vand.u32 %v219, 4294901760
      %8265 = vmatpush1.msra.mxu0 %v8264
      %8266 = vmatprep.subr.mxu0 0.0
      %v8267 = vand.u32 %v220, 4294901760
      %8268 = vmatpush1.msra.mxu0 %v8267
      %8269 = vmatprep.subr.mxu0 0.0
      %v8270 = vand.u32 %v221, 4294901760
      %8271 = vmatpush1.msra.mxu0 %v8270
      %8272 = vmatprep.subr.mxu0 0.0
      %8273 = vmatpush1.msra.mxu0 0.0
      %8274 = vmatprep.subr.mxu0 0.0
      %8275 = vmatpush1.msra.mxu0 0.0
      %8276 = vmatprep.subr.mxu0 0.0
      %8277 = vmatpush1.msra.mxu0 0.0
      %8278 = vmatprep.subr.mxu0 0.0
      %8279 = vmatpush1.msra.mxu0 0.0
      %8280 = vmatprep.subr.mxu0 0.0
      %8281 = vmatpush1.msra.mxu0 0.0
      %8282 = vmatprep.subr.mxu0 0.0
      %8283 = vmatpush1.msra.mxu0 0.0
      %8284 = vmatprep.subr.mxu0 0.0
      %8285 = vmatpush1.msra.mxu0 0.0
      %8286 = vmatprep.subr.mxu0 0.0
      %8287 = vmatpush1.msra.mxu0 0.0
      %8288 = vmatprep.subr.mxu0 0.0
      %8289 = vmatpush1.msra.mxu0 0.0
      %8290 = vmatprep.subr.mxu0 0.0
      %8291 = vmatpush1.msra.mxu0 0.0
      %8292 = vmatprep.subr.mxu0 0.0
      %8293 = vmatpush1.msra.mxu0 0.0
      %8294 = vmatprep.subr.mxu0 0.0
      %8295 = vmatpush1.msra.mxu0 0.0
      %8296 = vmatprep.subr.mxu0 0.0
      %8297 = vmatpush1.msra.mxu0 0.0
      %8298 = vmatprep.subr.mxu0 0.0
      %8299 = vmatpush1.msra.mxu0 0.0
      %8300 = vmatprep.subr.mxu0 0.0
      %8301 = vmatpush1.msra.mxu0 0.0
      %8302 = vmatprep.subr.mxu0 0.0
      %8303 = vmatpush1.msra.mxu0 0.0
      %8304 = vmatprep.subr.mxu0 0.0
      %8305 = vmatpush1.msra.mxu0 0.0
      %8306 = vmatprep.subr.mxu0 0.0
      %8307 = vmatpush1.msra.mxu0 0.0
      %8308 = vmatprep.subr.mxu0 0.0
      %8309 = vmatpush1.msra.mxu0 0.0
      %8310 = vmatprep.subr.mxu0 0.0
      %8311 = vmatpush1.msra.mxu0 0.0
      %8312 = vmatprep.subr.mxu0 0.0
      %8313 = vmatpush1.msra.mxu0 0.0
      %8314 = vmatprep.subr.mxu0 0.0
      %8315 = vmatpush1.msra.mxu0 0.0
      %8316 = vmatprep.subr.mxu0 0.0
      %8317 = vmatpush1.msra.mxu0 0.0
      %8318 = vmatprep.subr.mxu0 0.0
      %8319 = vmatpush1.msra.mxu0 0.0
      %8320 = vmatprep.mubr.f32.mxu0 0.0
      %v8321 = vand.u32 %v7574, 4294901760
      %v8322 = vsub.f32 %v7574, %v8321
      %v8323 = vand.u32 %v8322, 4294901760
      %8324 = vmatmul.mubr.f32.gmra.mrb[0].mxu0 %v8323
      %v8325 = vpop.f32.mrb[0].mxu0
      %v8326 = vadd.f32 %v8140, %v8325
      %v8327 = vpop.f32.mrb[0].mxu0
      %8328 = vmatprep.mubr.f32.mxu0 0.0
      %v8329 = vand.u32 %v7577, 4294901760
      %v8330 = vsub.f32 %v7577, %v8329
      %v8331 = vand.u32 %v8330, 4294901760
      %8332 = vmatmul.mubr.f32.gmra.mrb[0].mxu0 %v8331
      %v8333 = vpop.f32.mrb[0].mxu0
      %v8334 = vadd.f32 %v8147, %v8333
      %v8335 = vpop.f32.mrb[0].mxu0
      %8336 = vmatprep.mubr.f32.mxu0 0.0
      %v8337 = vand.u32 %v7580, 4294901760
      %v8338 = vsub.f32 %v7580, %v8337
      %v8339 = vand.u32 %v8338, 4294901760
      %8340 = vmatmul.mubr.f32.gmra.mrb[0].mxu0 %v8339
      %v8341 = vpop.f32.mrb[0].mxu0
      %v8342 = vadd.f32 %v8154, %v8341
      %v8343 = vpop.f32.mrb[0].mxu0
      %8344 = vmatprep.mubr.f32.mxu0 0.0
      %v8345 = vand.u32 %v7583, 4294901760
      %v8346 = vsub.f32 %v7583, %v8345
      %v8347 = vand.u32 %v8346, 4294901760
      %8348 = vmatmul.mubr.f32.gmra.mrb[0].mxu0 %v8347
      %v8349 = vpop.f32.mrb[0].mxu0
      %v8350 = vadd.f32 %v8161, %v8349
      %v8351 = vpop.f32.mrb[0].mxu0
      %8352 = vmatprep.mubr.f32.mxu0 0.0
      %v8353 = vand.u32 %v7586, 4294901760
      %v8354 = vsub.f32 %v7586, %v8353
      %v8355 = vand.u32 %v8354, 4294901760
      %8356 = vmatmul.mubr.f32.gmra.mrb[0].mxu0 %v8355
      %v8357 = vpop.f32.mrb[0].mxu0
      %v8358 = vadd.f32 %v8168, %v8357
      %v8359 = vpop.f32.mrb[0].mxu0
      %8360 = vmatprep.mubr.f32.mxu0 0.0
      %v8361 = vand.u32 %v7589, 4294901760
      %v8362 = vsub.f32 %v7589, %v8361
      %v8363 = vand.u32 %v8362, 4294901760
      %8364 = vmatmul.mubr.f32.gmra.mrb[0].mxu0 %v8363
      %v8365 = vpop.f32.mrb[0].mxu0
      %v8366 = vadd.f32 %v8175, %v8365
      %v8367 = vpop.f32.mrb[0].mxu0
      %8368 = vmatprep.mubr.f32.mxu0 0.0
      %v8369 = vand.u32 %v7592, 4294901760
      %v8370 = vsub.f32 %v7592, %v8369
      %v8371 = vand.u32 %v8370, 4294901760
      %8372 = vmatmul.mubr.f32.gmra.mrb[0].mxu0 %v8371
      %v8373 = vpop.f32.mrb[0].mxu0
      %v8374 = vadd.f32 %v8182, %v8373
      %v8375 = vpop.f32.mrb[0].mxu0
      %8376 = vmatprep.mubr.f32.mxu0 0.0
      %v8377 = vand.u32 %v7595, 4294901760
      %v8378 = vsub.f32 %v7595, %v8377
      %v8379 = vand.u32 %v8378, 4294901760
      %8380 = vmatmul.mubr.f32.gmra.mrb[0].mxu0 %v8379
      %v8381 = vpop.f32.mrb[0].mxu0
      %v8382 = vadd.f32 %v8189, %v8381
      %v8383 = vpop.f32.mrb[0].mxu0
      %8384 = vmatprep.mubr.f32.mxu0 0.0
      %v8385 = vand.u32 %v7598, 4294901760
      %v8386 = vsub.f32 %v7598, %v8385
      %v8387 = vand.u32 %v8386, 4294901760
      %8388 = vmatmul.mubr.f32.gmra.mrb[0].mxu0 %v8387
      %v8389 = vpop.f32.mrb[0].mxu0
      %v8390 = vadd.f32 %v8196, %v8389
      %v8391 = vpop.f32.mrb[0].mxu0
      %8392 = vmatprep.mubr.f32.mxu0 0.0
      %v8393 = vand.u32 %v7601, 4294901760
      %v8394 = vsub.f32 %v7601, %v8393
      %v8395 = vand.u32 %v8394, 4294901760
      %8396 = vmatmul.mubr.f32.gmra.mrb[0].mxu0 %v8395
      %v8397 = vpop.f32.mrb[0].mxu0
      %v8398 = vadd.f32 %v8203, %v8397
      %v8399 = vpop.f32.mrb[0].mxu0
      %8400 = vmatprep.mubr.f32.mxu0 0.0
      %v8401 = vand.u32 %v7604, 4294901760
      %v8402 = vsub.f32 %v7604, %v8401
      %v8403 = vand.u32 %v8402, 4294901760
      %8404 = vmatmul.mubr.f32.gmra.mrb[0].mxu0 %v8403
      %v8405 = vpop.f32.mrb[0].mxu0
      %v8406 = vadd.f32 %v8210, %v8405
      %v8407 = vpop.f32.mrb[0].mxu0
      %8408 = vmatprep.mubr.f32.mxu0 0.0
      %v8409 = vand.u32 %v7607, 4294901760
      %v8410 = vsub.f32 %v7607, %v8409
      %v8411 = vand.u32 %v8410, 4294901760
      %8412 = vmatmul.mubr.f32.gmra.mrb[0].mxu0 %v8411
      %v8413 = vpop.f32.mrb[0].mxu0
      %v8414 = vadd.f32 %v8217, %v8413
      %v8415 = vpop.f32.mrb[0].mxu0
      %8416 = vmatprep.mubr.f32.mxu0 0.0
      %v8417 = vand.u32 %v7610, 4294901760
      %v8418 = vsub.f32 %v7610, %v8417
      %v8419 = vand.u32 %v8418, 4294901760
      %8420 = vmatmul.mubr.f32.gmra.mrb[0].mxu0 %v8419
      %v8421 = vpop.f32.mrb[0].mxu0
      %v8422 = vadd.f32 %v8224, %v8421
      %v8423 = vpop.f32.mrb[0].mxu0
      %8424 = vmatprep.mubr.f32.mxu0 0.0
      %v8425 = vand.u32 %v7613, 4294901760
      %v8426 = vsub.f32 %v7613, %v8425
      %v8427 = vand.u32 %v8426, 4294901760
      %8428 = vmatmul.mubr.f32.gmra.mrb[0].mxu0 %v8427
      %v8429 = vpop.f32.mrb[0].mxu0
      %v8430 = vadd.f32 %v8231, %v8429
      %v8431 = vpop.f32.mrb[0].mxu0
      %8432 = vmatprep.mubr.f32.mxu0 0.0
      %v8433 = vand.u32 %v7616, 4294901760
      %v8434 = vsub.f32 %v7616, %v8433
      %v8435 = vand.u32 %v8434, 4294901760
      %8436 = vmatmul.mubr.f32.gmra.mrb[0].mxu0 %v8435
      %v8437 = vpop.f32.mrb[0].mxu0
      %v8438 = vadd.f32 %v8238, %v8437
      %v8439 = vpop.f32.mrb[0].mxu0
      %8440 = vmatprep.mubr.f32.mxu0 0.0
      %v8441 = vand.u32 %v7619, 4294901760
      %v8442 = vsub.f32 %v7619, %v8441
      %v8443 = vand.u32 %v8442, 4294901760
      %8444 = vmatmul.mubr.f32.gmra.mrb[0].mxu0 %v8443
      %v8445 = vpop.f32.mrb[0].mxu0
      %v8446 = vadd.f32 %v8245, %v8445
      %v8447 = vpop.f32.mrb[0].mxu0
      %8448 = vdwg.mxu0
      %8449 = vmatprep.subr.mxu0 0.0
      %v8450 = vand.u32 %v214, 4294901760
      %v8451 = vsub.f32 %v214, %v8450
      %v8452 = vand.u32 %v8451, 4294901760
      %8453 = vmatpush1.msra.mxu0 %v8452
      %8454 = vmatprep.subr.mxu0 0.0
      %v8455 = vand.u32 %v215, 4294901760
      %v8456 = vsub.f32 %v215, %v8455
      %v8457 = vand.u32 %v8456, 4294901760
      %8458 = vmatpush1.msra.mxu0 %v8457
      %8459 = vmatprep.subr.mxu0 0.0
      %v8460 = vand.u32 %v216, 4294901760
      %v8461 = vsub.f32 %v216, %v8460
      %v8462 = vand.u32 %v8461, 4294901760
      %8463 = vmatpush1.msra.mxu0 %v8462
      %8464 = vmatprep.subr.mxu0 0.0
      %v8465 = vand.u32 %v217, 4294901760
      %v8466 = vsub.f32 %v217, %v8465
      %v8467 = vand.u32 %v8466, 4294901760
      %8468 = vmatpush1.msra.mxu0 %v8467
      %8469 = vmatprep.subr.mxu0 0.0
      %v8470 = vand.u32 %v218, 4294901760
      %v8471 = vsub.f32 %v218, %v8470
      %v8472 = vand.u32 %v8471, 4294901760
      %8473 = vmatpush1.msra.mxu0 %v8472
      %8474 = vmatprep.subr.mxu0 0.0
      %v8475 = vand.u32 %v219, 4294901760
      %v8476 = vsub.f32 %v219, %v8475
      %v8477 = vand.u32 %v8476, 4294901760
      %8478 = vmatpush1.msra.mxu0 %v8477
      %8479 = vmatprep.subr.mxu0 0.0
      %v8480 = vand.u32 %v220, 4294901760
      %v8481 = vsub.f32 %v220, %v8480
      %v8482 = vand.u32 %v8481, 4294901760
      %8483 = vmatpush1.msra.mxu0 %v8482
      %8484 = vmatprep.subr.mxu0 0.0
      %v8485 = vand.u32 %v221, 4294901760
      %v8486 = vsub.f32 %v221, %v8485
      %v8487 = vand.u32 %v8486, 4294901760
      %8488 = vmatpush1.msra.mxu0 %v8487
      %8489 = vmatprep.subr.mxu0 0.0
      %8490 = vmatpush1.msra.mxu0 0.0
      %8491 = vmatprep.subr.mxu0 0.0
      %8492 = vmatpush1.msra.mxu0 0.0
      %8493 = vmatprep.subr.mxu0 0.0
      %8494 = vmatpush1.msra.mxu0 0.0
      %8495 = vmatprep.subr.mxu0 0.0
      %8496 = vmatpush1.msra.mxu0 0.0
      %8497 = vmatprep.subr.mxu0 0.0
      %8498 = vmatpush1.msra.mxu0 0.0
      %8499 = vmatprep.subr.mxu0 0.0
      %8500 = vmatpush1.msra.mxu0 0.0
      %8501 = vmatprep.subr.mxu0 0.0
      %8502 = vmatpush1.msra.mxu0 0.0
      %8503 = vmatprep.subr.mxu0 0.0
      %8504 = vmatpush1.msra.mxu0 0.0
      %8505 = vmatprep.subr.mxu0 0.0
      %8506 = vmatpush1.msra.mxu0 0.0
      %8507 = vmatprep.subr.mxu0 0.0
      %8508 = vmatpush1.msra.mxu0 0.0
      %8509 = vmatprep.subr.mxu0 0.0
      %8510 = vmatpush1.msra.mxu0 0.0
      %8511 = vmatprep.subr.mxu0 0.0
      %8512 = vmatpush1.msra.mxu0 0.0
      %8513 = vmatprep.subr.mxu0 0.0
      %8514 = vmatpush1.msra.mxu0 0.0
      %8515 = vmatprep.subr.mxu0 0.0
      %8516 = vmatpush1.msra.mxu0 0.0
      %8517 = vmatprep.subr.mxu0 0.0
      %8518 = vmatpush1.msra.mxu0 0.0
      %8519 = vmatprep.subr.mxu0 0.0
      %8520 = vmatpush1.msra.mxu0 0.0
      %8521 = vmatprep.subr.mxu0 0.0
      %8522 = vmatpush1.msra.mxu0 0.0
      %8523 = vmatprep.subr.mxu0 0.0
      %8524 = vmatpush1.msra.mxu0 0.0
      %8525 = vmatprep.subr.mxu0 0.0
      %8526 = vmatpush1.msra.mxu0 0.0
      %8527 = vmatprep.subr.mxu0 0.0
      %8528 = vmatpush1.msra.mxu0 0.0
      %8529 = vmatprep.subr.mxu0 0.0
      %8530 = vmatpush1.msra.mxu0 0.0
      %8531 = vmatprep.subr.mxu0 0.0
      %8532 = vmatpush1.msra.mxu0 0.0
      %8533 = vmatprep.subr.mxu0 0.0
      %8534 = vmatpush1.msra.mxu0 0.0
      %8535 = vmatprep.subr.mxu0 0.0
      %8536 = vmatpush1.msra.mxu0 0.0
      %8537 = vmatprep.mubr.f32.mxu0 0.0
      %v8538 = vand.u32 %v7574, 4294901760
      %8539 = vmatmul.mubr.f32.gmra.mrb[0].mxu0 %v8538
      %v8540 = vpop.f32.mrb[0].mxu0
      %v8541 = vadd.f32 %v8326, %v8540
      %v8542 = vpop.f32.mrb[0].mxu0
      %8543 = vmatprep.mubr.f32.mxu0 0.0
      %v8544 = vand.u32 %v7577, 4294901760
      %8545 = vmatmul.mubr.f32.gmra.mrb[0].mxu0 %v8544
      %v8546 = vpop.f32.mrb[0].mxu0
      %v8547 = vadd.f32 %v8334, %v8546
      %v8548 = vpop.f32.mrb[0].mxu0
      %8549 = vmatprep.mubr.f32.mxu0 0.0
      %v8550 = vand.u32 %v7580, 4294901760
      %8551 = vmatmul.mubr.f32.gmra.mrb[0].mxu0 %v8550
      %v8552 = vpop.f32.mrb[0].mxu0
      %v8553 = vadd.f32 %v8342, %v8552
      %v8554 = vpop.f32.mrb[0].mxu0
      %8555 = vmatprep.mubr.f32.mxu0 0.0
      %v8556 = vand.u32 %v7583, 4294901760
      %8557 = vmatmul.mubr.f32.gmra.mrb[0].mxu0 %v8556
      %v8558 = vpop.f32.mrb[0].mxu0
      %v8559 = vadd.f32 %v8350, %v8558
      %v8560 = vpop.f32.mrb[0].mxu0
      %8561 = vmatprep.mubr.f32.mxu0 0.0
      %v8562 = vand.u32 %v7586, 4294901760
      %8563 = vmatmul.mubr.f32.gmra.mrb[0].mxu0 %v8562
      %v8564 = vpop.f32.mrb[0].mxu0
      %v8565 = vadd.f32 %v8358, %v8564
      %v8566 = vpop.f32.mrb[0].mxu0
      %8567 = vmatprep.mubr.f32.mxu0 0.0
      %v8568 = vand.u32 %v7589, 4294901760
      %8569 = vmatmul.mubr.f32.gmra.mrb[0].mxu0 %v8568
      %v8570 = vpop.f32.mrb[0].mxu0
      %v8571 = vadd.f32 %v8366, %v8570
      %v8572 = vpop.f32.mrb[0].mxu0
      %8573 = vmatprep.mubr.f32.mxu0 0.0
      %v8574 = vand.u32 %v7592, 4294901760
      %8575 = vmatmul.mubr.f32.gmra.mrb[0].mxu0 %v8574
      %v8576 = vpop.f32.mrb[0].mxu0
      %v8577 = vadd.f32 %v8374, %v8576
      %v8578 = vpop.f32.mrb[0].mxu0
      %8579 = vmatprep.mubr.f32.mxu0 0.0
      %v8580 = vand.u32 %v7595, 4294901760
      %8581 = vmatmul.mubr.f32.gmra.mrb[0].mxu0 %v8580
      %v8582 = vpop.f32.mrb[0].mxu0
      %v8583 = vadd.f32 %v8382, %v8582
      %v8584 = vpop.f32.mrb[0].mxu0
      %8585 = vmatprep.mubr.f32.mxu0 0.0
      %v8586 = vand.u32 %v7598, 4294901760
      %8587 = vmatmul.mubr.f32.gmra.mrb[0].mxu0 %v8586
      %v8588 = vpop.f32.mrb[0].mxu0
      %v8589 = vadd.f32 %v8390, %v8588
      %v8590 = vpop.f32.mrb[0].mxu0
      %8591 = vmatprep.mubr.f32.mxu0 0.0
      %v8592 = vand.u32 %v7601, 4294901760
      %8593 = vmatmul.mubr.f32.gmra.mrb[0].mxu0 %v8592
      %v8594 = vpop.f32.mrb[0].mxu0
      %v8595 = vadd.f32 %v8398, %v8594
      %v8596 = vpop.f32.mrb[0].mxu0
      %8597 = vmatprep.mubr.f32.mxu0 0.0
      %v8598 = vand.u32 %v7604, 4294901760
      %8599 = vmatmul.mubr.f32.gmra.mrb[0].mxu0 %v8598
      %v8600 = vpop.f32.mrb[0].mxu0
      %v8601 = vadd.f32 %v8406, %v8600
      %v8602 = vpop.f32.mrb[0].mxu0
      %8603 = vmatprep.mubr.f32.mxu0 0.0
      %v8604 = vand.u32 %v7607, 4294901760
      %8605 = vmatmul.mubr.f32.gmra.mrb[0].mxu0 %v8604
      %v8606 = vpop.f32.mrb[0].mxu0
      %v8607 = vadd.f32 %v8414, %v8606
      %v8608 = vpop.f32.mrb[0].mxu0
      %8609 = vmatprep.mubr.f32.mxu0 0.0
      %v8610 = vand.u32 %v7610, 4294901760
      %8611 = vmatmul.mubr.f32.gmra.mrb[0].mxu0 %v8610
      %v8612 = vpop.f32.mrb[0].mxu0
      %v8613 = vadd.f32 %v8422, %v8612
      %v8614 = vpop.f32.mrb[0].mxu0
      %8615 = vmatprep.mubr.f32.mxu0 0.0
      %v8616 = vand.u32 %v7613, 4294901760
      %8617 = vmatmul.mubr.f32.gmra.mrb[0].mxu0 %v8616
      %v8618 = vpop.f32.mrb[0].mxu0
      %v8619 = vadd.f32 %v8430, %v8618
      %v8620 = vpop.f32.mrb[0].mxu0
      %8621 = vmatprep.mubr.f32.mxu0 0.0
      %v8622 = vand.u32 %v7616, 4294901760
      %8623 = vmatmul.mubr.f32.gmra.mrb[0].mxu0 %v8622
      %v8624 = vpop.f32.mrb[0].mxu0
      %v8625 = vadd.f32 %v8438, %v8624
      %v8626 = vpop.f32.mrb[0].mxu0
      %8627 = vmatprep.mubr.f32.mxu0 0.0
      %v8628 = vand.u32 %v7619, 4294901760
      %8629 = vmatmul.mubr.f32.gmra.mrb[0].mxu0 %v8628
      %v8630 = vpop.f32.mrb[0].mxu0
      %v8631 = vadd.f32 %v8446, %v8630
      %v8632 = vpop.f32.mrb[0].mxu0
      %8633 = vdwg.mxu0
      %8634 = vmatprep.subr.mxu0 0.0
      %v8635 = vand.u32 %v214, 4294901760
      %8636 = vmatpush1.msra.mxu0 %v8635
      %8637 = vmatprep.subr.mxu0 0.0
      %v8638 = vand.u32 %v215, 4294901760
      %8639 = vmatpush1.msra.mxu0 %v8638
      %8640 = vmatprep.subr.mxu0 0.0
      %v8641 = vand.u32 %v216, 4294901760
      %8642 = vmatpush1.msra.mxu0 %v8641
      %8643 = vmatprep.subr.mxu0 0.0
      %v8644 = vand.u32 %v217, 4294901760
      %8645 = vmatpush1.msra.mxu0 %v8644
      %8646 = vmatprep.subr.mxu0 0.0
      %v8647 = vand.u32 %v218, 4294901760
      %8648 = vmatpush1.msra.mxu0 %v8647
      %8649 = vmatprep.subr.mxu0 0.0
      %v8650 = vand.u32 %v219, 4294901760
      %8651 = vmatpush1.msra.mxu0 %v8650
      %8652 = vmatprep.subr.mxu0 0.0
      %v8653 = vand.u32 %v220, 4294901760
      %8654 = vmatpush1.msra.mxu0 %v8653
      %8655 = vmatprep.subr.mxu0 0.0
      %v8656 = vand.u32 %v221, 4294901760
      %8657 = vmatpush1.msra.mxu0 %v8656
      %8658 = vmatprep.subr.mxu0 0.0
      %8659 = vmatpush1.msra.mxu0 0.0
      %8660 = vmatprep.subr.mxu0 0.0
      %8661 = vmatpush1.msra.mxu0 0.0
      %8662 = vmatprep.subr.mxu0 0.0
      %8663 = vmatpush1.msra.mxu0 0.0
      %8664 = vmatprep.subr.mxu0 0.0
      %8665 = vmatpush1.msra.mxu0 0.0
      %8666 = vmatprep.subr.mxu0 0.0
      %8667 = vmatpush1.msra.mxu0 0.0
      %8668 = vmatprep.subr.mxu0 0.0
      %8669 = vmatpush1.msra.mxu0 0.0
      %8670 = vmatprep.subr.mxu0 0.0
      %8671 = vmatpush1.msra.mxu0 0.0
      %8672 = vmatprep.subr.mxu0 0.0
      %8673 = vmatpush1.msra.mxu0 0.0
      %8674 = vmatprep.subr.mxu0 0.0
      %8675 = vmatpush1.msra.mxu0 0.0
      %8676 = vmatprep.subr.mxu0 0.0
      %8677 = vmatpush1.msra.mxu0 0.0
      %8678 = vmatprep.subr.mxu0 0.0
      %8679 = vmatpush1.msra.mxu0 0.0
      %8680 = vmatprep.subr.mxu0 0.0
      %8681 = vmatpush1.msra.mxu0 0.0
      %8682 = vmatprep.subr.mxu0 0.0
      %8683 = vmatpush1.msra.mxu0 0.0
      %8684 = vmatprep.subr.mxu0 0.0
      %8685 = vmatpush1.msra.mxu0 0.0
      %8686 = vmatprep.subr.mxu0 0.0
      %8687 = vmatpush1.msra.mxu0 0.0
      %8688 = vmatprep.subr.mxu0 0.0
      %8689 = vmatpush1.msra.mxu0 0.0
      %8690 = vmatprep.subr.mxu0 0.0
      %8691 = vmatpush1.msra.mxu0 0.0
      %8692 = vmatprep.subr.mxu0 0.0
      %8693 = vmatpush1.msra.mxu0 0.0
      %8694 = vmatprep.subr.mxu0 0.0
      %8695 = vmatpush1.msra.mxu0 0.0
      %8696 = vmatprep.subr.mxu0 0.0
      %8697 = vmatpush1.msra.mxu0 0.0
      %8698 = vmatprep.subr.mxu0 0.0
      %8699 = vmatpush1.msra.mxu0 0.0
      %8700 = vmatprep.subr.mxu0 0.0
      %8701 = vmatpush1.msra.mxu0 0.0
      %8702 = vmatprep.subr.mxu0 0.0
      %8703 = vmatpush1.msra.mxu0 0.0
      %8704 = vmatprep.subr.mxu0 0.0
      %8705 = vmatpush1.msra.mxu0 0.0
      %8706 = vmatprep.mubr.f32.mxu0 0.0
      %v8707 = vand.u32 %v7574, 4294901760
      %8708 = vmatmul.mubr.f32.gmra.mrb[0].mxu0 %v8707
      %v8709 = vpop.f32.mrb[0].mxu0
      %v8710 = vadd.f32 %v8541, %v8709
      %v8711 = vpop.f32.mrb[0].mxu0
      %8712 = vmatprep.mubr.f32.mxu0 0.0
      %v8713 = vand.u32 %v7577, 4294901760
      %8714 = vmatmul.mubr.f32.gmra.mrb[0].mxu0 %v8713
      %v8715 = vpop.f32.mrb[0].mxu0
      %v8716 = vadd.f32 %v8547, %v8715
      %v8717 = vpop.f32.mrb[0].mxu0
      %8718 = vmatprep.mubr.f32.mxu0 0.0
      %v8719 = vand.u32 %v7580, 4294901760
      %8720 = vmatmul.mubr.f32.gmra.mrb[0].mxu0 %v8719
      %v8721 = vpop.f32.mrb[0].mxu0
      %v8722 = vadd.f32 %v8553, %v8721
      %v8723 = vpop.f32.mrb[0].mxu0
      %8724 = vmatprep.mubr.f32.mxu0 0.0
      %v8725 = vand.u32 %v7583, 4294901760
      %8726 = vmatmul.mubr.f32.gmra.mrb[0].mxu0 %v8725
      %v8727 = vpop.f32.mrb[0].mxu0
      %v8728 = vadd.f32 %v8559, %v8727
      %v8729 = vpop.f32.mrb[0].mxu0
      %8730 = vmatprep.mubr.f32.mxu0 0.0
      %v8731 = vand.u32 %v7586, 4294901760
      %8732 = vmatmul.mubr.f32.gmra.mrb[0].mxu0 %v8731
      %v8733 = vpop.f32.mrb[0].mxu0
      %v8734 = vadd.f32 %v8565, %v8733
      %v8735 = vpop.f32.mrb[0].mxu0
      %8736 = vmatprep.mubr.f32.mxu0 0.0
      %v8737 = vand.u32 %v7589, 4294901760
      %8738 = vmatmul.mubr.f32.gmra.mrb[0].mxu0 %v8737
      %v8739 = vpop.f32.mrb[0].mxu0
      %v8740 = vadd.f32 %v8571, %v8739
      %v8741 = vpop.f32.mrb[0].mxu0
      %8742 = vmatprep.mubr.f32.mxu0 0.0
      %v8743 = vand.u32 %v7592, 4294901760
      %8744 = vmatmul.mubr.f32.gmra.mrb[0].mxu0 %v8743
      %v8745 = vpop.f32.mrb[0].mxu0
      %v8746 = vadd.f32 %v8577, %v8745
      %v8747 = vpop.f32.mrb[0].mxu0
      %8748 = vmatprep.mubr.f32.mxu0 0.0
      %v8749 = vand.u32 %v7595, 4294901760
      %8750 = vmatmul.mubr.f32.gmra.mrb[0].mxu0 %v8749
      %v8751 = vpop.f32.mrb[0].mxu0
      %v8752 = vadd.f32 %v8583, %v8751
      %v8753 = vpop.f32.mrb[0].mxu0
      %8754 = vmatprep.mubr.f32.mxu0 0.0
      %v8755 = vand.u32 %v7598, 4294901760
      %8756 = vmatmul.mubr.f32.gmra.mrb[0].mxu0 %v8755
      %v8757 = vpop.f32.mrb[0].mxu0
      %v8758 = vadd.f32 %v8589, %v8757
      %v8759 = vpop.f32.mrb[0].mxu0
      %8760 = vmatprep.mubr.f32.mxu0 0.0
      %v8761 = vand.u32 %v7601, 4294901760
      %8762 = vmatmul.mubr.f32.gmra.mrb[0].mxu0 %v8761
      %v8763 = vpop.f32.mrb[0].mxu0
      %v8764 = vadd.f32 %v8595, %v8763
      %v8765 = vpop.f32.mrb[0].mxu0
      %8766 = vmatprep.mubr.f32.mxu0 0.0
      %v8767 = vand.u32 %v7604, 4294901760
      %8768 = vmatmul.mubr.f32.gmra.mrb[0].mxu0 %v8767
      %v8769 = vpop.f32.mrb[0].mxu0
      %v8770 = vadd.f32 %v8601, %v8769
      %v8771 = vpop.f32.mrb[0].mxu0
      %8772 = vmatprep.mubr.f32.mxu0 0.0
      %v8773 = vand.u32 %v7607, 4294901760
      %8774 = vmatmul.mubr.f32.gmra.mrb[0].mxu0 %v8773
      %v8775 = vpop.f32.mrb[0].mxu0
      %v8776 = vadd.f32 %v8607, %v8775
      %v8777 = vpop.f32.mrb[0].mxu0
      %8778 = vmatprep.mubr.f32.mxu0 0.0
      %v8779 = vand.u32 %v7610, 4294901760
      %8780 = vmatmul.mubr.f32.gmra.mrb[0].mxu0 %v8779
      %v8781 = vpop.f32.mrb[0].mxu0
      %v8782 = vadd.f32 %v8613, %v8781
      %v8783 = vpop.f32.mrb[0].mxu0
      %8784 = vmatprep.mubr.f32.mxu0 0.0
      %v8785 = vand.u32 %v7613, 4294901760
      %8786 = vmatmul.mubr.f32.gmra.mrb[0].mxu0 %v8785
      %v8787 = vpop.f32.mrb[0].mxu0
      %v8788 = vadd.f32 %v8619, %v8787
      %v8789 = vpop.f32.mrb[0].mxu0
      %8790 = vmatprep.mubr.f32.mxu0 0.0
      %v8791 = vand.u32 %v7616, 4294901760
      %8792 = vmatmul.mubr.f32.gmra.mrb[0].mxu0 %v8791
      %v8793 = vpop.f32.mrb[0].mxu0
      %v8794 = vadd.f32 %v8625, %v8793
      %v8795 = vpop.f32.mrb[0].mxu0
      %8796 = vmatprep.mubr.f32.mxu0 0.0
      %v8797 = vand.u32 %v7619, 4294901760
      %8798 = vmatmul.mubr.f32.gmra.mrb[0].mxu0 %v8797
      %v8799 = vpop.f32.mrb[0].mxu0
      %v8800 = vadd.f32 %v8631, %v8799
      %v8801 = vpop.f32.mrb[0].mxu0
      %8802 = vdwg.mxu0
      %s8803 = scalar_lea.vmem %s2, 48
      %v8804 = vld [vmem:[%s8803] sm:$0xff]
      %v8805 = vld [vmem:[%s8803 + $0x8] sm:$0xff]
      %v8807 = vsel %vm1471, %v8710, 0
      %v8810 = vsel %vm1471, %v8716, 0
      %v8813 = vsel %vm1471, %v8722, 0
      %v8816 = vsel %vm1471, %v8728, 0
      %v8819 = vsel %vm1471, %v8734, 0
      %v8822 = vsel %vm1471, %v8740, 0
      %v8825 = vsel %vm1471, %v8746, 0
      %v8828 = vsel %vm1471, %v8752, 0
      %v8831 = vsel %vm1471, %v8758, 0
      %v8834 = vsel %vm1471, %v8764, 0
      %v8837 = vsel %vm1471, %v8770, 0
      %v8840 = vsel %vm1471, %v8776, 0
      %v8843 = vsel %vm1471, %v8782, 0
      %v8846 = vsel %vm1471, %v8788, 0
      %v8849 = vsel %vm1471, %v8794, 0
      %v8852 = vsel %vm1471, %v8800, 0
      %8854 = vmatprep.subr.mxu0 0.0
      %v8855 = vand.u32 %v8804, 4294901760
      %8856 = vmatpush1.msra.mxu0 %v8855
      %8857 = vmatprep.subr.mxu0 0.0
      %v8858 = vand.u32 %v8805, 4294901760
      %8859 = vmatpush1.msra.mxu0 %v8858
      %8860 = vmatprep.subr.mxu0 0.0
      %8861 = vmatpush1.msra.mxu0 0.0
      %8862 = vmatprep.subr.mxu0 0.0
      %8863 = vmatpush1.msra.mxu0 0.0
      %8864 = vmatprep.subr.mxu0 0.0
      %8865 = vmatpush1.msra.mxu0 0.0
      %8866 = vmatprep.subr.mxu0 0.0
      %8867 = vmatpush1.msra.mxu0 0.0
      %8868 = vmatprep.subr.mxu0 0.0
      %8869 = vmatpush1.msra.mxu0 0.0
      %8870 = vmatprep.subr.mxu0 0.0
      %8871 = vmatpush1.msra.mxu0 0.0
      %8872 = vmatprep.subr.mxu0 0.0
      %8873 = vmatpush1.msra.mxu0 0.0
      %8874 = vmatprep.subr.mxu0 0.0
      %8875 = vmatpush1.msra.mxu0 0.0
      %8876 = vmatprep.subr.mxu0 0.0
      %8877 = vmatpush1.msra.mxu0 0.0
      %8878 = vmatprep.subr.mxu0 0.0
      %8879 = vmatpush1.msra.mxu0 0.0
      %8880 = vmatprep.subr.mxu0 0.0
      %8881 = vmatpush1.msra.mxu0 0.0
      %8882 = vmatprep.subr.mxu0 0.0
      %8883 = vmatpush1.msra.mxu0 0.0
      %8884 = vmatprep.subr.mxu0 0.0
      %8885 = vmatpush1.msra.mxu0 0.0
      %8886 = vmatprep.subr.mxu0 0.0
      %8887 = vmatpush1.msra.mxu0 0.0
      %8888 = vmatprep.subr.mxu0 0.0
      %8889 = vmatpush1.msra.mxu0 0.0
      %8890 = vmatprep.subr.mxu0 0.0
      %8891 = vmatpush1.msra.mxu0 0.0
      %8892 = vmatprep.subr.mxu0 0.0
      %8893 = vmatpush1.msra.mxu0 0.0
      %8894 = vmatprep.subr.mxu0 0.0
      %8895 = vmatpush1.msra.mxu0 0.0
      %8896 = vmatprep.subr.mxu0 0.0
      %8897 = vmatpush1.msra.mxu0 0.0
      %8898 = vmatprep.subr.mxu0 0.0
      %8899 = vmatpush1.msra.mxu0 0.0
      %8900 = vmatprep.subr.mxu0 0.0
      %8901 = vmatpush1.msra.mxu0 0.0
      %8902 = vmatprep.subr.mxu0 0.0
      %8903 = vmatpush1.msra.mxu0 0.0
      %8904 = vmatprep.subr.mxu0 0.0
      %8905 = vmatpush1.msra.mxu0 0.0
      %8906 = vmatprep.subr.mxu0 0.0
      %8907 = vmatpush1.msra.mxu0 0.0
      %8908 = vmatprep.subr.mxu0 0.0
      %8909 = vmatpush1.msra.mxu0 0.0
      %8910 = vmatprep.subr.mxu0 0.0
      %8911 = vmatpush1.msra.mxu0 0.0
      %8912 = vmatprep.subr.mxu0 0.0
      %8913 = vmatpush1.msra.mxu0 0.0
      %8914 = vmatprep.subr.mxu0 0.0
      %8915 = vmatpush1.msra.mxu0 0.0
      %8916 = vmatprep.subr.mxu0 0.0
      %8917 = vmatpush1.msra.mxu0 0.0
      %8918 = vmatprep.subr.mxu0 0.0
      %8919 = vmatpush1.msra.mxu0 0.0
      %8920 = vmatprep.mubr.f32.mxu0 0.0
      %v8921 = vand.u32 %v8807, 4294901760
      %v8922 = vsub.f32 %v8807, %v8921
      %v8923 = vand.u32 %v8922, 4294901760
      %v8924 = vsub.f32 %v8922, %v8923
      %v8925 = vand.u32 %v8924, 4294901760
      %8926 = vmatmul.mubr.f32.gmra.mrb[0].mxu0 %v8925
      %v8927 = vpop.f32.mrb[0].mxu0
      %v8928 = vadd.f32 0.0, %v8927
      %v8929 = vpop.f32.mrb[0].mxu0
      %8930 = vmatprep.mubr.f32.mxu0 0.0
      %v8931 = vand.u32 %v8810, 4294901760
      %v8932 = vsub.f32 %v8810, %v8931
      %v8933 = vand.u32 %v8932, 4294901760
      %v8934 = vsub.f32 %v8932, %v8933
      %v8935 = vand.u32 %v8934, 4294901760
      %8936 = vmatmul.mubr.f32.gmra.mrb[0].mxu0 %v8935
      %v8937 = vpop.f32.mrb[0].mxu0
      %v8938 = vadd.f32 0.0, %v8937
      %v8939 = vpop.f32.mrb[0].mxu0
      %8940 = vmatprep.mubr.f32.mxu0 0.0
      %v8941 = vand.u32 %v8813, 4294901760
      %v8942 = vsub.f32 %v8813, %v8941
      %v8943 = vand.u32 %v8942, 4294901760
      %v8944 = vsub.f32 %v8942, %v8943
      %v8945 = vand.u32 %v8944, 4294901760
      %8946 = vmatmul.mubr.f32.gmra.mrb[0].mxu0 %v8945
      %v8947 = vpop.f32.mrb[0].mxu0
      %v8948 = vadd.f32 0.0, %v8947
      %v8949 = vpop.f32.mrb[0].mxu0
      %8950 = vmatprep.mubr.f32.mxu0 0.0
      %v8951 = vand.u32 %v8816, 4294901760
      %v8952 = vsub.f32 %v8816, %v8951
      %v8953 = vand.u32 %v8952, 4294901760
      %v8954 = vsub.f32 %v8952, %v8953
      %v8955 = vand.u32 %v8954, 4294901760
      %8956 = vmatmul.mubr.f32.gmra.mrb[0].mxu0 %v8955
      %v8957 = vpop.f32.mrb[0].mxu0
      %v8958 = vadd.f32 0.0, %v8957
      %v8959 = vpop.f32.mrb[0].mxu0
      %8960 = vmatprep.mubr.f32.mxu0 0.0
      %v8961 = vand.u32 %v8819, 4294901760
      %v8962 = vsub.f32 %v8819, %v8961
      %v8963 = vand.u32 %v8962, 4294901760
      %v8964 = vsub.f32 %v8962, %v8963
      %v8965 = vand.u32 %v8964, 4294901760
      %8966 = vmatmul.mubr.f32.gmra.mrb[0].mxu0 %v8965
      %v8967 = vpop.f32.mrb[0].mxu0
      %v8968 = vadd.f32 0.0, %v8967
      %v8969 = vpop.f32.mrb[0].mxu0
      %8970 = vmatprep.mubr.f32.mxu0 0.0
      %v8971 = vand.u32 %v8822, 4294901760
      %v8972 = vsub.f32 %v8822, %v8971
      %v8973 = vand.u32 %v8972, 4294901760
      %v8974 = vsub.f32 %v8972, %v8973
      %v8975 = vand.u32 %v8974, 4294901760
      %8976 = vmatmul.mubr.f32.gmra.mrb[0].mxu0 %v8975
      %v8977 = vpop.f32.mrb[0].mxu0
      %v8978 = vadd.f32 0.0, %v8977
      %v8979 = vpop.f32.mrb[0].mxu0
      %8980 = vmatprep.mubr.f32.mxu0 0.0
      %v8981 = vand.u32 %v8825, 4294901760
      %v8982 = vsub.f32 %v8825, %v8981
      %v8983 = vand.u32 %v8982, 4294901760
      %v8984 = vsub.f32 %v8982, %v8983
      %v8985 = vand.u32 %v8984, 4294901760
      %8986 = vmatmul.mubr.f32.gmra.mrb[0].mxu0 %v8985
      %v8987 = vpop.f32.mrb[0].mxu0
      %v8988 = vadd.f32 0.0, %v8987
      %v8989 = vpop.f32.mrb[0].mxu0
      %8990 = vmatprep.mubr.f32.mxu0 0.0
      %v8991 = vand.u32 %v8828, 4294901760
      %v8992 = vsub.f32 %v8828, %v8991
      %v8993 = vand.u32 %v8992, 4294901760
      %v8994 = vsub.f32 %v8992, %v8993
      %v8995 = vand.u32 %v8994, 4294901760
      %8996 = vmatmul.mubr.f32.gmra.mrb[0].mxu0 %v8995
      %v8997 = vpop.f32.mrb[0].mxu0
      %v8998 = vadd.f32 0.0, %v8997
      %v8999 = vpop.f32.mrb[0].mxu0
      %9000 = vmatprep.mubr.f32.mxu0 0.0
      %v9001 = vand.u32 %v8831, 4294901760
      %v9002 = vsub.f32 %v8831, %v9001
      %v9003 = vand.u32 %v9002, 4294901760
      %v9004 = vsub.f32 %v9002, %v9003
      %v9005 = vand.u32 %v9004, 4294901760
      %9006 = vmatmul.mubr.f32.gmra.mrb[0].mxu0 %v9005
      %v9007 = vpop.f32.mrb[0].mxu0
      %v9008 = vadd.f32 0.0, %v9007
      %v9009 = vpop.f32.mrb[0].mxu0
      %9010 = vmatprep.mubr.f32.mxu0 0.0
      %v9011 = vand.u32 %v8834, 4294901760
      %v9012 = vsub.f32 %v8834, %v9011
      %v9013 = vand.u32 %v9012, 4294901760
      %v9014 = vsub.f32 %v9012, %v9013
      %v9015 = vand.u32 %v9014, 4294901760
      %9016 = vmatmul.mubr.f32.gmra.mrb[0].mxu0 %v9015
      %v9017 = vpop.f32.mrb[0].mxu0
      %v9018 = vadd.f32 0.0, %v9017
      %v9019 = vpop.f32.mrb[0].mxu0
      %9020 = vmatprep.mubr.f32.mxu0 0.0
      %v9021 = vand.u32 %v8837, 4294901760
      %v9022 = vsub.f32 %v8837, %v9021
      %v9023 = vand.u32 %v9022, 4294901760
      %v9024 = vsub.f32 %v9022, %v9023
      %v9025 = vand.u32 %v9024, 4294901760
      %9026 = vmatmul.mubr.f32.gmra.mrb[0].mxu0 %v9025
      %v9027 = vpop.f32.mrb[0].mxu0
      %v9028 = vadd.f32 0.0, %v9027
      %v9029 = vpop.f32.mrb[0].mxu0
      %9030 = vmatprep.mubr.f32.mxu0 0.0
      %v9031 = vand.u32 %v8840, 4294901760
      %v9032 = vsub.f32 %v8840, %v9031
      %v9033 = vand.u32 %v9032, 4294901760
      %v9034 = vsub.f32 %v9032, %v9033
      %v9035 = vand.u32 %v9034, 4294901760
      %9036 = vmatmul.mubr.f32.gmra.mrb[0].mxu0 %v9035
      %v9037 = vpop.f32.mrb[0].mxu0
      %v9038 = vadd.f32 0.0, %v9037
      %v9039 = vpop.f32.mrb[0].mxu0
      %9040 = vmatprep.mubr.f32.mxu0 0.0
      %v9041 = vand.u32 %v8843, 4294901760
      %v9042 = vsub.f32 %v8843, %v9041
      %v9043 = vand.u32 %v9042, 4294901760
      %v9044 = vsub.f32 %v9042, %v9043
      %v9045 = vand.u32 %v9044, 4294901760
      %9046 = vmatmul.mubr.f32.gmra.mrb[0].mxu0 %v9045
      %v9047 = vpop.f32.mrb[0].mxu0
      %v9048 = vadd.f32 0.0, %v9047
      %v9049 = vpop.f32.mrb[0].mxu0
      %9050 = vmatprep.mubr.f32.mxu0 0.0
      %v9051 = vand.u32 %v8846, 4294901760
      %v9052 = vsub.f32 %v8846, %v9051
      %v9053 = vand.u32 %v9052, 4294901760
      %v9054 = vsub.f32 %v9052, %v9053
      %v9055 = vand.u32 %v9054, 4294901760
      %9056 = vmatmul.mubr.f32.gmra.mrb[0].mxu0 %v9055
      %v9057 = vpop.f32.mrb[0].mxu0
      %v9058 = vadd.f32 0.0, %v9057
      %v9059 = vpop.f32.mrb[0].mxu0
      %9060 = vmatprep.mubr.f32.mxu0 0.0
      %v9061 = vand.u32 %v8849, 4294901760
      %v9062 = vsub.f32 %v8849, %v9061
      %v9063 = vand.u32 %v9062, 4294901760
      %v9064 = vsub.f32 %v9062, %v9063
      %v9065 = vand.u32 %v9064, 4294901760
      %9066 = vmatmul.mubr.f32.gmra.mrb[0].mxu0 %v9065
      %v9067 = vpop.f32.mrb[0].mxu0
      %v9068 = vadd.f32 0.0, %v9067
      %v9069 = vpop.f32.mrb[0].mxu0
      %9070 = vmatprep.mubr.f32.mxu0 0.0
      %v9071 = vand.u32 %v8852, 4294901760
      %v9072 = vsub.f32 %v8852, %v9071
      %v9073 = vand.u32 %v9072, 4294901760
      %v9074 = vsub.f32 %v9072, %v9073
      %v9075 = vand.u32 %v9074, 4294901760
      %9076 = vmatmul.mubr.f32.gmra.mrb[0].mxu0 %v9075
      %v9077 = vpop.f32.mrb[0].mxu0
      %v9078 = vadd.f32 0.0, %v9077
      %v9079 = vpop.f32.mrb[0].mxu0
      %9080 = vdwg.mxu0
      %9081 = vmatprep.subr.mxu0 0.0
      %v9082 = vand.u32 %v8804, 4294901760
      %v9083 = vsub.f32 %v8804, %v9082
      %v9084 = vand.u32 %v9083, 4294901760
      %v9085 = vsub.f32 %v9083, %v9084
      %v9086 = vand.u32 %v9085, 4294901760
      %9087 = vmatpush1.msra.mxu0 %v9086
      %9088 = vmatprep.subr.mxu0 0.0
      %v9089 = vand.u32 %v8805, 4294901760
      %v9090 = vsub.f32 %v8805, %v9089
      %v9091 = vand.u32 %v9090, 4294901760
      %v9092 = vsub.f32 %v9090, %v9091
      %v9093 = vand.u32 %v9092, 4294901760
      %9094 = vmatpush1.msra.mxu0 %v9093
      %9095 = vmatprep.subr.mxu0 0.0
      %9096 = vmatpush1.msra.mxu0 0.0
      %9097 = vmatprep.subr.mxu0 0.0
      %9098 = vmatpush1.msra.mxu0 0.0
      %9099 = vmatprep.subr.mxu0 0.0
      %9100 = vmatpush1.msra.mxu0 0.0
      %9101 = vmatprep.subr.mxu0 0.0
      %9102 = vmatpush1.msra.mxu0 0.0
      %9103 = vmatprep.subr.mxu0 0.0
      %9104 = vmatpush1.msra.mxu0 0.0
      %9105 = vmatprep.subr.mxu0 0.0
      %9106 = vmatpush1.msra.mxu0 0.0
      %9107 = vmatprep.subr.mxu0 0.0
      %9108 = vmatpush1.msra.mxu0 0.0
      %9109 = vmatprep.subr.mxu0 0.0
      %9110 = vmatpush1.msra.mxu0 0.0
      %9111 = vmatprep.subr.mxu0 0.0
      %9112 = vmatpush1.msra.mxu0 0.0
      %9113 = vmatprep.subr.mxu0 0.0
      %9114 = vmatpush1.msra.mxu0 0.0
      %9115 = vmatprep.subr.mxu0 0.0
      %9116 = vmatpush1.msra.mxu0 0.0
      %9117 = vmatprep.subr.mxu0 0.0
      %9118 = vmatpush1.msra.mxu0 0.0
      %9119 = vmatprep.subr.mxu0 0.0
      %9120 = vmatpush1.msra.mxu0 0.0
      %9121 = vmatprep.subr.mxu0 0.0
      %9122 = vmatpush1.msra.mxu0 0.0
      %9123 = vmatprep.subr.mxu0 0.0
      %9124 = vmatpush1.msra.mxu0 0.0
      %9125 = vmatprep.subr.mxu0 0.0
      %9126 = vmatpush1.msra.mxu0 0.0
      %9127 = vmatprep.subr.mxu0 0.0
      %9128 = vmatpush1.msra.mxu0 0.0
      %9129 = vmatprep.subr.mxu0 0.0
      %9130 = vmatpush1.msra.mxu0 0.0
      %9131 = vmatprep.subr.mxu0 0.0
      %9132 = vmatpush1.msra.mxu0 0.0
      %9133 = vmatprep.subr.mxu0 0.0
      %9134 = vmatpush1.msra.mxu0 0.0
      %9135 = vmatprep.subr.mxu0 0.0
      %9136 = vmatpush1.msra.mxu0 0.0
      %9137 = vmatprep.subr.mxu0 0.0
      %9138 = vmatpush1.msra.mxu0 0.0
      %9139 = vmatprep.subr.mxu0 0.0
      %9140 = vmatpush1.msra.mxu0 0.0
      %9141 = vmatprep.subr.mxu0 0.0
      %9142 = vmatpush1.msra.mxu0 0.0
      %9143 = vmatprep.subr.mxu0 0.0
      %9144 = vmatpush1.msra.mxu0 0.0
      %9145 = vmatprep.subr.mxu0 0.0
      %9146 = vmatpush1.msra.mxu0 0.0
      %9147 = vmatprep.subr.mxu0 0.0
      %9148 = vmatpush1.msra.mxu0 0.0
      %9149 = vmatprep.subr.mxu0 0.0
      %9150 = vmatpush1.msra.mxu0 0.0
      %9151 = vmatprep.subr.mxu0 0.0
      %9152 = vmatpush1.msra.mxu0 0.0
      %9153 = vmatprep.subr.mxu0 0.0
      %9154 = vmatpush1.msra.mxu0 0.0
      %9155 = vmatprep.mubr.f32.mxu0 0.0
      %v9156 = vand.u32 %v8807, 4294901760
      %9157 = vmatmul.mubr.f32.gmra.mrb[0].mxu0 %v9156
      %v9158 = vpop.f32.mrb[0].mxu0
      %v9159 = vadd.f32 %v8928, %v9158
      %v9160 = vpop.f32.mrb[0].mxu0
      %9161 = vmatprep.mubr.f32.mxu0 0.0
      %v9162 = vand.u32 %v8810, 4294901760
      %9163 = vmatmul.mubr.f32.gmra.mrb[0].mxu0 %v9162
      %v9164 = vpop.f32.mrb[0].mxu0
      %v9165 = vadd.f32 %v8938, %v9164
      %v9166 = vpop.f32.mrb[0].mxu0
      %9167 = vmatprep.mubr.f32.mxu0 0.0
      %v9168 = vand.u32 %v8813, 4294901760
      %9169 = vmatmul.mubr.f32.gmra.mrb[0].mxu0 %v9168
      %v9170 = vpop.f32.mrb[0].mxu0
      %v9171 = vadd.f32 %v8948, %v9170
      %v9172 = vpop.f32.mrb[0].mxu0
      %9173 = vmatprep.mubr.f32.mxu0 0.0
      %v9174 = vand.u32 %v8816, 4294901760
      %9175 = vmatmul.mubr.f32.gmra.mrb[0].mxu0 %v9174
      %v9176 = vpop.f32.mrb[0].mxu0
      %v9177 = vadd.f32 %v8958, %v9176
      %v9178 = vpop.f32.mrb[0].mxu0
      %9179 = vmatprep.mubr.f32.mxu0 0.0
      %v9180 = vand.u32 %v8819, 4294901760
      %9181 = vmatmul.mubr.f32.gmra.mrb[0].mxu0 %v9180
      %v9182 = vpop.f32.mrb[0].mxu0
      %v9183 = vadd.f32 %v8968, %v9182
      %v9184 = vpop.f32.mrb[0].mxu0
      %9185 = vmatprep.mubr.f32.mxu0 0.0
      %v9186 = vand.u32 %v8822, 4294901760
      %9187 = vmatmul.mubr.f32.gmra.mrb[0].mxu0 %v9186
      %v9188 = vpop.f32.mrb[0].mxu0
      %v9189 = vadd.f32 %v8978, %v9188
      %v9190 = vpop.f32.mrb[0].mxu0
      %9191 = vmatprep.mubr.f32.mxu0 0.0
      %v9192 = vand.u32 %v8825, 4294901760
      %9193 = vmatmul.mubr.f32.gmra.mrb[0].mxu0 %v9192
      %v9194 = vpop.f32.mrb[0].mxu0
      %v9195 = vadd.f32 %v8988, %v9194
      %v9196 = vpop.f32.mrb[0].mxu0
      %9197 = vmatprep.mubr.f32.mxu0 0.0
      %v9198 = vand.u32 %v8828, 4294901760
      %9199 = vmatmul.mubr.f32.gmra.mrb[0].mxu0 %v9198
      %v9200 = vpop.f32.mrb[0].mxu0
      %v9201 = vadd.f32 %v8998, %v9200
      %v9202 = vpop.f32.mrb[0].mxu0
      %9203 = vmatprep.mubr.f32.mxu0 0.0
      %v9204 = vand.u32 %v8831, 4294901760
      %9205 = vmatmul.mubr.f32.gmra.mrb[0].mxu0 %v9204
      %v9206 = vpop.f32.mrb[0].mxu0
      %v9207 = vadd.f32 %v9008, %v9206
      %v9208 = vpop.f32.mrb[0].mxu0
      %9209 = vmatprep.mubr.f32.mxu0 0.0
      %v9210 = vand.u32 %v8834, 4294901760
      %9211 = vmatmul.mubr.f32.gmra.mrb[0].mxu0 %v9210
      %v9212 = vpop.f32.mrb[0].mxu0
      %v9213 = vadd.f32 %v9018, %v9212
      %v9214 = vpop.f32.mrb[0].mxu0
      %9215 = vmatprep.mubr.f32.mxu0 0.0
      %v9216 = vand.u32 %v8837, 4294901760
      %9217 = vmatmul.mubr.f32.gmra.mrb[0].mxu0 %v9216
      %v9218 = vpop.f32.mrb[0].mxu0
      %v9219 = vadd.f32 %v9028, %v9218
      %v9220 = vpop.f32.mrb[0].mxu0
      %9221 = vmatprep.mubr.f32.mxu0 0.0
      %v9222 = vand.u32 %v8840, 4294901760
      %9223 = vmatmul.mubr.f32.gmra.mrb[0].mxu0 %v9222
      %v9224 = vpop.f32.mrb[0].mxu0
      %v9225 = vadd.f32 %v9038, %v9224
      %v9226 = vpop.f32.mrb[0].mxu0
      %9227 = vmatprep.mubr.f32.mxu0 0.0
      %v9228 = vand.u32 %v8843, 4294901760
      %9229 = vmatmul.mubr.f32.gmra.mrb[0].mxu0 %v9228
      %v9230 = vpop.f32.mrb[0].mxu0
      %v9231 = vadd.f32 %v9048, %v9230
      %v9232 = vpop.f32.mrb[0].mxu0
      %9233 = vmatprep.mubr.f32.mxu0 0.0
      %v9234 = vand.u32 %v8846, 4294901760
      %9235 = vmatmul.mubr.f32.gmra.mrb[0].mxu0 %v9234
      %v9236 = vpop.f32.mrb[0].mxu0
      %v9237 = vadd.f32 %v9058, %v9236
      %v9238 = vpop.f32.mrb[0].mxu0
      %9239 = vmatprep.mubr.f32.mxu0 0.0
      %v9240 = vand.u32 %v8849, 4294901760
      %9241 = vmatmul.mubr.f32.gmra.mrb[0].mxu0 %v9240
      %v9242 = vpop.f32.mrb[0].mxu0
      %v9243 = vadd.f32 %v9068, %v9242
      %v9244 = vpop.f32.mrb[0].mxu0
      %9245 = vmatprep.mubr.f32.mxu0 0.0
      %v9246 = vand.u32 %v8852, 4294901760
      %9247 = vmatmul.mubr.f32.gmra.mrb[0].mxu0 %v9246
      %v9248 = vpop.f32.mrb[0].mxu0
      %v9249 = vadd.f32 %v9078, %v9248
      %v9250 = vpop.f32.mrb[0].mxu0
      %9251 = vdwg.mxu0
      %9252 = vmatprep.subr.mxu0 0.0
      %v9253 = vand.u32 %v8804, 4294901760
      %v9254 = vsub.f32 %v8804, %v9253
      %9255 = vmatpush1.msra.mxu0 %v9254
      %9256 = vmatprep.subr.mxu0 0.0
      %v9257 = vand.u32 %v8805, 4294901760
      %v9258 = vsub.f32 %v8805, %v9257
      %9259 = vmatpush1.msra.mxu0 %v9258
      %9260 = vmatprep.subr.mxu0 0.0
      %9261 = vmatpush1.msra.mxu0 0.0
      %9262 = vmatprep.subr.mxu0 0.0
      %9263 = vmatpush1.msra.mxu0 0.0
      %9264 = vmatprep.subr.mxu0 0.0
      %9265 = vmatpush1.msra.mxu0 0.0
      %9266 = vmatprep.subr.mxu0 0.0
      %9267 = vmatpush1.msra.mxu0 0.0
      %9268 = vmatprep.subr.mxu0 0.0
      %9269 = vmatpush1.msra.mxu0 0.0
      %9270 = vmatprep.subr.mxu0 0.0
      %9271 = vmatpush1.msra.mxu0 0.0
      %9272 = vmatprep.subr.mxu0 0.0
      %9273 = vmatpush1.msra.mxu0 0.0
      %9274 = vmatprep.subr.mxu0 0.0
      %9275 = vmatpush1.msra.mxu0 0.0
      %9276 = vmatprep.subr.mxu0 0.0
      %9277 = vmatpush1.msra.mxu0 0.0
      %9278 = vmatprep.subr.mxu0 0.0
      %9279 = vmatpush1.msra.mxu0 0.0
      %9280 = vmatprep.subr.mxu0 0.0
      %9281 = vmatpush1.msra.mxu0 0.0
      %9282 = vmatprep.subr.mxu0 0.0
      %9283 = vmatpush1.msra.mxu0 0.0
      %9284 = vmatprep.subr.mxu0 0.0
      %9285 = vmatpush1.msra.mxu0 0.0
      %9286 = vmatprep.subr.mxu0 0.0
      %9287 = vmatpush1.msra.mxu0 0.0
      %9288 = vmatprep.subr.mxu0 0.0
      %9289 = vmatpush1.msra.mxu0 0.0
      %9290 = vmatprep.subr.mxu0 0.0
      %9291 = vmatpush1.msra.mxu0 0.0
      %9292 = vmatprep.subr.mxu0 0.0
      %9293 = vmatpush1.msra.mxu0 0.0
      %9294 = vmatprep.subr.mxu0 0.0
      %9295 = vmatpush1.msra.mxu0 0.0
      %9296 = vmatprep.subr.mxu0 0.0
      %9297 = vmatpush1.msra.mxu0 0.0
      %9298 = vmatprep.subr.mxu0 0.0
      %9299 = vmatpush1.msra.mxu0 0.0
      %9300 = vmatprep.subr.mxu0 0.0
      %9301 = vmatpush1.msra.mxu0 0.0
      %9302 = vmatprep.subr.mxu0 0.0
      %9303 = vmatpush1.msra.mxu0 0.0
      %9304 = vmatprep.subr.mxu0 0.0
      %9305 = vmatpush1.msra.mxu0 0.0
      %9306 = vmatprep.subr.mxu0 0.0
      %9307 = vmatpush1.msra.mxu0 0.0
      %9308 = vmatprep.subr.mxu0 0.0
      %9309 = vmatpush1.msra.mxu0 0.0
      %9310 = vmatprep.subr.mxu0 0.0
      %9311 = vmatpush1.msra.mxu0 0.0
      %9312 = vmatprep.subr.mxu0 0.0
      %9313 = vmatpush1.msra.mxu0 0.0
      %9314 = vmatprep.subr.mxu0 0.0
      %9315 = vmatpush1.msra.mxu0 0.0
      %9316 = vmatprep.subr.mxu0 0.0
      %9317 = vmatpush1.msra.mxu0 0.0
      %9318 = vmatprep.subr.mxu0 0.0
      %9319 = vmatpush1.msra.mxu0 0.0
      %9320 = vmatprep.mubr.f32.mxu0 0.0
      %v9321 = vand.u32 %v8807, 4294901760
      %v9322 = vsub.f32 %v8807, %v9321
      %9323 = vmatmul.mubr.f32.gmra.mrb[0].mxu0 %v9322
      %v9324 = vpop.f32.mrb[0].mxu0
      %v9325 = vadd.f32 %v9159, %v9324
      %v9326 = vpop.f32.mrb[0].mxu0
      %9327 = vmatprep.mubr.f32.mxu0 0.0
      %v9328 = vand.u32 %v8810, 4294901760
      %v9329 = vsub.f32 %v8810, %v9328
      %9330 = vmatmul.mubr.f32.gmra.mrb[0].mxu0 %v9329
      %v9331 = vpop.f32.mrb[0].mxu0
      %v9332 = vadd.f32 %v9165, %v9331
      %v9333 = vpop.f32.mrb[0].mxu0
      %9334 = vmatprep.mubr.f32.mxu0 0.0
      %v9335 = vand.u32 %v8813, 4294901760
      %v9336 = vsub.f32 %v8813, %v9335
      %9337 = vmatmul.mubr.f32.gmra.mrb[0].mxu0 %v9336
      %v9338 = vpop.f32.mrb[0].mxu0
      %v9339 = vadd.f32 %v9171, %v9338
      %v9340 = vpop.f32.mrb[0].mxu0
      %9341 = vmatprep.mubr.f32.mxu0 0.0
      %v9342 = vand.u32 %v8816, 4294901760
      %v9343 = vsub.f32 %v8816, %v9342
      %9344 = vmatmul.mubr.f32.gmra.mrb[0].mxu0 %v9343
      %v9345 = vpop.f32.mrb[0].mxu0
      %v9346 = vadd.f32 %v9177, %v9345
      %v9347 = vpop.f32.mrb[0].mxu0
      %9348 = vmatprep.mubr.f32.mxu0 0.0
      %v9349 = vand.u32 %v8819, 4294901760
      %v9350 = vsub.f32 %v8819, %v9349
      %9351 = vmatmul.mubr.f32.gmra.mrb[0].mxu0 %v9350
      %v9352 = vpop.f32.mrb[0].mxu0
      %v9353 = vadd.f32 %v9183, %v9352
      %v9354 = vpop.f32.mrb[0].mxu0
      %9355 = vmatprep.mubr.f32.mxu0 0.0
      %v9356 = vand.u32 %v8822, 4294901760
      %v9357 = vsub.f32 %v8822, %v9356
      %9358 = vmatmul.mubr.f32.gmra.mrb[0].mxu0 %v9357
      %v9359 = vpop.f32.mrb[0].mxu0
      %v9360 = vadd.f32 %v9189, %v9359
      %v9361 = vpop.f32.mrb[0].mxu0
      %9362 = vmatprep.mubr.f32.mxu0 0.0
      %v9363 = vand.u32 %v8825, 4294901760
      %v9364 = vsub.f32 %v8825, %v9363
      %9365 = vmatmul.mubr.f32.gmra.mrb[0].mxu0 %v9364
      %v9366 = vpop.f32.mrb[0].mxu0
      %v9367 = vadd.f32 %v9195, %v9366
      %v9368 = vpop.f32.mrb[0].mxu0
      %9369 = vmatprep.mubr.f32.mxu0 0.0
      %v9370 = vand.u32 %v8828, 4294901760
      %v9371 = vsub.f32 %v8828, %v9370
      %9372 = vmatmul.mubr.f32.gmra.mrb[0].mxu0 %v9371
      %v9373 = vpop.f32.mrb[0].mxu0
      %v9374 = vadd.f32 %v9201, %v9373
      %v9375 = vpop.f32.mrb[0].mxu0
      %9376 = vmatprep.mubr.f32.mxu0 0.0
      %v9377 = vand.u32 %v8831, 4294901760
      %v9378 = vsub.f32 %v8831, %v9377
      %9379 = vmatmul.mubr.f32.gmra.mrb[0].mxu0 %v9378
      %v9380 = vpop.f32.mrb[0].mxu0
      %v9381 = vadd.f32 %v9207, %v9380
      %v9382 = vpop.f32.mrb[0].mxu0
      %9383 = vmatprep.mubr.f32.mxu0 0.0
      %v9384 = vand.u32 %v8834, 4294901760
      %v9385 = vsub.f32 %v8834, %v9384
      %9386 = vmatmul.mubr.f32.gmra.mrb[0].mxu0 %v9385
      %v9387 = vpop.f32.mrb[0].mxu0
      %v9388 = vadd.f32 %v9213, %v9387
      %v9389 = vpop.f32.mrb[0].mxu0
      %9390 = vmatprep.mubr.f32.mxu0 0.0
      %v9391 = vand.u32 %v8837, 4294901760
      %v9392 = vsub.f32 %v8837, %v9391
      %9393 = vmatmul.mubr.f32.gmra.mrb[0].mxu0 %v9392
      %v9394 = vpop.f32.mrb[0].mxu0
      %v9395 = vadd.f32 %v9219, %v9394
      %v9396 = vpop.f32.mrb[0].mxu0
      %9397 = vmatprep.mubr.f32.mxu0 0.0
      %v9398 = vand.u32 %v8840, 4294901760
      %v9399 = vsub.f32 %v8840, %v9398
      %9400 = vmatmul.mubr.f32.gmra.mrb[0].mxu0 %v9399
      %v9401 = vpop.f32.mrb[0].mxu0
      %v9402 = vadd.f32 %v9225, %v9401
      %v9403 = vpop.f32.mrb[0].mxu0
      %9404 = vmatprep.mubr.f32.mxu0 0.0
      %v9405 = vand.u32 %v8843, 4294901760
      %v9406 = vsub.f32 %v8843, %v9405
      %9407 = vmatmul.mubr.f32.gmra.mrb[0].mxu0 %v9406
      %v9408 = vpop.f32.mrb[0].mxu0
      %v9409 = vadd.f32 %v9231, %v9408
      %v9410 = vpop.f32.mrb[0].mxu0
      %9411 = vmatprep.mubr.f32.mxu0 0.0
      %v9412 = vand.u32 %v8846, 4294901760
      %v9413 = vsub.f32 %v8846, %v9412
      %9414 = vmatmul.mubr.f32.gmra.mrb[0].mxu0 %v9413
      %v9415 = vpop.f32.mrb[0].mxu0
      %v9416 = vadd.f32 %v9237, %v9415
      %v9417 = vpop.f32.mrb[0].mxu0
      %9418 = vmatprep.mubr.f32.mxu0 0.0
      %v9419 = vand.u32 %v8849, 4294901760
      %v9420 = vsub.f32 %v8849, %v9419
      %9421 = vmatmul.mubr.f32.gmra.mrb[0].mxu0 %v9420
      %v9422 = vpop.f32.mrb[0].mxu0
      %v9423 = vadd.f32 %v9243, %v9422
      %v9424 = vpop.f32.mrb[0].mxu0
      %9425 = vmatprep.mubr.f32.mxu0 0.0
      %v9426 = vand.u32 %v8852, 4294901760
      %v9427 = vsub.f32 %v8852, %v9426
      %9428 = vmatmul.mubr.f32.gmra.mrb[0].mxu0 %v9427
      %v9429 = vpop.f32.mrb[0].mxu0
      %v9430 = vadd.f32 %v9249, %v9429
      %v9431 = vpop.f32.mrb[0].mxu0
      %9432 = vdwg.mxu0
      %9433 = vmatprep.subr.mxu0 0.0
      %v9434 = vand.u32 %v8804, 4294901760
      %9435 = vmatpush1.msra.mxu0 %v9434
      %9436 = vmatprep.subr.mxu0 0.0
      %v9437 = vand.u32 %v8805, 4294901760
      %9438 = vmatpush1.msra.mxu0 %v9437
      %9439 = vmatprep.subr.mxu0 0.0
      %9440 = vmatpush1.msra.mxu0 0.0
      %9441 = vmatprep.subr.mxu0 0.0
      %9442 = vmatpush1.msra.mxu0 0.0
      %9443 = vmatprep.subr.mxu0 0.0
      %9444 = vmatpush1.msra.mxu0 0.0
      %9445 = vmatprep.subr.mxu0 0.0
      %9446 = vmatpush1.msra.mxu0 0.0
      %9447 = vmatprep.subr.mxu0 0.0
      %9448 = vmatpush1.msra.mxu0 0.0
      %9449 = vmatprep.subr.mxu0 0.0
      %9450 = vmatpush1.msra.mxu0 0.0
      %9451 = vmatprep.subr.mxu0 0.0
      %9452 = vmatpush1.msra.mxu0 0.0
      %9453 = vmatprep.subr.mxu0 0.0
      %9454 = vmatpush1.msra.mxu0 0.0
      %9455 = vmatprep.subr.mxu0 0.0
      %9456 = vmatpush1.msra.mxu0 0.0
      %9457 = vmatprep.subr.mxu0 0.0
      %9458 = vmatpush1.msra.mxu0 0.0
      %9459 = vmatprep.subr.mxu0 0.0
      %9460 = vmatpush1.msra.mxu0 0.0
      %9461 = vmatprep.subr.mxu0 0.0
      %9462 = vmatpush1.msra.mxu0 0.0
      %9463 = vmatprep.subr.mxu0 0.0
      %9464 = vmatpush1.msra.mxu0 0.0
      %9465 = vmatprep.subr.mxu0 0.0
      %9466 = vmatpush1.msra.mxu0 0.0
      %9467 = vmatprep.subr.mxu0 0.0
      %9468 = vmatpush1.msra.mxu0 0.0
      %9469 = vmatprep.subr.mxu0 0.0
      %9470 = vmatpush1.msra.mxu0 0.0
      %9471 = vmatprep.subr.mxu0 0.0
      %9472 = vmatpush1.msra.mxu0 0.0
      %9473 = vmatprep.subr.mxu0 0.0
      %9474 = vmatpush1.msra.mxu0 0.0
      %9475 = vmatprep.subr.mxu0 0.0
      %9476 = vmatpush1.msra.mxu0 0.0
      %9477 = vmatprep.subr.mxu0 0.0
      %9478 = vmatpush1.msra.mxu0 0.0
      %9479 = vmatprep.subr.mxu0 0.0
      %9480 = vmatpush1.msra.mxu0 0.0
      %9481 = vmatprep.subr.mxu0 0.0
      %9482 = vmatpush1.msra.mxu0 0.0
      %9483 = vmatprep.subr.mxu0 0.0
      %9484 = vmatpush1.msra.mxu0 0.0
      %9485 = vmatprep.subr.mxu0 0.0
      %9486 = vmatpush1.msra.mxu0 0.0
      %9487 = vmatprep.subr.mxu0 0.0
      %9488 = vmatpush1.msra.mxu0 0.0
      %9489 = vmatprep.subr.mxu0 0.0
      %9490 = vmatpush1.msra.mxu0 0.0
      %9491 = vmatprep.subr.mxu0 0.0
      %9492 = vmatpush1.msra.mxu0 0.0
      %9493 = vmatprep.subr.mxu0 0.0
      %9494 = vmatpush1.msra.mxu0 0.0
      %9495 = vmatprep.subr.mxu0 0.0
      %9496 = vmatpush1.msra.mxu0 0.0
      %9497 = vmatprep.subr.mxu0 0.0
      %9498 = vmatpush1.msra.mxu0 0.0
      %9499 = vmatprep.mubr.f32.mxu0 0.0
      %v9500 = vand.u32 %v8807, 4294901760
      %v9501 = vsub.f32 %v8807, %v9500
      %v9502 = vand.u32 %v9501, 4294901760
      %9503 = vmatmul.mubr.f32.gmra.mrb[0].mxu0 %v9502
      %v9504 = vpop.f32.mrb[0].mxu0
      %v9505 = vadd.f32 %v9325, %v9504
      %v9506 = vpop.f32.mrb[0].mxu0
      %9507 = vmatprep.mubr.f32.mxu0 0.0
      %v9508 = vand.u32 %v8810, 4294901760
      %v9509 = vsub.f32 %v8810, %v9508
      %v9510 = vand.u32 %v9509, 4294901760
      %9511 = vmatmul.mubr.f32.gmra.mrb[0].mxu0 %v9510
      %v9512 = vpop.f32.mrb[0].mxu0
      %v9513 = vadd.f32 %v9332, %v9512
      %v9514 = vpop.f32.mrb[0].mxu0
      %9515 = vmatprep.mubr.f32.mxu0 0.0
      %v9516 = vand.u32 %v8813, 4294901760
      %v9517 = vsub.f32 %v8813, %v9516
      %v9518 = vand.u32 %v9517, 4294901760
      %9519 = vmatmul.mubr.f32.gmra.mrb[0].mxu0 %v9518
      %v9520 = vpop.f32.mrb[0].mxu0
      %v9521 = vadd.f32 %v9339, %v9520
      %v9522 = vpop.f32.mrb[0].mxu0
      %9523 = vmatprep.mubr.f32.mxu0 0.0
      %v9524 = vand.u32 %v8816, 4294901760
      %v9525 = vsub.f32 %v8816, %v9524
      %v9526 = vand.u32 %v9525, 4294901760
      %9527 = vmatmul.mubr.f32.gmra.mrb[0].mxu0 %v9526
      %v9528 = vpop.f32.mrb[0].mxu0
      %v9529 = vadd.f32 %v9346, %v9528
      %v9530 = vpop.f32.mrb[0].mxu0
      %9531 = vmatprep.mubr.f32.mxu0 0.0
      %v9532 = vand.u32 %v8819, 4294901760
      %v9533 = vsub.f32 %v8819, %v9532
      %v9534 = vand.u32 %v9533, 4294901760
      %9535 = vmatmul.mubr.f32.gmra.mrb[0].mxu0 %v9534
      %v9536 = vpop.f32.mrb[0].mxu0
      %v9537 = vadd.f32 %v9353, %v9536
      %v9538 = vpop.f32.mrb[0].mxu0
      %9539 = vmatprep.mubr.f32.mxu0 0.0
      %v9540 = vand.u32 %v8822, 4294901760
      %v9541 = vsub.f32 %v8822, %v9540
      %v9542 = vand.u32 %v9541, 4294901760
      %9543 = vmatmul.mubr.f32.gmra.mrb[0].mxu0 %v9542
      %v9544 = vpop.f32.mrb[0].mxu0
      %v9545 = vadd.f32 %v9360, %v9544
      %v9546 = vpop.f32.mrb[0].mxu0
      %9547 = vmatprep.mubr.f32.mxu0 0.0
      %v9548 = vand.u32 %v8825, 4294901760
      %v9549 = vsub.f32 %v8825, %v9548
      %v9550 = vand.u32 %v9549, 4294901760
      %9551 = vmatmul.mubr.f32.gmra.mrb[0].mxu0 %v9550
      %v9552 = vpop.f32.mrb[0].mxu0
      %v9553 = vadd.f32 %v9367, %v9552
      %v9554 = vpop.f32.mrb[0].mxu0
      %9555 = vmatprep.mubr.f32.mxu0 0.0
      %v9556 = vand.u32 %v8828, 4294901760
      %v9557 = vsub.f32 %v8828, %v9556
      %v9558 = vand.u32 %v9557, 4294901760
      %9559 = vmatmul.mubr.f32.gmra.mrb[0].mxu0 %v9558
      %v9560 = vpop.f32.mrb[0].mxu0
      %v9561 = vadd.f32 %v9374, %v9560
      %v9562 = vpop.f32.mrb[0].mxu0
      %9563 = vmatprep.mubr.f32.mxu0 0.0
      %v9564 = vand.u32 %v8831, 4294901760
      %v9565 = vsub.f32 %v8831, %v9564
      %v9566 = vand.u32 %v9565, 4294901760
      %9567 = vmatmul.mubr.f32.gmra.mrb[0].mxu0 %v9566
      %v9568 = vpop.f32.mrb[0].mxu0
      %v9569 = vadd.f32 %v9381, %v9568
      %v9570 = vpop.f32.mrb[0].mxu0
      %9571 = vmatprep.mubr.f32.mxu0 0.0
      %v9572 = vand.u32 %v8834, 4294901760
      %v9573 = vsub.f32 %v8834, %v9572
      %v9574 = vand.u32 %v9573, 4294901760
      %9575 = vmatmul.mubr.f32.gmra.mrb[0].mxu0 %v9574
      %v9576 = vpop.f32.mrb[0].mxu0
      %v9577 = vadd.f32 %v9388, %v9576
      %v9578 = vpop.f32.mrb[0].mxu0
      %9579 = vmatprep.mubr.f32.mxu0 0.0
      %v9580 = vand.u32 %v8837, 4294901760
      %v9581 = vsub.f32 %v8837, %v9580
      %v9582 = vand.u32 %v9581, 4294901760
      %9583 = vmatmul.mubr.f32.gmra.mrb[0].mxu0 %v9582
      %v9584 = vpop.f32.mrb[0].mxu0
      %v9585 = vadd.f32 %v9395, %v9584
      %v9586 = vpop.f32.mrb[0].mxu0
      %9587 = vmatprep.mubr.f32.mxu0 0.0
      %v9588 = vand.u32 %v8840, 4294901760
      %v9589 = vsub.f32 %v8840, %v9588
      %v9590 = vand.u32 %v9589, 4294901760
      %9591 = vmatmul.mubr.f32.gmra.mrb[0].mxu0 %v9590
      %v9592 = vpop.f32.mrb[0].mxu0
      %v9593 = vadd.f32 %v9402, %v9592
      %v9594 = vpop.f32.mrb[0].mxu0
      %9595 = vmatprep.mubr.f32.mxu0 0.0
      %v9596 = vand.u32 %v8843, 4294901760
      %v9597 = vsub.f32 %v8843, %v9596
      %v9598 = vand.u32 %v9597, 4294901760
      %9599 = vmatmul.mubr.f32.gmra.mrb[0].mxu0 %v9598
      %v9600 = vpop.f32.mrb[0].mxu0
      %v9601 = vadd.f32 %v9409, %v9600
      %v9602 = vpop.f32.mrb[0].mxu0
      %9603 = vmatprep.mubr.f32.mxu0 0.0
      %v9604 = vand.u32 %v8846, 4294901760
      %v9605 = vsub.f32 %v8846, %v9604
      %v9606 = vand.u32 %v9605, 4294901760
      %9607 = vmatmul.mubr.f32.gmra.mrb[0].mxu0 %v9606
      %v9608 = vpop.f32.mrb[0].mxu0
      %v9609 = vadd.f32 %v9416, %v9608
      %v9610 = vpop.f32.mrb[0].mxu0
      %9611 = vmatprep.mubr.f32.mxu0 0.0
      %v9612 = vand.u32 %v8849, 4294901760
      %v9613 = vsub.f32 %v8849, %v9612
      %v9614 = vand.u32 %v9613, 4294901760
      %9615 = vmatmul.mubr.f32.gmra.mrb[0].mxu0 %v9614
      %v9616 = vpop.f32.mrb[0].mxu0
      %v9617 = vadd.f32 %v9423, %v9616
      %v9618 = vpop.f32.mrb[0].mxu0
      %9619 = vmatprep.mubr.f32.mxu0 0.0
      %v9620 = vand.u32 %v8852, 4294901760
      %v9621 = vsub.f32 %v8852, %v9620
      %v9622 = vand.u32 %v9621, 4294901760
      %9623 = vmatmul.mubr.f32.gmra.mrb[0].mxu0 %v9622
      %v9624 = vpop.f32.mrb[0].mxu0
      %v9625 = vadd.f32 %v9430, %v9624
      %v9626 = vpop.f32.mrb[0].mxu0
      %9627 = vdwg.mxu0
      %9628 = vmatprep.subr.mxu0 0.0
      %v9629 = vand.u32 %v8804, 4294901760
      %v9630 = vsub.f32 %v8804, %v9629
      %v9631 = vand.u32 %v9630, 4294901760
      %9632 = vmatpush1.msra.mxu0 %v9631
      %9633 = vmatprep.subr.mxu0 0.0
      %v9634 = vand.u32 %v8805, 4294901760
      %v9635 = vsub.f32 %v8805, %v9634
      %v9636 = vand.u32 %v9635, 4294901760
      %9637 = vmatpush1.msra.mxu0 %v9636
      %9638 = vmatprep.subr.mxu0 0.0
      %9639 = vmatpush1.msra.mxu0 0.0
      %9640 = vmatprep.subr.mxu0 0.0
      %9641 = vmatpush1.msra.mxu0 0.0
      %9642 = vmatprep.subr.mxu0 0.0
      %9643 = vmatpush1.msra.mxu0 0.0
      %9644 = vmatprep.subr.mxu0 0.0
      %9645 = vmatpush1.msra.mxu0 0.0
      %9646 = vmatprep.subr.mxu0 0.0
      %9647 = vmatpush1.msra.mxu0 0.0
      %9648 = vmatprep.subr.mxu0 0.0
      %9649 = vmatpush1.msra.mxu0 0.0
      %9650 = vmatprep.subr.mxu0 0.0
      %9651 = vmatpush1.msra.mxu0 0.0
      %9652 = vmatprep.subr.mxu0 0.0
      %9653 = vmatpush1.msra.mxu0 0.0
      %9654 = vmatprep.subr.mxu0 0.0
      %9655 = vmatpush1.msra.mxu0 0.0
      %9656 = vmatprep.subr.mxu0 0.0
      %9657 = vmatpush1.msra.mxu0 0.0
      %9658 = vmatprep.subr.mxu0 0.0
      %9659 = vmatpush1.msra.mxu0 0.0
      %9660 = vmatprep.subr.mxu0 0.0
      %9661 = vmatpush1.msra.mxu0 0.0
      %9662 = vmatprep.subr.mxu0 0.0
      %9663 = vmatpush1.msra.mxu0 0.0
      %9664 = vmatprep.subr.mxu0 0.0
      %9665 = vmatpush1.msra.mxu0 0.0
      %9666 = vmatprep.subr.mxu0 0.0
      %9667 = vmatpush1.msra.mxu0 0.0
      %9668 = vmatprep.subr.mxu0 0.0
      %9669 = vmatpush1.msra.mxu0 0.0
      %9670 = vmatprep.subr.mxu0 0.0
      %9671 = vmatpush1.msra.mxu0 0.0
      %9672 = vmatprep.subr.mxu0 0.0
      %9673 = vmatpush1.msra.mxu0 0.0
      %9674 = vmatprep.subr.mxu0 0.0
      %9675 = vmatpush1.msra.mxu0 0.0
      %9676 = vmatprep.subr.mxu0 0.0
      %9677 = vmatpush1.msra.mxu0 0.0
      %9678 = vmatprep.subr.mxu0 0.0
      %9679 = vmatpush1.msra.mxu0 0.0
      %9680 = vmatprep.subr.mxu0 0.0
      %9681 = vmatpush1.msra.mxu0 0.0
      %9682 = vmatprep.subr.mxu0 0.0
      %9683 = vmatpush1.msra.mxu0 0.0
      %9684 = vmatprep.subr.mxu0 0.0
      %9685 = vmatpush1.msra.mxu0 0.0
      %9686 = vmatprep.subr.mxu0 0.0
      %9687 = vmatpush1.msra.mxu0 0.0
      %9688 = vmatprep.subr.mxu0 0.0
      %9689 = vmatpush1.msra.mxu0 0.0
      %9690 = vmatprep.subr.mxu0 0.0
      %9691 = vmatpush1.msra.mxu0 0.0
      %9692 = vmatprep.subr.mxu0 0.0
      %9693 = vmatpush1.msra.mxu0 0.0
      %9694 = vmatprep.subr.mxu0 0.0
      %9695 = vmatpush1.msra.mxu0 0.0
      %9696 = vmatprep.subr.mxu0 0.0
      %9697 = vmatpush1.msra.mxu0 0.0
      %9698 = vmatprep.mubr.f32.mxu0 0.0
      %v9699 = vand.u32 %v8807, 4294901760
      %9700 = vmatmul.mubr.f32.gmra.mrb[0].mxu0 %v9699
      %v9701 = vpop.f32.mrb[0].mxu0
      %v9702 = vadd.f32 %v9505, %v9701
      %v9703 = vpop.f32.mrb[0].mxu0
      %9704 = vmatprep.mubr.f32.mxu0 0.0
      %v9705 = vand.u32 %v8810, 4294901760
      %9706 = vmatmul.mubr.f32.gmra.mrb[0].mxu0 %v9705
      %v9707 = vpop.f32.mrb[0].mxu0
      %v9708 = vadd.f32 %v9513, %v9707
      %v9709 = vpop.f32.mrb[0].mxu0
      %9710 = vmatprep.mubr.f32.mxu0 0.0
      %v9711 = vand.u32 %v8813, 4294901760
      %9712 = vmatmul.mubr.f32.gmra.mrb[0].mxu0 %v9711
      %v9713 = vpop.f32.mrb[0].mxu0
      %v9714 = vadd.f32 %v9521, %v9713
      %v9715 = vpop.f32.mrb[0].mxu0
      %9716 = vmatprep.mubr.f32.mxu0 0.0
      %v9717 = vand.u32 %v8816, 4294901760
      %9718 = vmatmul.mubr.f32.gmra.mrb[0].mxu0 %v9717
      %v9719 = vpop.f32.mrb[0].mxu0
      %v9720 = vadd.f32 %v9529, %v9719
      %v9721 = vpop.f32.mrb[0].mxu0
      %9722 = vmatprep.mubr.f32.mxu0 0.0
      %v9723 = vand.u32 %v8819, 4294901760
      %9724 = vmatmul.mubr.f32.gmra.mrb[0].mxu0 %v9723
      %v9725 = vpop.f32.mrb[0].mxu0
      %v9726 = vadd.f32 %v9537, %v9725
      %v9727 = vpop.f32.mrb[0].mxu0
      %9728 = vmatprep.mubr.f32.mxu0 0.0
      %v9729 = vand.u32 %v8822, 4294901760
      %9730 = vmatmul.mubr.f32.gmra.mrb[0].mxu0 %v9729
      %v9731 = vpop.f32.mrb[0].mxu0
      %v9732 = vadd.f32 %v9545, %v9731
      %v9733 = vpop.f32.mrb[0].mxu0
      %9734 = vmatprep.mubr.f32.mxu0 0.0
      %v9735 = vand.u32 %v8825, 4294901760
      %9736 = vmatmul.mubr.f32.gmra.mrb[0].mxu0 %v9735
      %v9737 = vpop.f32.mrb[0].mxu0
      %v9738 = vadd.f32 %v9553, %v9737
      %v9739 = vpop.f32.mrb[0].mxu0
      %9740 = vmatprep.mubr.f32.mxu0 0.0
      %v9741 = vand.u32 %v8828, 4294901760
      %9742 = vmatmul.mubr.f32.gmra.mrb[0].mxu0 %v9741
      %v9743 = vpop.f32.mrb[0].mxu0
      %v9744 = vadd.f32 %v9561, %v9743
      %v9745 = vpop.f32.mrb[0].mxu0
      %9746 = vmatprep.mubr.f32.mxu0 0.0
      %v9747 = vand.u32 %v8831, 4294901760
      %9748 = vmatmul.mubr.f32.gmra.mrb[0].mxu0 %v9747
      %v9749 = vpop.f32.mrb[0].mxu0
      %v9750 = vadd.f32 %v9569, %v9749
      %v9751 = vpop.f32.mrb[0].mxu0
      %9752 = vmatprep.mubr.f32.mxu0 0.0
      %v9753 = vand.u32 %v8834, 4294901760
      %9754 = vmatmul.mubr.f32.gmra.mrb[0].mxu0 %v9753
      %v9755 = vpop.f32.mrb[0].mxu0
      %v9756 = vadd.f32 %v9577, %v9755
      %v9757 = vpop.f32.mrb[0].mxu0
      %9758 = vmatprep.mubr.f32.mxu0 0.0
      %v9759 = vand.u32 %v8837, 4294901760
      %9760 = vmatmul.mubr.f32.gmra.mrb[0].mxu0 %v9759
      %v9761 = vpop.f32.mrb[0].mxu0
      %v9762 = vadd.f32 %v9585, %v9761
      %v9763 = vpop.f32.mrb[0].mxu0
      %9764 = vmatprep.mubr.f32.mxu0 0.0
      %v9765 = vand.u32 %v8840, 4294901760
      %9766 = vmatmul.mubr.f32.gmra.mrb[0].mxu0 %v9765
      %v9767 = vpop.f32.mrb[0].mxu0
      %v9768 = vadd.f32 %v9593, %v9767
      %v9769 = vpop.f32.mrb[0].mxu0
      %9770 = vmatprep.mubr.f32.mxu0 0.0
      %v9771 = vand.u32 %v8843, 4294901760
      %9772 = vmatmul.mubr.f32.gmra.mrb[0].mxu0 %v9771
      %v9773 = vpop.f32.mrb[0].mxu0
      %v9774 = vadd.f32 %v9601, %v9773
      %v9775 = vpop.f32.mrb[0].mxu0
      %9776 = vmatprep.mubr.f32.mxu0 0.0
      %v9777 = vand.u32 %v8846, 4294901760
      %9778 = vmatmul.mubr.f32.gmra.mrb[0].mxu0 %v9777
      %v9779 = vpop.f32.mrb[0].mxu0
      %v9780 = vadd.f32 %v9609, %v9779
      %v9781 = vpop.f32.mrb[0].mxu0
      %9782 = vmatprep.mubr.f32.mxu0 0.0
      %v9783 = vand.u32 %v8849, 4294901760
      %9784 = vmatmul.mubr.f32.gmra.mrb[0].mxu0 %v9783
      %v9785 = vpop.f32.mrb[0].mxu0
      %v9786 = vadd.f32 %v9617, %v9785
      %v9787 = vpop.f32.mrb[0].mxu0
      %9788 = vmatprep.mubr.f32.mxu0 0.0
      %v9789 = vand.u32 %v8852, 4294901760
      %9790 = vmatmul.mubr.f32.gmra.mrb[0].mxu0 %v9789
      %v9791 = vpop.f32.mrb[0].mxu0
      %v9792 = vadd.f32 %v9625, %v9791
      %v9793 = vpop.f32.mrb[0].mxu0
      %9794 = vdwg.mxu0
      %9795 = vmatprep.subr.mxu0 0.0
      %v9796 = vand.u32 %v8804, 4294901760
      %9797 = vmatpush1.msra.mxu0 %v9796
      %9798 = vmatprep.subr.mxu0 0.0
      %v9799 = vand.u32 %v8805, 4294901760
      %9800 = vmatpush1.msra.mxu0 %v9799
      %9801 = vmatprep.subr.mxu0 0.0
      %9802 = vmatpush1.msra.mxu0 0.0
      %9803 = vmatprep.subr.mxu0 0.0
      %9804 = vmatpush1.msra.mxu0 0.0
      %9805 = vmatprep.subr.mxu0 0.0
      %9806 = vmatpush1.msra.mxu0 0.0
      %9807 = vmatprep.subr.mxu0 0.0
      %9808 = vmatpush1.msra.mxu0 0.0
      %9809 = vmatprep.subr.mxu0 0.0
      %9810 = vmatpush1.msra.mxu0 0.0
      %9811 = vmatprep.subr.mxu0 0.0
      %9812 = vmatpush1.msra.mxu0 0.0
      %9813 = vmatprep.subr.mxu0 0.0
      %9814 = vmatpush1.msra.mxu0 0.0
      %9815 = vmatprep.subr.mxu0 0.0
      %9816 = vmatpush1.msra.mxu0 0.0
      %9817 = vmatprep.subr.mxu0 0.0
      %9818 = vmatpush1.msra.mxu0 0.0
      %9819 = vmatprep.subr.mxu0 0.0
      %9820 = vmatpush1.msra.mxu0 0.0
      %9821 = vmatprep.subr.mxu0 0.0
      %9822 = vmatpush1.msra.mxu0 0.0
      %9823 = vmatprep.subr.mxu0 0.0
      %9824 = vmatpush1.msra.mxu0 0.0
      %9825 = vmatprep.subr.mxu0 0.0
      %9826 = vmatpush1.msra.mxu0 0.0
      %9827 = vmatprep.subr.mxu0 0.0
      %9828 = vmatpush1.msra.mxu0 0.0
      %9829 = vmatprep.subr.mxu0 0.0
      %9830 = vmatpush1.msra.mxu0 0.0
      %9831 = vmatprep.subr.mxu0 0.0
      %9832 = vmatpush1.msra.mxu0 0.0
      %9833 = vmatprep.subr.mxu0 0.0
      %9834 = vmatpush1.msra.mxu0 0.0
      %9835 = vmatprep.subr.mxu0 0.0
      %9836 = vmatpush1.msra.mxu0 0.0
      %9837 = vmatprep.subr.mxu0 0.0
      %9838 = vmatpush1.msra.mxu0 0.0
      %9839 = vmatprep.subr.mxu0 0.0
      %9840 = vmatpush1.msra.mxu0 0.0
      %9841 = vmatprep.subr.mxu0 0.0
      %9842 = vmatpush1.msra.mxu0 0.0
      %9843 = vmatprep.subr.mxu0 0.0
      %9844 = vmatpush1.msra.mxu0 0.0
      %9845 = vmatprep.subr.mxu0 0.0
      %9846 = vmatpush1.msra.mxu0 0.0
      %9847 = vmatprep.subr.mxu0 0.0
      %9848 = vmatpush1.msra.mxu0 0.0
      %9849 = vmatprep.subr.mxu0 0.0
      %9850 = vmatpush1.msra.mxu0 0.0
      %9851 = vmatprep.subr.mxu0 0.0
      %9852 = vmatpush1.msra.mxu0 0.0
      %9853 = vmatprep.subr.mxu0 0.0
      %9854 = vmatpush1.msra.mxu0 0.0
      %9855 = vmatprep.subr.mxu0 0.0
      %9856 = vmatpush1.msra.mxu0 0.0
      %9857 = vmatprep.subr.mxu0 0.0
      %9858 = vmatpush1.msra.mxu0 0.0
      %9859 = vmatprep.subr.mxu0 0.0
      %9860 = vmatpush1.msra.mxu0 0.0
      %9861 = vmatprep.mubr.f32.mxu0 0.0
      %v9862 = vand.u32 %v8807, 4294901760
      %9863 = vmatmul.mubr.f32.gmra.mrb[0].mxu0 %v9862
      %v9864 = vpop.f32.mrb[0].mxu0
      %v9865 = vadd.f32 %v9702, %v9864
      %v9866 = vpop.f32.mrb[0].mxu0
      %9867 = vmatprep.mubr.f32.mxu0 0.0
      %v9868 = vand.u32 %v8810, 4294901760
      %9869 = vmatmul.mubr.f32.gmra.mrb[0].mxu0 %v9868
      %v9870 = vpop.f32.mrb[0].mxu0
      %v9871 = vadd.f32 %v9708, %v9870
      %v9872 = vpop.f32.mrb[0].mxu0
      %9873 = vmatprep.mubr.f32.mxu0 0.0
      %v9874 = vand.u32 %v8813, 4294901760
      %9875 = vmatmul.mubr.f32.gmra.mrb[0].mxu0 %v9874
      %v9876 = vpop.f32.mrb[0].mxu0
      %v9877 = vadd.f32 %v9714, %v9876
      %v9878 = vpop.f32.mrb[0].mxu0
      %9879 = vmatprep.mubr.f32.mxu0 0.0
      %v9880 = vand.u32 %v8816, 4294901760
      %9881 = vmatmul.mubr.f32.gmra.mrb[0].mxu0 %v9880
      %v9882 = vpop.f32.mrb[0].mxu0
      %v9883 = vadd.f32 %v9720, %v9882
      %v9884 = vpop.f32.mrb[0].mxu0
      %9885 = vmatprep.mubr.f32.mxu0 0.0
      %v9886 = vand.u32 %v8819, 4294901760
      %9887 = vmatmul.mubr.f32.gmra.mrb[0].mxu0 %v9886
      %v9888 = vpop.f32.mrb[0].mxu0
      %v9889 = vadd.f32 %v9726, %v9888
      %v9890 = vpop.f32.mrb[0].mxu0
      %9891 = vmatprep.mubr.f32.mxu0 0.0
      %v9892 = vand.u32 %v8822, 4294901760
      %9893 = vmatmul.mubr.f32.gmra.mrb[0].mxu0 %v9892
      %v9894 = vpop.f32.mrb[0].mxu0
      %v9895 = vadd.f32 %v9732, %v9894
      %v9896 = vpop.f32.mrb[0].mxu0
      %9897 = vmatprep.mubr.f32.mxu0 0.0
      %v9898 = vand.u32 %v8825, 4294901760
      %9899 = vmatmul.mubr.f32.gmra.mrb[0].mxu0 %v9898
      %v9900 = vpop.f32.mrb[0].mxu0
      %v9901 = vadd.f32 %v9738, %v9900
      %v9902 = vpop.f32.mrb[0].mxu0
      %9903 = vmatprep.mubr.f32.mxu0 0.0
      %v9904 = vand.u32 %v8828, 4294901760
      %9905 = vmatmul.mubr.f32.gmra.mrb[0].mxu0 %v9904
      %v9906 = vpop.f32.mrb[0].mxu0
      %v9907 = vadd.f32 %v9744, %v9906
      %v9908 = vpop.f32.mrb[0].mxu0
      %9909 = vmatprep.mubr.f32.mxu0 0.0
      %v9910 = vand.u32 %v8831, 4294901760
      %9911 = vmatmul.mubr.f32.gmra.mrb[0].mxu0 %v9910
      %v9912 = vpop.f32.mrb[0].mxu0
      %v9913 = vadd.f32 %v9750, %v9912
      %v9914 = vpop.f32.mrb[0].mxu0
      %9915 = vmatprep.mubr.f32.mxu0 0.0
      %v9916 = vand.u32 %v8834, 4294901760
      %9917 = vmatmul.mubr.f32.gmra.mrb[0].mxu0 %v9916
      %v9918 = vpop.f32.mrb[0].mxu0
      %v9919 = vadd.f32 %v9756, %v9918
      %v9920 = vpop.f32.mrb[0].mxu0
      %9921 = vmatprep.mubr.f32.mxu0 0.0
      %v9922 = vand.u32 %v8837, 4294901760
      %9923 = vmatmul.mubr.f32.gmra.mrb[0].mxu0 %v9922
      %v9924 = vpop.f32.mrb[0].mxu0
      %v9925 = vadd.f32 %v9762, %v9924
      %v9926 = vpop.f32.mrb[0].mxu0
      %9927 = vmatprep.mubr.f32.mxu0 0.0
      %v9928 = vand.u32 %v8840, 4294901760
      %9929 = vmatmul.mubr.f32.gmra.mrb[0].mxu0 %v9928
      %v9930 = vpop.f32.mrb[0].mxu0
      %v9931 = vadd.f32 %v9768, %v9930
      %v9932 = vpop.f32.mrb[0].mxu0
      %9933 = vmatprep.mubr.f32.mxu0 0.0
      %v9934 = vand.u32 %v8843, 4294901760
      %9935 = vmatmul.mubr.f32.gmra.mrb[0].mxu0 %v9934
      %v9936 = vpop.f32.mrb[0].mxu0
      %v9937 = vadd.f32 %v9774, %v9936
      %v9938 = vpop.f32.mrb[0].mxu0
      %9939 = vmatprep.mubr.f32.mxu0 0.0
      %v9940 = vand.u32 %v8846, 4294901760
      %9941 = vmatmul.mubr.f32.gmra.mrb[0].mxu0 %v9940
      %v9942 = vpop.f32.mrb[0].mxu0
      %v9943 = vadd.f32 %v9780, %v9942
      %v9944 = vpop.f32.mrb[0].mxu0
      %9945 = vmatprep.mubr.f32.mxu0 0.0
      %v9946 = vand.u32 %v8849, 4294901760
      %9947 = vmatmul.mubr.f32.gmra.mrb[0].mxu0 %v9946
      %v9948 = vpop.f32.mrb[0].mxu0
      %v9949 = vadd.f32 %v9786, %v9948
      %v9950 = vpop.f32.mrb[0].mxu0
      %9951 = vmatprep.mubr.f32.mxu0 0.0
      %v9952 = vand.u32 %v8852, 4294901760
      %9953 = vmatmul.mubr.f32.gmra.mrb[0].mxu0 %v9952
      %v9954 = vpop.f32.mrb[0].mxu0
      %v9955 = vadd.f32 %v9792, %v9954
      %v9956 = vpop.f32.mrb[0].mxu0
      %9957 = vdwg.mxu0
      %v9958 = vadd.f32 %v7540, %v9865
      %v9959 = vadd.f32 %v7541, %v9871
      %v9960 = vadd.f32 %v7542, %v9877
      %v9961 = vadd.f32 %v7543, %v9883
      %v9962 = vadd.f32 %v7544, %v9889
      %v9963 = vadd.f32 %v7545, %v9895
      %v9964 = vadd.f32 %v7546, %v9901
      %v9965 = vadd.f32 %v7547, %v9907
      %v9966 = vadd.f32 %v7548, %v9913
      %v9967 = vadd.f32 %v7549, %v9919
      %v9968 = vadd.f32 %v7550, %v9925
      %v9969 = vadd.f32 %v7551, %v9931
      %v9970 = vadd.f32 %v7552, %v9937
      %v9971 = vadd.f32 %v7553, %v9943
      %v9972 = vadd.f32 %v7554, %v9949
      %v9973 = vadd.f32 %v7555, %v9955
      %vm9974 = vcmp.ge.f32.partialorder %v9958, 0.0
      %vm9975 = vcmp.ge.f32.partialorder %v9959, 0.0
      %vm9976 = vcmp.ge.f32.partialorder %v9960, 0.0
      %vm9977 = vcmp.ge.f32.partialorder %v9961, 0.0
      %vm9978 = vcmp.ge.f32.partialorder %v9962, 0.0
      %vm9979 = vcmp.ge.f32.partialorder %v9963, 0.0
      %vm9980 = vcmp.ge.f32.partialorder %v9964, 0.0
      %vm9981 = vcmp.ge.f32.partialorder %v9965, 0.0
      %vm9982 = vcmp.ge.f32.partialorder %v9966, 0.0
      %vm9983 = vcmp.ge.f32.partialorder %v9967, 0.0
      %vm9984 = vcmp.ge.f32.partialorder %v9968, 0.0
      %vm9985 = vcmp.ge.f32.partialorder %v9969, 0.0
      %vm9986 = vcmp.ge.f32.partialorder %v9970, 0.0
      %vm9987 = vcmp.ge.f32.partialorder %v9971, 0.0
      %vm9988 = vcmp.ge.f32.partialorder %v9972, 0.0
      %vm9989 = vcmp.ge.f32.partialorder %v9973, 0.0
      %v9990 = vmul.f32 %v9958, 0.01
      %v9991 = vmul.f32 %v9959, 0.01
      %v9992 = vmul.f32 %v9960, 0.01
      %v9993 = vmul.f32 %v9961, 0.01
      %v9994 = vmul.f32 %v9962, 0.01
      %v9995 = vmul.f32 %v9963, 0.01
      %v9996 = vmul.f32 %v9964, 0.01
      %v9997 = vmul.f32 %v9965, 0.01
      %v9998 = vmul.f32 %v9966, 0.01
      %v9999 = vmul.f32 %v9967, 0.01
      %v10000 = vmul.f32 %v9968, 0.01
      %v10001 = vmul.f32 %v9969, 0.01
      %v10002 = vmul.f32 %v9970, 0.01
      %v10003 = vmul.f32 %v9971, 0.01
      %v10004 = vmul.f32 %v9972, 0.01
      %v10005 = vmul.f32 %v9973, 0.01
      %v10006 = vsel %vm9974, %v9958, %v9990
      %v10007 = vsel %vm9975, %v9959, %v9991
      %v10008 = vsel %vm9976, %v9960, %v9992
      %v10009 = vsel %vm9977, %v9961, %v9993
      %v10010 = vsel %vm9978, %v9962, %v9994
      %v10011 = vsel %vm9979, %v9963, %v9995
      %v10012 = vsel %vm9980, %v9964, %v9996
      %v10013 = vsel %vm9981, %v9965, %v9997
      %v10014 = vsel %vm9982, %v9966, %v9998
      %v10015 = vsel %vm9983, %v9967, %v9999
      %v10016 = vsel %vm9984, %v9968, %v10000
      %v10017 = vsel %vm9985, %v9969, %v10001
      %v10018 = vsel %vm9986, %v9970, %v10002
      %v10019 = vsel %vm9987, %v9971, %v10003
      %v10020 = vsel %vm9988, %v9972, %v10004
      %v10021 = vsel %vm9989, %v9973, %v10005
      %vm10022 = vcmask 261120
      %10023 = vst.msk [vmem:[%s197] sm:$0xff] %vm10022, %v10006
      %10024 = vst.msk [vmem:[%s197 + $0x8] sm:$0xff] %vm10022, %v10007
      %10025 = vst.msk [vmem:[%s197 + $0x10] sm:$0xff] %vm10022, %v10008
      %10026 = vst.msk [vmem:[%s197 + $0x18] sm:$0xff] %vm10022, %v10009
      %10027 = vst.msk [vmem:[%s197 + $0x20] sm:$0xff] %vm10022, %v10010
      %10028 = vst.msk [vmem:[%s197 + $0x28] sm:$0xff] %vm10022, %v10011
      %10029 = vst.msk [vmem:[%s197 + $0x30] sm:$0xff] %vm10022, %v10012
      %10030 = vst.msk [vmem:[%s197 + $0x38] sm:$0xff] %vm10022, %v10013
      %10031 = vst.msk [vmem:[%s197 + $0x40] sm:$0xff] %vm10022, %v10014
      %10032 = vst.msk [vmem:[%s197 + $0x48] sm:$0xff] %vm10022, %v10015
      %10033 = vst.msk [vmem:[%s197 + $0x50] sm:$0xff] %vm10022, %v10016
      %10034 = vst.msk [vmem:[%s197 + $0x58] sm:$0xff] %vm10022, %v10017
      %10035 = vst.msk [vmem:[%s197 + $0x60] sm:$0xff] %vm10022, %v10018
      %10036 = vst.msk [vmem:[%s197 + $0x68] sm:$0xff] %vm10022, %v10019
      %10037 = vst.msk [vmem:[%s197 + $0x70] sm:$0xff] %vm10022, %v10020
      %10038 = vst.msk [vmem:[%s197 + $0x78] sm:$0xff] %vm10022, %v10021
      %p10039 = scmp.lt.s32.totalorder %s15, 1
      %s10040 = scalar_select %p10039, %s15, 1
      %s10041 = smul.addr %s10040, 16
      %s10042 = smul.addr %s10041, 8
      %s10043 = scalar_lea.vmem %s4, %s10042
      // Predicated region
      $region37: #{tpu_custom_call.1} parent=35 // pred_check
        %p10044 = pneg %p122
      $region38: #{tpu_custom_call.1} parent=35 // pred_check_branch
        %10046 = sbr.rel (%p10044) target = $region40
      $region39: #{tpu_custom_call.1} parent=35 // pred_region
        _
      $region40: #{tpu_custom_call.1} parent=35 // pred_fallthru
        _
    $region36: #{tpu_custom_call.1} parent=5 // pred_fallthru
      _
    %p10047 = scmp.le.s32.totalorder 2, %s10
    // Predicated region
    $region41: #{tpu_custom_call.1} parent=5 // pred_check
      %p10048 = pneg %p10047
    $region42: #{tpu_custom_call.1} parent=5 // pred_check_branch
      %10050 = sbr.rel (%p10048) target = $region44
    $region43: #{tpu_custom_call.1} parent=5 // pred_region
      %s10051 = ssub.s32 %s10, 2
      // Predicated region
      $region45: #{tpu_custom_call.1} parent=43 // pred_check
        %p10052 = pneg %p128
      $region46: #{tpu_custom_call.1} parent=43 // pred_check_branch
        %10054 = sbr.rel (%p10052) target = $region48
      $region47: #{tpu_custom_call.1} parent=43 // pred_region
        %p10055 = scmp.lt.s32.totalorder %s16, 1
        %s10056 = scalar_select %p10055, %s16, 1
        %s10057 = smul.addr %s10056, 16
        %s10058 = smul.addr %s10057, 8
        %s10059 = scalar_lea.vmem %s4, %s10058
      $region48: #{tpu_custom_call.1} parent=43 // pred_fallthru
        _
    $region44: #{tpu_custom_call.1} parent=5 // pred_fallthru
      _
  $region6: #{tpu_custom_call.1} parent=0 // loop_footer
    %s14 = sadd.s32 1, %s10
  $region7: #{tpu_custom_call.1} parent=0 // loop_footer_branch
    %9 = sbr.rel target = $region3
  $region8: #{tpu_custom_call.1} parent=0 // loop_exit
    _

</llo_original>
